<compile_context>
chip_gen: v5e
topology: v5e:2x2
jax: 0.10.0
libtpu: 0.0.40
codegen_flags: <defaults>
</compile_context>

<pallas_src>
import functools

import jax
import jax.numpy as jnp
from jax.experimental import pallas as pl
from jax.experimental.pallas import tpu as pltpu

# PyTorch layer dims: 630 -> 512 -> 1024 -> 512 -> 128 -> 2
DIMS = [(630, 512), (512, 1024), (1024, 512), (512, 128), (128, 2)]
IN_PAD = 640    # 630 padded up to a multiple of 128 (lane-dense first matmul)
OUT_PAD = 128   # 2-wide final output padded to a full lane width


def mlp_kernel(x_ref,
               w1_ref, b1_ref,
               w2_ref, b2_ref,
               w3_ref, b3_ref,
               w4_ref, b4_ref,
               w5_ref, b5_ref,
               o_ref):
    """Fused 5-layer MLP. Dot operands bf16; accumulate/bias/ReLU in f32."""

    def layer(h, w_ref, b_ref, relu=True):
        acc = jnp.dot(h, w_ref[...], preferred_element_type=jnp.float32)
        acc = acc + b_ref[...]
        if relu:
            acc = jnp.maximum(acc, 0.0)
        return acc

    h = x_ref[...]                                        # (tile, 640) bf16
    h = layer(h, w1_ref, b1_ref).astype(jnp.bfloat16)     # (tile, 512)
    h = layer(h, w2_ref, b2_ref).astype(jnp.bfloat16)     # (tile, 1024)
    h = layer(h, w3_ref, b3_ref).astype(jnp.bfloat16)     # (tile, 512)
    h = layer(h, w4_ref, b4_ref).astype(jnp.bfloat16)     # (tile, 128)
    o_ref[...] = layer(h, w5_ref, b5_ref, relu=False)     # (tile, 128) f32


@functools.partial(jax.jit, static_argnames=("batch_tile",))
def mlp_forward(x, params, batch_tile=128):
    # Mimic PyTorch's x.view(-1, 630).
    x = x.reshape(-1, 630).astype(jnp.float32)
    B = x.shape[0]
    n_tiles = pl.cdiv(B, batch_tile)
    B_pad = n_tiles * batch_tile

    # Host-side padding: batch to a tile multiple, feature dim 630 -> 640.
    x_p = jnp.pad(x, ((0, B_pad - B), (0, IN_PAD - 630))).astype(jnp.bfloat16)

    (w1, b1), (w2, b2), (w3, b3), (w4, b4), (w5, b5) = params
    # Zero-pad w1 rows / w5+b5 cols (bit-identical maths); dot operands -> bf16.
    w1p = jnp.pad(w1, ((0, IN_PAD - 630), (0, 0))).astype(jnp.bfloat16)
    w5p = jnp.pad(w5, ((0, 0), (0, OUT_PAD - 2))).astype(jnp.bfloat16)
    b5p = jnp.pad(b5, ((0, 0), (0, OUT_PAD - 2)))          # stays f32
    weights = [w1p, w2.astype(jnp.bfloat16), w3.astype(jnp.bfloat16),
               w4.astype(jnp.bfloat16), w5p]
    biases = [b1, b2, b3, b4, b5p]                         # f32, (1, dout)

    # Grid-invariant operands: constant index_map + single buffering.
    def const_spec(arr):
        return pl.BlockSpec(arr.shape, lambda i: (0, 0),
                            pipeline_mode=pl.Buffered(1))

    in_specs = [pl.BlockSpec((batch_tile, IN_PAD), lambda i: (i, 0))]
    args = [x_p]
    for w, b in zip(weights, biases):
        in_specs += [const_spec(w), const_spec(b)]
        args += [w, b]

    flops = 2 * B_pad * sum(w.shape[0] * w.shape[1] for w in weights)
    bytes_accessed = (sum(w.size * 2 for w in weights)
                      + sum(b.size * 4 for b in biases)
                      + B_pad * IN_PAD * 2 + B_pad * OUT_PAD * 4)

    out = pl.pallas_call(
        mlp_kernel,
        out_shape=jax.ShapeDtypeStruct((B_pad, OUT_PAD), jnp.float32),
        grid_spec=pltpu.PrefetchScalarGridSpec(
            num_scalar_prefetch=0,
            grid=(n_tiles,),
            in_specs=in_specs,
            out_specs=pl.BlockSpec((batch_tile, OUT_PAD), lambda i: (i, 0)),
        ),
        compiler_params=pltpu.CompilerParams(
            dimension_semantics=("parallel",),
            vmem_limit_bytes=32 << 20,
        ),
        cost_estimate=pl.CostEstimate(
            flops=flops, transcendentals=0, bytes_accessed=bytes_accessed),
    )(*args)

    # Drop batch padding and lane padding: true output is (B, 2).
    return out[:B, :2]


def init_params(key):
    """Deterministic init matching nn.Linear shapes.

    PyTorch nn.Linear(in, out) has weight (out, in), bias (out,) with
    U(-1/sqrt(in), 1/sqrt(in)) init. We store weights transposed (in, out)
    and biases as (1, out) so TPU tiles are 2-D.
    """
    params = []
    for (din, dout) in DIMS:
        key, kw, kb = jax.random.split(key, 3)
        bound = 1.0 / jnp.sqrt(din)
        w = jax.random.uniform(kw, (din, dout), jnp.float32, -bound, bound)
        b = jax.random.uniform(kb, (1, dout), jnp.float32, -bound, bound)
        params.append((w, b))
    return params


def mlp_reference(x, params):
    x = x.reshape(-1, 630).astype(jnp.float32)
    (w1, b1), (w2, b2), (w3, b3), (w4, b4), (w5, b5) = params
    h = jnp.maximum(x @ w1 + b1, 0.0)
    h = jnp.maximum(h @ w2 + b2, 0.0)
    h = jnp.maximum(h @ w3 + b3, 0.0)
    h = jnp.maximum(h @ w4 + b4, 0.0)
    return h @ w5 + b5


if __name__ == "__main__":
    key = jax.random.PRNGKey(0)
    kp, kx = jax.random.split(key)
    params = init_params(kp)

    # Small batch of flattened 630-dim feature vectors (what view(-1, 630) sees).
    # batch=8 is NOT a multiple of the 128 batch tile -> exercises the padding path.
    x = jax.random.normal(kx, (8, 630), dtype=jnp.float32)

    out = jax.block_until_ready(mlp_forward(x, params))
    ref = mlp_reference(x, params)

    assert out.shape == (8, 2), out.shape
    # bf16 dot operands with f32 accumulation vs. a pure-f32 reference.
    assert jnp.allclose(out, ref, atol=5e-2, rtol=5e-2), (
        float(jnp.max(jnp.abs(out - ref))))

    print("KERNEL_OK")
</pallas_src>

<mosaic_0001>
module attributes {stable_mosaic.version = 11 : i64} {
  func.func @mlp_kernel(%arg0: i32, %arg1: memref<128x640xbf16, #tpu.memory_space<vmem>>, %arg2: memref<640x512xbf16, #tpu.memory_space<vmem>>, %arg3: memref<1x512xf32, #tpu.memory_space<vmem>>, %arg4: memref<512x1024xbf16, #tpu.memory_space<vmem>>, %arg5: memref<1x1024xf32, #tpu.memory_space<vmem>>, %arg6: memref<1024x512xbf16, #tpu.memory_space<vmem>>, %arg7: memref<1x512xf32, #tpu.memory_space<vmem>>, %arg8: memref<512x128xbf16, #tpu.memory_space<vmem>>, %arg9: memref<1x128xf32, #tpu.memory_space<vmem>>, %arg10: memref<128x128xbf16, #tpu.memory_space<vmem>>, %arg11: memref<1x128xf32, #tpu.memory_space<vmem>>, %arg12: memref<128x128xf32, #tpu.memory_space<vmem>>) attributes {dimension_semantics = [#tpu.dimension_semantics<parallel>], iteration_bounds = array<i64: 1>, scalar_prefetch = 0 : i64, scratch_operands = 0 : i64, tpu.core_type = #tpu.core_type<tc>, window_params = [{transform_indices = @transform_0, window_bounds = array<i64: 128, 640>}, {pipeline_mode = #tpu.pipeline_mode<synchronous>, transform_indices = @transform_1, window_bounds = array<i64: 640, 512>}, {pipeline_mode = #tpu.pipeline_mode<synchronous>, transform_indices = @transform_2, window_bounds = array<i64: 1, 512>}, {pipeline_mode = #tpu.pipeline_mode<synchronous>, transform_indices = @transform_3, window_bounds = array<i64: 512, 1024>}, {pipeline_mode = #tpu.pipeline_mode<synchronous>, transform_indices = @transform_4, window_bounds = array<i64: 1, 1024>}, {pipeline_mode = #tpu.pipeline_mode<synchronous>, transform_indices = @transform_5, window_bounds = array<i64: 1024, 512>}, {pipeline_mode = #tpu.pipeline_mode<synchronous>, transform_indices = @transform_6, window_bounds = array<i64: 1, 512>}, {pipeline_mode = #tpu.pipeline_mode<synchronous>, transform_indices = @transform_7, window_bounds = array<i64: 512, 128>}, {pipeline_mode = #tpu.pipeline_mode<synchronous>, transform_indices = @transform_8, window_bounds = array<i64: 1, 128>}, {pipeline_mode = #tpu.pipeline_mode<synchronous>, transform_indices = @transform_9, window_bounds = array<i64: 128, 128>}, {pipeline_mode = #tpu.pipeline_mode<synchronous>, transform_indices = @transform_10, window_bounds = array<i64: 1, 128>}, {transform_indices = @transform_11, window_bounds = array<i64: 128, 128>}]} {
    %c0 = arith.constant 0 : index
    %c0_0 = arith.constant 0 : index
    %0 = vector.load %arg1[%c0, %c0_0] : memref<128x640xbf16, #tpu.memory_space<vmem>>, vector<128x640xbf16>
    %c0_1 = arith.constant 0 : index
    %c0_2 = arith.constant 0 : index
    %1 = vector.load %arg2[%c0_1, %c0_2] : memref<640x512xbf16, #tpu.memory_space<vmem>>, vector<640x512xbf16>
    %cst = arith.constant dense<0.000000e+00> : vector<128x512xf32>
    %2 = tpu.matmul %0, %1, %cst {dimension_numbers = #tpu.dot_dimension_numbers<[1], [0], [0], [1], [0, 0, 1, 1], [], []>} : vector<128x640xbf16>, vector<640x512xbf16>, vector<128x512xf32> -> vector<128x512xf32>
    %c0_3 = arith.constant 0 : index
    %c0_4 = arith.constant 0 : index
    %3 = vector.load %arg3[%c0_3, %c0_4] : memref<1x512xf32, #tpu.memory_space<vmem>>, vector<1x512xf32>
    %4 = vector.broadcast %3 : vector<1x512xf32> to vector<128x512xf32>
    %5 = arith.addf %2, %4 : vector<128x512xf32>
    %cst_5 = arith.constant 0.000000e+00 : f32
    %6 = vector.broadcast %cst_5 : f32 to vector<128x512xf32>
    %7 = arith.maximumf %5, %6 : vector<128x512xf32>
    %8 = arith.truncf %7 : vector<128x512xf32> to vector<128x512xbf16>
    %c0_6 = arith.constant 0 : index
    %c0_7 = arith.constant 0 : index
    %9 = vector.load %arg4[%c0_6, %c0_7] : memref<512x1024xbf16, #tpu.memory_space<vmem>>, vector<512x1024xbf16>
    %cst_8 = arith.constant dense<0.000000e+00> : vector<128x1024xf32>
    %10 = tpu.matmul %8, %9, %cst_8 {dimension_numbers = #tpu.dot_dimension_numbers<[1], [0], [0], [1], [0, 0, 1, 1], [], []>} : vector<128x512xbf16>, vector<512x1024xbf16>, vector<128x1024xf32> -> vector<128x1024xf32>
    %c0_9 = arith.constant 0 : index
    %c0_10 = arith.constant 0 : index
    %11 = vector.load %arg5[%c0_9, %c0_10] : memref<1x1024xf32, #tpu.memory_space<vmem>>, vector<1x1024xf32>
    %12 = vector.broadcast %11 : vector<1x1024xf32> to vector<128x1024xf32>
    %13 = arith.addf %10, %12 : vector<128x1024xf32>
    %cst_11 = arith.constant 0.000000e+00 : f32
    %14 = vector.broadcast %cst_11 : f32 to vector<128x1024xf32>
    %15 = arith.maximumf %13, %14 : vector<128x1024xf32>
    %16 = arith.truncf %15 : vector<128x1024xf32> to vector<128x1024xbf16>
    %c0_12 = arith.constant 0 : index
    %c0_13 = arith.constant 0 : index
    %17 = vector.load %arg6[%c0_12, %c0_13] : memref<1024x512xbf16, #tpu.memory_space<vmem>>, vector<1024x512xbf16>
    %cst_14 = arith.constant dense<0.000000e+00> : vector<128x512xf32>
    %18 = tpu.matmul %16, %17, %cst_14 {dimension_numbers = #tpu.dot_dimension_numbers<[1], [0], [0], [1], [0, 0, 1, 1], [], []>} : vector<128x1024xbf16>, vector<1024x512xbf16>, vector<128x512xf32> -> vector<128x512xf32>
    %c0_15 = arith.constant 0 : index
    %c0_16 = arith.constant 0 : index
    %19 = vector.load %arg7[%c0_15, %c0_16] : memref<1x512xf32, #tpu.memory_space<vmem>>, vector<1x512xf32>
    %20 = vector.broadcast %19 : vector<1x512xf32> to vector<128x512xf32>
    %21 = arith.addf %18, %20 : vector<128x512xf32>
    %cst_17 = arith.constant 0.000000e+00 : f32
    %22 = vector.broadcast %cst_17 : f32 to vector<128x512xf32>
    %23 = arith.maximumf %21, %22 : vector<128x512xf32>
    %24 = arith.truncf %23 : vector<128x512xf32> to vector<128x512xbf16>
    %c0_18 = arith.constant 0 : index
    %c0_19 = arith.constant 0 : index
    %25 = vector.load %arg8[%c0_18, %c0_19] : memref<512x128xbf16, #tpu.memory_space<vmem>>, vector<512x128xbf16>
    %cst_20 = arith.constant dense<0.000000e+00> : vector<128x128xf32>
    %26 = tpu.matmul %24, %25, %cst_20 {dimension_numbers = #tpu.dot_dimension_numbers<[1], [0], [0], [1], [0, 0, 1, 1], [], []>} : vector<128x512xbf16>, vector<512x128xbf16>, vector<128x128xf32> -> vector<128x128xf32>
    %c0_21 = arith.constant 0 : index
    %c0_22 = arith.constant 0 : index
    %27 = vector.load %arg9[%c0_21, %c0_22] : memref<1x128xf32, #tpu.memory_space<vmem>>, vector<1x128xf32>
    %28 = vector.broadcast %27 : vector<1x128xf32> to vector<128x128xf32>
    %29 = arith.addf %26, %28 : vector<128x128xf32>
    %cst_23 = arith.constant 0.000000e+00 : f32
    %30 = vector.broadcast %cst_23 : f32 to vector<128x128xf32>
    %31 = arith.maximumf %29, %30 : vector<128x128xf32>
    %32 = arith.truncf %31 : vector<128x128xf32> to vector<128x128xbf16>
    %c0_24 = arith.constant 0 : index
    %c0_25 = arith.constant 0 : index
    %33 = vector.load %arg10[%c0_24, %c0_25] : memref<128x128xbf16, #tpu.memory_space<vmem>>, vector<128x128xbf16>
    %cst_26 = arith.constant dense<0.000000e+00> : vector<128x128xf32>
    %34 = tpu.matmul %32, %33, %cst_26 {dimension_numbers = #tpu.dot_dimension_numbers<[1], [0], [0], [1], [0, 0, 1, 1], [], []>} : vector<128x128xbf16>, vector<128x128xbf16>, vector<128x128xf32> -> vector<128x128xf32>
    %c0_27 = arith.constant 0 : index
    %c0_28 = arith.constant 0 : index
    %35 = vector.load %arg11[%c0_27, %c0_28] : memref<1x128xf32, #tpu.memory_space<vmem>>, vector<1x128xf32>
    %36 = vector.broadcast %35 : vector<1x128xf32> to vector<128x128xf32>
    %37 = arith.addf %34, %36 : vector<128x128xf32>
    %c0_29 = arith.constant 0 : index
    %c0_30 = arith.constant 0 : index
    %38 = vector.load %arg12[%c0_29, %c0_30] : memref<128x128xf32, #tpu.memory_space<vmem>>, vector<128x128xf32>
    tpu.vector_store %arg12[%c0_29, %c0_30], %37 {strides = array<i32>} : memref<128x128xf32, #tpu.memory_space<vmem>>, vector<128x128xf32>,
    return
  }
  func.func @transform_0(%arg0: i32) -> (i32, i32) {
    %c0_i32 = arith.constant 0 : i32
    %c0_i32_0 = arith.constant 0 : i32
    return %arg0, %c0_i32 : i32, i32
  }
  func.func @transform_1(%arg0: i32) -> (i32, i32) {
    %c0_i32 = arith.constant 0 : i32
    %c0_i32_0 = arith.constant 0 : i32
    %c0_i32_1 = arith.constant 0 : i32
    return %c0_i32, %c0_i32_0 : i32, i32
  }
  func.func @transform_2(%arg0: i32) -> (i32, i32) {
    %c0_i32 = arith.constant 0 : i32
    %c0_i32_0 = arith.constant 0 : i32
    %c0_i32_1 = arith.constant 0 : i32
    return %c0_i32, %c0_i32_0 : i32, i32
  }
  func.func @transform_3(%arg0: i32) -> (i32, i32) {
    %c0_i32 = arith.constant 0 : i32
    %c0_i32_0 = arith.constant 0 : i32
    %c0_i32_1 = arith.constant 0 : i32
    return %c0_i32, %c0_i32_0 : i32, i32
  }
  func.func @transform_4(%arg0: i32) -> (i32, i32) {
    %c0_i32 = arith.constant 0 : i32
    %c0_i32_0 = arith.constant 0 : i32
    %c0_i32_1 = arith.constant 0 : i32
    return %c0_i32, %c0_i32_0 : i32, i32
  }
  func.func @transform_5(%arg0: i32) -> (i32, i32) {
    %c0_i32 = arith.constant 0 : i32
    %c0_i32_0 = arith.constant 0 : i32
    %c0_i32_1 = arith.constant 0 : i32
    return %c0_i32, %c0_i32_0 : i32, i32
  }
  func.func @transform_6(%arg0: i32) -> (i32, i32) {
    %c0_i32 = arith.constant 0 : i32
    %c0_i32_0 = arith.constant 0 : i32
    %c0_i32_1 = arith.constant 0 : i32
    return %c0_i32, %c0_i32_0 : i32, i32
  }
  func.func @transform_7(%arg0: i32) -> (i32, i32) {
    %c0_i32 = arith.constant 0 : i32
    %c0_i32_0 = arith.constant 0 : i32
    %c0_i32_1 = arith.constant 0 : i32
    return %c0_i32, %c0_i32_0 : i32, i32
  }
  func.func @transform_8(%arg0: i32) -> (i32, i32) {
    %c0_i32 = arith.constant 0 : i32
    %c0_i32_0 = arith.constant 0 : i32
    %c0_i32_1 = arith.constant 0 : i32
    return %c0_i32, %c0_i32_0 : i32, i32
  }
  func.func @transform_9(%arg0: i32) -> (i32, i32) {
    %c0_i32 = arith.constant 0 : i32
    %c0_i32_0 = arith.constant 0 : i32
    %c0_i32_1 = arith.constant 0 : i32
    return %c0_i32, %c0_i32_0 : i32, i32
  }
  func.func @transform_10(%arg0: i32) -> (i32, i32) {
    %c0_i32 = arith.constant 0 : i32
    %c0_i32_0 = arith.constant 0 : i32
    %c0_i32_1 = arith.constant 0 : i32
    return %c0_i32, %c0_i32_0 : i32, i32
  }
  func.func @transform_11(%arg0: i32) -> (i32, i32) {
    %c0_i32 = arith.constant 0 : i32
    %c0_i32_0 = arith.constant 0 : i32
    return %arg0, %c0_i32 : i32, i32
  }
}

</mosaic_0001>

<llo_original>
// kernel: mlp_forward.1
$region0: #{mlp_forward.1}
  #allocation0 [shape = 'u32[]', space=smem, size = 0x4, offset = 0x4, fixed_abs, tag = 'smem constant byte address 0x4 - core index']
  #allocation1 [shape = 'u32[72,128]{1,0:T(1,128)}', space=vmem, size = 0x9000, scoped, tag = 'internal scratch']
  %s0 = inlined_call_operand.vmem [shape: bf16[128,640], index: 0, kind: input, shape index: {}]
  %s1 = inlined_call_operand.vmem [shape: bf16[640,512], index: 1, kind: input, shape index: {}]
  %s2 = inlined_call_operand.vmem [shape: f32[1,512], index: 2, kind: input, shape index: {}]
  %s3 = inlined_call_operand.vmem [shape: bf16[512,1024], index: 3, kind: input, shape index: {}]
  %s4 = inlined_call_operand.vmem [shape: f32[1,1024], index: 4, kind: input, shape index: {}]
  %s5 = inlined_call_operand.vmem [shape: bf16[1024,512], index: 5, kind: input, shape index: {}]
  %s6 = inlined_call_operand.vmem [shape: f32[1,512], index: 6, kind: input, shape index: {}]
  %s7 = inlined_call_operand.vmem [shape: bf16[512,128], index: 7, kind: input, shape index: {}]
  %s8 = inlined_call_operand.vmem [shape: f32[1,128], index: 8, kind: input, shape index: {}]
  %s9 = inlined_call_operand.vmem [shape: bf16[128,128], index: 9, kind: input, shape index: {}]
  %s10 = inlined_call_operand.vmem [shape: f32[1,128], index: 10, kind: input, shape index: {}]
  %s11 = inlined_call_operand.vmem [shape: f32[128,128], index: 11, kind: output, shape index: {}]
  %s12 = sld [smem:[#allocation0]]
  $region54: #{mlp_forward.1} parent=0
    _
  %s14 = ssub.s32 1, %s12
  %s15 = scalar_select 0, %s14, %s12
  // Predicated region
  $region2: #{mlp_forward.1} parent=0 // pred_check
    _
  $region3: #{mlp_forward.1} parent=0 // pred_check_branch
    %17 = sbr.rel (0) target = $region5
  $region4: #{mlp_forward.1} parent=0 // pred_region
    _
  $region5: #{mlp_forward.1} parent=0 // pred_fallthru
    _
  // Predicated region
  $region6: #{mlp_forward.1} parent=0 // pred_check
    _
  $region7: #{mlp_forward.1} parent=0 // pred_check_branch
    %19 = sbr.rel (0) target = $region9
  $region8: #{mlp_forward.1} parent=0 // pred_region
    _
  $region9: #{mlp_forward.1} parent=0 // pred_fallthru
    _
  // Predicated region
  $region10: #{mlp_forward.1} parent=0 // pred_check
    _
  $region11: #{mlp_forward.1} parent=0 // pred_check_branch
    %21 = sbr.rel (0) target = $region13
  $region12: #{mlp_forward.1} parent=0 // pred_region
    _
  $region13: #{mlp_forward.1} parent=0 // pred_fallthru
    _
  // Predicated region
  $region14: #{mlp_forward.1} parent=0 // pred_check
    _
  $region15: #{mlp_forward.1} parent=0 // pred_check_branch
    %23 = sbr.rel (0) target = $region17
  $region16: #{mlp_forward.1} parent=0 // pred_region
    _
  $region17: #{mlp_forward.1} parent=0 // pred_fallthru
    _
  // Predicated region
  $region18: #{mlp_forward.1} parent=0 // pred_check
    _
  $region19: #{mlp_forward.1} parent=0 // pred_check_branch
    %25 = sbr.rel (0) target = $region21
  $region20: #{mlp_forward.1} parent=0 // pred_region
    _
  $region21: #{mlp_forward.1} parent=0 // pred_fallthru
    _
  // Predicated region
  $region22: #{mlp_forward.1} parent=0 // pred_check
    _
  $region23: #{mlp_forward.1} parent=0 // pred_check_branch
    %27 = sbr.rel (0) target = $region25
  $region24: #{mlp_forward.1} parent=0 // pred_region
    _
  $region25: #{mlp_forward.1} parent=0 // pred_fallthru
    _
  // Predicated region
  $region26: #{mlp_forward.1} parent=0 // pred_check
    _
  $region27: #{mlp_forward.1} parent=0 // pred_check_branch
    %29 = sbr.rel (0) target = $region29
  $region28: #{mlp_forward.1} parent=0 // pred_region
    _
  $region29: #{mlp_forward.1} parent=0 // pred_fallthru
    _
  // Predicated region
  $region30: #{mlp_forward.1} parent=0 // pred_check
    _
  $region31: #{mlp_forward.1} parent=0 // pred_check_branch
    %31 = sbr.rel (0) target = $region33
  $region32: #{mlp_forward.1} parent=0 // pred_region
    _
  $region33: #{mlp_forward.1} parent=0 // pred_fallthru
    _
  // Predicated region
  $region34: #{mlp_forward.1} parent=0 // pred_check
    _
  $region35: #{mlp_forward.1} parent=0 // pred_check_branch
    %33 = sbr.rel (0) target = $region37
  $region36: #{mlp_forward.1} parent=0 // pred_region
    _
  $region37: #{mlp_forward.1} parent=0 // pred_fallthru
    _
  // Predicated region
  $region38: #{mlp_forward.1} parent=0 // pred_check
    _
  $region39: #{mlp_forward.1} parent=0 // pred_check_branch
    %35 = sbr.rel (0) target = $region41
  $region40: #{mlp_forward.1} parent=0 // pred_region
    _
  $region41: #{mlp_forward.1} parent=0 // pred_fallthru
    _
  // Predicated region
  $region42: #{mlp_forward.1} parent=0 // pred_check
    _
  $region43: #{mlp_forward.1} parent=0 // pred_check_branch
    %37 = sbr.rel (0) target = $region45
  $region44: #{mlp_forward.1} parent=0 // pred_region
    _
  $region45: #{mlp_forward.1} parent=0 // pred_fallthru
    _
  %v38 = vld [vmem:[%s0] sm:$0xff]
  %v39 = vld [vmem:[%s0 + $0x8] sm:$0xff]
  %v40 = vld [vmem:[%s0 + $0x10] sm:$0xf]
  %v41 = vld [vmem:[%s0 + $0x14] sm:$0xff]
  %v42 = vld [vmem:[%s0 + $0x1c] sm:$0xff]
  %v43 = vld [vmem:[%s0 + $0x24] sm:$0xf]
  %v44 = vld [vmem:[%s0 + $0x28] sm:$0xff]
  %v45 = vld [vmem:[%s0 + $0x30] sm:$0xff]
  %v46 = vld [vmem:[%s0 + $0x38] sm:$0xf]
  %v47 = vld [vmem:[%s0 + $0x3c] sm:$0xff]
  %v48 = vld [vmem:[%s0 + $0x44] sm:$0xff]
  %v49 = vld [vmem:[%s0 + $0x4c] sm:$0xf]
  %v50 = vld [vmem:[%s0 + $0x50] sm:$0xff]
  %v51 = vld [vmem:[%s0 + $0x58] sm:$0xff]
  %v52 = vld [vmem:[%s0 + $0x60] sm:$0xf]
  %v53 = vld [vmem:[%s0 + $0x64] sm:$0xff]
  %v54 = vld [vmem:[%s0 + $0x6c] sm:$0xff]
  %v55 = vld [vmem:[%s0 + $0x74] sm:$0xf]
  %v56 = vld [vmem:[%s0 + $0x78] sm:$0xff]
  %v57 = vld [vmem:[%s0 + $0x80] sm:$0xff]
  %v58 = vld [vmem:[%s0 + $0x88] sm:$0xf]
  %v59 = vld [vmem:[%s0 + $0x8c] sm:$0xff]
  %v60 = vld [vmem:[%s0 + $0x94] sm:$0xff]
  %v61 = vld [vmem:[%s0 + $0x9c] sm:$0xf]
  %v62 = vld [vmem:[%s0 + $0xa0] sm:$0xff]
  %v63 = vld [vmem:[%s0 + $0xa8] sm:$0xff]
  %v64 = vld [vmem:[%s0 + $0xb0] sm:$0xf]
  %v65 = vld [vmem:[%s0 + $0xb4] sm:$0xff]
  %v66 = vld [vmem:[%s0 + $0xbc] sm:$0xff]
  %v67 = vld [vmem:[%s0 + $0xc4] sm:$0xf]
  %v68 = vld [vmem:[%s0 + $0xc8] sm:$0xff]
  %v69 = vld [vmem:[%s0 + $0xd0] sm:$0xff]
  %v70 = vld [vmem:[%s0 + $0xd8] sm:$0xf]
  %v71 = vld [vmem:[%s0 + $0xdc] sm:$0xff]
  %v72 = vld [vmem:[%s0 + $0xe4] sm:$0xff]
  %v73 = vld [vmem:[%s0 + $0xec] sm:$0xf]
  %v74 = vld [vmem:[%s0 + $0xf0] sm:$0xff]
  %v75 = vld [vmem:[%s0 + $0xf8] sm:$0xff]
  %v76 = vld [vmem:[%s0 + $0x100] sm:$0xf]
  %v77 = vld [vmem:[%s0 + $0x104] sm:$0xff]
  %v78 = vld [vmem:[%s0 + $0x10c] sm:$0xff]
  %v79 = vld [vmem:[%s0 + $0x114] sm:$0xf]
  %v80 = vld [vmem:[%s0 + $0x118] sm:$0xff]
  %v81 = vld [vmem:[%s0 + $0x120] sm:$0xff]
  %v82 = vld [vmem:[%s0 + $0x128] sm:$0xf]
  %v83 = vld [vmem:[%s0 + $0x12c] sm:$0xff]
  %v84 = vld [vmem:[%s0 + $0x134] sm:$0xff]
  %v85 = vld [vmem:[%s0 + $0x13c] sm:$0xf]
  %v86 = vld [vmem:[%s1] sm:$0xff]
  %v87 = vld [vmem:[%s1 + $0x8] sm:$0xff]
  %v88 = vld [vmem:[%s1 + $0x10] sm:$0xff]
  %v89 = vld [vmem:[%s1 + $0x18] sm:$0xff]
  %v90 = vld [vmem:[%s1 + $0x20] sm:$0xff]
  %v91 = vld [vmem:[%s1 + $0x28] sm:$0xff]
  %v92 = vld [vmem:[%s1 + $0x30] sm:$0xff]
  %v93 = vld [vmem:[%s1 + $0x38] sm:$0xff]
  %v94 = vld [vmem:[%s1 + $0x40] sm:$0xff]
  %v95 = vld [vmem:[%s1 + $0x48] sm:$0xff]
  %v96 = vld [vmem:[%s1 + $0x50] sm:$0xff]
  %v97 = vld [vmem:[%s1 + $0x58] sm:$0xff]
  %v98 = vld [vmem:[%s1 + $0x60] sm:$0xff]
  %v99 = vld [vmem:[%s1 + $0x68] sm:$0xff]
  %v100 = vld [vmem:[%s1 + $0x70] sm:$0xff]
  %v101 = vld [vmem:[%s1 + $0x78] sm:$0xff]
  %v102 = vld [vmem:[%s1 + $0x80] sm:$0xff]
  %v103 = vld [vmem:[%s1 + $0x88] sm:$0xff]
  %v104 = vld [vmem:[%s1 + $0x90] sm:$0xff]
  %v105 = vld [vmem:[%s1 + $0x98] sm:$0xff]
  %v106 = vld [vmem:[%s1 + $0xa0] sm:$0xff]
  %v107 = vld [vmem:[%s1 + $0xa8] sm:$0xff]
  %v108 = vld [vmem:[%s1 + $0xb0] sm:$0xff]
  %v109 = vld [vmem:[%s1 + $0xb8] sm:$0xff]
  %v110 = vld [vmem:[%s1 + $0xc0] sm:$0xff]
  %v111 = vld [vmem:[%s1 + $0xc8] sm:$0xff]
  %v112 = vld [vmem:[%s1 + $0xd0] sm:$0xff]
  %v113 = vld [vmem:[%s1 + $0xd8] sm:$0xff]
  %v114 = vld [vmem:[%s1 + $0xe0] sm:$0xff]
  %v115 = vld [vmem:[%s1 + $0xe8] sm:$0xff]
  %v116 = vld [vmem:[%s1 + $0xf0] sm:$0xff]
  %v117 = vld [vmem:[%s1 + $0xf8] sm:$0xff]
  %v118 = vld [vmem:[%s1 + $0x100] sm:$0xff]
  %v119 = vld [vmem:[%s1 + $0x108] sm:$0xff]
  %v120 = vld [vmem:[%s1 + $0x110] sm:$0xff]
  %v121 = vld [vmem:[%s1 + $0x118] sm:$0xff]
  %v122 = vld [vmem:[%s1 + $0x120] sm:$0xff]
  %v123 = vld [vmem:[%s1 + $0x128] sm:$0xff]
  %v124 = vld [vmem:[%s1 + $0x130] sm:$0xff]
  %v125 = vld [vmem:[%s1 + $0x138] sm:$0xff]
  %v126 = vld [vmem:[%s1 + $0x140] sm:$0xff]
  %v127 = vld [vmem:[%s1 + $0x148] sm:$0xff]
  %v128 = vld [vmem:[%s1 + $0x150] sm:$0xff]
  %v129 = vld [vmem:[%s1 + $0x158] sm:$0xff]
  %v130 = vld [vmem:[%s1 + $0x160] sm:$0xff]
  %v131 = vld [vmem:[%s1 + $0x168] sm:$0xff]
  %v132 = vld [vmem:[%s1 + $0x170] sm:$0xff]
  %v133 = vld [vmem:[%s1 + $0x178] sm:$0xff]
  %v134 = vld [vmem:[%s1 + $0x180] sm:$0xff]
  %v135 = vld [vmem:[%s1 + $0x188] sm:$0xff]
  %v136 = vld [vmem:[%s1 + $0x190] sm:$0xff]
  %v137 = vld [vmem:[%s1 + $0x198] sm:$0xff]
  %v138 = vld [vmem:[%s1 + $0x1a0] sm:$0xff]
  %v139 = vld [vmem:[%s1 + $0x1a8] sm:$0xff]
  %v140 = vld [vmem:[%s1 + $0x1b0] sm:$0xff]
  %v141 = vld [vmem:[%s1 + $0x1b8] sm:$0xff]
  %v142 = vld [vmem:[%s1 + $0x1c0] sm:$0xff]
  %v143 = vld [vmem:[%s1 + $0x1c8] sm:$0xff]
  %v144 = vld [vmem:[%s1 + $0x1d0] sm:$0xff]
  %v145 = vld [vmem:[%s1 + $0x1d8] sm:$0xff]
  %v146 = vld [vmem:[%s1 + $0x1e0] sm:$0xff]
  %v147 = vld [vmem:[%s1 + $0x1e8] sm:$0xff]
  %v148 = vld [vmem:[%s1 + $0x1f0] sm:$0xff]
  %v149 = vld [vmem:[%s1 + $0x1f8] sm:$0xff]
  %v150 = vld [vmem:[%s1 + $0x200] sm:$0xff]
  %v151 = vld [vmem:[%s1 + $0x208] sm:$0xff]
  %v152 = vld [vmem:[%s1 + $0x210] sm:$0xff]
  %v153 = vld [vmem:[%s1 + $0x218] sm:$0xff]
  %v154 = vld [vmem:[%s1 + $0x220] sm:$0xff]
  %v155 = vld [vmem:[%s1 + $0x228] sm:$0xff]
  %v156 = vld [vmem:[%s1 + $0x230] sm:$0xff]
  %v157 = vld [vmem:[%s1 + $0x238] sm:$0xff]
  %v158 = vld [vmem:[%s1 + $0x240] sm:$0xff]
  %v159 = vld [vmem:[%s1 + $0x248] sm:$0xff]
  %v160 = vld [vmem:[%s1 + $0x250] sm:$0xff]
  %v161 = vld [vmem:[%s1 + $0x258] sm:$0xff]
  %v162 = vld [vmem:[%s1 + $0x260] sm:$0xff]
  %v163 = vld [vmem:[%s1 + $0x268] sm:$0xff]
  %v164 = vld [vmem:[%s1 + $0x270] sm:$0xff]
  %v165 = vld [vmem:[%s1 + $0x278] sm:$0xff]
  %v166 = vld [vmem:[%s1 + $0x280] sm:$0xff]
  %v167 = vld [vmem:[%s1 + $0x288] sm:$0xff]
  %v168 = vld [vmem:[%s1 + $0x290] sm:$0xff]
  %v169 = vld [vmem:[%s1 + $0x298] sm:$0xff]
  %v170 = vld [vmem:[%s1 + $0x2a0] sm:$0xff]
  %v171 = vld [vmem:[%s1 + $0x2a8] sm:$0xff]
  %v172 = vld [vmem:[%s1 + $0x2b0] sm:$0xff]
  %v173 = vld [vmem:[%s1 + $0x2b8] sm:$0xff]
  %v174 = vld [vmem:[%s1 + $0x2c0] sm:$0xff]
  %v175 = vld [vmem:[%s1 + $0x2c8] sm:$0xff]
  %v176 = vld [vmem:[%s1 + $0x2d0] sm:$0xff]
  %v177 = vld [vmem:[%s1 + $0x2d8] sm:$0xff]
  %v178 = vld [vmem:[%s1 + $0x2e0] sm:$0xff]
  %v179 = vld [vmem:[%s1 + $0x2e8] sm:$0xff]
  %v180 = vld [vmem:[%s1 + $0x2f0] sm:$0xff]
  %v181 = vld [vmem:[%s1 + $0x2f8] sm:$0xff]
  %v182 = vld [vmem:[%s1 + $0x300] sm:$0xff]
  %v183 = vld [vmem:[%s1 + $0x308] sm:$0xff]
  %v184 = vld [vmem:[%s1 + $0x310] sm:$0xff]
  %v185 = vld [vmem:[%s1 + $0x318] sm:$0xff]
  %v186 = vld [vmem:[%s1 + $0x320] sm:$0xff]
  %v187 = vld [vmem:[%s1 + $0x328] sm:$0xff]
  %v188 = vld [vmem:[%s1 + $0x330] sm:$0xff]
  %v189 = vld [vmem:[%s1 + $0x338] sm:$0xff]
  %v190 = vld [vmem:[%s1 + $0x340] sm:$0xff]
  %v191 = vld [vmem:[%s1 + $0x348] sm:$0xff]
  %v192 = vld [vmem:[%s1 + $0x350] sm:$0xff]
  %v193 = vld [vmem:[%s1 + $0x358] sm:$0xff]
  %v194 = vld [vmem:[%s1 + $0x360] sm:$0xff]
  %v195 = vld [vmem:[%s1 + $0x368] sm:$0xff]
  %v196 = vld [vmem:[%s1 + $0x370] sm:$0xff]
  %v197 = vld [vmem:[%s1 + $0x378] sm:$0xff]
  %v198 = vld [vmem:[%s1 + $0x380] sm:$0xff]
  %v199 = vld [vmem:[%s1 + $0x388] sm:$0xff]
  %v200 = vld [vmem:[%s1 + $0x390] sm:$0xff]
  %v201 = vld [vmem:[%s1 + $0x398] sm:$0xff]
  %v202 = vld [vmem:[%s1 + $0x3a0] sm:$0xff]
  %v203 = vld [vmem:[%s1 + $0x3a8] sm:$0xff]
  %v204 = vld [vmem:[%s1 + $0x3b0] sm:$0xff]
  %v205 = vld [vmem:[%s1 + $0x3b8] sm:$0xff]
  %v206 = vld [vmem:[%s1 + $0x3c0] sm:$0xff]
  %v207 = vld [vmem:[%s1 + $0x3c8] sm:$0xff]
  %v208 = vld [vmem:[%s1 + $0x3d0] sm:$0xff]
  %v209 = vld [vmem:[%s1 + $0x3d8] sm:$0xff]
  %v210 = vld [vmem:[%s1 + $0x3e0] sm:$0xff]
  %v211 = vld [vmem:[%s1 + $0x3e8] sm:$0xff]
  %v212 = vld [vmem:[%s1 + $0x3f0] sm:$0xff]
  %v213 = vld [vmem:[%s1 + $0x3f8] sm:$0xff]
  %v214 = vld [vmem:[%s1 + $0x400] sm:$0xff]
  %v215 = vld [vmem:[%s1 + $0x408] sm:$0xff]
  %v216 = vld [vmem:[%s1 + $0x410] sm:$0xff]
  %v217 = vld [vmem:[%s1 + $0x418] sm:$0xff]
  %v218 = vld [vmem:[%s1 + $0x420] sm:$0xff]
  %v219 = vld [vmem:[%s1 + $0x428] sm:$0xff]
  %v220 = vld [vmem:[%s1 + $0x430] sm:$0xff]
  %v221 = vld [vmem:[%s1 + $0x438] sm:$0xff]
  %v222 = vld [vmem:[%s1 + $0x440] sm:$0xff]
  %v223 = vld [vmem:[%s1 + $0x448] sm:$0xff]
  %v224 = vld [vmem:[%s1 + $0x450] sm:$0xff]
  %v225 = vld [vmem:[%s1 + $0x458] sm:$0xff]
  %v226 = vld [vmem:[%s1 + $0x460] sm:$0xff]
  %v227 = vld [vmem:[%s1 + $0x468] sm:$0xff]
  %v228 = vld [vmem:[%s1 + $0x470] sm:$0xff]
  %v229 = vld [vmem:[%s1 + $0x478] sm:$0xff]
  %v230 = vld [vmem:[%s1 + $0x480] sm:$0xff]
  %v231 = vld [vmem:[%s1 + $0x488] sm:$0xff]
  %v232 = vld [vmem:[%s1 + $0x490] sm:$0xff]
  %v233 = vld [vmem:[%s1 + $0x498] sm:$0xff]
  %v234 = vld [vmem:[%s1 + $0x4a0] sm:$0xff]
  %v235 = vld [vmem:[%s1 + $0x4a8] sm:$0xff]
  %v236 = vld [vmem:[%s1 + $0x4b0] sm:$0xff]
  %v237 = vld [vmem:[%s1 + $0x4b8] sm:$0xff]
  %v238 = vld [vmem:[%s1 + $0x4c0] sm:$0xff]
  %v239 = vld [vmem:[%s1 + $0x4c8] sm:$0xff]
  %v240 = vld [vmem:[%s1 + $0x4d0] sm:$0xff]
  %v241 = vld [vmem:[%s1 + $0x4d8] sm:$0xff]
  %v242 = vld [vmem:[%s1 + $0x4e0] sm:$0xff]
  %v243 = vld [vmem:[%s1 + $0x4e8] sm:$0xff]
  %v244 = vld [vmem:[%s1 + $0x4f0] sm:$0xff]
  %v245 = vld [vmem:[%s1 + $0x4f8] sm:$0xff]
  %v246 = vld [vmem:[%s2] sm:$0xf]
  %v248 = vperm.slane %v246, 0
  %v249 = vperm.slane %v246, 1
  %v250 = vperm.slane %v246, 2
  %v251 = vperm.slane %v246, 3
  %v304 = vunpack.c.l.b16 %v38
  %v305 = vunpack.c.h.b16 %v38
  %v306 = vunpack.c.l.b16 %v39
  %v307 = vunpack.c.h.b16 %v39
  %v308 = vunpack.c.l.b16 %v40
  %v309 = vunpack.c.l.b16 %v41
  %v310 = vunpack.c.h.b16 %v41
  %v311 = vunpack.c.l.b16 %v42
  %v312 = vunpack.c.h.b16 %v42
  %v313 = vunpack.c.l.b16 %v43
  %v314 = vunpack.c.l.b16 %v44
  %v315 = vunpack.c.h.b16 %v44
  %v316 = vunpack.c.l.b16 %v45
  %v317 = vunpack.c.h.b16 %v45
  %v318 = vunpack.c.l.b16 %v46
  %v319 = vunpack.c.l.b16 %v47
  %v320 = vunpack.c.h.b16 %v47
  %v321 = vunpack.c.l.b16 %v48
  %v322 = vunpack.c.h.b16 %v48
  %v323 = vunpack.c.l.b16 %v49
  %v324 = vunpack.c.l.b16 %v50
  %v325 = vunpack.c.h.b16 %v50
  %v326 = vunpack.c.l.b16 %v51
  %v327 = vunpack.c.h.b16 %v51
  %v328 = vunpack.c.l.b16 %v52
  %v329 = vunpack.c.l.b16 %v53
  %v330 = vunpack.c.h.b16 %v53
  %v331 = vunpack.c.l.b16 %v54
  %v332 = vunpack.c.h.b16 %v54
  %v333 = vunpack.c.l.b16 %v55
  %v334 = vunpack.c.l.b16 %v56
  %v335 = vunpack.c.h.b16 %v56
  %v336 = vunpack.c.l.b16 %v57
  %v337 = vunpack.c.h.b16 %v57
  %v338 = vunpack.c.l.b16 %v58
  %v339 = vunpack.c.l.b16 %v59
  %v340 = vunpack.c.h.b16 %v59
  %v341 = vunpack.c.l.b16 %v60
  %v342 = vunpack.c.h.b16 %v60
  %v343 = vunpack.c.l.b16 %v61
  %v344 = vunpack.c.l.b16 %v62
  %v345 = vunpack.c.h.b16 %v62
  %v346 = vunpack.c.l.b16 %v63
  %v347 = vunpack.c.h.b16 %v63
  %v348 = vunpack.c.l.b16 %v64
  %v349 = vunpack.c.l.b16 %v65
  %v350 = vunpack.c.h.b16 %v65
  %v351 = vunpack.c.l.b16 %v66
  %v352 = vunpack.c.h.b16 %v66
  %v353 = vunpack.c.l.b16 %v67
  %v354 = vunpack.c.l.b16 %v68
  %v355 = vunpack.c.h.b16 %v68
  %v356 = vunpack.c.l.b16 %v69
  %v357 = vunpack.c.h.b16 %v69
  %v358 = vunpack.c.l.b16 %v70
  %v359 = vunpack.c.l.b16 %v71
  %v360 = vunpack.c.h.b16 %v71
  %v361 = vunpack.c.l.b16 %v72
  %v362 = vunpack.c.h.b16 %v72
  %v363 = vunpack.c.l.b16 %v73
  %v364 = vunpack.c.l.b16 %v74
  %v365 = vunpack.c.h.b16 %v74
  %v366 = vunpack.c.l.b16 %v75
  %v367 = vunpack.c.h.b16 %v75
  %v368 = vunpack.c.l.b16 %v76
  %v369 = vunpack.c.l.b16 %v77
  %v370 = vunpack.c.h.b16 %v77
  %v371 = vunpack.c.l.b16 %v78
  %v372 = vunpack.c.h.b16 %v78
  %v373 = vunpack.c.l.b16 %v79
  %v374 = vunpack.c.l.b16 %v80
  %v375 = vunpack.c.h.b16 %v80
  %v376 = vunpack.c.l.b16 %v81
  %v377 = vunpack.c.h.b16 %v81
  %v378 = vunpack.c.l.b16 %v82
  %v379 = vunpack.c.l.b16 %v83
  %v380 = vunpack.c.h.b16 %v83
  %v381 = vunpack.c.l.b16 %v84
  %v382 = vunpack.c.h.b16 %v84
  %v383 = vunpack.c.l.b16 %v85
  %v384 = vpack.c.b16 %v309, %v304
  %v385 = vpack.c.b16 %v310, %v305
  %v386 = vpack.c.b16 %v311, %v306
  %v387 = vpack.c.b16 %v312, %v307
  %v388 = vpack.c.b16 %v313, %v308
  %v389 = vpack.c.b16 %v319, %v314
  %v390 = vpack.c.b16 %v320, %v315
  %v391 = vpack.c.b16 %v321, %v316
  %v392 = vpack.c.b16 %v322, %v317
  %v393 = vpack.c.b16 %v323, %v318
  %v394 = vpack.c.b16 %v329, %v324
  %v395 = vpack.c.b16 %v330, %v325
  %v396 = vpack.c.b16 %v331, %v326
  %v397 = vpack.c.b16 %v332, %v327
  %v398 = vpack.c.b16 %v333, %v328
  %v399 = vpack.c.b16 %v339, %v334
  %v400 = vpack.c.b16 %v340, %v335
  %v401 = vpack.c.b16 %v341, %v336
  %v402 = vpack.c.b16 %v342, %v337
  %v403 = vpack.c.b16 %v343, %v338
  %v404 = vpack.c.b16 %v349, %v344
  %v405 = vpack.c.b16 %v350, %v345
  %v406 = vpack.c.b16 %v351, %v346
  %v407 = vpack.c.b16 %v352, %v347
  %v408 = vpack.c.b16 %v353, %v348
  %v409 = vpack.c.b16 %v359, %v354
  %v410 = vpack.c.b16 %v360, %v355
  %v411 = vpack.c.b16 %v361, %v356
  %v412 = vpack.c.b16 %v362, %v357
  %v413 = vpack.c.b16 %v363, %v358
  %v414 = vpack.c.b16 %v369, %v364
  %v415 = vpack.c.b16 %v370, %v365
  %v416 = vpack.c.b16 %v371, %v366
  %v417 = vpack.c.b16 %v372, %v367
  %v418 = vpack.c.b16 %v373, %v368
  %v419 = vpack.c.b16 %v379, %v374
  %v420 = vpack.c.b16 %v380, %v375
  %v421 = vpack.c.b16 %v381, %v376
  %v422 = vpack.c.b16 %v382, %v377
  %v423 = vpack.c.b16 %v383, %v378
  %v624 = vunpack.c.l.b16 %v86
  %v625 = vunpack.c.h.b16 %v86
  %v626 = vunpack.c.l.b16 %v87
  %v627 = vunpack.c.h.b16 %v87
  %v628 = vunpack.c.l.b16 %v88
  %v629 = vunpack.c.h.b16 %v88
  %v630 = vunpack.c.l.b16 %v89
  %v631 = vunpack.c.h.b16 %v89
  %v632 = vunpack.c.l.b16 %v90
  %v633 = vunpack.c.h.b16 %v90
  %v634 = vunpack.c.l.b16 %v91
  %v635 = vunpack.c.h.b16 %v91
  %v636 = vunpack.c.l.b16 %v92
  %v637 = vunpack.c.h.b16 %v92
  %v638 = vunpack.c.l.b16 %v93
  %v639 = vunpack.c.h.b16 %v93
  %v640 = vunpack.c.l.b16 %v94
  %v641 = vunpack.c.h.b16 %v94
  %v642 = vunpack.c.l.b16 %v95
  %v643 = vunpack.c.h.b16 %v95
  %v644 = vunpack.c.l.b16 %v96
  %v645 = vunpack.c.h.b16 %v96
  %v646 = vunpack.c.l.b16 %v97
  %v647 = vunpack.c.h.b16 %v97
  %v648 = vunpack.c.l.b16 %v98
  %v649 = vunpack.c.h.b16 %v98
  %v650 = vunpack.c.l.b16 %v99
  %v651 = vunpack.c.h.b16 %v99
  %v652 = vunpack.c.l.b16 %v100
  %v653 = vunpack.c.h.b16 %v100
  %v654 = vunpack.c.l.b16 %v101
  %v655 = vunpack.c.h.b16 %v101
  %v656 = vunpack.c.l.b16 %v102
  %v657 = vunpack.c.h.b16 %v102
  %v658 = vunpack.c.l.b16 %v103
  %v659 = vunpack.c.h.b16 %v103
  %v660 = vunpack.c.l.b16 %v104
  %v661 = vunpack.c.h.b16 %v104
  %v662 = vunpack.c.l.b16 %v105
  %v663 = vunpack.c.h.b16 %v105
  %v664 = vunpack.c.l.b16 %v106
  %v665 = vunpack.c.h.b16 %v106
  %v666 = vunpack.c.l.b16 %v107
  %v667 = vunpack.c.h.b16 %v107
  %v668 = vunpack.c.l.b16 %v108
  %v669 = vunpack.c.h.b16 %v108
  %v670 = vunpack.c.l.b16 %v109
  %v671 = vunpack.c.h.b16 %v109
  %v672 = vunpack.c.l.b16 %v110
  %v673 = vunpack.c.h.b16 %v110
  %v674 = vunpack.c.l.b16 %v111
  %v675 = vunpack.c.h.b16 %v111
  %v676 = vunpack.c.l.b16 %v112
  %v677 = vunpack.c.h.b16 %v112
  %v678 = vunpack.c.l.b16 %v113
  %v679 = vunpack.c.h.b16 %v113
  %v680 = vunpack.c.l.b16 %v114
  %v681 = vunpack.c.h.b16 %v114
  %v682 = vunpack.c.l.b16 %v115
  %v683 = vunpack.c.h.b16 %v115
  %v684 = vunpack.c.l.b16 %v116
  %v685 = vunpack.c.h.b16 %v116
  %v686 = vunpack.c.l.b16 %v117
  %v687 = vunpack.c.h.b16 %v117
  %v688 = vunpack.c.l.b16 %v118
  %v689 = vunpack.c.h.b16 %v118
  %v690 = vunpack.c.l.b16 %v119
  %v691 = vunpack.c.h.b16 %v119
  %v692 = vunpack.c.l.b16 %v120
  %v693 = vunpack.c.h.b16 %v120
  %v694 = vunpack.c.l.b16 %v121
  %v695 = vunpack.c.h.b16 %v121
  %v696 = vunpack.c.l.b16 %v122
  %v697 = vunpack.c.h.b16 %v122
  %v698 = vunpack.c.l.b16 %v123
  %v699 = vunpack.c.h.b16 %v123
  %v700 = vunpack.c.l.b16 %v124
  %v701 = vunpack.c.h.b16 %v124
  %v702 = vunpack.c.l.b16 %v125
  %v703 = vunpack.c.h.b16 %v125
  %v704 = vunpack.c.l.b16 %v126
  %v705 = vunpack.c.h.b16 %v126
  %v706 = vunpack.c.l.b16 %v127
  %v707 = vunpack.c.h.b16 %v127
  %v708 = vunpack.c.l.b16 %v128
  %v709 = vunpack.c.h.b16 %v128
  %v710 = vunpack.c.l.b16 %v129
  %v711 = vunpack.c.h.b16 %v129
  %v712 = vunpack.c.l.b16 %v130
  %v713 = vunpack.c.h.b16 %v130
  %v714 = vunpack.c.l.b16 %v131
  %v715 = vunpack.c.h.b16 %v131
  %v716 = vunpack.c.l.b16 %v132
  %v717 = vunpack.c.h.b16 %v132
  %v718 = vunpack.c.l.b16 %v133
  %v719 = vunpack.c.h.b16 %v133
  %v720 = vunpack.c.l.b16 %v134
  %v721 = vunpack.c.h.b16 %v134
  %v722 = vunpack.c.l.b16 %v135
  %v723 = vunpack.c.h.b16 %v135
  %v724 = vunpack.c.l.b16 %v136
  %v725 = vunpack.c.h.b16 %v136
  %v726 = vunpack.c.l.b16 %v137
  %v727 = vunpack.c.h.b16 %v137
  %v728 = vunpack.c.l.b16 %v138
  %v729 = vunpack.c.h.b16 %v138
  %v730 = vunpack.c.l.b16 %v139
  %v731 = vunpack.c.h.b16 %v139
  %v732 = vunpack.c.l.b16 %v140
  %v733 = vunpack.c.h.b16 %v140
  %v734 = vunpack.c.l.b16 %v141
  %v735 = vunpack.c.h.b16 %v141
  %v736 = vunpack.c.l.b16 %v142
  %v737 = vunpack.c.h.b16 %v142
  %v738 = vunpack.c.l.b16 %v143
  %v739 = vunpack.c.h.b16 %v143
  %v740 = vunpack.c.l.b16 %v144
  %v741 = vunpack.c.h.b16 %v144
  %v742 = vunpack.c.l.b16 %v145
  %v743 = vunpack.c.h.b16 %v145
  %v744 = vunpack.c.l.b16 %v146
  %v745 = vunpack.c.h.b16 %v146
  %v746 = vunpack.c.l.b16 %v147
  %v747 = vunpack.c.h.b16 %v147
  %v748 = vunpack.c.l.b16 %v148
  %v749 = vunpack.c.h.b16 %v148
  %v750 = vunpack.c.l.b16 %v149
  %v751 = vunpack.c.h.b16 %v149
  %v752 = vunpack.c.l.b16 %v150
  %v753 = vunpack.c.h.b16 %v150
  %v754 = vunpack.c.l.b16 %v151
  %v755 = vunpack.c.h.b16 %v151
  %v756 = vunpack.c.l.b16 %v152
  %v757 = vunpack.c.h.b16 %v152
  %v758 = vunpack.c.l.b16 %v153
  %v759 = vunpack.c.h.b16 %v153
  %v760 = vunpack.c.l.b16 %v154
  %v761 = vunpack.c.h.b16 %v154
  %v762 = vunpack.c.l.b16 %v155
  %v763 = vunpack.c.h.b16 %v155
  %v764 = vunpack.c.l.b16 %v156
  %v765 = vunpack.c.h.b16 %v156
  %v766 = vunpack.c.l.b16 %v157
  %v767 = vunpack.c.h.b16 %v157
  %v768 = vunpack.c.l.b16 %v158
  %v769 = vunpack.c.h.b16 %v158
  %v770 = vunpack.c.l.b16 %v159
  %v771 = vunpack.c.h.b16 %v159
  %v772 = vunpack.c.l.b16 %v160
  %v773 = vunpack.c.h.b16 %v160
  %v774 = vunpack.c.l.b16 %v161
  %v775 = vunpack.c.h.b16 %v161
  %v776 = vunpack.c.l.b16 %v162
  %v777 = vunpack.c.h.b16 %v162
  %v778 = vunpack.c.l.b16 %v163
  %v779 = vunpack.c.h.b16 %v163
  %v780 = vunpack.c.l.b16 %v164
  %v781 = vunpack.c.h.b16 %v164
  %v782 = vunpack.c.l.b16 %v165
  %v783 = vunpack.c.h.b16 %v165
  %v784 = vunpack.c.l.b16 %v166
  %v785 = vunpack.c.h.b16 %v166
  %v786 = vunpack.c.l.b16 %v167
  %v787 = vunpack.c.h.b16 %v167
  %v788 = vunpack.c.l.b16 %v168
  %v789 = vunpack.c.h.b16 %v168
  %v790 = vunpack.c.l.b16 %v169
  %v791 = vunpack.c.h.b16 %v169
  %v792 = vunpack.c.l.b16 %v170
  %v793 = vunpack.c.h.b16 %v170
  %v794 = vunpack.c.l.b16 %v171
  %v795 = vunpack.c.h.b16 %v171
  %v796 = vunpack.c.l.b16 %v172
  %v797 = vunpack.c.h.b16 %v172
  %v798 = vunpack.c.l.b16 %v173
  %v799 = vunpack.c.h.b16 %v173
  %v800 = vunpack.c.l.b16 %v174
  %v801 = vunpack.c.h.b16 %v174
  %v802 = vunpack.c.l.b16 %v175
  %v803 = vunpack.c.h.b16 %v175
  %v804 = vunpack.c.l.b16 %v176
  %v805 = vunpack.c.h.b16 %v176
  %v806 = vunpack.c.l.b16 %v177
  %v807 = vunpack.c.h.b16 %v177
  %v808 = vunpack.c.l.b16 %v178
  %v809 = vunpack.c.h.b16 %v178
  %v810 = vunpack.c.l.b16 %v179
  %v811 = vunpack.c.h.b16 %v179
  %v812 = vunpack.c.l.b16 %v180
  %v813 = vunpack.c.h.b16 %v180
  %v814 = vunpack.c.l.b16 %v181
  %v815 = vunpack.c.h.b16 %v181
  %v816 = vunpack.c.l.b16 %v182
  %v817 = vunpack.c.h.b16 %v182
  %v818 = vunpack.c.l.b16 %v183
  %v819 = vunpack.c.h.b16 %v183
  %v820 = vunpack.c.l.b16 %v184
  %v821 = vunpack.c.h.b16 %v184
  %v822 = vunpack.c.l.b16 %v185
  %v823 = vunpack.c.h.b16 %v185
  %v824 = vunpack.c.l.b16 %v186
  %v825 = vunpack.c.h.b16 %v186
  %v826 = vunpack.c.l.b16 %v187
  %v827 = vunpack.c.h.b16 %v187
  %v828 = vunpack.c.l.b16 %v188
  %v829 = vunpack.c.h.b16 %v188
  %v830 = vunpack.c.l.b16 %v189
  %v831 = vunpack.c.h.b16 %v189
  %v832 = vunpack.c.l.b16 %v190
  %v833 = vunpack.c.h.b16 %v190
  %v834 = vunpack.c.l.b16 %v191
  %v835 = vunpack.c.h.b16 %v191
  %v836 = vunpack.c.l.b16 %v192
  %v837 = vunpack.c.h.b16 %v192
  %v838 = vunpack.c.l.b16 %v193
  %v839 = vunpack.c.h.b16 %v193
  %v840 = vunpack.c.l.b16 %v194
  %v841 = vunpack.c.h.b16 %v194
  %v842 = vunpack.c.l.b16 %v195
  %v843 = vunpack.c.h.b16 %v195
  %v844 = vunpack.c.l.b16 %v196
  %v845 = vunpack.c.h.b16 %v196
  %v846 = vunpack.c.l.b16 %v197
  %v847 = vunpack.c.h.b16 %v197
  %v848 = vunpack.c.l.b16 %v198
  %v849 = vunpack.c.h.b16 %v198
  %v850 = vunpack.c.l.b16 %v199
  %v851 = vunpack.c.h.b16 %v199
  %v852 = vunpack.c.l.b16 %v200
  %v853 = vunpack.c.h.b16 %v200
  %v854 = vunpack.c.l.b16 %v201
  %v855 = vunpack.c.h.b16 %v201
  %v856 = vunpack.c.l.b16 %v202
  %v857 = vunpack.c.h.b16 %v202
  %v858 = vunpack.c.l.b16 %v203
  %v859 = vunpack.c.h.b16 %v203
  %v860 = vunpack.c.l.b16 %v204
  %v861 = vunpack.c.h.b16 %v204
  %v862 = vunpack.c.l.b16 %v205
  %v863 = vunpack.c.h.b16 %v205
  %v864 = vunpack.c.l.b16 %v206
  %v865 = vunpack.c.h.b16 %v206
  %v866 = vunpack.c.l.b16 %v207
  %v867 = vunpack.c.h.b16 %v207
  %v868 = vunpack.c.l.b16 %v208
  %v869 = vunpack.c.h.b16 %v208
  %v870 = vunpack.c.l.b16 %v209
  %v871 = vunpack.c.h.b16 %v209
  %v872 = vunpack.c.l.b16 %v210
  %v873 = vunpack.c.h.b16 %v210
  %v874 = vunpack.c.l.b16 %v211
  %v875 = vunpack.c.h.b16 %v211
  %v876 = vunpack.c.l.b16 %v212
  %v877 = vunpack.c.h.b16 %v212
  %v878 = vunpack.c.l.b16 %v213
  %v879 = vunpack.c.h.b16 %v213
  %v880 = vunpack.c.l.b16 %v214
  %v881 = vunpack.c.h.b16 %v214
  %v882 = vunpack.c.l.b16 %v215
  %v883 = vunpack.c.h.b16 %v215
  %v884 = vunpack.c.l.b16 %v216
  %v885 = vunpack.c.h.b16 %v216
  %v886 = vunpack.c.l.b16 %v217
  %v887 = vunpack.c.h.b16 %v217
  %v888 = vunpack.c.l.b16 %v218
  %v889 = vunpack.c.h.b16 %v218
  %v890 = vunpack.c.l.b16 %v219
  %v891 = vunpack.c.h.b16 %v219
  %v892 = vunpack.c.l.b16 %v220
  %v893 = vunpack.c.h.b16 %v220
  %v894 = vunpack.c.l.b16 %v221
  %v895 = vunpack.c.h.b16 %v221
  %v896 = vunpack.c.l.b16 %v222
  %v897 = vunpack.c.h.b16 %v222
  %v898 = vunpack.c.l.b16 %v223
  %v899 = vunpack.c.h.b16 %v223
  %v900 = vunpack.c.l.b16 %v224
  %v901 = vunpack.c.h.b16 %v224
  %v902 = vunpack.c.l.b16 %v225
  %v903 = vunpack.c.h.b16 %v225
  %v904 = vunpack.c.l.b16 %v226
  %v905 = vunpack.c.h.b16 %v226
  %v906 = vunpack.c.l.b16 %v227
  %v907 = vunpack.c.h.b16 %v227
  %v908 = vunpack.c.l.b16 %v228
  %v909 = vunpack.c.h.b16 %v228
  %v910 = vunpack.c.l.b16 %v229
  %v911 = vunpack.c.h.b16 %v229
  %v912 = vunpack.c.l.b16 %v230
  %v913 = vunpack.c.h.b16 %v230
  %v914 = vunpack.c.l.b16 %v231
  %v915 = vunpack.c.h.b16 %v231
  %v916 = vunpack.c.l.b16 %v232
  %v917 = vunpack.c.h.b16 %v232
  %v918 = vunpack.c.l.b16 %v233
  %v919 = vunpack.c.h.b16 %v233
  %v920 = vunpack.c.l.b16 %v234
  %v921 = vunpack.c.h.b16 %v234
  %v922 = vunpack.c.l.b16 %v235
  %v923 = vunpack.c.h.b16 %v235
  %v924 = vunpack.c.l.b16 %v236
  %v925 = vunpack.c.h.b16 %v236
  %v926 = vunpack.c.l.b16 %v237
  %v927 = vunpack.c.h.b16 %v237
  %v928 = vunpack.c.l.b16 %v238
  %v929 = vunpack.c.h.b16 %v238
  %v930 = vunpack.c.l.b16 %v239
  %v931 = vunpack.c.h.b16 %v239
  %v932 = vunpack.c.l.b16 %v240
  %v933 = vunpack.c.h.b16 %v240
  %v934 = vunpack.c.l.b16 %v241
  %v935 = vunpack.c.h.b16 %v241
  %v936 = vunpack.c.l.b16 %v242
  %v937 = vunpack.c.h.b16 %v242
  %v938 = vunpack.c.l.b16 %v243
  %v939 = vunpack.c.h.b16 %v243
  %v940 = vunpack.c.l.b16 %v244
  %v941 = vunpack.c.h.b16 %v244
  %v942 = vunpack.c.l.b16 %v245
  %v943 = vunpack.c.h.b16 %v245
  %v944 = vpack.c.b16 %v628, %v624
  %v945 = vpack.c.b16 %v629, %v625
  %v946 = vpack.c.b16 %v630, %v626
  %v947 = vpack.c.b16 %v631, %v627
  %v948 = vpack.c.b16 %v636, %v632
  %v949 = vpack.c.b16 %v637, %v633
  %v950 = vpack.c.b16 %v638, %v634
  %v951 = vpack.c.b16 %v639, %v635
  %v952 = vpack.c.b16 %v644, %v640
  %v953 = vpack.c.b16 %v645, %v641
  %v954 = vpack.c.b16 %v646, %v642
  %v955 = vpack.c.b16 %v647, %v643
  %v956 = vpack.c.b16 %v652, %v648
  %v957 = vpack.c.b16 %v653, %v649
  %v958 = vpack.c.b16 %v654, %v650
  %v959 = vpack.c.b16 %v655, %v651
  %v960 = vpack.c.b16 %v660, %v656
  %v961 = vpack.c.b16 %v661, %v657
  %v962 = vpack.c.b16 %v662, %v658
  %v963 = vpack.c.b16 %v663, %v659
  %v964 = vpack.c.b16 %v668, %v664
  %v965 = vpack.c.b16 %v669, %v665
  %v966 = vpack.c.b16 %v670, %v666
  %v967 = vpack.c.b16 %v671, %v667
  %v968 = vpack.c.b16 %v676, %v672
  %v969 = vpack.c.b16 %v677, %v673
  %v970 = vpack.c.b16 %v678, %v674
  %v971 = vpack.c.b16 %v679, %v675
  %v972 = vpack.c.b16 %v684, %v680
  %v973 = vpack.c.b16 %v685, %v681
  %v974 = vpack.c.b16 %v686, %v682
  %v975 = vpack.c.b16 %v687, %v683
  %v976 = vpack.c.b16 %v692, %v688
  %v977 = vpack.c.b16 %v693, %v689
  %v978 = vpack.c.b16 %v694, %v690
  %v979 = vpack.c.b16 %v695, %v691
  %v980 = vpack.c.b16 %v700, %v696
  %v981 = vpack.c.b16 %v701, %v697
  %v982 = vpack.c.b16 %v702, %v698
  %v983 = vpack.c.b16 %v703, %v699
  %v984 = vpack.c.b16 %v708, %v704
  %v985 = vpack.c.b16 %v709, %v705
  %v986 = vpack.c.b16 %v710, %v706
  %v987 = vpack.c.b16 %v711, %v707
  %v988 = vpack.c.b16 %v716, %v712
  %v989 = vpack.c.b16 %v717, %v713
  %v990 = vpack.c.b16 %v718, %v714
  %v991 = vpack.c.b16 %v719, %v715
  %v992 = vpack.c.b16 %v724, %v720
  %v993 = vpack.c.b16 %v725, %v721
  %v994 = vpack.c.b16 %v726, %v722
  %v995 = vpack.c.b16 %v727, %v723
  %v996 = vpack.c.b16 %v732, %v728
  %v997 = vpack.c.b16 %v733, %v729
  %v998 = vpack.c.b16 %v734, %v730
  %v999 = vpack.c.b16 %v735, %v731
  %v1000 = vpack.c.b16 %v740, %v736
  %v1001 = vpack.c.b16 %v741, %v737
  %v1002 = vpack.c.b16 %v742, %v738
  %v1003 = vpack.c.b16 %v743, %v739
  %v1004 = vpack.c.b16 %v748, %v744
  %v1005 = vpack.c.b16 %v749, %v745
  %v1006 = vpack.c.b16 %v750, %v746
  %v1007 = vpack.c.b16 %v751, %v747
  %v1008 = vpack.c.b16 %v756, %v752
  %v1009 = vpack.c.b16 %v757, %v753
  %v1010 = vpack.c.b16 %v758, %v754
  %v1011 = vpack.c.b16 %v759, %v755
  %v1012 = vpack.c.b16 %v764, %v760
  %v1013 = vpack.c.b16 %v765, %v761
  %v1014 = vpack.c.b16 %v766, %v762
  %v1015 = vpack.c.b16 %v767, %v763
  %v1016 = vpack.c.b16 %v772, %v768
  %v1017 = vpack.c.b16 %v773, %v769
  %v1018 = vpack.c.b16 %v774, %v770
  %v1019 = vpack.c.b16 %v775, %v771
  %v1020 = vpack.c.b16 %v780, %v776
  %v1021 = vpack.c.b16 %v781, %v777
  %v1022 = vpack.c.b16 %v782, %v778
  %v1023 = vpack.c.b16 %v783, %v779
  %v1024 = vpack.c.b16 %v788, %v784
  %v1025 = vpack.c.b16 %v789, %v785
  %v1026 = vpack.c.b16 %v790, %v786
  %v1027 = vpack.c.b16 %v791, %v787
  %v1028 = vpack.c.b16 %v796, %v792
  %v1029 = vpack.c.b16 %v797, %v793
  %v1030 = vpack.c.b16 %v798, %v794
  %v1031 = vpack.c.b16 %v799, %v795
  %v1032 = vpack.c.b16 %v804, %v800
  %v1033 = vpack.c.b16 %v805, %v801
  %v1034 = vpack.c.b16 %v806, %v802
  %v1035 = vpack.c.b16 %v807, %v803
  %v1036 = vpack.c.b16 %v812, %v808
  %v1037 = vpack.c.b16 %v813, %v809
  %v1038 = vpack.c.b16 %v814, %v810
  %v1039 = vpack.c.b16 %v815, %v811
  %v1040 = vpack.c.b16 %v820, %v816
  %v1041 = vpack.c.b16 %v821, %v817
  %v1042 = vpack.c.b16 %v822, %v818
  %v1043 = vpack.c.b16 %v823, %v819
  %v1044 = vpack.c.b16 %v828, %v824
  %v1045 = vpack.c.b16 %v829, %v825
  %v1046 = vpack.c.b16 %v830, %v826
  %v1047 = vpack.c.b16 %v831, %v827
  %v1048 = vpack.c.b16 %v836, %v832
  %v1049 = vpack.c.b16 %v837, %v833
  %v1050 = vpack.c.b16 %v838, %v834
  %v1051 = vpack.c.b16 %v839, %v835
  %v1052 = vpack.c.b16 %v844, %v840
  %v1053 = vpack.c.b16 %v845, %v841
  %v1054 = vpack.c.b16 %v846, %v842
  %v1055 = vpack.c.b16 %v847, %v843
  %v1056 = vpack.c.b16 %v852, %v848
  %v1057 = vpack.c.b16 %v853, %v849
  %v1058 = vpack.c.b16 %v854, %v850
  %v1059 = vpack.c.b16 %v855, %v851
  %v1060 = vpack.c.b16 %v860, %v856
  %v1061 = vpack.c.b16 %v861, %v857
  %v1062 = vpack.c.b16 %v862, %v858
  %v1063 = vpack.c.b16 %v863, %v859
  %v1064 = vpack.c.b16 %v868, %v864
  %v1065 = vpack.c.b16 %v869, %v865
  %v1066 = vpack.c.b16 %v870, %v866
  %v1067 = vpack.c.b16 %v871, %v867
  %v1068 = vpack.c.b16 %v876, %v872
  %v1069 = vpack.c.b16 %v877, %v873
  %v1070 = vpack.c.b16 %v878, %v874
  %v1071 = vpack.c.b16 %v879, %v875
  %v1072 = vpack.c.b16 %v884, %v880
  %v1073 = vpack.c.b16 %v885, %v881
  %v1074 = vpack.c.b16 %v886, %v882
  %v1075 = vpack.c.b16 %v887, %v883
  %v1076 = vpack.c.b16 %v892, %v888
  %v1077 = vpack.c.b16 %v893, %v889
  %v1078 = vpack.c.b16 %v894, %v890
  %v1079 = vpack.c.b16 %v895, %v891
  %v1080 = vpack.c.b16 %v900, %v896
  %v1081 = vpack.c.b16 %v901, %v897
  %v1082 = vpack.c.b16 %v902, %v898
  %v1083 = vpack.c.b16 %v903, %v899
  %v1084 = vpack.c.b16 %v908, %v904
  %v1085 = vpack.c.b16 %v909, %v905
  %v1086 = vpack.c.b16 %v910, %v906
  %v1087 = vpack.c.b16 %v911, %v907
  %v1088 = vpack.c.b16 %v916, %v912
  %v1089 = vpack.c.b16 %v917, %v913
  %v1090 = vpack.c.b16 %v918, %v914
  %v1091 = vpack.c.b16 %v919, %v915
  %v1092 = vpack.c.b16 %v924, %v920
  %v1093 = vpack.c.b16 %v925, %v921
  %v1094 = vpack.c.b16 %v926, %v922
  %v1095 = vpack.c.b16 %v927, %v923
  %v1096 = vpack.c.b16 %v932, %v928
  %v1097 = vpack.c.b16 %v933, %v929
  %v1098 = vpack.c.b16 %v934, %v930
  %v1099 = vpack.c.b16 %v935, %v931
  %v1100 = vpack.c.b16 %v940, %v936
  %v1101 = vpack.c.b16 %v941, %v937
  %v1102 = vpack.c.b16 %v942, %v938
  %v1103 = vpack.c.b16 %v943, %v939
  %1264 = vmatpush.bf16.msra.mxu0 %v972
  %1265 = vmatpush.bf16.msra.mxu0 %v968
  %1266 = vmatpush.bf16.msra.mxu0 %v964
  %1267 = vmatpush.bf16.msra.mxu0 %v960
  %1268 = vmatpush.bf16.msra.mxu0 %v956
  %1269 = vmatpush.bf16.msra.mxu0 %v952
  %1270 = vmatpush.bf16.msra.mxu0 %v948
  %1271 = vmatpush.bf16.msra.mxu0 %v944
  %1272 = vmatmul.bf16.gmra.mxu0 %v384
  %v1273 = vpop.f32.mrf.mxu0
  %v1274 = vadd.f32 %v248, %v1273
  %v1275 = vpop.f32.mrf.mxu0
  %v1276 = vadd.f32 %v248, %v1275
  %1277 = vmatmul.bf16.gmra.mxu0 %v389
  %v1278 = vpop.f32.mrf.mxu0
  %v1279 = vadd.f32 %v248, %v1278
  %v1280 = vpop.f32.mrf.mxu0
  %v1281 = vadd.f32 %v248, %v1280
  %1282 = vmatmul.bf16.gmra.mxu0 %v394
  %v1283 = vpop.f32.mrf.mxu0
  %v1284 = vadd.f32 %v248, %v1283
  %v1285 = vpop.f32.mrf.mxu0
  %v1286 = vadd.f32 %v248, %v1285
  %1287 = vmatmul.bf16.gmra.mxu0 %v399
  %v1288 = vpop.f32.mrf.mxu0
  %v1289 = vadd.f32 %v248, %v1288
  %v1290 = vpop.f32.mrf.mxu0
  %v1291 = vadd.f32 %v248, %v1290
  %1292 = vmatmul.bf16.gmra.mxu0 %v404
  %v1293 = vpop.f32.mrf.mxu0
  %v1294 = vadd.f32 %v248, %v1293
  %v1295 = vpop.f32.mrf.mxu0
  %v1296 = vadd.f32 %v248, %v1295
  %1297 = vmatmul.bf16.gmra.mxu0 %v409
  %v1298 = vpop.f32.mrf.mxu0
  %v1299 = vadd.f32 %v248, %v1298
  %v1300 = vpop.f32.mrf.mxu0
  %v1301 = vadd.f32 %v248, %v1300
  %1302 = vmatmul.bf16.gmra.mxu0 %v414
  %v1303 = vpop.f32.mrf.mxu0
  %v1304 = vadd.f32 %v248, %v1303
  %v1305 = vpop.f32.mrf.mxu0
  %v1306 = vadd.f32 %v248, %v1305
  %1307 = vmatmul.bf16.gmra.mxu0 %v419
  %v1308 = vpop.f32.mrf.mxu0
  %v1309 = vadd.f32 %v248, %v1308
  %v1310 = vpop.f32.mrf.mxu0
  %v1311 = vadd.f32 %v248, %v1310
  %1312 = vdwg.mxu0
  %1313 = vmatpush.bf16.msra.mxu0 %v1004
  %1314 = vmatpush.bf16.msra.mxu0 %v1000
  %1315 = vmatpush.bf16.msra.mxu0 %v996
  %1316 = vmatpush.bf16.msra.mxu0 %v992
  %1317 = vmatpush.bf16.msra.mxu0 %v988
  %1318 = vmatpush.bf16.msra.mxu0 %v984
  %1319 = vmatpush.bf16.msra.mxu0 %v980
  %1320 = vmatpush.bf16.msra.mxu0 %v976
  %1321 = vmatmul.bf16.gmra.mxu0 %v385
  %v1322 = vpop.f32.mrf.mxu0
  %v1323 = vadd.f32 %v1274, %v1322
  %v1324 = vpop.f32.mrf.mxu0
  %v1325 = vadd.f32 %v1276, %v1324
  %1326 = vmatmul.bf16.gmra.mxu0 %v390
  %v1327 = vpop.f32.mrf.mxu0
  %v1328 = vadd.f32 %v1279, %v1327
  %v1329 = vpop.f32.mrf.mxu0
  %v1330 = vadd.f32 %v1281, %v1329
  %1331 = vmatmul.bf16.gmra.mxu0 %v395
  %v1332 = vpop.f32.mrf.mxu0
  %v1333 = vadd.f32 %v1284, %v1332
  %v1334 = vpop.f32.mrf.mxu0
  %v1335 = vadd.f32 %v1286, %v1334
  %1336 = vmatmul.bf16.gmra.mxu0 %v400
  %v1337 = vpop.f32.mrf.mxu0
  %v1338 = vadd.f32 %v1289, %v1337
  %v1339 = vpop.f32.mrf.mxu0
  %v1340 = vadd.f32 %v1291, %v1339
  %1341 = vmatmul.bf16.gmra.mxu0 %v405
  %v1342 = vpop.f32.mrf.mxu0
  %v1343 = vadd.f32 %v1294, %v1342
  %v1344 = vpop.f32.mrf.mxu0
  %v1345 = vadd.f32 %v1296, %v1344
  %1346 = vmatmul.bf16.gmra.mxu0 %v410
  %v1347 = vpop.f32.mrf.mxu0
  %v1348 = vadd.f32 %v1299, %v1347
  %v1349 = vpop.f32.mrf.mxu0
  %v1350 = vadd.f32 %v1301, %v1349
  %1351 = vmatmul.bf16.gmra.mxu0 %v415
  %v1352 = vpop.f32.mrf.mxu0
  %v1353 = vadd.f32 %v1304, %v1352
  %v1354 = vpop.f32.mrf.mxu0
  %v1355 = vadd.f32 %v1306, %v1354
  %1356 = vmatmul.bf16.gmra.mxu0 %v420
  %v1357 = vpop.f32.mrf.mxu0
  %v1358 = vadd.f32 %v1309, %v1357
  %v1359 = vpop.f32.mrf.mxu0
  %v1360 = vadd.f32 %v1311, %v1359
  %1361 = vdwg.mxu0
  %1362 = vmatpush.bf16.msra.mxu0 %v1036
  %1363 = vmatpush.bf16.msra.mxu0 %v1032
  %1364 = vmatpush.bf16.msra.mxu0 %v1028
  %1365 = vmatpush.bf16.msra.mxu0 %v1024
  %1366 = vmatpush.bf16.msra.mxu0 %v1020
  %1367 = vmatpush.bf16.msra.mxu0 %v1016
  %1368 = vmatpush.bf16.msra.mxu0 %v1012
  %1369 = vmatpush.bf16.msra.mxu0 %v1008
  %1370 = vmatmul.bf16.gmra.mxu0 %v386
  %v1371 = vpop.f32.mrf.mxu0
  %v1372 = vadd.f32 %v1323, %v1371
  %v1373 = vpop.f32.mrf.mxu0
  %v1374 = vadd.f32 %v1325, %v1373
  %1375 = vmatmul.bf16.gmra.mxu0 %v391
  %v1376 = vpop.f32.mrf.mxu0
  %v1377 = vadd.f32 %v1328, %v1376
  %v1378 = vpop.f32.mrf.mxu0
  %v1379 = vadd.f32 %v1330, %v1378
  %1380 = vmatmul.bf16.gmra.mxu0 %v396
  %v1381 = vpop.f32.mrf.mxu0
  %v1382 = vadd.f32 %v1333, %v1381
  %v1383 = vpop.f32.mrf.mxu0
  %v1384 = vadd.f32 %v1335, %v1383
  %1385 = vmatmul.bf16.gmra.mxu0 %v401
  %v1386 = vpop.f32.mrf.mxu0
  %v1387 = vadd.f32 %v1338, %v1386
  %v1388 = vpop.f32.mrf.mxu0
  %v1389 = vadd.f32 %v1340, %v1388
  %1390 = vmatmul.bf16.gmra.mxu0 %v406
  %v1391 = vpop.f32.mrf.mxu0
  %v1392 = vadd.f32 %v1343, %v1391
  %v1393 = vpop.f32.mrf.mxu0
  %v1394 = vadd.f32 %v1345, %v1393
  %1395 = vmatmul.bf16.gmra.mxu0 %v411
  %v1396 = vpop.f32.mrf.mxu0
  %v1397 = vadd.f32 %v1348, %v1396
  %v1398 = vpop.f32.mrf.mxu0
  %v1399 = vadd.f32 %v1350, %v1398
  %1400 = vmatmul.bf16.gmra.mxu0 %v416
  %v1401 = vpop.f32.mrf.mxu0
  %v1402 = vadd.f32 %v1353, %v1401
  %v1403 = vpop.f32.mrf.mxu0
  %v1404 = vadd.f32 %v1355, %v1403
  %1405 = vmatmul.bf16.gmra.mxu0 %v421
  %v1406 = vpop.f32.mrf.mxu0
  %v1407 = vadd.f32 %v1358, %v1406
  %v1408 = vpop.f32.mrf.mxu0
  %v1409 = vadd.f32 %v1360, %v1408
  %1410 = vdwg.mxu0
  %1411 = vmatpush.bf16.msra.mxu0 %v1068
  %1412 = vmatpush.bf16.msra.mxu0 %v1064
  %1413 = vmatpush.bf16.msra.mxu0 %v1060
  %1414 = vmatpush.bf16.msra.mxu0 %v1056
  %1415 = vmatpush.bf16.msra.mxu0 %v1052
  %1416 = vmatpush.bf16.msra.mxu0 %v1048
  %1417 = vmatpush.bf16.msra.mxu0 %v1044
  %1418 = vmatpush.bf16.msra.mxu0 %v1040
  %1419 = vmatmul.bf16.gmra.mxu0 %v387
  %v1420 = vpop.f32.mrf.mxu0
  %v1421 = vadd.f32 %v1372, %v1420
  %v1422 = vpop.f32.mrf.mxu0
  %v1423 = vadd.f32 %v1374, %v1422
  %1424 = vmatmul.bf16.gmra.mxu0 %v392
  %v1425 = vpop.f32.mrf.mxu0
  %v1426 = vadd.f32 %v1377, %v1425
  %v1427 = vpop.f32.mrf.mxu0
  %v1428 = vadd.f32 %v1379, %v1427
  %1429 = vmatmul.bf16.gmra.mxu0 %v397
  %v1430 = vpop.f32.mrf.mxu0
  %v1431 = vadd.f32 %v1382, %v1430
  %v1432 = vpop.f32.mrf.mxu0
  %v1433 = vadd.f32 %v1384, %v1432
  %1434 = vmatmul.bf16.gmra.mxu0 %v402
  %v1435 = vpop.f32.mrf.mxu0
  %v1436 = vadd.f32 %v1387, %v1435
  %v1437 = vpop.f32.mrf.mxu0
  %v1438 = vadd.f32 %v1389, %v1437
  %1439 = vmatmul.bf16.gmra.mxu0 %v407
  %v1440 = vpop.f32.mrf.mxu0
  %v1441 = vadd.f32 %v1392, %v1440
  %v1442 = vpop.f32.mrf.mxu0
  %v1443 = vadd.f32 %v1394, %v1442
  %1444 = vmatmul.bf16.gmra.mxu0 %v412
  %v1445 = vpop.f32.mrf.mxu0
  %v1446 = vadd.f32 %v1397, %v1445
  %v1447 = vpop.f32.mrf.mxu0
  %v1448 = vadd.f32 %v1399, %v1447
  %1449 = vmatmul.bf16.gmra.mxu0 %v417
  %v1450 = vpop.f32.mrf.mxu0
  %v1451 = vadd.f32 %v1402, %v1450
  %v1452 = vpop.f32.mrf.mxu0
  %v1453 = vadd.f32 %v1404, %v1452
  %1454 = vmatmul.bf16.gmra.mxu0 %v422
  %v1455 = vpop.f32.mrf.mxu0
  %v1456 = vadd.f32 %v1407, %v1455
  %v1457 = vpop.f32.mrf.mxu0
  %v1458 = vadd.f32 %v1409, %v1457
  %1459 = vdwg.mxu0
  %1460 = vmatpush.bf16.msra.mxu0 %v1100
  %1461 = vmatpush.bf16.msra.mxu0 %v1096
  %1462 = vmatpush.bf16.msra.mxu0 %v1092
  %1463 = vmatpush.bf16.msra.mxu0 %v1088
  %1464 = vmatpush.bf16.msra.mxu0 %v1084
  %1465 = vmatpush.bf16.msra.mxu0 %v1080
  %1466 = vmatpush.bf16.msra.mxu0 %v1076
  %1467 = vmatpush.bf16.msra.mxu0 %v1072
  %1468 = vmatmul.bf16.gmra.mxu0 %v388
  %v1469 = vpop.f32.mrf.mxu0
  %v1470 = vadd.f32 %v1421, %v1469
  %v1471 = vpop.f32.mrf.mxu0
  %v1472 = vadd.f32 %v1423, %v1471
  %1473 = vmatmul.bf16.gmra.mxu0 %v393
  %v1474 = vpop.f32.mrf.mxu0
  %v1475 = vadd.f32 %v1426, %v1474
  %v1476 = vpop.f32.mrf.mxu0
  %v1477 = vadd.f32 %v1428, %v1476
  %1478 = vmatmul.bf16.gmra.mxu0 %v398
  %v1479 = vpop.f32.mrf.mxu0
  %v1480 = vadd.f32 %v1431, %v1479
  %v1481 = vpop.f32.mrf.mxu0
  %v1482 = vadd.f32 %v1433, %v1481
  %1483 = vmatmul.bf16.gmra.mxu0 %v403
  %v1484 = vpop.f32.mrf.mxu0
  %v1485 = vadd.f32 %v1436, %v1484
  %v1486 = vpop.f32.mrf.mxu0
  %v1487 = vadd.f32 %v1438, %v1486
  %1488 = vmatmul.bf16.gmra.mxu0 %v408
  %v1489 = vpop.f32.mrf.mxu0
  %v1490 = vadd.f32 %v1441, %v1489
  %v1491 = vpop.f32.mrf.mxu0
  %v1492 = vadd.f32 %v1443, %v1491
  %1493 = vmatmul.bf16.gmra.mxu0 %v413
  %v1494 = vpop.f32.mrf.mxu0
  %v1495 = vadd.f32 %v1446, %v1494
  %v1496 = vpop.f32.mrf.mxu0
  %v1497 = vadd.f32 %v1448, %v1496
  %1498 = vmatmul.bf16.gmra.mxu0 %v418
  %v1499 = vpop.f32.mrf.mxu0
  %v1500 = vadd.f32 %v1451, %v1499
  %v1501 = vpop.f32.mrf.mxu0
  %v1502 = vadd.f32 %v1453, %v1501
  %1503 = vmatmul.bf16.gmra.mxu0 %v423
  %v1504 = vpop.f32.mrf.mxu0
  %v1505 = vadd.f32 %v1456, %v1504
  %v1506 = vpop.f32.mrf.mxu0
  %v1507 = vadd.f32 %v1458, %v1506
  %1508 = vdwg.mxu0
  %1509 = vmatpush.bf16.msra.mxu0 %v973
  %1510 = vmatpush.bf16.msra.mxu0 %v969
  %1511 = vmatpush.bf16.msra.mxu0 %v965
  %1512 = vmatpush.bf16.msra.mxu0 %v961
  %1513 = vmatpush.bf16.msra.mxu0 %v957
  %1514 = vmatpush.bf16.msra.mxu0 %v953
  %1515 = vmatpush.bf16.msra.mxu0 %v949
  %1516 = vmatpush.bf16.msra.mxu0 %v945
  %1517 = vmatmul.bf16.gmra.mxu0 %v384
  %v1518 = vpop.f32.mrf.mxu0
  %v1519 = vadd.f32 %v249, %v1518
  %v1520 = vpop.f32.mrf.mxu0
  %v1521 = vadd.f32 %v249, %v1520
  %1522 = vmatmul.bf16.gmra.mxu0 %v389
  %v1523 = vpop.f32.mrf.mxu0
  %v1524 = vadd.f32 %v249, %v1523
  %v1525 = vpop.f32.mrf.mxu0
  %v1526 = vadd.f32 %v249, %v1525
  %1527 = vmatmul.bf16.gmra.mxu0 %v394
  %v1528 = vpop.f32.mrf.mxu0
  %v1529 = vadd.f32 %v249, %v1528
  %v1530 = vpop.f32.mrf.mxu0
  %v1531 = vadd.f32 %v249, %v1530
  %1532 = vmatmul.bf16.gmra.mxu0 %v399
  %v1533 = vpop.f32.mrf.mxu0
  %v1534 = vadd.f32 %v249, %v1533
  %v1535 = vpop.f32.mrf.mxu0
  %v1536 = vadd.f32 %v249, %v1535
  %1537 = vmatmul.bf16.gmra.mxu0 %v404
  %v1538 = vpop.f32.mrf.mxu0
  %v1539 = vadd.f32 %v249, %v1538
  %v1540 = vpop.f32.mrf.mxu0
  %v1541 = vadd.f32 %v249, %v1540
  %1542 = vmatmul.bf16.gmra.mxu0 %v409
  %v1543 = vpop.f32.mrf.mxu0
  %v1544 = vadd.f32 %v249, %v1543
  %v1545 = vpop.f32.mrf.mxu0
  %v1546 = vadd.f32 %v249, %v1545
  %1547 = vmatmul.bf16.gmra.mxu0 %v414
  %v1548 = vpop.f32.mrf.mxu0
  %v1549 = vadd.f32 %v249, %v1548
  %v1550 = vpop.f32.mrf.mxu0
  %v1551 = vadd.f32 %v249, %v1550
  %1552 = vmatmul.bf16.gmra.mxu0 %v419
  %v1553 = vpop.f32.mrf.mxu0
  %v1554 = vadd.f32 %v249, %v1553
  %v1555 = vpop.f32.mrf.mxu0
  %v1556 = vadd.f32 %v249, %v1555
  %1557 = vdwg.mxu0
  %1558 = vmatpush.bf16.msra.mxu0 %v1005
  %1559 = vmatpush.bf16.msra.mxu0 %v1001
  %1560 = vmatpush.bf16.msra.mxu0 %v997
  %1561 = vmatpush.bf16.msra.mxu0 %v993
  %1562 = vmatpush.bf16.msra.mxu0 %v989
  %1563 = vmatpush.bf16.msra.mxu0 %v985
  %1564 = vmatpush.bf16.msra.mxu0 %v981
  %1565 = vmatpush.bf16.msra.mxu0 %v977
  %1566 = vmatmul.bf16.gmra.mxu0 %v385
  %v1567 = vpop.f32.mrf.mxu0
  %v1568 = vadd.f32 %v1519, %v1567
  %v1569 = vpop.f32.mrf.mxu0
  %v1570 = vadd.f32 %v1521, %v1569
  %1571 = vmatmul.bf16.gmra.mxu0 %v390
  %v1572 = vpop.f32.mrf.mxu0
  %v1573 = vadd.f32 %v1524, %v1572
  %v1574 = vpop.f32.mrf.mxu0
  %v1575 = vadd.f32 %v1526, %v1574
  %1576 = vmatmul.bf16.gmra.mxu0 %v395
  %v1577 = vpop.f32.mrf.mxu0
  %v1578 = vadd.f32 %v1529, %v1577
  %v1579 = vpop.f32.mrf.mxu0
  %v1580 = vadd.f32 %v1531, %v1579
  %1581 = vmatmul.bf16.gmra.mxu0 %v400
  %v1582 = vpop.f32.mrf.mxu0
  %v1583 = vadd.f32 %v1534, %v1582
  %v1584 = vpop.f32.mrf.mxu0
  %v1585 = vadd.f32 %v1536, %v1584
  %1586 = vmatmul.bf16.gmra.mxu0 %v405
  %v1587 = vpop.f32.mrf.mxu0
  %v1588 = vadd.f32 %v1539, %v1587
  %v1589 = vpop.f32.mrf.mxu0
  %v1590 = vadd.f32 %v1541, %v1589
  %1591 = vmatmul.bf16.gmra.mxu0 %v410
  %v1592 = vpop.f32.mrf.mxu0
  %v1593 = vadd.f32 %v1544, %v1592
  %v1594 = vpop.f32.mrf.mxu0
  %v1595 = vadd.f32 %v1546, %v1594
  %1596 = vmatmul.bf16.gmra.mxu0 %v415
  %v1597 = vpop.f32.mrf.mxu0
  %v1598 = vadd.f32 %v1549, %v1597
  %v1599 = vpop.f32.mrf.mxu0
  %v1600 = vadd.f32 %v1551, %v1599
  %1601 = vmatmul.bf16.gmra.mxu0 %v420
  %v1602 = vpop.f32.mrf.mxu0
  %v1603 = vadd.f32 %v1554, %v1602
  %v1604 = vpop.f32.mrf.mxu0
  %v1605 = vadd.f32 %v1556, %v1604
  %1606 = vdwg.mxu0
  %1607 = vmatpush.bf16.msra.mxu0 %v1037
  %1608 = vmatpush.bf16.msra.mxu0 %v1033
  %1609 = vmatpush.bf16.msra.mxu0 %v1029
  %1610 = vmatpush.bf16.msra.mxu0 %v1025
  %1611 = vmatpush.bf16.msra.mxu0 %v1021
  %1612 = vmatpush.bf16.msra.mxu0 %v1017
  %1613 = vmatpush.bf16.msra.mxu0 %v1013
  %1614 = vmatpush.bf16.msra.mxu0 %v1009
  %1615 = vmatmul.bf16.gmra.mxu0 %v386
  %v1616 = vpop.f32.mrf.mxu0
  %v1617 = vadd.f32 %v1568, %v1616
  %v1618 = vpop.f32.mrf.mxu0
  %v1619 = vadd.f32 %v1570, %v1618
  %1620 = vmatmul.bf16.gmra.mxu0 %v391
  %v1621 = vpop.f32.mrf.mxu0
  %v1622 = vadd.f32 %v1573, %v1621
  %v1623 = vpop.f32.mrf.mxu0
  %v1624 = vadd.f32 %v1575, %v1623
  %1625 = vmatmul.bf16.gmra.mxu0 %v396
  %v1626 = vpop.f32.mrf.mxu0
  %v1627 = vadd.f32 %v1578, %v1626
  %v1628 = vpop.f32.mrf.mxu0
  %v1629 = vadd.f32 %v1580, %v1628
  %1630 = vmatmul.bf16.gmra.mxu0 %v401
  %v1631 = vpop.f32.mrf.mxu0
  %v1632 = vadd.f32 %v1583, %v1631
  %v1633 = vpop.f32.mrf.mxu0
  %v1634 = vadd.f32 %v1585, %v1633
  %1635 = vmatmul.bf16.gmra.mxu0 %v406
  %v1636 = vpop.f32.mrf.mxu0
  %v1637 = vadd.f32 %v1588, %v1636
  %v1638 = vpop.f32.mrf.mxu0
  %v1639 = vadd.f32 %v1590, %v1638
  %1640 = vmatmul.bf16.gmra.mxu0 %v411
  %v1641 = vpop.f32.mrf.mxu0
  %v1642 = vadd.f32 %v1593, %v1641
  %v1643 = vpop.f32.mrf.mxu0
  %v1644 = vadd.f32 %v1595, %v1643
  %1645 = vmatmul.bf16.gmra.mxu0 %v416
  %v1646 = vpop.f32.mrf.mxu0
  %v1647 = vadd.f32 %v1598, %v1646
  %v1648 = vpop.f32.mrf.mxu0
  %v1649 = vadd.f32 %v1600, %v1648
  %1650 = vmatmul.bf16.gmra.mxu0 %v421
  %v1651 = vpop.f32.mrf.mxu0
  %v1652 = vadd.f32 %v1603, %v1651
  %v1653 = vpop.f32.mrf.mxu0
  %v1654 = vadd.f32 %v1605, %v1653
  %1655 = vdwg.mxu0
  %1656 = vmatpush.bf16.msra.mxu0 %v1069
  %1657 = vmatpush.bf16.msra.mxu0 %v1065
  %1658 = vmatpush.bf16.msra.mxu0 %v1061
  %1659 = vmatpush.bf16.msra.mxu0 %v1057
  %1660 = vmatpush.bf16.msra.mxu0 %v1053
  %1661 = vmatpush.bf16.msra.mxu0 %v1049
  %1662 = vmatpush.bf16.msra.mxu0 %v1045
  %1663 = vmatpush.bf16.msra.mxu0 %v1041
  %1664 = vmatmul.bf16.gmra.mxu0 %v387
  %v1665 = vpop.f32.mrf.mxu0
  %v1666 = vadd.f32 %v1617, %v1665
  %v1667 = vpop.f32.mrf.mxu0
  %v1668 = vadd.f32 %v1619, %v1667
  %1669 = vmatmul.bf16.gmra.mxu0 %v392
  %v1670 = vpop.f32.mrf.mxu0
  %v1671 = vadd.f32 %v1622, %v1670
  %v1672 = vpop.f32.mrf.mxu0
  %v1673 = vadd.f32 %v1624, %v1672
  %1674 = vmatmul.bf16.gmra.mxu0 %v397
  %v1675 = vpop.f32.mrf.mxu0
  %v1676 = vadd.f32 %v1627, %v1675
  %v1677 = vpop.f32.mrf.mxu0
  %v1678 = vadd.f32 %v1629, %v1677
  %1679 = vmatmul.bf16.gmra.mxu0 %v402
  %v1680 = vpop.f32.mrf.mxu0
  %v1681 = vadd.f32 %v1632, %v1680
  %v1682 = vpop.f32.mrf.mxu0
  %v1683 = vadd.f32 %v1634, %v1682
  %1684 = vmatmul.bf16.gmra.mxu0 %v407
  %v1685 = vpop.f32.mrf.mxu0
  %v1686 = vadd.f32 %v1637, %v1685
  %v1687 = vpop.f32.mrf.mxu0
  %v1688 = vadd.f32 %v1639, %v1687
  %1689 = vmatmul.bf16.gmra.mxu0 %v412
  %v1690 = vpop.f32.mrf.mxu0
  %v1691 = vadd.f32 %v1642, %v1690
  %v1692 = vpop.f32.mrf.mxu0
  %v1693 = vadd.f32 %v1644, %v1692
  %1694 = vmatmul.bf16.gmra.mxu0 %v417
  %v1695 = vpop.f32.mrf.mxu0
  %v1696 = vadd.f32 %v1647, %v1695
  %v1697 = vpop.f32.mrf.mxu0
  %v1698 = vadd.f32 %v1649, %v1697
  %1699 = vmatmul.bf16.gmra.mxu0 %v422
  %v1700 = vpop.f32.mrf.mxu0
  %v1701 = vadd.f32 %v1652, %v1700
  %v1702 = vpop.f32.mrf.mxu0
  %v1703 = vadd.f32 %v1654, %v1702
  %1704 = vdwg.mxu0
  %1705 = vmatpush.bf16.msra.mxu0 %v1101
  %1706 = vmatpush.bf16.msra.mxu0 %v1097
  %1707 = vmatpush.bf16.msra.mxu0 %v1093
  %1708 = vmatpush.bf16.msra.mxu0 %v1089
  %1709 = vmatpush.bf16.msra.mxu0 %v1085
  %1710 = vmatpush.bf16.msra.mxu0 %v1081
  %1711 = vmatpush.bf16.msra.mxu0 %v1077
  %1712 = vmatpush.bf16.msra.mxu0 %v1073
  %1713 = vmatmul.bf16.gmra.mxu0 %v388
  %v1714 = vpop.f32.mrf.mxu0
  %v1715 = vadd.f32 %v1666, %v1714
  %v1716 = vpop.f32.mrf.mxu0
  %v1717 = vadd.f32 %v1668, %v1716
  %1718 = vmatmul.bf16.gmra.mxu0 %v393
  %v1719 = vpop.f32.mrf.mxu0
  %v1720 = vadd.f32 %v1671, %v1719
  %v1721 = vpop.f32.mrf.mxu0
  %v1722 = vadd.f32 %v1673, %v1721
  %1723 = vmatmul.bf16.gmra.mxu0 %v398
  %v1724 = vpop.f32.mrf.mxu0
  %v1725 = vadd.f32 %v1676, %v1724
  %v1726 = vpop.f32.mrf.mxu0
  %v1727 = vadd.f32 %v1678, %v1726
  %1728 = vmatmul.bf16.gmra.mxu0 %v403
  %v1729 = vpop.f32.mrf.mxu0
  %v1730 = vadd.f32 %v1681, %v1729
  %v1731 = vpop.f32.mrf.mxu0
  %v1732 = vadd.f32 %v1683, %v1731
  %1733 = vmatmul.bf16.gmra.mxu0 %v408
  %v1734 = vpop.f32.mrf.mxu0
  %v1735 = vadd.f32 %v1686, %v1734
  %v1736 = vpop.f32.mrf.mxu0
  %v1737 = vadd.f32 %v1688, %v1736
  %1738 = vmatmul.bf16.gmra.mxu0 %v413
  %v1739 = vpop.f32.mrf.mxu0
  %v1740 = vadd.f32 %v1691, %v1739
  %v1741 = vpop.f32.mrf.mxu0
  %v1742 = vadd.f32 %v1693, %v1741
  %1743 = vmatmul.bf16.gmra.mxu0 %v418
  %v1744 = vpop.f32.mrf.mxu0
  %v1745 = vadd.f32 %v1696, %v1744
  %v1746 = vpop.f32.mrf.mxu0
  %v1747 = vadd.f32 %v1698, %v1746
  %1748 = vmatmul.bf16.gmra.mxu0 %v423
  %v1749 = vpop.f32.mrf.mxu0
  %v1750 = vadd.f32 %v1701, %v1749
  %v1751 = vpop.f32.mrf.mxu0
  %v1752 = vadd.f32 %v1703, %v1751
  %1753 = vdwg.mxu0
  %1754 = vmatpush.bf16.msra.mxu0 %v974
  %1755 = vmatpush.bf16.msra.mxu0 %v970
  %1756 = vmatpush.bf16.msra.mxu0 %v966
  %1757 = vmatpush.bf16.msra.mxu0 %v962
  %1758 = vmatpush.bf16.msra.mxu0 %v958
  %1759 = vmatpush.bf16.msra.mxu0 %v954
  %1760 = vmatpush.bf16.msra.mxu0 %v950
  %1761 = vmatpush.bf16.msra.mxu0 %v946
  %1762 = vmatmul.bf16.gmra.mxu0 %v384
  %v1763 = vpop.f32.mrf.mxu0
  %v1764 = vadd.f32 %v250, %v1763
  %v1765 = vpop.f32.mrf.mxu0
  %v1766 = vadd.f32 %v250, %v1765
  %1767 = vmatmul.bf16.gmra.mxu0 %v389
  %v1768 = vpop.f32.mrf.mxu0
  %v1769 = vadd.f32 %v250, %v1768
  %v1770 = vpop.f32.mrf.mxu0
  %v1771 = vadd.f32 %v250, %v1770
  %1772 = vmatmul.bf16.gmra.mxu0 %v394
  %v1773 = vpop.f32.mrf.mxu0
  %v1774 = vadd.f32 %v250, %v1773
  %v1775 = vpop.f32.mrf.mxu0
  %v1776 = vadd.f32 %v250, %v1775
  %1777 = vmatmul.bf16.gmra.mxu0 %v399
  %v1778 = vpop.f32.mrf.mxu0
  %v1779 = vadd.f32 %v250, %v1778
  %v1780 = vpop.f32.mrf.mxu0
  %v1781 = vadd.f32 %v250, %v1780
  %1782 = vmatmul.bf16.gmra.mxu0 %v404
  %v1783 = vpop.f32.mrf.mxu0
  %v1784 = vadd.f32 %v250, %v1783
  %v1785 = vpop.f32.mrf.mxu0
  %v1786 = vadd.f32 %v250, %v1785
  %1787 = vmatmul.bf16.gmra.mxu0 %v409
  %v1788 = vpop.f32.mrf.mxu0
  %v1789 = vadd.f32 %v250, %v1788
  %v1790 = vpop.f32.mrf.mxu0
  %v1791 = vadd.f32 %v250, %v1790
  %1792 = vmatmul.bf16.gmra.mxu0 %v414
  %v1793 = vpop.f32.mrf.mxu0
  %v1794 = vadd.f32 %v250, %v1793
  %v1795 = vpop.f32.mrf.mxu0
  %v1796 = vadd.f32 %v250, %v1795
  %1797 = vmatmul.bf16.gmra.mxu0 %v419
  %v1798 = vpop.f32.mrf.mxu0
  %v1799 = vadd.f32 %v250, %v1798
  %v1800 = vpop.f32.mrf.mxu0
  %v1801 = vadd.f32 %v250, %v1800
  %1802 = vdwg.mxu0
  %1803 = vmatpush.bf16.msra.mxu0 %v1006
  %1804 = vmatpush.bf16.msra.mxu0 %v1002
  %1805 = vmatpush.bf16.msra.mxu0 %v998
  %1806 = vmatpush.bf16.msra.mxu0 %v994
  %1807 = vmatpush.bf16.msra.mxu0 %v990
  %1808 = vmatpush.bf16.msra.mxu0 %v986
  %1809 = vmatpush.bf16.msra.mxu0 %v982
  %1810 = vmatpush.bf16.msra.mxu0 %v978
  %1811 = vmatmul.bf16.gmra.mxu0 %v385
  %v1812 = vpop.f32.mrf.mxu0
  %v1813 = vadd.f32 %v1764, %v1812
  %v1814 = vpop.f32.mrf.mxu0
  %v1815 = vadd.f32 %v1766, %v1814
  %1816 = vmatmul.bf16.gmra.mxu0 %v390
  %v1817 = vpop.f32.mrf.mxu0
  %v1818 = vadd.f32 %v1769, %v1817
  %v1819 = vpop.f32.mrf.mxu0
  %v1820 = vadd.f32 %v1771, %v1819
  %1821 = vmatmul.bf16.gmra.mxu0 %v395
  %v1822 = vpop.f32.mrf.mxu0
  %v1823 = vadd.f32 %v1774, %v1822
  %v1824 = vpop.f32.mrf.mxu0
  %v1825 = vadd.f32 %v1776, %v1824
  %1826 = vmatmul.bf16.gmra.mxu0 %v400
  %v1827 = vpop.f32.mrf.mxu0
  %v1828 = vadd.f32 %v1779, %v1827
  %v1829 = vpop.f32.mrf.mxu0
  %v1830 = vadd.f32 %v1781, %v1829
  %1831 = vmatmul.bf16.gmra.mxu0 %v405
  %v1832 = vpop.f32.mrf.mxu0
  %v1833 = vadd.f32 %v1784, %v1832
  %v1834 = vpop.f32.mrf.mxu0
  %v1835 = vadd.f32 %v1786, %v1834
  %1836 = vmatmul.bf16.gmra.mxu0 %v410
  %v1837 = vpop.f32.mrf.mxu0
  %v1838 = vadd.f32 %v1789, %v1837
  %v1839 = vpop.f32.mrf.mxu0
  %v1840 = vadd.f32 %v1791, %v1839
  %1841 = vmatmul.bf16.gmra.mxu0 %v415
  %v1842 = vpop.f32.mrf.mxu0
  %v1843 = vadd.f32 %v1794, %v1842
  %v1844 = vpop.f32.mrf.mxu0
  %v1845 = vadd.f32 %v1796, %v1844
  %1846 = vmatmul.bf16.gmra.mxu0 %v420
  %v1847 = vpop.f32.mrf.mxu0
  %v1848 = vadd.f32 %v1799, %v1847
  %v1849 = vpop.f32.mrf.mxu0
  %v1850 = vadd.f32 %v1801, %v1849
  %1851 = vdwg.mxu0
  %1852 = vmatpush.bf16.msra.mxu0 %v1038
  %1853 = vmatpush.bf16.msra.mxu0 %v1034
  %1854 = vmatpush.bf16.msra.mxu0 %v1030
  %1855 = vmatpush.bf16.msra.mxu0 %v1026
  %1856 = vmatpush.bf16.msra.mxu0 %v1022
  %1857 = vmatpush.bf16.msra.mxu0 %v1018
  %1858 = vmatpush.bf16.msra.mxu0 %v1014
  %1859 = vmatpush.bf16.msra.mxu0 %v1010
  %1860 = vmatmul.bf16.gmra.mxu0 %v386
  %v1861 = vpop.f32.mrf.mxu0
  %v1862 = vadd.f32 %v1813, %v1861
  %v1863 = vpop.f32.mrf.mxu0
  %v1864 = vadd.f32 %v1815, %v1863
  %1865 = vmatmul.bf16.gmra.mxu0 %v391
  %v1866 = vpop.f32.mrf.mxu0
  %v1867 = vadd.f32 %v1818, %v1866
  %v1868 = vpop.f32.mrf.mxu0
  %v1869 = vadd.f32 %v1820, %v1868
  %1870 = vmatmul.bf16.gmra.mxu0 %v396
  %v1871 = vpop.f32.mrf.mxu0
  %v1872 = vadd.f32 %v1823, %v1871
  %v1873 = vpop.f32.mrf.mxu0
  %v1874 = vadd.f32 %v1825, %v1873
  %1875 = vmatmul.bf16.gmra.mxu0 %v401
  %v1876 = vpop.f32.mrf.mxu0
  %v1877 = vadd.f32 %v1828, %v1876
  %v1878 = vpop.f32.mrf.mxu0
  %v1879 = vadd.f32 %v1830, %v1878
  %1880 = vmatmul.bf16.gmra.mxu0 %v406
  %v1881 = vpop.f32.mrf.mxu0
  %v1882 = vadd.f32 %v1833, %v1881
  %v1883 = vpop.f32.mrf.mxu0
  %v1884 = vadd.f32 %v1835, %v1883
  %1885 = vmatmul.bf16.gmra.mxu0 %v411
  %v1886 = vpop.f32.mrf.mxu0
  %v1887 = vadd.f32 %v1838, %v1886
  %v1888 = vpop.f32.mrf.mxu0
  %v1889 = vadd.f32 %v1840, %v1888
  %1890 = vmatmul.bf16.gmra.mxu0 %v416
  %v1891 = vpop.f32.mrf.mxu0
  %v1892 = vadd.f32 %v1843, %v1891
  %v1893 = vpop.f32.mrf.mxu0
  %v1894 = vadd.f32 %v1845, %v1893
  %1895 = vmatmul.bf16.gmra.mxu0 %v421
  %v1896 = vpop.f32.mrf.mxu0
  %v1897 = vadd.f32 %v1848, %v1896
  %v1898 = vpop.f32.mrf.mxu0
  %v1899 = vadd.f32 %v1850, %v1898
  %1900 = vdwg.mxu0
  %1901 = vmatpush.bf16.msra.mxu0 %v1070
  %1902 = vmatpush.bf16.msra.mxu0 %v1066
  %1903 = vmatpush.bf16.msra.mxu0 %v1062
  %1904 = vmatpush.bf16.msra.mxu0 %v1058
  %1905 = vmatpush.bf16.msra.mxu0 %v1054
  %1906 = vmatpush.bf16.msra.mxu0 %v1050
  %1907 = vmatpush.bf16.msra.mxu0 %v1046
  %1908 = vmatpush.bf16.msra.mxu0 %v1042
  %1909 = vmatmul.bf16.gmra.mxu0 %v387
  %v1910 = vpop.f32.mrf.mxu0
  %v1911 = vadd.f32 %v1862, %v1910
  %v1912 = vpop.f32.mrf.mxu0
  %v1913 = vadd.f32 %v1864, %v1912
  %1914 = vmatmul.bf16.gmra.mxu0 %v392
  %v1915 = vpop.f32.mrf.mxu0
  %v1916 = vadd.f32 %v1867, %v1915
  %v1917 = vpop.f32.mrf.mxu0
  %v1918 = vadd.f32 %v1869, %v1917
  %1919 = vmatmul.bf16.gmra.mxu0 %v397
  %v1920 = vpop.f32.mrf.mxu0
  %v1921 = vadd.f32 %v1872, %v1920
  %v1922 = vpop.f32.mrf.mxu0
  %v1923 = vadd.f32 %v1874, %v1922
  %1924 = vmatmul.bf16.gmra.mxu0 %v402
  %v1925 = vpop.f32.mrf.mxu0
  %v1926 = vadd.f32 %v1877, %v1925
  %v1927 = vpop.f32.mrf.mxu0
  %v1928 = vadd.f32 %v1879, %v1927
  %1929 = vmatmul.bf16.gmra.mxu0 %v407
  %v1930 = vpop.f32.mrf.mxu0
  %v1931 = vadd.f32 %v1882, %v1930
  %v1932 = vpop.f32.mrf.mxu0
  %v1933 = vadd.f32 %v1884, %v1932
  %1934 = vmatmul.bf16.gmra.mxu0 %v412
  %v1935 = vpop.f32.mrf.mxu0
  %v1936 = vadd.f32 %v1887, %v1935
  %v1937 = vpop.f32.mrf.mxu0
  %v1938 = vadd.f32 %v1889, %v1937
  %1939 = vmatmul.bf16.gmra.mxu0 %v417
  %v1940 = vpop.f32.mrf.mxu0
  %v1941 = vadd.f32 %v1892, %v1940
  %v1942 = vpop.f32.mrf.mxu0
  %v1943 = vadd.f32 %v1894, %v1942
  %1944 = vmatmul.bf16.gmra.mxu0 %v422
  %v1945 = vpop.f32.mrf.mxu0
  %v1946 = vadd.f32 %v1897, %v1945
  %v1947 = vpop.f32.mrf.mxu0
  %v1948 = vadd.f32 %v1899, %v1947
  %1949 = vdwg.mxu0
  %1950 = vmatpush.bf16.msra.mxu0 %v1102
  %1951 = vmatpush.bf16.msra.mxu0 %v1098
  %1952 = vmatpush.bf16.msra.mxu0 %v1094
  %1953 = vmatpush.bf16.msra.mxu0 %v1090
  %1954 = vmatpush.bf16.msra.mxu0 %v1086
  %1955 = vmatpush.bf16.msra.mxu0 %v1082
  %1956 = vmatpush.bf16.msra.mxu0 %v1078
  %1957 = vmatpush.bf16.msra.mxu0 %v1074
  %1958 = vmatmul.bf16.gmra.mxu0 %v388
  %v1959 = vpop.f32.mrf.mxu0
  %v1960 = vadd.f32 %v1911, %v1959
  %v1961 = vpop.f32.mrf.mxu0
  %v1962 = vadd.f32 %v1913, %v1961
  %1963 = vmatmul.bf16.gmra.mxu0 %v393
  %v1964 = vpop.f32.mrf.mxu0
  %v1965 = vadd.f32 %v1916, %v1964
  %v1966 = vpop.f32.mrf.mxu0
  %v1967 = vadd.f32 %v1918, %v1966
  %1968 = vmatmul.bf16.gmra.mxu0 %v398
  %v1969 = vpop.f32.mrf.mxu0
  %v1970 = vadd.f32 %v1921, %v1969
  %v1971 = vpop.f32.mrf.mxu0
  %v1972 = vadd.f32 %v1923, %v1971
  %1973 = vmatmul.bf16.gmra.mxu0 %v403
  %v1974 = vpop.f32.mrf.mxu0
  %v1975 = vadd.f32 %v1926, %v1974
  %v1976 = vpop.f32.mrf.mxu0
  %v1977 = vadd.f32 %v1928, %v1976
  %1978 = vmatmul.bf16.gmra.mxu0 %v408
  %v1979 = vpop.f32.mrf.mxu0
  %v1980 = vadd.f32 %v1931, %v1979
  %v1981 = vpop.f32.mrf.mxu0
  %v1982 = vadd.f32 %v1933, %v1981
  %1983 = vmatmul.bf16.gmra.mxu0 %v413
  %v1984 = vpop.f32.mrf.mxu0
  %v1985 = vadd.f32 %v1936, %v1984
  %v1986 = vpop.f32.mrf.mxu0
  %v1987 = vadd.f32 %v1938, %v1986
  %1988 = vmatmul.bf16.gmra.mxu0 %v418
  %v1989 = vpop.f32.mrf.mxu0
  %v1990 = vadd.f32 %v1941, %v1989
  %v1991 = vpop.f32.mrf.mxu0
  %v1992 = vadd.f32 %v1943, %v1991
  %1993 = vmatmul.bf16.gmra.mxu0 %v423
  %v1994 = vpop.f32.mrf.mxu0
  %v1995 = vadd.f32 %v1946, %v1994
  %v1996 = vpop.f32.mrf.mxu0
  %v1997 = vadd.f32 %v1948, %v1996
  %1998 = vdwg.mxu0
  %1999 = vmatpush.bf16.msra.mxu0 %v975
  %2000 = vmatpush.bf16.msra.mxu0 %v971
  %2001 = vmatpush.bf16.msra.mxu0 %v967
  %2002 = vmatpush.bf16.msra.mxu0 %v963
  %2003 = vmatpush.bf16.msra.mxu0 %v959
  %2004 = vmatpush.bf16.msra.mxu0 %v955
  %2005 = vmatpush.bf16.msra.mxu0 %v951
  %2006 = vmatpush.bf16.msra.mxu0 %v947
  %2007 = vmatmul.bf16.gmra.mxu0 %v384
  %v2008 = vpop.f32.mrf.mxu0
  %v2009 = vadd.f32 %v251, %v2008
  %v2010 = vpop.f32.mrf.mxu0
  %v2011 = vadd.f32 %v251, %v2010
  %2012 = vmatmul.bf16.gmra.mxu0 %v389
  %v2013 = vpop.f32.mrf.mxu0
  %v2014 = vadd.f32 %v251, %v2013
  %v2015 = vpop.f32.mrf.mxu0
  %v2016 = vadd.f32 %v251, %v2015
  %2017 = vmatmul.bf16.gmra.mxu0 %v394
  %v2018 = vpop.f32.mrf.mxu0
  %v2019 = vadd.f32 %v251, %v2018
  %v2020 = vpop.f32.mrf.mxu0
  %v2021 = vadd.f32 %v251, %v2020
  %2022 = vmatmul.bf16.gmra.mxu0 %v399
  %v2023 = vpop.f32.mrf.mxu0
  %v2024 = vadd.f32 %v251, %v2023
  %v2025 = vpop.f32.mrf.mxu0
  %v2026 = vadd.f32 %v251, %v2025
  %2027 = vmatmul.bf16.gmra.mxu0 %v404
  %v2028 = vpop.f32.mrf.mxu0
  %v2029 = vadd.f32 %v251, %v2028
  %v2030 = vpop.f32.mrf.mxu0
  %v2031 = vadd.f32 %v251, %v2030
  %2032 = vmatmul.bf16.gmra.mxu0 %v409
  %v2033 = vpop.f32.mrf.mxu0
  %v2034 = vadd.f32 %v251, %v2033
  %v2035 = vpop.f32.mrf.mxu0
  %v2036 = vadd.f32 %v251, %v2035
  %2037 = vmatmul.bf16.gmra.mxu0 %v414
  %v2038 = vpop.f32.mrf.mxu0
  %v2039 = vadd.f32 %v251, %v2038
  %v2040 = vpop.f32.mrf.mxu0
  %v2041 = vadd.f32 %v251, %v2040
  %2042 = vmatmul.bf16.gmra.mxu0 %v419
  %v2043 = vpop.f32.mrf.mxu0
  %v2044 = vadd.f32 %v251, %v2043
  %v2045 = vpop.f32.mrf.mxu0
  %v2046 = vadd.f32 %v251, %v2045
  %2047 = vdwg.mxu0
  %2048 = vmatpush.bf16.msra.mxu0 %v1007
  %2049 = vmatpush.bf16.msra.mxu0 %v1003
  %2050 = vmatpush.bf16.msra.mxu0 %v999
  %2051 = vmatpush.bf16.msra.mxu0 %v995
  %2052 = vmatpush.bf16.msra.mxu0 %v991
  %2053 = vmatpush.bf16.msra.mxu0 %v987
  %2054 = vmatpush.bf16.msra.mxu0 %v983
  %2055 = vmatpush.bf16.msra.mxu0 %v979
  %2056 = vmatmul.bf16.gmra.mxu0 %v385
  %v2057 = vpop.f32.mrf.mxu0
  %v2058 = vadd.f32 %v2009, %v2057
  %v2059 = vpop.f32.mrf.mxu0
  %v2060 = vadd.f32 %v2011, %v2059
  %2061 = vmatmul.bf16.gmra.mxu0 %v390
  %v2062 = vpop.f32.mrf.mxu0
  %v2063 = vadd.f32 %v2014, %v2062
  %v2064 = vpop.f32.mrf.mxu0
  %v2065 = vadd.f32 %v2016, %v2064
  %2066 = vmatmul.bf16.gmra.mxu0 %v395
  %v2067 = vpop.f32.mrf.mxu0
  %v2068 = vadd.f32 %v2019, %v2067
  %v2069 = vpop.f32.mrf.mxu0
  %v2070 = vadd.f32 %v2021, %v2069
  %2071 = vmatmul.bf16.gmra.mxu0 %v400
  %v2072 = vpop.f32.mrf.mxu0
  %v2073 = vadd.f32 %v2024, %v2072
  %v2074 = vpop.f32.mrf.mxu0
  %v2075 = vadd.f32 %v2026, %v2074
  %2076 = vmatmul.bf16.gmra.mxu0 %v405
  %v2077 = vpop.f32.mrf.mxu0
  %v2078 = vadd.f32 %v2029, %v2077
  %v2079 = vpop.f32.mrf.mxu0
  %v2080 = vadd.f32 %v2031, %v2079
  %2081 = vmatmul.bf16.gmra.mxu0 %v410
  %v2082 = vpop.f32.mrf.mxu0
  %v2083 = vadd.f32 %v2034, %v2082
  %v2084 = vpop.f32.mrf.mxu0
  %v2085 = vadd.f32 %v2036, %v2084
  %2086 = vmatmul.bf16.gmra.mxu0 %v415
  %v2087 = vpop.f32.mrf.mxu0
  %v2088 = vadd.f32 %v2039, %v2087
  %v2089 = vpop.f32.mrf.mxu0
  %v2090 = vadd.f32 %v2041, %v2089
  %2091 = vmatmul.bf16.gmra.mxu0 %v420
  %v2092 = vpop.f32.mrf.mxu0
  %v2093 = vadd.f32 %v2044, %v2092
  %v2094 = vpop.f32.mrf.mxu0
  %v2095 = vadd.f32 %v2046, %v2094
  %2096 = vdwg.mxu0
  %2097 = vmatpush.bf16.msra.mxu0 %v1039
  %2098 = vmatpush.bf16.msra.mxu0 %v1035
  %2099 = vmatpush.bf16.msra.mxu0 %v1031
  %2100 = vmatpush.bf16.msra.mxu0 %v1027
  %2101 = vmatpush.bf16.msra.mxu0 %v1023
  %2102 = vmatpush.bf16.msra.mxu0 %v1019
  %2103 = vmatpush.bf16.msra.mxu0 %v1015
  %2104 = vmatpush.bf16.msra.mxu0 %v1011
  %2105 = vmatmul.bf16.gmra.mxu0 %v386
  %v2106 = vpop.f32.mrf.mxu0
  %v2107 = vadd.f32 %v2058, %v2106
  %v2108 = vpop.f32.mrf.mxu0
  %v2109 = vadd.f32 %v2060, %v2108
  %2110 = vmatmul.bf16.gmra.mxu0 %v391
  %v2111 = vpop.f32.mrf.mxu0
  %v2112 = vadd.f32 %v2063, %v2111
  %v2113 = vpop.f32.mrf.mxu0
  %v2114 = vadd.f32 %v2065, %v2113
  %2115 = vmatmul.bf16.gmra.mxu0 %v396
  %v2116 = vpop.f32.mrf.mxu0
  %v2117 = vadd.f32 %v2068, %v2116
  %v2118 = vpop.f32.mrf.mxu0
  %v2119 = vadd.f32 %v2070, %v2118
  %2120 = vmatmul.bf16.gmra.mxu0 %v401
  %v2121 = vpop.f32.mrf.mxu0
  %v2122 = vadd.f32 %v2073, %v2121
  %v2123 = vpop.f32.mrf.mxu0
  %v2124 = vadd.f32 %v2075, %v2123
  %2125 = vmatmul.bf16.gmra.mxu0 %v406
  %v2126 = vpop.f32.mrf.mxu0
  %v2127 = vadd.f32 %v2078, %v2126
  %v2128 = vpop.f32.mrf.mxu0
  %v2129 = vadd.f32 %v2080, %v2128
  %2130 = vmatmul.bf16.gmra.mxu0 %v411
  %v2131 = vpop.f32.mrf.mxu0
  %v2132 = vadd.f32 %v2083, %v2131
  %v2133 = vpop.f32.mrf.mxu0
  %v2134 = vadd.f32 %v2085, %v2133
  %2135 = vmatmul.bf16.gmra.mxu0 %v416
  %v2136 = vpop.f32.mrf.mxu0
  %v2137 = vadd.f32 %v2088, %v2136
  %v2138 = vpop.f32.mrf.mxu0
  %v2139 = vadd.f32 %v2090, %v2138
  %2140 = vmatmul.bf16.gmra.mxu0 %v421
  %v2141 = vpop.f32.mrf.mxu0
  %v2142 = vadd.f32 %v2093, %v2141
  %v2143 = vpop.f32.mrf.mxu0
  %v2144 = vadd.f32 %v2095, %v2143
  %2145 = vdwg.mxu0
  %2146 = vmatpush.bf16.msra.mxu0 %v1071
  %2147 = vmatpush.bf16.msra.mxu0 %v1067
  %2148 = vmatpush.bf16.msra.mxu0 %v1063
  %2149 = vmatpush.bf16.msra.mxu0 %v1059
  %2150 = vmatpush.bf16.msra.mxu0 %v1055
  %2151 = vmatpush.bf16.msra.mxu0 %v1051
  %2152 = vmatpush.bf16.msra.mxu0 %v1047
  %2153 = vmatpush.bf16.msra.mxu0 %v1043
  %2154 = vmatmul.bf16.gmra.mxu0 %v387
  %v2155 = vpop.f32.mrf.mxu0
  %v2156 = vadd.f32 %v2107, %v2155
  %v2157 = vpop.f32.mrf.mxu0
  %v2158 = vadd.f32 %v2109, %v2157
  %2159 = vmatmul.bf16.gmra.mxu0 %v392
  %v2160 = vpop.f32.mrf.mxu0
  %v2161 = vadd.f32 %v2112, %v2160
  %v2162 = vpop.f32.mrf.mxu0
  %v2163 = vadd.f32 %v2114, %v2162
  %2164 = vmatmul.bf16.gmra.mxu0 %v397
  %v2165 = vpop.f32.mrf.mxu0
  %v2166 = vadd.f32 %v2117, %v2165
  %v2167 = vpop.f32.mrf.mxu0
  %v2168 = vadd.f32 %v2119, %v2167
  %2169 = vmatmul.bf16.gmra.mxu0 %v402
  %v2170 = vpop.f32.mrf.mxu0
  %v2171 = vadd.f32 %v2122, %v2170
  %v2172 = vpop.f32.mrf.mxu0
  %v2173 = vadd.f32 %v2124, %v2172
  %2174 = vmatmul.bf16.gmra.mxu0 %v407
  %v2175 = vpop.f32.mrf.mxu0
  %v2176 = vadd.f32 %v2127, %v2175
  %v2177 = vpop.f32.mrf.mxu0
  %v2178 = vadd.f32 %v2129, %v2177
  %2179 = vmatmul.bf16.gmra.mxu0 %v412
  %v2180 = vpop.f32.mrf.mxu0
  %v2181 = vadd.f32 %v2132, %v2180
  %v2182 = vpop.f32.mrf.mxu0
  %v2183 = vadd.f32 %v2134, %v2182
  %2184 = vmatmul.bf16.gmra.mxu0 %v417
  %v2185 = vpop.f32.mrf.mxu0
  %v2186 = vadd.f32 %v2137, %v2185
  %v2187 = vpop.f32.mrf.mxu0
  %v2188 = vadd.f32 %v2139, %v2187
  %2189 = vmatmul.bf16.gmra.mxu0 %v422
  %v2190 = vpop.f32.mrf.mxu0
  %v2191 = vadd.f32 %v2142, %v2190
  %v2192 = vpop.f32.mrf.mxu0
  %v2193 = vadd.f32 %v2144, %v2192
  %2194 = vdwg.mxu0
  %2195 = vmatpush.bf16.msra.mxu0 %v1103
  %2196 = vmatpush.bf16.msra.mxu0 %v1099
  %2197 = vmatpush.bf16.msra.mxu0 %v1095
  %2198 = vmatpush.bf16.msra.mxu0 %v1091
  %2199 = vmatpush.bf16.msra.mxu0 %v1087
  %2200 = vmatpush.bf16.msra.mxu0 %v1083
  %2201 = vmatpush.bf16.msra.mxu0 %v1079
  %2202 = vmatpush.bf16.msra.mxu0 %v1075
  %2203 = vmatmul.bf16.gmra.mxu0 %v388
  %v2204 = vpop.f32.mrf.mxu0
  %v2205 = vadd.f32 %v2156, %v2204
  %v2206 = vpop.f32.mrf.mxu0
  %v2207 = vadd.f32 %v2158, %v2206
  %2208 = vmatmul.bf16.gmra.mxu0 %v393
  %v2209 = vpop.f32.mrf.mxu0
  %v2210 = vadd.f32 %v2161, %v2209
  %v2211 = vpop.f32.mrf.mxu0
  %v2212 = vadd.f32 %v2163, %v2211
  %2213 = vmatmul.bf16.gmra.mxu0 %v398
  %v2214 = vpop.f32.mrf.mxu0
  %v2215 = vadd.f32 %v2166, %v2214
  %v2216 = vpop.f32.mrf.mxu0
  %v2217 = vadd.f32 %v2168, %v2216
  %2218 = vmatmul.bf16.gmra.mxu0 %v403
  %v2219 = vpop.f32.mrf.mxu0
  %v2220 = vadd.f32 %v2171, %v2219
  %v2221 = vpop.f32.mrf.mxu0
  %v2222 = vadd.f32 %v2173, %v2221
  %2223 = vmatmul.bf16.gmra.mxu0 %v408
  %v2224 = vpop.f32.mrf.mxu0
  %v2225 = vadd.f32 %v2176, %v2224
  %v2226 = vpop.f32.mrf.mxu0
  %v2227 = vadd.f32 %v2178, %v2226
  %2228 = vmatmul.bf16.gmra.mxu0 %v413
  %v2229 = vpop.f32.mrf.mxu0
  %v2230 = vadd.f32 %v2181, %v2229
  %v2231 = vpop.f32.mrf.mxu0
  %v2232 = vadd.f32 %v2183, %v2231
  %2233 = vmatmul.bf16.gmra.mxu0 %v418
  %v2234 = vpop.f32.mrf.mxu0
  %v2235 = vadd.f32 %v2186, %v2234
  %v2236 = vpop.f32.mrf.mxu0
  %v2237 = vadd.f32 %v2188, %v2236
  %2238 = vmatmul.bf16.gmra.mxu0 %v423
  %v2239 = vpop.f32.mrf.mxu0
  %v2240 = vadd.f32 %v2191, %v2239
  %v2241 = vpop.f32.mrf.mxu0
  %v2242 = vadd.f32 %v2193, %v2241
  %2243 = vdwg.mxu0
  %v2244 = vmax.f32 %v1470, 0.0
  %v2245 = vmax.f32 %v1715, 0.0
  %v2246 = vmax.f32 %v1960, 0.0
  %v2247 = vmax.f32 %v2205, 0.0
  %v2248 = vmax.f32 %v1472, 0.0
  %v2249 = vmax.f32 %v1717, 0.0
  %v2250 = vmax.f32 %v1962, 0.0
  %v2251 = vmax.f32 %v2207, 0.0
  %v2252 = vmax.f32 %v1475, 0.0
  %v2253 = vmax.f32 %v1720, 0.0
  %v2254 = vmax.f32 %v1965, 0.0
  %v2255 = vmax.f32 %v2210, 0.0
  %v2256 = vmax.f32 %v1477, 0.0
  %v2257 = vmax.f32 %v1722, 0.0
  %v2258 = vmax.f32 %v1967, 0.0
  %v2259 = vmax.f32 %v2212, 0.0
  %v2260 = vmax.f32 %v1480, 0.0
  %v2261 = vmax.f32 %v1725, 0.0
  %v2262 = vmax.f32 %v1970, 0.0
  %v2263 = vmax.f32 %v2215, 0.0
  %v2264 = vmax.f32 %v1482, 0.0
  %v2265 = vmax.f32 %v1727, 0.0
  %v2266 = vmax.f32 %v1972, 0.0
  %v2267 = vmax.f32 %v2217, 0.0
  %v2268 = vmax.f32 %v1485, 0.0
  %v2269 = vmax.f32 %v1730, 0.0
  %v2270 = vmax.f32 %v1975, 0.0
  %v2271 = vmax.f32 %v2220, 0.0
  %v2272 = vmax.f32 %v1487, 0.0
  %v2273 = vmax.f32 %v1732, 0.0
  %v2274 = vmax.f32 %v1977, 0.0
  %v2275 = vmax.f32 %v2222, 0.0
  %v2276 = vmax.f32 %v1490, 0.0
  %v2277 = vmax.f32 %v1735, 0.0
  %v2278 = vmax.f32 %v1980, 0.0
  %v2279 = vmax.f32 %v2225, 0.0
  %v2280 = vmax.f32 %v1492, 0.0
  %v2281 = vmax.f32 %v1737, 0.0
  %v2282 = vmax.f32 %v1982, 0.0
  %v2283 = vmax.f32 %v2227, 0.0
  %v2284 = vmax.f32 %v1495, 0.0
  %v2285 = vmax.f32 %v1740, 0.0
  %v2286 = vmax.f32 %v1985, 0.0
  %v2287 = vmax.f32 %v2230, 0.0
  %v2288 = vmax.f32 %v1497, 0.0
  %v2289 = vmax.f32 %v1742, 0.0
  %v2290 = vmax.f32 %v1987, 0.0
  %v2291 = vmax.f32 %v2232, 0.0
  %v2292 = vmax.f32 %v1500, 0.0
  %v2293 = vmax.f32 %v1745, 0.0
  %v2294 = vmax.f32 %v1990, 0.0
  %v2295 = vmax.f32 %v2235, 0.0
  %v2296 = vmax.f32 %v1502, 0.0
  %v2297 = vmax.f32 %v1747, 0.0
  %v2298 = vmax.f32 %v1992, 0.0
  %v2299 = vmax.f32 %v2237, 0.0
  %v2300 = vmax.f32 %v1505, 0.0
  %v2301 = vmax.f32 %v1750, 0.0
  %v2302 = vmax.f32 %v1995, 0.0
  %v2303 = vmax.f32 %v2240, 0.0
  %v2304 = vmax.f32 %v1507, 0.0
  %v2305 = vmax.f32 %v1752, 0.0
  %v2306 = vmax.f32 %v1997, 0.0
  %v2307 = vmax.f32 %v2242, 0.0
  %v2308 = vpack.c.bf16 %v2248, %v2244
  %v2309 = vpack.c.bf16 %v2249, %v2245
  %v2310 = vpack.c.bf16 %v2250, %v2246
  %v2311 = vpack.c.bf16 %v2251, %v2247
  %v2312 = vpack.c.bf16 %v2256, %v2252
  %v2313 = vpack.c.bf16 %v2257, %v2253
  %v2314 = vpack.c.bf16 %v2258, %v2254
  %v2315 = vpack.c.bf16 %v2259, %v2255
  %v2316 = vpack.c.bf16 %v2264, %v2260
  %v2317 = vpack.c.bf16 %v2265, %v2261
  %v2318 = vpack.c.bf16 %v2266, %v2262
  %v2319 = vpack.c.bf16 %v2267, %v2263
  %v2320 = vpack.c.bf16 %v2272, %v2268
  %v2321 = vpack.c.bf16 %v2273, %v2269
  %v2322 = vpack.c.bf16 %v2274, %v2270
  %v2323 = vpack.c.bf16 %v2275, %v2271
  %v2324 = vpack.c.bf16 %v2280, %v2276
  %v2325 = vpack.c.bf16 %v2281, %v2277
  %v2326 = vpack.c.bf16 %v2282, %v2278
  %v2327 = vpack.c.bf16 %v2283, %v2279
  %v2328 = vpack.c.bf16 %v2288, %v2284
  %v2329 = vpack.c.bf16 %v2289, %v2285
  %v2330 = vpack.c.bf16 %v2290, %v2286
  %v2331 = vpack.c.bf16 %v2291, %v2287
  %v2332 = vpack.c.bf16 %v2296, %v2292
  %v2333 = vpack.c.bf16 %v2297, %v2293
  %v2334 = vpack.c.bf16 %v2298, %v2294
  %v2335 = vpack.c.bf16 %v2299, %v2295
  %v2336 = vpack.c.bf16 %v2304, %v2300
  %v2337 = vpack.c.bf16 %v2305, %v2301
  %v2338 = vpack.c.bf16 %v2306, %v2302
  %v2339 = vpack.c.bf16 %v2307, %v2303
  %v2340 = vld [vmem:[%s3] sm:$0xff]
  %v2341 = vld [vmem:[%s3 + $0x8] sm:$0xff]
  %v2342 = vld [vmem:[%s3 + $0x10] sm:$0xff]
  %v2343 = vld [vmem:[%s3 + $0x18] sm:$0xff]
  %v2344 = vld [vmem:[%s3 + $0x20] sm:$0xff]
  %v2345 = vld [vmem:[%s3 + $0x28] sm:$0xff]
  %v2346 = vld [vmem:[%s3 + $0x30] sm:$0xff]
  %v2347 = vld [vmem:[%s3 + $0x38] sm:$0xff]
  %v2348 = vld [vmem:[%s3 + $0x40] sm:$0xff]
  %v2349 = vld [vmem:[%s3 + $0x48] sm:$0xff]
  %v2350 = vld [vmem:[%s3 + $0x50] sm:$0xff]
  %v2351 = vld [vmem:[%s3 + $0x58] sm:$0xff]
  %v2352 = vld [vmem:[%s3 + $0x60] sm:$0xff]
  %v2353 = vld [vmem:[%s3 + $0x68] sm:$0xff]
  %v2354 = vld [vmem:[%s3 + $0x70] sm:$0xff]
  %v2355 = vld [vmem:[%s3 + $0x78] sm:$0xff]
  %v2356 = vld [vmem:[%s3 + $0x80] sm:$0xff]
  %v2357 = vld [vmem:[%s3 + $0x88] sm:$0xff]
  %v2358 = vld [vmem:[%s3 + $0x90] sm:$0xff]
  %v2359 = vld [vmem:[%s3 + $0x98] sm:$0xff]
  %v2360 = vld [vmem:[%s3 + $0xa0] sm:$0xff]
  %v2361 = vld [vmem:[%s3 + $0xa8] sm:$0xff]
  %v2362 = vld [vmem:[%s3 + $0xb0] sm:$0xff]
  %v2363 = vld [vmem:[%s3 + $0xb8] sm:$0xff]
  %v2364 = vld [vmem:[%s3 + $0xc0] sm:$0xff]
  %v2365 = vld [vmem:[%s3 + $0xc8] sm:$0xff]
  %v2366 = vld [vmem:[%s3 + $0xd0] sm:$0xff]
  %v2367 = vld [vmem:[%s3 + $0xd8] sm:$0xff]
  %v2368 = vld [vmem:[%s3 + $0xe0] sm:$0xff]
  %v2369 = vld [vmem:[%s3 + $0xe8] sm:$0xff]
  %v2370 = vld [vmem:[%s3 + $0xf0] sm:$0xff]
  %v2371 = vld [vmem:[%s3 + $0xf8] sm:$0xff]
  %v2372 = vld [vmem:[%s3 + $0x100] sm:$0xff]
  %v2373 = vld [vmem:[%s3 + $0x108] sm:$0xff]
  %v2374 = vld [vmem:[%s3 + $0x110] sm:$0xff]
  %v2375 = vld [vmem:[%s3 + $0x118] sm:$0xff]
  %v2376 = vld [vmem:[%s3 + $0x120] sm:$0xff]
  %v2377 = vld [vmem:[%s3 + $0x128] sm:$0xff]
  %v2378 = vld [vmem:[%s3 + $0x130] sm:$0xff]
  %v2379 = vld [vmem:[%s3 + $0x138] sm:$0xff]
  %v2380 = vld [vmem:[%s3 + $0x140] sm:$0xff]
  %v2381 = vld [vmem:[%s3 + $0x148] sm:$0xff]
  %v2382 = vld [vmem:[%s3 + $0x150] sm:$0xff]
  %v2383 = vld [vmem:[%s3 + $0x158] sm:$0xff]
  %v2384 = vld [vmem:[%s3 + $0x160] sm:$0xff]
  %v2385 = vld [vmem:[%s3 + $0x168] sm:$0xff]
  %v2386 = vld [vmem:[%s3 + $0x170] sm:$0xff]
  %v2387 = vld [vmem:[%s3 + $0x178] sm:$0xff]
  %v2388 = vld [vmem:[%s3 + $0x180] sm:$0xff]
  %v2389 = vld [vmem:[%s3 + $0x188] sm:$0xff]
  %v2390 = vld [vmem:[%s3 + $0x190] sm:$0xff]
  %v2391 = vld [vmem:[%s3 + $0x198] sm:$0xff]
  %v2392 = vld [vmem:[%s3 + $0x1a0] sm:$0xff]
  %v2393 = vld [vmem:[%s3 + $0x1a8] sm:$0xff]
  %v2394 = vld [vmem:[%s3 + $0x1b0] sm:$0xff]
  %v2395 = vld [vmem:[%s3 + $0x1b8] sm:$0xff]
  %v2396 = vld [vmem:[%s3 + $0x1c0] sm:$0xff]
  %v2397 = vld [vmem:[%s3 + $0x1c8] sm:$0xff]
  %v2398 = vld [vmem:[%s3 + $0x1d0] sm:$0xff]
  %v2399 = vld [vmem:[%s3 + $0x1d8] sm:$0xff]
  %v2400 = vld [vmem:[%s3 + $0x1e0] sm:$0xff]
  %v2401 = vld [vmem:[%s3 + $0x1e8] sm:$0xff]
  %v2402 = vld [vmem:[%s3 + $0x1f0] sm:$0xff]
  %v2403 = vld [vmem:[%s3 + $0x1f8] sm:$0xff]
  %v2404 = vld [vmem:[%s3 + $0x200] sm:$0xff]
  %v2405 = vld [vmem:[%s3 + $0x208] sm:$0xff]
  %v2406 = vld [vmem:[%s3 + $0x210] sm:$0xff]
  %v2407 = vld [vmem:[%s3 + $0x218] sm:$0xff]
  %v2408 = vld [vmem:[%s3 + $0x220] sm:$0xff]
  %v2409 = vld [vmem:[%s3 + $0x228] sm:$0xff]
  %v2410 = vld [vmem:[%s3 + $0x230] sm:$0xff]
  %v2411 = vld [vmem:[%s3 + $0x238] sm:$0xff]
  %v2412 = vld [vmem:[%s3 + $0x240] sm:$0xff]
  %v2413 = vld [vmem:[%s3 + $0x248] sm:$0xff]
  %v2414 = vld [vmem:[%s3 + $0x250] sm:$0xff]
  %v2415 = vld [vmem:[%s3 + $0x258] sm:$0xff]
  %v2416 = vld [vmem:[%s3 + $0x260] sm:$0xff]
  %v2417 = vld [vmem:[%s3 + $0x268] sm:$0xff]
  %v2418 = vld [vmem:[%s3 + $0x270] sm:$0xff]
  %v2419 = vld [vmem:[%s3 + $0x278] sm:$0xff]
  %v2420 = vld [vmem:[%s3 + $0x280] sm:$0xff]
  %v2421 = vld [vmem:[%s3 + $0x288] sm:$0xff]
  %v2422 = vld [vmem:[%s3 + $0x290] sm:$0xff]
  %v2423 = vld [vmem:[%s3 + $0x298] sm:$0xff]
  %v2424 = vld [vmem:[%s3 + $0x2a0] sm:$0xff]
  %v2425 = vld [vmem:[%s3 + $0x2a8] sm:$0xff]
  %v2426 = vld [vmem:[%s3 + $0x2b0] sm:$0xff]
  %v2427 = vld [vmem:[%s3 + $0x2b8] sm:$0xff]
  %v2428 = vld [vmem:[%s3 + $0x2c0] sm:$0xff]
  %v2429 = vld [vmem:[%s3 + $0x2c8] sm:$0xff]
  %v2430 = vld [vmem:[%s3 + $0x2d0] sm:$0xff]
  %v2431 = vld [vmem:[%s3 + $0x2d8] sm:$0xff]
  %v2432 = vld [vmem:[%s3 + $0x2e0] sm:$0xff]
  %v2433 = vld [vmem:[%s3 + $0x2e8] sm:$0xff]
  %v2434 = vld [vmem:[%s3 + $0x2f0] sm:$0xff]
  %v2435 = vld [vmem:[%s3 + $0x2f8] sm:$0xff]
  %v2436 = vld [vmem:[%s3 + $0x300] sm:$0xff]
  %v2437 = vld [vmem:[%s3 + $0x308] sm:$0xff]
  %v2438 = vld [vmem:[%s3 + $0x310] sm:$0xff]
  %v2439 = vld [vmem:[%s3 + $0x318] sm:$0xff]
  %v2440 = vld [vmem:[%s3 + $0x320] sm:$0xff]
  %v2441 = vld [vmem:[%s3 + $0x328] sm:$0xff]
  %v2442 = vld [vmem:[%s3 + $0x330] sm:$0xff]
  %v2443 = vld [vmem:[%s3 + $0x338] sm:$0xff]
  %v2444 = vld [vmem:[%s3 + $0x340] sm:$0xff]
  %v2445 = vld [vmem:[%s3 + $0x348] sm:$0xff]
  %v2446 = vld [vmem:[%s3 + $0x350] sm:$0xff]
  %v2447 = vld [vmem:[%s3 + $0x358] sm:$0xff]
  %v2448 = vld [vmem:[%s3 + $0x360] sm:$0xff]
  %v2449 = vld [vmem:[%s3 + $0x368] sm:$0xff]
  %v2450 = vld [vmem:[%s3 + $0x370] sm:$0xff]
  %v2451 = vld [vmem:[%s3 + $0x378] sm:$0xff]
  %v2452 = vld [vmem:[%s3 + $0x380] sm:$0xff]
  %v2453 = vld [vmem:[%s3 + $0x388] sm:$0xff]
  %v2454 = vld [vmem:[%s3 + $0x390] sm:$0xff]
  %v2455 = vld [vmem:[%s3 + $0x398] sm:$0xff]
  %v2456 = vld [vmem:[%s3 + $0x3a0] sm:$0xff]
  %v2457 = vld [vmem:[%s3 + $0x3a8] sm:$0xff]
  %v2458 = vld [vmem:[%s3 + $0x3b0] sm:$0xff]
  %v2459 = vld [vmem:[%s3 + $0x3b8] sm:$0xff]
  %v2460 = vld [vmem:[%s3 + $0x3c0] sm:$0xff]
  %v2461 = vld [vmem:[%s3 + $0x3c8] sm:$0xff]
  %v2462 = vld [vmem:[%s3 + $0x3d0] sm:$0xff]
  %v2463 = vld [vmem:[%s3 + $0x3d8] sm:$0xff]
  %v2464 = vld [vmem:[%s3 + $0x3e0] sm:$0xff]
  %v2465 = vld [vmem:[%s3 + $0x3e8] sm:$0xff]
  %v2466 = vld [vmem:[%s3 + $0x3f0] sm:$0xff]
  %v2467 = vld [vmem:[%s3 + $0x3f8] sm:$0xff]
  %v2468 = vld [vmem:[%s3 + $0x400] sm:$0xff]
  %v2469 = vld [vmem:[%s3 + $0x408] sm:$0xff]
  %v2470 = vld [vmem:[%s3 + $0x410] sm:$0xff]
  %v2471 = vld [vmem:[%s3 + $0x418] sm:$0xff]
  %v2472 = vld [vmem:[%s3 + $0x420] sm:$0xff]
  %v2473 = vld [vmem:[%s3 + $0x428] sm:$0xff]
  %v2474 = vld [vmem:[%s3 + $0x430] sm:$0xff]
  %v2475 = vld [vmem:[%s3 + $0x438] sm:$0xff]
  %v2476 = vld [vmem:[%s3 + $0x440] sm:$0xff]
  %v2477 = vld [vmem:[%s3 + $0x448] sm:$0xff]
  %v2478 = vld [vmem:[%s3 + $0x450] sm:$0xff]
  %v2479 = vld [vmem:[%s3 + $0x458] sm:$0xff]
  %v2480 = vld [vmem:[%s3 + $0x460] sm:$0xff]
  %v2481 = vld [vmem:[%s3 + $0x468] sm:$0xff]
  %v2482 = vld [vmem:[%s3 + $0x470] sm:$0xff]
  %v2483 = vld [vmem:[%s3 + $0x478] sm:$0xff]
  %v2484 = vld [vmem:[%s3 + $0x480] sm:$0xff]
  %v2485 = vld [vmem:[%s3 + $0x488] sm:$0xff]
  %v2486 = vld [vmem:[%s3 + $0x490] sm:$0xff]
  %v2487 = vld [vmem:[%s3 + $0x498] sm:$0xff]
  %v2488 = vld [vmem:[%s3 + $0x4a0] sm:$0xff]
  %v2489 = vld [vmem:[%s3 + $0x4a8] sm:$0xff]
  %v2490 = vld [vmem:[%s3 + $0x4b0] sm:$0xff]
  %v2491 = vld [vmem:[%s3 + $0x4b8] sm:$0xff]
  %v2492 = vld [vmem:[%s3 + $0x4c0] sm:$0xff]
  %v2493 = vld [vmem:[%s3 + $0x4c8] sm:$0xff]
  %v2494 = vld [vmem:[%s3 + $0x4d0] sm:$0xff]
  %v2495 = vld [vmem:[%s3 + $0x4d8] sm:$0xff]
  %v2496 = vld [vmem:[%s3 + $0x4e0] sm:$0xff]
  %v2497 = vld [vmem:[%s3 + $0x4e8] sm:$0xff]
  %v2498 = vld [vmem:[%s3 + $0x4f0] sm:$0xff]
  %v2499 = vld [vmem:[%s3 + $0x4f8] sm:$0xff]
  %v2500 = vld [vmem:[%s3 + $0x500] sm:$0xff]
  %v2501 = vld [vmem:[%s3 + $0x508] sm:$0xff]
  %v2502 = vld [vmem:[%s3 + $0x510] sm:$0xff]
  %v2503 = vld [vmem:[%s3 + $0x518] sm:$0xff]
  %v2504 = vld [vmem:[%s3 + $0x520] sm:$0xff]
  %v2505 = vld [vmem:[%s3 + $0x528] sm:$0xff]
  %v2506 = vld [vmem:[%s3 + $0x530] sm:$0xff]
  %v2507 = vld [vmem:[%s3 + $0x538] sm:$0xff]
  %v2508 = vld [vmem:[%s3 + $0x540] sm:$0xff]
  %v2509 = vld [vmem:[%s3 + $0x548] sm:$0xff]
  %v2510 = vld [vmem:[%s3 + $0x550] sm:$0xff]
  %v2511 = vld [vmem:[%s3 + $0x558] sm:$0xff]
  %v2512 = vld [vmem:[%s3 + $0x560] sm:$0xff]
  %v2513 = vld [vmem:[%s3 + $0x568] sm:$0xff]
  %v2514 = vld [vmem:[%s3 + $0x570] sm:$0xff]
  %v2515 = vld [vmem:[%s3 + $0x578] sm:$0xff]
  %v2516 = vld [vmem:[%s3 + $0x580] sm:$0xff]
  %v2517 = vld [vmem:[%s3 + $0x588] sm:$0xff]
  %v2518 = vld [vmem:[%s3 + $0x590] sm:$0xff]
  %v2519 = vld [vmem:[%s3 + $0x598] sm:$0xff]
  %v2520 = vld [vmem:[%s3 + $0x5a0] sm:$0xff]
  %v2521 = vld [vmem:[%s3 + $0x5a8] sm:$0xff]
  %v2522 = vld [vmem:[%s3 + $0x5b0] sm:$0xff]
  %v2523 = vld [vmem:[%s3 + $0x5b8] sm:$0xff]
  %v2524 = vld [vmem:[%s3 + $0x5c0] sm:$0xff]
  %v2525 = vld [vmem:[%s3 + $0x5c8] sm:$0xff]
  %v2526 = vld [vmem:[%s3 + $0x5d0] sm:$0xff]
  %v2527 = vld [vmem:[%s3 + $0x5d8] sm:$0xff]
  %v2528 = vld [vmem:[%s3 + $0x5e0] sm:$0xff]
  %v2529 = vld [vmem:[%s3 + $0x5e8] sm:$0xff]
  %v2530 = vld [vmem:[%s3 + $0x5f0] sm:$0xff]
  %v2531 = vld [vmem:[%s3 + $0x5f8] sm:$0xff]
  %v2532 = vld [vmem:[%s3 + $0x600] sm:$0xff]
  %v2533 = vld [vmem:[%s3 + $0x608] sm:$0xff]
  %v2534 = vld [vmem:[%s3 + $0x610] sm:$0xff]
  %v2535 = vld [vmem:[%s3 + $0x618] sm:$0xff]
  %v2536 = vld [vmem:[%s3 + $0x620] sm:$0xff]
  %v2537 = vld [vmem:[%s3 + $0x628] sm:$0xff]
  %v2538 = vld [vmem:[%s3 + $0x630] sm:$0xff]
  %v2539 = vld [vmem:[%s3 + $0x638] sm:$0xff]
  %v2540 = vld [vmem:[%s3 + $0x640] sm:$0xff]
  %v2541 = vld [vmem:[%s3 + $0x648] sm:$0xff]
  %v2542 = vld [vmem:[%s3 + $0x650] sm:$0xff]
  %v2543 = vld [vmem:[%s3 + $0x658] sm:$0xff]
  %v2544 = vld [vmem:[%s3 + $0x660] sm:$0xff]
  %v2545 = vld [vmem:[%s3 + $0x668] sm:$0xff]
  %v2546 = vld [vmem:[%s3 + $0x670] sm:$0xff]
  %v2547 = vld [vmem:[%s3 + $0x678] sm:$0xff]
  %v2548 = vld [vmem:[%s3 + $0x680] sm:$0xff]
  %v2549 = vld [vmem:[%s3 + $0x688] sm:$0xff]
  %v2550 = vld [vmem:[%s3 + $0x690] sm:$0xff]
  %v2551 = vld [vmem:[%s3 + $0x698] sm:$0xff]
  %v2552 = vld [vmem:[%s3 + $0x6a0] sm:$0xff]
  %v2553 = vld [vmem:[%s3 + $0x6a8] sm:$0xff]
  %v2554 = vld [vmem:[%s3 + $0x6b0] sm:$0xff]
  %v2555 = vld [vmem:[%s3 + $0x6b8] sm:$0xff]
  %v2556 = vld [vmem:[%s3 + $0x6c0] sm:$0xff]
  %v2557 = vld [vmem:[%s3 + $0x6c8] sm:$0xff]
  %v2558 = vld [vmem:[%s3 + $0x6d0] sm:$0xff]
  %v2559 = vld [vmem:[%s3 + $0x6d8] sm:$0xff]
  %v2560 = vld [vmem:[%s3 + $0x6e0] sm:$0xff]
  %v2561 = vld [vmem:[%s3 + $0x6e8] sm:$0xff]
  %v2562 = vld [vmem:[%s3 + $0x6f0] sm:$0xff]
  %v2563 = vld [vmem:[%s3 + $0x6f8] sm:$0xff]
  %v2564 = vld [vmem:[%s3 + $0x700] sm:$0xff]
  %v2565 = vld [vmem:[%s3 + $0x708] sm:$0xff]
  %v2566 = vld [vmem:[%s3 + $0x710] sm:$0xff]
  %v2567 = vld [vmem:[%s3 + $0x718] sm:$0xff]
  %v2568 = vld [vmem:[%s3 + $0x720] sm:$0xff]
  %v2569 = vld [vmem:[%s3 + $0x728] sm:$0xff]
  %v2570 = vld [vmem:[%s3 + $0x730] sm:$0xff]
  %v2571 = vld [vmem:[%s3 + $0x738] sm:$0xff]
  %v2572 = vld [vmem:[%s3 + $0x740] sm:$0xff]
  %v2573 = vld [vmem:[%s3 + $0x748] sm:$0xff]
  %v2574 = vld [vmem:[%s3 + $0x750] sm:$0xff]
  %v2575 = vld [vmem:[%s3 + $0x758] sm:$0xff]
  %v2576 = vld [vmem:[%s3 + $0x760] sm:$0xff]
  %v2577 = vld [vmem:[%s3 + $0x768] sm:$0xff]
  %v2578 = vld [vmem:[%s3 + $0x770] sm:$0xff]
  %v2579 = vld [vmem:[%s3 + $0x778] sm:$0xff]
  %v2580 = vld [vmem:[%s3 + $0x780] sm:$0xff]
  %v2581 = vld [vmem:[%s3 + $0x788] sm:$0xff]
  %v2582 = vld [vmem:[%s3 + $0x790] sm:$0xff]
  %v2583 = vld [vmem:[%s3 + $0x798] sm:$0xff]
  %v2584 = vld [vmem:[%s3 + $0x7a0] sm:$0xff]
  %v2585 = vld [vmem:[%s3 + $0x7a8] sm:$0xff]
  %v2586 = vld [vmem:[%s3 + $0x7b0] sm:$0xff]
  %v2587 = vld [vmem:[%s3 + $0x7b8] sm:$0xff]
  %v2588 = vld [vmem:[%s3 + $0x7c0] sm:$0xff]
  %v2589 = vld [vmem:[%s3 + $0x7c8] sm:$0xff]
  %v2590 = vld [vmem:[%s3 + $0x7d0] sm:$0xff]
  %v2591 = vld [vmem:[%s3 + $0x7d8] sm:$0xff]
  %v2592 = vld [vmem:[%s3 + $0x7e0] sm:$0xff]
  %v2593 = vld [vmem:[%s3 + $0x7e8] sm:$0xff]
  %v2594 = vld [vmem:[%s3 + $0x7f0] sm:$0xff]
  %v2595 = vld [vmem:[%s3 + $0x7f8] sm:$0xff]
  %v2596 = vld [vmem:[%s4] sm:$0xff]
  %v2598 = vperm.slane %v2596, 0
  %v2599 = vperm.slane %v2596, 1
  %v2600 = vperm.slane %v2596, 2
  %v2601 = vperm.slane %v2596, 3
  %v2602 = vperm.slane %v2596, 4
  %v2603 = vperm.slane %v2596, 5
  %v2604 = vperm.slane %v2596, 6
  %v2605 = vperm.slane %v2596, 7
  %v2870 = vunpack.c.l.b16 %v2340
  %v2871 = vunpack.c.h.b16 %v2340
  %v2872 = vunpack.c.l.b16 %v2341
  %v2873 = vunpack.c.h.b16 %v2341
  %v2874 = vunpack.c.l.b16 %v2342
  %v2875 = vunpack.c.h.b16 %v2342
  %v2876 = vunpack.c.l.b16 %v2343
  %v2877 = vunpack.c.h.b16 %v2343
  %v2878 = vunpack.c.l.b16 %v2344
  %v2879 = vunpack.c.h.b16 %v2344
  %v2880 = vunpack.c.l.b16 %v2345
  %v2881 = vunpack.c.h.b16 %v2345
  %v2882 = vunpack.c.l.b16 %v2346
  %v2883 = vunpack.c.h.b16 %v2346
  %v2884 = vunpack.c.l.b16 %v2347
  %v2885 = vunpack.c.h.b16 %v2347
  %v2886 = vunpack.c.l.b16 %v2348
  %v2887 = vunpack.c.h.b16 %v2348
  %v2888 = vunpack.c.l.b16 %v2349
  %v2889 = vunpack.c.h.b16 %v2349
  %v2890 = vunpack.c.l.b16 %v2350
  %v2891 = vunpack.c.h.b16 %v2350
  %v2892 = vunpack.c.l.b16 %v2351
  %v2893 = vunpack.c.h.b16 %v2351
  %v2894 = vunpack.c.l.b16 %v2352
  %v2895 = vunpack.c.h.b16 %v2352
  %v2896 = vunpack.c.l.b16 %v2353
  %v2897 = vunpack.c.h.b16 %v2353
  %v2898 = vunpack.c.l.b16 %v2354
  %v2899 = vunpack.c.h.b16 %v2354
  %v2900 = vunpack.c.l.b16 %v2355
  %v2901 = vunpack.c.h.b16 %v2355
  %v2902 = vunpack.c.l.b16 %v2356
  %v2903 = vunpack.c.h.b16 %v2356
  %v2904 = vunpack.c.l.b16 %v2357
  %v2905 = vunpack.c.h.b16 %v2357
  %v2906 = vunpack.c.l.b16 %v2358
  %v2907 = vunpack.c.h.b16 %v2358
  %v2908 = vunpack.c.l.b16 %v2359
  %v2909 = vunpack.c.h.b16 %v2359
  %v2910 = vunpack.c.l.b16 %v2360
  %v2911 = vunpack.c.h.b16 %v2360
  %v2912 = vunpack.c.l.b16 %v2361
  %v2913 = vunpack.c.h.b16 %v2361
  %v2914 = vunpack.c.l.b16 %v2362
  %v2915 = vunpack.c.h.b16 %v2362
  %v2916 = vunpack.c.l.b16 %v2363
  %v2917 = vunpack.c.h.b16 %v2363
  %v2918 = vunpack.c.l.b16 %v2364
  %v2919 = vunpack.c.h.b16 %v2364
  %v2920 = vunpack.c.l.b16 %v2365
  %v2921 = vunpack.c.h.b16 %v2365
  %v2922 = vunpack.c.l.b16 %v2366
  %v2923 = vunpack.c.h.b16 %v2366
  %v2924 = vunpack.c.l.b16 %v2367
  %v2925 = vunpack.c.h.b16 %v2367
  %v2926 = vunpack.c.l.b16 %v2368
  %v2927 = vunpack.c.h.b16 %v2368
  %v2928 = vunpack.c.l.b16 %v2369
  %v2929 = vunpack.c.h.b16 %v2369
  %v2930 = vunpack.c.l.b16 %v2370
  %v2931 = vunpack.c.h.b16 %v2370
  %v2932 = vunpack.c.l.b16 %v2371
  %v2933 = vunpack.c.h.b16 %v2371
  %v2934 = vunpack.c.l.b16 %v2372
  %v2935 = vunpack.c.h.b16 %v2372
  %v2936 = vunpack.c.l.b16 %v2373
  %v2937 = vunpack.c.h.b16 %v2373
  %v2938 = vunpack.c.l.b16 %v2374
  %v2939 = vunpack.c.h.b16 %v2374
  %v2940 = vunpack.c.l.b16 %v2375
  %v2941 = vunpack.c.h.b16 %v2375
  %v2942 = vunpack.c.l.b16 %v2376
  %v2943 = vunpack.c.h.b16 %v2376
  %v2944 = vunpack.c.l.b16 %v2377
  %v2945 = vunpack.c.h.b16 %v2377
  %v2946 = vunpack.c.l.b16 %v2378
  %v2947 = vunpack.c.h.b16 %v2378
  %v2948 = vunpack.c.l.b16 %v2379
  %v2949 = vunpack.c.h.b16 %v2379
  %v2950 = vunpack.c.l.b16 %v2380
  %v2951 = vunpack.c.h.b16 %v2380
  %v2952 = vunpack.c.l.b16 %v2381
  %v2953 = vunpack.c.h.b16 %v2381
  %v2954 = vunpack.c.l.b16 %v2382
  %v2955 = vunpack.c.h.b16 %v2382
  %v2956 = vunpack.c.l.b16 %v2383
  %v2957 = vunpack.c.h.b16 %v2383
  %v2958 = vunpack.c.l.b16 %v2384
  %v2959 = vunpack.c.h.b16 %v2384
  %v2960 = vunpack.c.l.b16 %v2385
  %v2961 = vunpack.c.h.b16 %v2385
  %v2962 = vunpack.c.l.b16 %v2386
  %v2963 = vunpack.c.h.b16 %v2386
  %v2964 = vunpack.c.l.b16 %v2387
  %v2965 = vunpack.c.h.b16 %v2387
  %v2966 = vunpack.c.l.b16 %v2388
  %v2967 = vunpack.c.h.b16 %v2388
  %v2968 = vunpack.c.l.b16 %v2389
  %v2969 = vunpack.c.h.b16 %v2389
  %v2970 = vunpack.c.l.b16 %v2390
  %v2971 = vunpack.c.h.b16 %v2390
  %v2972 = vunpack.c.l.b16 %v2391
  %v2973 = vunpack.c.h.b16 %v2391
  %v2974 = vunpack.c.l.b16 %v2392
  %v2975 = vunpack.c.h.b16 %v2392
  %v2976 = vunpack.c.l.b16 %v2393
  %v2977 = vunpack.c.h.b16 %v2393
  %v2978 = vunpack.c.l.b16 %v2394
  %v2979 = vunpack.c.h.b16 %v2394
  %v2980 = vunpack.c.l.b16 %v2395
  %v2981 = vunpack.c.h.b16 %v2395
  %v2982 = vunpack.c.l.b16 %v2396
  %v2983 = vunpack.c.h.b16 %v2396
  %v2984 = vunpack.c.l.b16 %v2397
  %v2985 = vunpack.c.h.b16 %v2397
  %v2986 = vunpack.c.l.b16 %v2398
  %v2987 = vunpack.c.h.b16 %v2398
  %v2988 = vunpack.c.l.b16 %v2399
  %v2989 = vunpack.c.h.b16 %v2399
  %v2990 = vunpack.c.l.b16 %v2400
  %v2991 = vunpack.c.h.b16 %v2400
  %v2992 = vunpack.c.l.b16 %v2401
  %v2993 = vunpack.c.h.b16 %v2401
  %v2994 = vunpack.c.l.b16 %v2402
  %v2995 = vunpack.c.h.b16 %v2402
  %v2996 = vunpack.c.l.b16 %v2403
  %v2997 = vunpack.c.h.b16 %v2403
  %v2998 = vunpack.c.l.b16 %v2404
  %v2999 = vunpack.c.h.b16 %v2404
  %v3000 = vunpack.c.l.b16 %v2405
  %v3001 = vunpack.c.h.b16 %v2405
  %v3002 = vunpack.c.l.b16 %v2406
  %v3003 = vunpack.c.h.b16 %v2406
  %v3004 = vunpack.c.l.b16 %v2407
  %v3005 = vunpack.c.h.b16 %v2407
  %v3006 = vunpack.c.l.b16 %v2408
  %v3007 = vunpack.c.h.b16 %v2408
  %v3008 = vunpack.c.l.b16 %v2409
  %v3009 = vunpack.c.h.b16 %v2409
  %v3010 = vunpack.c.l.b16 %v2410
  %v3011 = vunpack.c.h.b16 %v2410
  %v3012 = vunpack.c.l.b16 %v2411
  %v3013 = vunpack.c.h.b16 %v2411
  %v3014 = vunpack.c.l.b16 %v2412
  %v3015 = vunpack.c.h.b16 %v2412
  %v3016 = vunpack.c.l.b16 %v2413
  %v3017 = vunpack.c.h.b16 %v2413
  %v3018 = vunpack.c.l.b16 %v2414
  %v3019 = vunpack.c.h.b16 %v2414
  %v3020 = vunpack.c.l.b16 %v2415
  %v3021 = vunpack.c.h.b16 %v2415
  %v3022 = vunpack.c.l.b16 %v2416
  %v3023 = vunpack.c.h.b16 %v2416
  %v3024 = vunpack.c.l.b16 %v2417
  %v3025 = vunpack.c.h.b16 %v2417
  %v3026 = vunpack.c.l.b16 %v2418
  %v3027 = vunpack.c.h.b16 %v2418
  %v3028 = vunpack.c.l.b16 %v2419
  %v3029 = vunpack.c.h.b16 %v2419
  %v3030 = vunpack.c.l.b16 %v2420
  %v3031 = vunpack.c.h.b16 %v2420
  %v3032 = vunpack.c.l.b16 %v2421
  %v3033 = vunpack.c.h.b16 %v2421
  %v3034 = vunpack.c.l.b16 %v2422
  %v3035 = vunpack.c.h.b16 %v2422
  %v3036 = vunpack.c.l.b16 %v2423
  %v3037 = vunpack.c.h.b16 %v2423
  %v3038 = vunpack.c.l.b16 %v2424
  %v3039 = vunpack.c.h.b16 %v2424
  %v3040 = vunpack.c.l.b16 %v2425
  %v3041 = vunpack.c.h.b16 %v2425
  %v3042 = vunpack.c.l.b16 %v2426
  %v3043 = vunpack.c.h.b16 %v2426
  %v3044 = vunpack.c.l.b16 %v2427
  %v3045 = vunpack.c.h.b16 %v2427
  %v3046 = vunpack.c.l.b16 %v2428
  %v3047 = vunpack.c.h.b16 %v2428
  %v3048 = vunpack.c.l.b16 %v2429
  %v3049 = vunpack.c.h.b16 %v2429
  %v3050 = vunpack.c.l.b16 %v2430
  %v3051 = vunpack.c.h.b16 %v2430
  %v3052 = vunpack.c.l.b16 %v2431
  %v3053 = vunpack.c.h.b16 %v2431
  %v3054 = vunpack.c.l.b16 %v2432
  %v3055 = vunpack.c.h.b16 %v2432
  %v3056 = vunpack.c.l.b16 %v2433
  %v3057 = vunpack.c.h.b16 %v2433
  %v3058 = vunpack.c.l.b16 %v2434
  %v3059 = vunpack.c.h.b16 %v2434
  %v3060 = vunpack.c.l.b16 %v2435
  %v3061 = vunpack.c.h.b16 %v2435
  %v3062 = vunpack.c.l.b16 %v2436
  %v3063 = vunpack.c.h.b16 %v2436
  %v3064 = vunpack.c.l.b16 %v2437
  %v3065 = vunpack.c.h.b16 %v2437
  %v3066 = vunpack.c.l.b16 %v2438
  %v3067 = vunpack.c.h.b16 %v2438
  %v3068 = vunpack.c.l.b16 %v2439
  %v3069 = vunpack.c.h.b16 %v2439
  %v3070 = vunpack.c.l.b16 %v2440
  %v3071 = vunpack.c.h.b16 %v2440
  %v3072 = vunpack.c.l.b16 %v2441
  %v3073 = vunpack.c.h.b16 %v2441
  %v3074 = vunpack.c.l.b16 %v2442
  %v3075 = vunpack.c.h.b16 %v2442
  %v3076 = vunpack.c.l.b16 %v2443
  %v3077 = vunpack.c.h.b16 %v2443
  %v3078 = vunpack.c.l.b16 %v2444
  %v3079 = vunpack.c.h.b16 %v2444
  %v3080 = vunpack.c.l.b16 %v2445
  %v3081 = vunpack.c.h.b16 %v2445
  %v3082 = vunpack.c.l.b16 %v2446
  %v3083 = vunpack.c.h.b16 %v2446
  %v3084 = vunpack.c.l.b16 %v2447
  %v3085 = vunpack.c.h.b16 %v2447
  %v3086 = vunpack.c.l.b16 %v2448
  %v3087 = vunpack.c.h.b16 %v2448
  %v3088 = vunpack.c.l.b16 %v2449
  %v3089 = vunpack.c.h.b16 %v2449
  %v3090 = vunpack.c.l.b16 %v2450
  %v3091 = vunpack.c.h.b16 %v2450
  %v3092 = vunpack.c.l.b16 %v2451
  %v3093 = vunpack.c.h.b16 %v2451
  %v3094 = vunpack.c.l.b16 %v2452
  %v3095 = vunpack.c.h.b16 %v2452
  %v3096 = vunpack.c.l.b16 %v2453
  %v3097 = vunpack.c.h.b16 %v2453
  %v3098 = vunpack.c.l.b16 %v2454
  %v3099 = vunpack.c.h.b16 %v2454
  %v3100 = vunpack.c.l.b16 %v2455
  %v3101 = vunpack.c.h.b16 %v2455
  %v3102 = vunpack.c.l.b16 %v2456
  %v3103 = vunpack.c.h.b16 %v2456
  %v3104 = vunpack.c.l.b16 %v2457
  %v3105 = vunpack.c.h.b16 %v2457
  %v3106 = vunpack.c.l.b16 %v2458
  %v3107 = vunpack.c.h.b16 %v2458
  %v3108 = vunpack.c.l.b16 %v2459
  %v3109 = vunpack.c.h.b16 %v2459
  %v3110 = vunpack.c.l.b16 %v2460
  %v3111 = vunpack.c.h.b16 %v2460
  %v3112 = vunpack.c.l.b16 %v2461
  %v3113 = vunpack.c.h.b16 %v2461
  %v3114 = vunpack.c.l.b16 %v2462
  %v3115 = vunpack.c.h.b16 %v2462
  %v3116 = vunpack.c.l.b16 %v2463
  %v3117 = vunpack.c.h.b16 %v2463
  %v3118 = vunpack.c.l.b16 %v2464
  %v3119 = vunpack.c.h.b16 %v2464
  %v3120 = vunpack.c.l.b16 %v2465
  %v3121 = vunpack.c.h.b16 %v2465
  %v3122 = vunpack.c.l.b16 %v2466
  %v3123 = vunpack.c.h.b16 %v2466
  %v3124 = vunpack.c.l.b16 %v2467
  %v3125 = vunpack.c.h.b16 %v2467
  %v3126 = vunpack.c.l.b16 %v2468
  %v3127 = vunpack.c.h.b16 %v2468
  %v3128 = vunpack.c.l.b16 %v2469
  %v3129 = vunpack.c.h.b16 %v2469
  %v3130 = vunpack.c.l.b16 %v2470
  %v3131 = vunpack.c.h.b16 %v2470
  %v3132 = vunpack.c.l.b16 %v2471
  %v3133 = vunpack.c.h.b16 %v2471
  %v3134 = vunpack.c.l.b16 %v2472
  %v3135 = vunpack.c.h.b16 %v2472
  %v3136 = vunpack.c.l.b16 %v2473
  %v3137 = vunpack.c.h.b16 %v2473
  %v3138 = vunpack.c.l.b16 %v2474
  %v3139 = vunpack.c.h.b16 %v2474
  %v3140 = vunpack.c.l.b16 %v2475
  %v3141 = vunpack.c.h.b16 %v2475
  %v3142 = vunpack.c.l.b16 %v2476
  %v3143 = vunpack.c.h.b16 %v2476
  %v3144 = vunpack.c.l.b16 %v2477
  %v3145 = vunpack.c.h.b16 %v2477
  %v3146 = vunpack.c.l.b16 %v2478
  %v3147 = vunpack.c.h.b16 %v2478
  %v3148 = vunpack.c.l.b16 %v2479
  %v3149 = vunpack.c.h.b16 %v2479
  %v3150 = vunpack.c.l.b16 %v2480
  %v3151 = vunpack.c.h.b16 %v2480
  %v3152 = vunpack.c.l.b16 %v2481
  %v3153 = vunpack.c.h.b16 %v2481
  %v3154 = vunpack.c.l.b16 %v2482
  %v3155 = vunpack.c.h.b16 %v2482
  %v3156 = vunpack.c.l.b16 %v2483
  %v3157 = vunpack.c.h.b16 %v2483
  %v3158 = vunpack.c.l.b16 %v2484
  %v3159 = vunpack.c.h.b16 %v2484
  %v3160 = vunpack.c.l.b16 %v2485
  %v3161 = vunpack.c.h.b16 %v2485
  %v3162 = vunpack.c.l.b16 %v2486
  %v3163 = vunpack.c.h.b16 %v2486
  %v3164 = vunpack.c.l.b16 %v2487
  %v3165 = vunpack.c.h.b16 %v2487
  %v3166 = vunpack.c.l.b16 %v2488
  %v3167 = vunpack.c.h.b16 %v2488
  %v3168 = vunpack.c.l.b16 %v2489
  %v3169 = vunpack.c.h.b16 %v2489
  %v3170 = vunpack.c.l.b16 %v2490
  %v3171 = vunpack.c.h.b16 %v2490
  %v3172 = vunpack.c.l.b16 %v2491
  %v3173 = vunpack.c.h.b16 %v2491
  %v3174 = vunpack.c.l.b16 %v2492
  %v3175 = vunpack.c.h.b16 %v2492
  %v3176 = vunpack.c.l.b16 %v2493
  %v3177 = vunpack.c.h.b16 %v2493
  %v3178 = vunpack.c.l.b16 %v2494
  %v3179 = vunpack.c.h.b16 %v2494
  %v3180 = vunpack.c.l.b16 %v2495
  %v3181 = vunpack.c.h.b16 %v2495
  %v3182 = vunpack.c.l.b16 %v2496
  %v3183 = vunpack.c.h.b16 %v2496
  %v3184 = vunpack.c.l.b16 %v2497
  %v3185 = vunpack.c.h.b16 %v2497
  %v3186 = vunpack.c.l.b16 %v2498
  %v3187 = vunpack.c.h.b16 %v2498
  %v3188 = vunpack.c.l.b16 %v2499
  %v3189 = vunpack.c.h.b16 %v2499
  %v3190 = vunpack.c.l.b16 %v2500
  %v3191 = vunpack.c.h.b16 %v2500
  %v3192 = vunpack.c.l.b16 %v2501
  %v3193 = vunpack.c.h.b16 %v2501
  %v3194 = vunpack.c.l.b16 %v2502
  %v3195 = vunpack.c.h.b16 %v2502
  %v3196 = vunpack.c.l.b16 %v2503
  %v3197 = vunpack.c.h.b16 %v2503
  %v3198 = vunpack.c.l.b16 %v2504
  %v3199 = vunpack.c.h.b16 %v2504
  %v3200 = vunpack.c.l.b16 %v2505
  %v3201 = vunpack.c.h.b16 %v2505
  %v3202 = vunpack.c.l.b16 %v2506
  %v3203 = vunpack.c.h.b16 %v2506
  %v3204 = vunpack.c.l.b16 %v2507
  %v3205 = vunpack.c.h.b16 %v2507
  %v3206 = vunpack.c.l.b16 %v2508
  %v3207 = vunpack.c.h.b16 %v2508
  %v3208 = vunpack.c.l.b16 %v2509
  %v3209 = vunpack.c.h.b16 %v2509
  %v3210 = vunpack.c.l.b16 %v2510
  %v3211 = vunpack.c.h.b16 %v2510
  %v3212 = vunpack.c.l.b16 %v2511
  %v3213 = vunpack.c.h.b16 %v2511
  %v3214 = vunpack.c.l.b16 %v2512
  %v3215 = vunpack.c.h.b16 %v2512
  %v3216 = vunpack.c.l.b16 %v2513
  %v3217 = vunpack.c.h.b16 %v2513
  %v3218 = vunpack.c.l.b16 %v2514
  %v3219 = vunpack.c.h.b16 %v2514
  %v3220 = vunpack.c.l.b16 %v2515
  %v3221 = vunpack.c.h.b16 %v2515
  %v3222 = vunpack.c.l.b16 %v2516
  %v3223 = vunpack.c.h.b16 %v2516
  %v3224 = vunpack.c.l.b16 %v2517
  %v3225 = vunpack.c.h.b16 %v2517
  %v3226 = vunpack.c.l.b16 %v2518
  %v3227 = vunpack.c.h.b16 %v2518
  %v3228 = vunpack.c.l.b16 %v2519
  %v3229 = vunpack.c.h.b16 %v2519
  %v3230 = vunpack.c.l.b16 %v2520
  %v3231 = vunpack.c.h.b16 %v2520
  %v3232 = vunpack.c.l.b16 %v2521
  %v3233 = vunpack.c.h.b16 %v2521
  %v3234 = vunpack.c.l.b16 %v2522
  %v3235 = vunpack.c.h.b16 %v2522
  %v3236 = vunpack.c.l.b16 %v2523
  %v3237 = vunpack.c.h.b16 %v2523
  %v3238 = vunpack.c.l.b16 %v2524
  %v3239 = vunpack.c.h.b16 %v2524
  %v3240 = vunpack.c.l.b16 %v2525
  %v3241 = vunpack.c.h.b16 %v2525
  %v3242 = vunpack.c.l.b16 %v2526
  %v3243 = vunpack.c.h.b16 %v2526
  %v3244 = vunpack.c.l.b16 %v2527
  %v3245 = vunpack.c.h.b16 %v2527
  %v3246 = vunpack.c.l.b16 %v2528
  %v3247 = vunpack.c.h.b16 %v2528
  %v3248 = vunpack.c.l.b16 %v2529
  %v3249 = vunpack.c.h.b16 %v2529
  %v3250 = vunpack.c.l.b16 %v2530
  %v3251 = vunpack.c.h.b16 %v2530
  %v3252 = vunpack.c.l.b16 %v2531
  %v3253 = vunpack.c.h.b16 %v2531
  %v3254 = vunpack.c.l.b16 %v2532
  %v3255 = vunpack.c.h.b16 %v2532
  %v3256 = vunpack.c.l.b16 %v2533
  %v3257 = vunpack.c.h.b16 %v2533
  %v3258 = vunpack.c.l.b16 %v2534
  %v3259 = vunpack.c.h.b16 %v2534
  %v3260 = vunpack.c.l.b16 %v2535
  %v3261 = vunpack.c.h.b16 %v2535
  %v3262 = vunpack.c.l.b16 %v2536
  %v3263 = vunpack.c.h.b16 %v2536
  %v3264 = vunpack.c.l.b16 %v2537
  %v3265 = vunpack.c.h.b16 %v2537
  %v3266 = vunpack.c.l.b16 %v2538
  %v3267 = vunpack.c.h.b16 %v2538
  %v3268 = vunpack.c.l.b16 %v2539
  %v3269 = vunpack.c.h.b16 %v2539
  %v3270 = vunpack.c.l.b16 %v2540
  %v3271 = vunpack.c.h.b16 %v2540
  %v3272 = vunpack.c.l.b16 %v2541
  %v3273 = vunpack.c.h.b16 %v2541
  %v3274 = vunpack.c.l.b16 %v2542
  %v3275 = vunpack.c.h.b16 %v2542
  %v3276 = vunpack.c.l.b16 %v2543
  %v3277 = vunpack.c.h.b16 %v2543
  %v3278 = vunpack.c.l.b16 %v2544
  %v3279 = vunpack.c.h.b16 %v2544
  %v3280 = vunpack.c.l.b16 %v2545
  %v3281 = vunpack.c.h.b16 %v2545
  %v3282 = vunpack.c.l.b16 %v2546
  %v3283 = vunpack.c.h.b16 %v2546
  %v3284 = vunpack.c.l.b16 %v2547
  %v3285 = vunpack.c.h.b16 %v2547
  %v3286 = vunpack.c.l.b16 %v2548
  %v3287 = vunpack.c.h.b16 %v2548
  %v3288 = vunpack.c.l.b16 %v2549
  %v3289 = vunpack.c.h.b16 %v2549
  %v3290 = vunpack.c.l.b16 %v2550
  %v3291 = vunpack.c.h.b16 %v2550
  %v3292 = vunpack.c.l.b16 %v2551
  %v3293 = vunpack.c.h.b16 %v2551
  %v3294 = vunpack.c.l.b16 %v2552
  %v3295 = vunpack.c.h.b16 %v2552
  %v3296 = vunpack.c.l.b16 %v2553
  %v3297 = vunpack.c.h.b16 %v2553
  %v3298 = vunpack.c.l.b16 %v2554
  %v3299 = vunpack.c.h.b16 %v2554
  %v3300 = vunpack.c.l.b16 %v2555
  %v3301 = vunpack.c.h.b16 %v2555
  %v3302 = vunpack.c.l.b16 %v2556
  %v3303 = vunpack.c.h.b16 %v2556
  %v3304 = vunpack.c.l.b16 %v2557
  %v3305 = vunpack.c.h.b16 %v2557
  %v3306 = vunpack.c.l.b16 %v2558
  %v3307 = vunpack.c.h.b16 %v2558
  %v3308 = vunpack.c.l.b16 %v2559
  %v3309 = vunpack.c.h.b16 %v2559
  %v3310 = vunpack.c.l.b16 %v2560
  %v3311 = vunpack.c.h.b16 %v2560
  %v3312 = vunpack.c.l.b16 %v2561
  %v3313 = vunpack.c.h.b16 %v2561
  %v3314 = vunpack.c.l.b16 %v2562
  %v3315 = vunpack.c.h.b16 %v2562
  %v3316 = vunpack.c.l.b16 %v2563
  %v3317 = vunpack.c.h.b16 %v2563
  %v3318 = vunpack.c.l.b16 %v2564
  %v3319 = vunpack.c.h.b16 %v2564
  %v3320 = vunpack.c.l.b16 %v2565
  %v3321 = vunpack.c.h.b16 %v2565
  %v3322 = vunpack.c.l.b16 %v2566
  %v3323 = vunpack.c.h.b16 %v2566
  %v3324 = vunpack.c.l.b16 %v2567
  %v3325 = vunpack.c.h.b16 %v2567
  %v3326 = vunpack.c.l.b16 %v2568
  %v3327 = vunpack.c.h.b16 %v2568
  %v3328 = vunpack.c.l.b16 %v2569
  %v3329 = vunpack.c.h.b16 %v2569
  %v3330 = vunpack.c.l.b16 %v2570
  %v3331 = vunpack.c.h.b16 %v2570
  %v3332 = vunpack.c.l.b16 %v2571
  %v3333 = vunpack.c.h.b16 %v2571
  %v3334 = vunpack.c.l.b16 %v2572
  %v3335 = vunpack.c.h.b16 %v2572
  %v3336 = vunpack.c.l.b16 %v2573
  %v3337 = vunpack.c.h.b16 %v2573
  %v3338 = vunpack.c.l.b16 %v2574
  %v3339 = vunpack.c.h.b16 %v2574
  %v3340 = vunpack.c.l.b16 %v2575
  %v3341 = vunpack.c.h.b16 %v2575
  %v3342 = vunpack.c.l.b16 %v2576
  %v3343 = vunpack.c.h.b16 %v2576
  %v3344 = vunpack.c.l.b16 %v2577
  %v3345 = vunpack.c.h.b16 %v2577
  %v3346 = vunpack.c.l.b16 %v2578
  %v3347 = vunpack.c.h.b16 %v2578
  %v3348 = vunpack.c.l.b16 %v2579
  %v3349 = vunpack.c.h.b16 %v2579
  %v3350 = vunpack.c.l.b16 %v2580
  %v3351 = vunpack.c.h.b16 %v2580
  %v3352 = vunpack.c.l.b16 %v2581
  %v3353 = vunpack.c.h.b16 %v2581
  %v3354 = vunpack.c.l.b16 %v2582
  %v3355 = vunpack.c.h.b16 %v2582
  %v3356 = vunpack.c.l.b16 %v2583
  %v3357 = vunpack.c.h.b16 %v2583
  %v3358 = vunpack.c.l.b16 %v2584
  %v3359 = vunpack.c.h.b16 %v2584
  %v3360 = vunpack.c.l.b16 %v2585
  %v3361 = vunpack.c.h.b16 %v2585
  %v3362 = vunpack.c.l.b16 %v2586
  %v3363 = vunpack.c.h.b16 %v2586
  %v3364 = vunpack.c.l.b16 %v2587
  %v3365 = vunpack.c.h.b16 %v2587
  %v3366 = vunpack.c.l.b16 %v2588
  %v3367 = vunpack.c.h.b16 %v2588
  %v3368 = vunpack.c.l.b16 %v2589
  %v3369 = vunpack.c.h.b16 %v2589
  %v3370 = vunpack.c.l.b16 %v2590
  %v3371 = vunpack.c.h.b16 %v2590
  %v3372 = vunpack.c.l.b16 %v2591
  %v3373 = vunpack.c.h.b16 %v2591
  %v3374 = vunpack.c.l.b16 %v2592
  %v3375 = vunpack.c.h.b16 %v2592
  %v3376 = vunpack.c.l.b16 %v2593
  %v3377 = vunpack.c.h.b16 %v2593
  %v3378 = vunpack.c.l.b16 %v2594
  %v3379 = vunpack.c.h.b16 %v2594
  %v3380 = vunpack.c.l.b16 %v2595
  %v3381 = vunpack.c.h.b16 %v2595
  %v3382 = vpack.c.b16 %v2878, %v2870
  %v3383 = vpack.c.b16 %v2879, %v2871
  %v3384 = vpack.c.b16 %v2880, %v2872
  %v3385 = vpack.c.b16 %v2881, %v2873
  %v3386 = vpack.c.b16 %v2882, %v2874
  %v3387 = vpack.c.b16 %v2883, %v2875
  %v3388 = vpack.c.b16 %v2884, %v2876
  %v3389 = vpack.c.b16 %v2885, %v2877
  %v3390 = vpack.c.b16 %v2894, %v2886
  %v3391 = vpack.c.b16 %v2895, %v2887
  %v3392 = vpack.c.b16 %v2896, %v2888
  %v3393 = vpack.c.b16 %v2897, %v2889
  %v3394 = vpack.c.b16 %v2898, %v2890
  %v3395 = vpack.c.b16 %v2899, %v2891
  %v3396 = vpack.c.b16 %v2900, %v2892
  %v3397 = vpack.c.b16 %v2901, %v2893
  %v3398 = vpack.c.b16 %v2910, %v2902
  %v3399 = vpack.c.b16 %v2911, %v2903
  %v3400 = vpack.c.b16 %v2912, %v2904
  %v3401 = vpack.c.b16 %v2913, %v2905
  %v3402 = vpack.c.b16 %v2914, %v2906
  %v3403 = vpack.c.b16 %v2915, %v2907
  %v3404 = vpack.c.b16 %v2916, %v2908
  %v3405 = vpack.c.b16 %v2917, %v2909
  %v3406 = vpack.c.b16 %v2926, %v2918
  %v3407 = vpack.c.b16 %v2927, %v2919
  %v3408 = vpack.c.b16 %v2928, %v2920
  %v3409 = vpack.c.b16 %v2929, %v2921
  %v3410 = vpack.c.b16 %v2930, %v2922
  %v3411 = vpack.c.b16 %v2931, %v2923
  %v3412 = vpack.c.b16 %v2932, %v2924
  %v3413 = vpack.c.b16 %v2933, %v2925
  %v3414 = vpack.c.b16 %v2942, %v2934
  %v3415 = vpack.c.b16 %v2943, %v2935
  %v3416 = vpack.c.b16 %v2944, %v2936
  %v3417 = vpack.c.b16 %v2945, %v2937
  %v3418 = vpack.c.b16 %v2946, %v2938
  %v3419 = vpack.c.b16 %v2947, %v2939
  %v3420 = vpack.c.b16 %v2948, %v2940
  %v3421 = vpack.c.b16 %v2949, %v2941
  %v3422 = vpack.c.b16 %v2958, %v2950
  %v3423 = vpack.c.b16 %v2959, %v2951
  %v3424 = vpack.c.b16 %v2960, %v2952
  %v3425 = vpack.c.b16 %v2961, %v2953
  %v3426 = vpack.c.b16 %v2962, %v2954
  %v3427 = vpack.c.b16 %v2963, %v2955
  %v3428 = vpack.c.b16 %v2964, %v2956
  %v3429 = vpack.c.b16 %v2965, %v2957
  %v3430 = vpack.c.b16 %v2974, %v2966
  %v3431 = vpack.c.b16 %v2975, %v2967
  %v3432 = vpack.c.b16 %v2976, %v2968
  %v3433 = vpack.c.b16 %v2977, %v2969
  %v3434 = vpack.c.b16 %v2978, %v2970
  %v3435 = vpack.c.b16 %v2979, %v2971
  %v3436 = vpack.c.b16 %v2980, %v2972
  %v3437 = vpack.c.b16 %v2981, %v2973
  %v3438 = vpack.c.b16 %v2990, %v2982
  %v3439 = vpack.c.b16 %v2991, %v2983
  %v3440 = vpack.c.b16 %v2992, %v2984
  %v3441 = vpack.c.b16 %v2993, %v2985
  %v3442 = vpack.c.b16 %v2994, %v2986
  %v3443 = vpack.c.b16 %v2995, %v2987
  %v3444 = vpack.c.b16 %v2996, %v2988
  %v3445 = vpack.c.b16 %v2997, %v2989
  %v3446 = vpack.c.b16 %v3006, %v2998
  %v3447 = vpack.c.b16 %v3007, %v2999
  %v3448 = vpack.c.b16 %v3008, %v3000
  %v3449 = vpack.c.b16 %v3009, %v3001
  %v3450 = vpack.c.b16 %v3010, %v3002
  %v3451 = vpack.c.b16 %v3011, %v3003
  %v3452 = vpack.c.b16 %v3012, %v3004
  %v3453 = vpack.c.b16 %v3013, %v3005
  %v3454 = vpack.c.b16 %v3022, %v3014
  %v3455 = vpack.c.b16 %v3023, %v3015
  %v3456 = vpack.c.b16 %v3024, %v3016
  %v3457 = vpack.c.b16 %v3025, %v3017
  %v3458 = vpack.c.b16 %v3026, %v3018
  %v3459 = vpack.c.b16 %v3027, %v3019
  %v3460 = vpack.c.b16 %v3028, %v3020
  %v3461 = vpack.c.b16 %v3029, %v3021
  %v3462 = vpack.c.b16 %v3038, %v3030
  %v3463 = vpack.c.b16 %v3039, %v3031
  %v3464 = vpack.c.b16 %v3040, %v3032
  %v3465 = vpack.c.b16 %v3041, %v3033
  %v3466 = vpack.c.b16 %v3042, %v3034
  %v3467 = vpack.c.b16 %v3043, %v3035
  %v3468 = vpack.c.b16 %v3044, %v3036
  %v3469 = vpack.c.b16 %v3045, %v3037
  %v3470 = vpack.c.b16 %v3054, %v3046
  %v3471 = vpack.c.b16 %v3055, %v3047
  %v3472 = vpack.c.b16 %v3056, %v3048
  %v3473 = vpack.c.b16 %v3057, %v3049
  %v3474 = vpack.c.b16 %v3058, %v3050
  %v3475 = vpack.c.b16 %v3059, %v3051
  %v3476 = vpack.c.b16 %v3060, %v3052
  %v3477 = vpack.c.b16 %v3061, %v3053
  %v3478 = vpack.c.b16 %v3070, %v3062
  %v3479 = vpack.c.b16 %v3071, %v3063
  %v3480 = vpack.c.b16 %v3072, %v3064
  %v3481 = vpack.c.b16 %v3073, %v3065
  %v3482 = vpack.c.b16 %v3074, %v3066
  %v3483 = vpack.c.b16 %v3075, %v3067
  %v3484 = vpack.c.b16 %v3076, %v3068
  %v3485 = vpack.c.b16 %v3077, %v3069
  %v3486 = vpack.c.b16 %v3086, %v3078
  %v3487 = vpack.c.b16 %v3087, %v3079
  %v3488 = vpack.c.b16 %v3088, %v3080
  %v3489 = vpack.c.b16 %v3089, %v3081
  %v3490 = vpack.c.b16 %v3090, %v3082
  %v3491 = vpack.c.b16 %v3091, %v3083
  %v3492 = vpack.c.b16 %v3092, %v3084
  %v3493 = vpack.c.b16 %v3093, %v3085
  %v3494 = vpack.c.b16 %v3102, %v3094
  %v3495 = vpack.c.b16 %v3103, %v3095
  %v3496 = vpack.c.b16 %v3104, %v3096
  %v3497 = vpack.c.b16 %v3105, %v3097
  %v3498 = vpack.c.b16 %v3106, %v3098
  %v3499 = vpack.c.b16 %v3107, %v3099
  %v3500 = vpack.c.b16 %v3108, %v3100
  %v3501 = vpack.c.b16 %v3109, %v3101
  %v3502 = vpack.c.b16 %v3118, %v3110
  %v3503 = vpack.c.b16 %v3119, %v3111
  %v3504 = vpack.c.b16 %v3120, %v3112
  %v3505 = vpack.c.b16 %v3121, %v3113
  %v3506 = vpack.c.b16 %v3122, %v3114
  %v3507 = vpack.c.b16 %v3123, %v3115
  %v3508 = vpack.c.b16 %v3124, %v3116
  %v3509 = vpack.c.b16 %v3125, %v3117
  %v3510 = vpack.c.b16 %v3134, %v3126
  %v3511 = vpack.c.b16 %v3135, %v3127
  %v3512 = vpack.c.b16 %v3136, %v3128
  %v3513 = vpack.c.b16 %v3137, %v3129
  %v3514 = vpack.c.b16 %v3138, %v3130
  %v3515 = vpack.c.b16 %v3139, %v3131
  %v3516 = vpack.c.b16 %v3140, %v3132
  %v3517 = vpack.c.b16 %v3141, %v3133
  %v3518 = vpack.c.b16 %v3150, %v3142
  %v3519 = vpack.c.b16 %v3151, %v3143
  %v3520 = vpack.c.b16 %v3152, %v3144
  %v3521 = vpack.c.b16 %v3153, %v3145
  %v3522 = vpack.c.b16 %v3154, %v3146
  %v3523 = vpack.c.b16 %v3155, %v3147
  %v3524 = vpack.c.b16 %v3156, %v3148
  %v3525 = vpack.c.b16 %v3157, %v3149
  %v3526 = vpack.c.b16 %v3166, %v3158
  %v3527 = vpack.c.b16 %v3167, %v3159
  %v3528 = vpack.c.b16 %v3168, %v3160
  %v3529 = vpack.c.b16 %v3169, %v3161
  %v3530 = vpack.c.b16 %v3170, %v3162
  %v3531 = vpack.c.b16 %v3171, %v3163
  %v3532 = vpack.c.b16 %v3172, %v3164
  %v3533 = vpack.c.b16 %v3173, %v3165
  %v3534 = vpack.c.b16 %v3182, %v3174
  %v3535 = vpack.c.b16 %v3183, %v3175
  %v3536 = vpack.c.b16 %v3184, %v3176
  %v3537 = vpack.c.b16 %v3185, %v3177
  %v3538 = vpack.c.b16 %v3186, %v3178
  %v3539 = vpack.c.b16 %v3187, %v3179
  %v3540 = vpack.c.b16 %v3188, %v3180
  %v3541 = vpack.c.b16 %v3189, %v3181
  %v3542 = vpack.c.b16 %v3198, %v3190
  %v3543 = vpack.c.b16 %v3199, %v3191
  %v3544 = vpack.c.b16 %v3200, %v3192
  %v3545 = vpack.c.b16 %v3201, %v3193
  %v3546 = vpack.c.b16 %v3202, %v3194
  %v3547 = vpack.c.b16 %v3203, %v3195
  %v3548 = vpack.c.b16 %v3204, %v3196
  %v3549 = vpack.c.b16 %v3205, %v3197
  %v3550 = vpack.c.b16 %v3214, %v3206
  %v3551 = vpack.c.b16 %v3215, %v3207
  %v3552 = vpack.c.b16 %v3216, %v3208
  %v3553 = vpack.c.b16 %v3217, %v3209
  %v3554 = vpack.c.b16 %v3218, %v3210
  %v3555 = vpack.c.b16 %v3219, %v3211
  %v3556 = vpack.c.b16 %v3220, %v3212
  %v3557 = vpack.c.b16 %v3221, %v3213
  %v3558 = vpack.c.b16 %v3230, %v3222
  %v3559 = vpack.c.b16 %v3231, %v3223
  %v3560 = vpack.c.b16 %v3232, %v3224
  %v3561 = vpack.c.b16 %v3233, %v3225
  %v3562 = vpack.c.b16 %v3234, %v3226
  %v3563 = vpack.c.b16 %v3235, %v3227
  %v3564 = vpack.c.b16 %v3236, %v3228
  %v3565 = vpack.c.b16 %v3237, %v3229
  %v3566 = vpack.c.b16 %v3246, %v3238
  %v3567 = vpack.c.b16 %v3247, %v3239
  %v3568 = vpack.c.b16 %v3248, %v3240
  %v3569 = vpack.c.b16 %v3249, %v3241
  %v3570 = vpack.c.b16 %v3250, %v3242
  %v3571 = vpack.c.b16 %v3251, %v3243
  %v3572 = vpack.c.b16 %v3252, %v3244
  %v3573 = vpack.c.b16 %v3253, %v3245
  %v3574 = vpack.c.b16 %v3262, %v3254
  %v3575 = vpack.c.b16 %v3263, %v3255
  %v3576 = vpack.c.b16 %v3264, %v3256
  %v3577 = vpack.c.b16 %v3265, %v3257
  %v3578 = vpack.c.b16 %v3266, %v3258
  %v3579 = vpack.c.b16 %v3267, %v3259
  %v3580 = vpack.c.b16 %v3268, %v3260
  %v3581 = vpack.c.b16 %v3269, %v3261
  %v3582 = vpack.c.b16 %v3278, %v3270
  %v3583 = vpack.c.b16 %v3279, %v3271
  %v3584 = vpack.c.b16 %v3280, %v3272
  %v3585 = vpack.c.b16 %v3281, %v3273
  %v3586 = vpack.c.b16 %v3282, %v3274
  %v3587 = vpack.c.b16 %v3283, %v3275
  %v3588 = vpack.c.b16 %v3284, %v3276
  %v3589 = vpack.c.b16 %v3285, %v3277
  %v3590 = vpack.c.b16 %v3294, %v3286
  %v3591 = vpack.c.b16 %v3295, %v3287
  %v3592 = vpack.c.b16 %v3296, %v3288
  %v3593 = vpack.c.b16 %v3297, %v3289
  %v3594 = vpack.c.b16 %v3298, %v3290
  %v3595 = vpack.c.b16 %v3299, %v3291
  %v3596 = vpack.c.b16 %v3300, %v3292
  %v3597 = vpack.c.b16 %v3301, %v3293
  %v3598 = vpack.c.b16 %v3310, %v3302
  %v3599 = vpack.c.b16 %v3311, %v3303
  %v3600 = vpack.c.b16 %v3312, %v3304
  %v3601 = vpack.c.b16 %v3313, %v3305
  %v3602 = vpack.c.b16 %v3314, %v3306
  %v3603 = vpack.c.b16 %v3315, %v3307
  %v3604 = vpack.c.b16 %v3316, %v3308
  %v3605 = vpack.c.b16 %v3317, %v3309
  %v3606 = vpack.c.b16 %v3326, %v3318
  %v3607 = vpack.c.b16 %v3327, %v3319
  %v3608 = vpack.c.b16 %v3328, %v3320
  %v3609 = vpack.c.b16 %v3329, %v3321
  %v3610 = vpack.c.b16 %v3330, %v3322
  %v3611 = vpack.c.b16 %v3331, %v3323
  %v3612 = vpack.c.b16 %v3332, %v3324
  %v3613 = vpack.c.b16 %v3333, %v3325
  %v3614 = vpack.c.b16 %v3342, %v3334
  %v3615 = vpack.c.b16 %v3343, %v3335
  %v3616 = vpack.c.b16 %v3344, %v3336
  %v3617 = vpack.c.b16 %v3345, %v3337
  %v3618 = vpack.c.b16 %v3346, %v3338
  %v3619 = vpack.c.b16 %v3347, %v3339
  %v3620 = vpack.c.b16 %v3348, %v3340
  %v3621 = vpack.c.b16 %v3349, %v3341
  %v3622 = vpack.c.b16 %v3358, %v3350
  %v3623 = vpack.c.b16 %v3359, %v3351
  %v3624 = vpack.c.b16 %v3360, %v3352
  %v3625 = vpack.c.b16 %v3361, %v3353
  %v3626 = vpack.c.b16 %v3362, %v3354
  %v3627 = vpack.c.b16 %v3363, %v3355
  %v3628 = vpack.c.b16 %v3364, %v3356
  %v3629 = vpack.c.b16 %v3365, %v3357
  %v3630 = vpack.c.b16 %v3374, %v3366
  %v3631 = vpack.c.b16 %v3375, %v3367
  %v3632 = vpack.c.b16 %v3376, %v3368
  %v3633 = vpack.c.b16 %v3377, %v3369
  %v3634 = vpack.c.b16 %v3378, %v3370
  %v3635 = vpack.c.b16 %v3379, %v3371
  %v3636 = vpack.c.b16 %v3380, %v3372
  %v3637 = vpack.c.b16 %v3381, %v3373
  %3894 = vmatpush.bf16.msra.mxu0 %v3438
  %3895 = vmatpush.bf16.msra.mxu0 %v3430
  %3896 = vmatpush.bf16.msra.mxu0 %v3422
  %3897 = vmatpush.bf16.msra.mxu0 %v3414
  %3898 = vmatpush.bf16.msra.mxu0 %v3406
  %3899 = vmatpush.bf16.msra.mxu0 %v3398
  %3900 = vmatpush.bf16.msra.mxu0 %v3390
  %3901 = vmatpush.bf16.msra.mxu0 %v3382
  %3902 = vmatmul.bf16.gmra.mxu0 %v2308
  %v3903 = vpop.f32.mrf.mxu0
  %v3904 = vadd.f32 %v2598, %v3903
  %v3905 = vpop.f32.mrf.mxu0
  %v3906 = vadd.f32 %v2598, %v3905
  %3907 = vmatmul.bf16.gmra.mxu0 %v2312
  %v3908 = vpop.f32.mrf.mxu0
  %v3909 = vadd.f32 %v2598, %v3908
  %v3910 = vpop.f32.mrf.mxu0
  %v3911 = vadd.f32 %v2598, %v3910
  %3912 = vmatmul.bf16.gmra.mxu0 %v2316
  %v3913 = vpop.f32.mrf.mxu0
  %v3914 = vadd.f32 %v2598, %v3913
  %v3915 = vpop.f32.mrf.mxu0
  %v3916 = vadd.f32 %v2598, %v3915
  %3917 = vmatmul.bf16.gmra.mxu0 %v2320
  %v3918 = vpop.f32.mrf.mxu0
  %v3919 = vadd.f32 %v2598, %v3918
  %v3920 = vpop.f32.mrf.mxu0
  %v3921 = vadd.f32 %v2598, %v3920
  %3922 = vmatmul.bf16.gmra.mxu0 %v2324
  %v3923 = vpop.f32.mrf.mxu0
  %v3924 = vadd.f32 %v2598, %v3923
  %v3925 = vpop.f32.mrf.mxu0
  %v3926 = vadd.f32 %v2598, %v3925
  %3927 = vmatmul.bf16.gmra.mxu0 %v2328
  %v3928 = vpop.f32.mrf.mxu0
  %v3929 = vadd.f32 %v2598, %v3928
  %v3930 = vpop.f32.mrf.mxu0
  %v3931 = vadd.f32 %v2598, %v3930
  %3932 = vmatmul.bf16.gmra.mxu0 %v2332
  %v3933 = vpop.f32.mrf.mxu0
  %v3934 = vadd.f32 %v2598, %v3933
  %v3935 = vpop.f32.mrf.mxu0
  %v3936 = vadd.f32 %v2598, %v3935
  %3937 = vmatmul.bf16.gmra.mxu0 %v2336
  %v3938 = vpop.f32.mrf.mxu0
  %v3939 = vadd.f32 %v2598, %v3938
  %v3940 = vpop.f32.mrf.mxu0
  %v3941 = vadd.f32 %v2598, %v3940
  %3942 = vdwg.mxu0
  %3943 = vmatpush.bf16.msra.mxu0 %v3502
  %3944 = vmatpush.bf16.msra.mxu0 %v3494
  %3945 = vmatpush.bf16.msra.mxu0 %v3486
  %3946 = vmatpush.bf16.msra.mxu0 %v3478
  %3947 = vmatpush.bf16.msra.mxu0 %v3470
  %3948 = vmatpush.bf16.msra.mxu0 %v3462
  %3949 = vmatpush.bf16.msra.mxu0 %v3454
  %3950 = vmatpush.bf16.msra.mxu0 %v3446
  %3951 = vmatmul.bf16.gmra.mxu0 %v2309
  %v3952 = vpop.f32.mrf.mxu0
  %v3953 = vadd.f32 %v3904, %v3952
  %v3954 = vpop.f32.mrf.mxu0
  %v3955 = vadd.f32 %v3906, %v3954
  %3956 = vmatmul.bf16.gmra.mxu0 %v2313
  %v3957 = vpop.f32.mrf.mxu0
  %v3958 = vadd.f32 %v3909, %v3957
  %v3959 = vpop.f32.mrf.mxu0
  %v3960 = vadd.f32 %v3911, %v3959
  %3961 = vmatmul.bf16.gmra.mxu0 %v2317
  %v3962 = vpop.f32.mrf.mxu0
  %v3963 = vadd.f32 %v3914, %v3962
  %v3964 = vpop.f32.mrf.mxu0
  %v3965 = vadd.f32 %v3916, %v3964
  %3966 = vmatmul.bf16.gmra.mxu0 %v2321
  %v3967 = vpop.f32.mrf.mxu0
  %v3968 = vadd.f32 %v3919, %v3967
  %v3969 = vpop.f32.mrf.mxu0
  %v3970 = vadd.f32 %v3921, %v3969
  %3971 = vmatmul.bf16.gmra.mxu0 %v2325
  %v3972 = vpop.f32.mrf.mxu0
  %v3973 = vadd.f32 %v3924, %v3972
  %v3974 = vpop.f32.mrf.mxu0
  %v3975 = vadd.f32 %v3926, %v3974
  %3976 = vmatmul.bf16.gmra.mxu0 %v2329
  %v3977 = vpop.f32.mrf.mxu0
  %v3978 = vadd.f32 %v3929, %v3977
  %v3979 = vpop.f32.mrf.mxu0
  %v3980 = vadd.f32 %v3931, %v3979
  %3981 = vmatmul.bf16.gmra.mxu0 %v2333
  %v3982 = vpop.f32.mrf.mxu0
  %v3983 = vadd.f32 %v3934, %v3982
  %v3984 = vpop.f32.mrf.mxu0
  %v3985 = vadd.f32 %v3936, %v3984
  %3986 = vmatmul.bf16.gmra.mxu0 %v2337
  %v3987 = vpop.f32.mrf.mxu0
  %v3988 = vadd.f32 %v3939, %v3987
  %v3989 = vpop.f32.mrf.mxu0
  %v3990 = vadd.f32 %v3941, %v3989
  %3991 = vdwg.mxu0
  %3992 = vmatpush.bf16.msra.mxu0 %v3566
  %3993 = vmatpush.bf16.msra.mxu0 %v3558
  %3994 = vmatpush.bf16.msra.mxu0 %v3550
  %3995 = vmatpush.bf16.msra.mxu0 %v3542
  %3996 = vmatpush.bf16.msra.mxu0 %v3534
  %3997 = vmatpush.bf16.msra.mxu0 %v3526
  %3998 = vmatpush.bf16.msra.mxu0 %v3518
  %3999 = vmatpush.bf16.msra.mxu0 %v3510
  %4000 = vmatmul.bf16.gmra.mxu0 %v2310
  %v4001 = vpop.f32.mrf.mxu0
  %v4002 = vadd.f32 %v3953, %v4001
  %v4003 = vpop.f32.mrf.mxu0
  %v4004 = vadd.f32 %v3955, %v4003
  %4005 = vmatmul.bf16.gmra.mxu0 %v2314
  %v4006 = vpop.f32.mrf.mxu0
  %v4007 = vadd.f32 %v3958, %v4006
  %v4008 = vpop.f32.mrf.mxu0
  %v4009 = vadd.f32 %v3960, %v4008
  %4010 = vmatmul.bf16.gmra.mxu0 %v2318
  %v4011 = vpop.f32.mrf.mxu0
  %v4012 = vadd.f32 %v3963, %v4011
  %v4013 = vpop.f32.mrf.mxu0
  %v4014 = vadd.f32 %v3965, %v4013
  %4015 = vmatmul.bf16.gmra.mxu0 %v2322
  %v4016 = vpop.f32.mrf.mxu0
  %v4017 = vadd.f32 %v3968, %v4016
  %v4018 = vpop.f32.mrf.mxu0
  %v4019 = vadd.f32 %v3970, %v4018
  %4020 = vmatmul.bf16.gmra.mxu0 %v2326
  %v4021 = vpop.f32.mrf.mxu0
  %v4022 = vadd.f32 %v3973, %v4021
  %v4023 = vpop.f32.mrf.mxu0
  %v4024 = vadd.f32 %v3975, %v4023
  %4025 = vmatmul.bf16.gmra.mxu0 %v2330
  %v4026 = vpop.f32.mrf.mxu0
  %v4027 = vadd.f32 %v3978, %v4026
  %v4028 = vpop.f32.mrf.mxu0
  %v4029 = vadd.f32 %v3980, %v4028
  %4030 = vmatmul.bf16.gmra.mxu0 %v2334
  %v4031 = vpop.f32.mrf.mxu0
  %v4032 = vadd.f32 %v3983, %v4031
  %v4033 = vpop.f32.mrf.mxu0
  %v4034 = vadd.f32 %v3985, %v4033
  %4035 = vmatmul.bf16.gmra.mxu0 %v2338
  %v4036 = vpop.f32.mrf.mxu0
  %v4037 = vadd.f32 %v3988, %v4036
  %v4038 = vpop.f32.mrf.mxu0
  %v4039 = vadd.f32 %v3990, %v4038
  %4040 = vdwg.mxu0
  %4041 = vmatpush.bf16.msra.mxu0 %v3630
  %4042 = vmatpush.bf16.msra.mxu0 %v3622
  %4043 = vmatpush.bf16.msra.mxu0 %v3614
  %4044 = vmatpush.bf16.msra.mxu0 %v3606
  %4045 = vmatpush.bf16.msra.mxu0 %v3598
  %4046 = vmatpush.bf16.msra.mxu0 %v3590
  %4047 = vmatpush.bf16.msra.mxu0 %v3582
  %4048 = vmatpush.bf16.msra.mxu0 %v3574
  %4049 = vmatmul.bf16.gmra.mxu0 %v2311
  %v4050 = vpop.f32.mrf.mxu0
  %v4051 = vadd.f32 %v4002, %v4050
  %v4052 = vpop.f32.mrf.mxu0
  %v4053 = vadd.f32 %v4004, %v4052
  %4054 = vmatmul.bf16.gmra.mxu0 %v2315
  %v4055 = vpop.f32.mrf.mxu0
  %v4056 = vadd.f32 %v4007, %v4055
  %v4057 = vpop.f32.mrf.mxu0
  %v4058 = vadd.f32 %v4009, %v4057
  %4059 = vmatmul.bf16.gmra.mxu0 %v2319
  %v4060 = vpop.f32.mrf.mxu0
  %v4061 = vadd.f32 %v4012, %v4060
  %v4062 = vpop.f32.mrf.mxu0
  %v4063 = vadd.f32 %v4014, %v4062
  %4064 = vmatmul.bf16.gmra.mxu0 %v2323
  %v4065 = vpop.f32.mrf.mxu0
  %v4066 = vadd.f32 %v4017, %v4065
  %v4067 = vpop.f32.mrf.mxu0
  %v4068 = vadd.f32 %v4019, %v4067
  %4069 = vmatmul.bf16.gmra.mxu0 %v2327
  %v4070 = vpop.f32.mrf.mxu0
  %v4071 = vadd.f32 %v4022, %v4070
  %v4072 = vpop.f32.mrf.mxu0
  %v4073 = vadd.f32 %v4024, %v4072
  %4074 = vmatmul.bf16.gmra.mxu0 %v2331
  %v4075 = vpop.f32.mrf.mxu0
  %v4076 = vadd.f32 %v4027, %v4075
  %v4077 = vpop.f32.mrf.mxu0
  %v4078 = vadd.f32 %v4029, %v4077
  %4079 = vmatmul.bf16.gmra.mxu0 %v2335
  %v4080 = vpop.f32.mrf.mxu0
  %v4081 = vadd.f32 %v4032, %v4080
  %v4082 = vpop.f32.mrf.mxu0
  %v4083 = vadd.f32 %v4034, %v4082
  %4084 = vmatmul.bf16.gmra.mxu0 %v2339
  %v4085 = vpop.f32.mrf.mxu0
  %v4086 = vadd.f32 %v4037, %v4085
  %v4087 = vpop.f32.mrf.mxu0
  %v4088 = vadd.f32 %v4039, %v4087
  %4089 = vdwg.mxu0
  %4090 = vmatpush.bf16.msra.mxu0 %v3439
  %4091 = vmatpush.bf16.msra.mxu0 %v3431
  %4092 = vmatpush.bf16.msra.mxu0 %v3423
  %4093 = vmatpush.bf16.msra.mxu0 %v3415
  %4094 = vmatpush.bf16.msra.mxu0 %v3407
  %4095 = vmatpush.bf16.msra.mxu0 %v3399
  %4096 = vmatpush.bf16.msra.mxu0 %v3391
  %4097 = vmatpush.bf16.msra.mxu0 %v3383
  %4098 = vmatmul.bf16.gmra.mxu0 %v2308
  %v4099 = vpop.f32.mrf.mxu0
  %v4100 = vadd.f32 %v2599, %v4099
  %v4101 = vpop.f32.mrf.mxu0
  %v4102 = vadd.f32 %v2599, %v4101
  %4103 = vmatmul.bf16.gmra.mxu0 %v2312
  %v4104 = vpop.f32.mrf.mxu0
  %v4105 = vadd.f32 %v2599, %v4104
  %v4106 = vpop.f32.mrf.mxu0
  %v4107 = vadd.f32 %v2599, %v4106
  %4108 = vmatmul.bf16.gmra.mxu0 %v2316
  %v4109 = vpop.f32.mrf.mxu0
  %v4110 = vadd.f32 %v2599, %v4109
  %v4111 = vpop.f32.mrf.mxu0
  %v4112 = vadd.f32 %v2599, %v4111
  %4113 = vmatmul.bf16.gmra.mxu0 %v2320
  %v4114 = vpop.f32.mrf.mxu0
  %v4115 = vadd.f32 %v2599, %v4114
  %v4116 = vpop.f32.mrf.mxu0
  %v4117 = vadd.f32 %v2599, %v4116
  %4118 = vmatmul.bf16.gmra.mxu0 %v2324
  %v4119 = vpop.f32.mrf.mxu0
  %v4120 = vadd.f32 %v2599, %v4119
  %v4121 = vpop.f32.mrf.mxu0
  %v4122 = vadd.f32 %v2599, %v4121
  %4123 = vmatmul.bf16.gmra.mxu0 %v2328
  %v4124 = vpop.f32.mrf.mxu0
  %v4125 = vadd.f32 %v2599, %v4124
  %v4126 = vpop.f32.mrf.mxu0
  %v4127 = vadd.f32 %v2599, %v4126
  %4128 = vmatmul.bf16.gmra.mxu0 %v2332
  %v4129 = vpop.f32.mrf.mxu0
  %v4130 = vadd.f32 %v2599, %v4129
  %v4131 = vpop.f32.mrf.mxu0
  %v4132 = vadd.f32 %v2599, %v4131
  %4133 = vmatmul.bf16.gmra.mxu0 %v2336
  %v4134 = vpop.f32.mrf.mxu0
  %v4135 = vadd.f32 %v2599, %v4134
  %v4136 = vpop.f32.mrf.mxu0
  %v4137 = vadd.f32 %v2599, %v4136
  %4138 = vdwg.mxu0
  %4139 = vmatpush.bf16.msra.mxu0 %v3503
  %4140 = vmatpush.bf16.msra.mxu0 %v3495
  %4141 = vmatpush.bf16.msra.mxu0 %v3487
  %4142 = vmatpush.bf16.msra.mxu0 %v3479
  %4143 = vmatpush.bf16.msra.mxu0 %v3471
  %4144 = vmatpush.bf16.msra.mxu0 %v3463
  %4145 = vmatpush.bf16.msra.mxu0 %v3455
  %4146 = vmatpush.bf16.msra.mxu0 %v3447
  %4147 = vmatmul.bf16.gmra.mxu0 %v2309
  %v4148 = vpop.f32.mrf.mxu0
  %v4149 = vadd.f32 %v4100, %v4148
  %v4150 = vpop.f32.mrf.mxu0
  %v4151 = vadd.f32 %v4102, %v4150
  %4152 = vmatmul.bf16.gmra.mxu0 %v2313
  %v4153 = vpop.f32.mrf.mxu0
  %v4154 = vadd.f32 %v4105, %v4153
  %v4155 = vpop.f32.mrf.mxu0
  %v4156 = vadd.f32 %v4107, %v4155
  %4157 = vmatmul.bf16.gmra.mxu0 %v2317
  %v4158 = vpop.f32.mrf.mxu0
  %v4159 = vadd.f32 %v4110, %v4158
  %v4160 = vpop.f32.mrf.mxu0
  %v4161 = vadd.f32 %v4112, %v4160
  %4162 = vmatmul.bf16.gmra.mxu0 %v2321
  %v4163 = vpop.f32.mrf.mxu0
  %v4164 = vadd.f32 %v4115, %v4163
  %v4165 = vpop.f32.mrf.mxu0
  %v4166 = vadd.f32 %v4117, %v4165
  %4167 = vmatmul.bf16.gmra.mxu0 %v2325
  %v4168 = vpop.f32.mrf.mxu0
  %v4169 = vadd.f32 %v4120, %v4168
  %v4170 = vpop.f32.mrf.mxu0
  %v4171 = vadd.f32 %v4122, %v4170
  %4172 = vmatmul.bf16.gmra.mxu0 %v2329
  %v4173 = vpop.f32.mrf.mxu0
  %v4174 = vadd.f32 %v4125, %v4173
  %v4175 = vpop.f32.mrf.mxu0
  %v4176 = vadd.f32 %v4127, %v4175
  %4177 = vmatmul.bf16.gmra.mxu0 %v2333
  %v4178 = vpop.f32.mrf.mxu0
  %v4179 = vadd.f32 %v4130, %v4178
  %v4180 = vpop.f32.mrf.mxu0
  %v4181 = vadd.f32 %v4132, %v4180
  %4182 = vmatmul.bf16.gmra.mxu0 %v2337
  %v4183 = vpop.f32.mrf.mxu0
  %v4184 = vadd.f32 %v4135, %v4183
  %v4185 = vpop.f32.mrf.mxu0
  %v4186 = vadd.f32 %v4137, %v4185
  %4187 = vdwg.mxu0
  %4188 = vmatpush.bf16.msra.mxu0 %v3567
  %4189 = vmatpush.bf16.msra.mxu0 %v3559
  %4190 = vmatpush.bf16.msra.mxu0 %v3551
  %4191 = vmatpush.bf16.msra.mxu0 %v3543
  %4192 = vmatpush.bf16.msra.mxu0 %v3535
  %4193 = vmatpush.bf16.msra.mxu0 %v3527
  %4194 = vmatpush.bf16.msra.mxu0 %v3519
  %4195 = vmatpush.bf16.msra.mxu0 %v3511
  %4196 = vmatmul.bf16.gmra.mxu0 %v2310
  %v4197 = vpop.f32.mrf.mxu0
  %v4198 = vadd.f32 %v4149, %v4197
  %v4199 = vpop.f32.mrf.mxu0
  %v4200 = vadd.f32 %v4151, %v4199
  %4201 = vmatmul.bf16.gmra.mxu0 %v2314
  %v4202 = vpop.f32.mrf.mxu0
  %v4203 = vadd.f32 %v4154, %v4202
  %v4204 = vpop.f32.mrf.mxu0
  %v4205 = vadd.f32 %v4156, %v4204
  %4206 = vmatmul.bf16.gmra.mxu0 %v2318
  %v4207 = vpop.f32.mrf.mxu0
  %v4208 = vadd.f32 %v4159, %v4207
  %v4209 = vpop.f32.mrf.mxu0
  %v4210 = vadd.f32 %v4161, %v4209
  %4211 = vmatmul.bf16.gmra.mxu0 %v2322
  %v4212 = vpop.f32.mrf.mxu0
  %v4213 = vadd.f32 %v4164, %v4212
  %v4214 = vpop.f32.mrf.mxu0
  %v4215 = vadd.f32 %v4166, %v4214
  %4216 = vmatmul.bf16.gmra.mxu0 %v2326
  %v4217 = vpop.f32.mrf.mxu0
  %v4218 = vadd.f32 %v4169, %v4217
  %v4219 = vpop.f32.mrf.mxu0
  %v4220 = vadd.f32 %v4171, %v4219
  %4221 = vmatmul.bf16.gmra.mxu0 %v2330
  %v4222 = vpop.f32.mrf.mxu0
  %v4223 = vadd.f32 %v4174, %v4222
  %v4224 = vpop.f32.mrf.mxu0
  %v4225 = vadd.f32 %v4176, %v4224
  %4226 = vmatmul.bf16.gmra.mxu0 %v2334
  %v4227 = vpop.f32.mrf.mxu0
  %v4228 = vadd.f32 %v4179, %v4227
  %v4229 = vpop.f32.mrf.mxu0
  %v4230 = vadd.f32 %v4181, %v4229
  %4231 = vmatmul.bf16.gmra.mxu0 %v2338
  %v4232 = vpop.f32.mrf.mxu0
  %v4233 = vadd.f32 %v4184, %v4232
  %v4234 = vpop.f32.mrf.mxu0
  %v4235 = vadd.f32 %v4186, %v4234
  %4236 = vdwg.mxu0
  %4237 = vmatpush.bf16.msra.mxu0 %v3631
  %4238 = vmatpush.bf16.msra.mxu0 %v3623
  %4239 = vmatpush.bf16.msra.mxu0 %v3615
  %4240 = vmatpush.bf16.msra.mxu0 %v3607
  %4241 = vmatpush.bf16.msra.mxu0 %v3599
  %4242 = vmatpush.bf16.msra.mxu0 %v3591
  %4243 = vmatpush.bf16.msra.mxu0 %v3583
  %4244 = vmatpush.bf16.msra.mxu0 %v3575
  %4245 = vmatmul.bf16.gmra.mxu0 %v2311
  %v4246 = vpop.f32.mrf.mxu0
  %v4247 = vadd.f32 %v4198, %v4246
  %v4248 = vpop.f32.mrf.mxu0
  %v4249 = vadd.f32 %v4200, %v4248
  %4250 = vmatmul.bf16.gmra.mxu0 %v2315
  %v4251 = vpop.f32.mrf.mxu0
  %v4252 = vadd.f32 %v4203, %v4251
  %v4253 = vpop.f32.mrf.mxu0
  %v4254 = vadd.f32 %v4205, %v4253
  %4255 = vmatmul.bf16.gmra.mxu0 %v2319
  %v4256 = vpop.f32.mrf.mxu0
  %v4257 = vadd.f32 %v4208, %v4256
  %v4258 = vpop.f32.mrf.mxu0
  %v4259 = vadd.f32 %v4210, %v4258
  %4260 = vmatmul.bf16.gmra.mxu0 %v2323
  %v4261 = vpop.f32.mrf.mxu0
  %v4262 = vadd.f32 %v4213, %v4261
  %v4263 = vpop.f32.mrf.mxu0
  %v4264 = vadd.f32 %v4215, %v4263
  %4265 = vmatmul.bf16.gmra.mxu0 %v2327
  %v4266 = vpop.f32.mrf.mxu0
  %v4267 = vadd.f32 %v4218, %v4266
  %v4268 = vpop.f32.mrf.mxu0
  %v4269 = vadd.f32 %v4220, %v4268
  %4270 = vmatmul.bf16.gmra.mxu0 %v2331
  %v4271 = vpop.f32.mrf.mxu0
  %v4272 = vadd.f32 %v4223, %v4271
  %v4273 = vpop.f32.mrf.mxu0
  %v4274 = vadd.f32 %v4225, %v4273
  %4275 = vmatmul.bf16.gmra.mxu0 %v2335
  %v4276 = vpop.f32.mrf.mxu0
  %v4277 = vadd.f32 %v4228, %v4276
  %v4278 = vpop.f32.mrf.mxu0
  %v4279 = vadd.f32 %v4230, %v4278
  %4280 = vmatmul.bf16.gmra.mxu0 %v2339
  %v4281 = vpop.f32.mrf.mxu0
  %v4282 = vadd.f32 %v4233, %v4281
  %v4283 = vpop.f32.mrf.mxu0
  %v4284 = vadd.f32 %v4235, %v4283
  %4285 = vdwg.mxu0
  %4286 = vmatpush.bf16.msra.mxu0 %v3440
  %4287 = vmatpush.bf16.msra.mxu0 %v3432
  %4288 = vmatpush.bf16.msra.mxu0 %v3424
  %4289 = vmatpush.bf16.msra.mxu0 %v3416
  %4290 = vmatpush.bf16.msra.mxu0 %v3408
  %4291 = vmatpush.bf16.msra.mxu0 %v3400
  %4292 = vmatpush.bf16.msra.mxu0 %v3392
  %4293 = vmatpush.bf16.msra.mxu0 %v3384
  %4294 = vmatmul.bf16.gmra.mxu0 %v2308
  %v4295 = vpop.f32.mrf.mxu0
  %v4296 = vadd.f32 %v2600, %v4295
  %v4297 = vpop.f32.mrf.mxu0
  %v4298 = vadd.f32 %v2600, %v4297
  %4299 = vmatmul.bf16.gmra.mxu0 %v2312
  %v4300 = vpop.f32.mrf.mxu0
  %v4301 = vadd.f32 %v2600, %v4300
  %v4302 = vpop.f32.mrf.mxu0
  %v4303 = vadd.f32 %v2600, %v4302
  %4304 = vmatmul.bf16.gmra.mxu0 %v2316
  %v4305 = vpop.f32.mrf.mxu0
  %v4306 = vadd.f32 %v2600, %v4305
  %v4307 = vpop.f32.mrf.mxu0
  %v4308 = vadd.f32 %v2600, %v4307
  %4309 = vmatmul.bf16.gmra.mxu0 %v2320
  %v4310 = vpop.f32.mrf.mxu0
  %v4311 = vadd.f32 %v2600, %v4310
  %v4312 = vpop.f32.mrf.mxu0
  %v4313 = vadd.f32 %v2600, %v4312
  %4314 = vmatmul.bf16.gmra.mxu0 %v2324
  %v4315 = vpop.f32.mrf.mxu0
  %v4316 = vadd.f32 %v2600, %v4315
  %v4317 = vpop.f32.mrf.mxu0
  %v4318 = vadd.f32 %v2600, %v4317
  %4319 = vmatmul.bf16.gmra.mxu0 %v2328
  %v4320 = vpop.f32.mrf.mxu0
  %v4321 = vadd.f32 %v2600, %v4320
  %v4322 = vpop.f32.mrf.mxu0
  %v4323 = vadd.f32 %v2600, %v4322
  %4324 = vmatmul.bf16.gmra.mxu0 %v2332
  %v4325 = vpop.f32.mrf.mxu0
  %v4326 = vadd.f32 %v2600, %v4325
  %v4327 = vpop.f32.mrf.mxu0
  %v4328 = vadd.f32 %v2600, %v4327
  %4329 = vmatmul.bf16.gmra.mxu0 %v2336
  %v4330 = vpop.f32.mrf.mxu0
  %v4331 = vadd.f32 %v2600, %v4330
  %v4332 = vpop.f32.mrf.mxu0
  %v4333 = vadd.f32 %v2600, %v4332
  %4334 = vdwg.mxu0
  %4335 = vmatpush.bf16.msra.mxu0 %v3504
  %4336 = vmatpush.bf16.msra.mxu0 %v3496
  %4337 = vmatpush.bf16.msra.mxu0 %v3488
  %4338 = vmatpush.bf16.msra.mxu0 %v3480
  %4339 = vmatpush.bf16.msra.mxu0 %v3472
  %4340 = vmatpush.bf16.msra.mxu0 %v3464
  %4341 = vmatpush.bf16.msra.mxu0 %v3456
  %4342 = vmatpush.bf16.msra.mxu0 %v3448
  %4343 = vmatmul.bf16.gmra.mxu0 %v2309
  %v4344 = vpop.f32.mrf.mxu0
  %v4345 = vadd.f32 %v4296, %v4344
  %v4346 = vpop.f32.mrf.mxu0
  %v4347 = vadd.f32 %v4298, %v4346
  %4348 = vmatmul.bf16.gmra.mxu0 %v2313
  %v4349 = vpop.f32.mrf.mxu0
  %v4350 = vadd.f32 %v4301, %v4349
  %v4351 = vpop.f32.mrf.mxu0
  %v4352 = vadd.f32 %v4303, %v4351
  %4353 = vmatmul.bf16.gmra.mxu0 %v2317
  %v4354 = vpop.f32.mrf.mxu0
  %v4355 = vadd.f32 %v4306, %v4354
  %v4356 = vpop.f32.mrf.mxu0
  %v4357 = vadd.f32 %v4308, %v4356
  %4358 = vmatmul.bf16.gmra.mxu0 %v2321
  %v4359 = vpop.f32.mrf.mxu0
  %v4360 = vadd.f32 %v4311, %v4359
  %v4361 = vpop.f32.mrf.mxu0
  %v4362 = vadd.f32 %v4313, %v4361
  %4363 = vmatmul.bf16.gmra.mxu0 %v2325
  %v4364 = vpop.f32.mrf.mxu0
  %v4365 = vadd.f32 %v4316, %v4364
  %v4366 = vpop.f32.mrf.mxu0
  %v4367 = vadd.f32 %v4318, %v4366
  %4368 = vmatmul.bf16.gmra.mxu0 %v2329
  %v4369 = vpop.f32.mrf.mxu0
  %v4370 = vadd.f32 %v4321, %v4369
  %v4371 = vpop.f32.mrf.mxu0
  %v4372 = vadd.f32 %v4323, %v4371
  %4373 = vmatmul.bf16.gmra.mxu0 %v2333
  %v4374 = vpop.f32.mrf.mxu0
  %v4375 = vadd.f32 %v4326, %v4374
  %v4376 = vpop.f32.mrf.mxu0
  %v4377 = vadd.f32 %v4328, %v4376
  %4378 = vmatmul.bf16.gmra.mxu0 %v2337
  %v4379 = vpop.f32.mrf.mxu0
  %v4380 = vadd.f32 %v4331, %v4379
  %v4381 = vpop.f32.mrf.mxu0
  %v4382 = vadd.f32 %v4333, %v4381
  %4383 = vdwg.mxu0
  %4384 = vmatpush.bf16.msra.mxu0 %v3568
  %4385 = vmatpush.bf16.msra.mxu0 %v3560
  %4386 = vmatpush.bf16.msra.mxu0 %v3552
  %4387 = vmatpush.bf16.msra.mxu0 %v3544
  %4388 = vmatpush.bf16.msra.mxu0 %v3536
  %4389 = vmatpush.bf16.msra.mxu0 %v3528
  %4390 = vmatpush.bf16.msra.mxu0 %v3520
  %4391 = vmatpush.bf16.msra.mxu0 %v3512
  %4392 = vmatmul.bf16.gmra.mxu0 %v2310
  %v4393 = vpop.f32.mrf.mxu0
  %v4394 = vadd.f32 %v4345, %v4393
  %v4395 = vpop.f32.mrf.mxu0
  %v4396 = vadd.f32 %v4347, %v4395
  %4397 = vmatmul.bf16.gmra.mxu0 %v2314
  %v4398 = vpop.f32.mrf.mxu0
  %v4399 = vadd.f32 %v4350, %v4398
  %v4400 = vpop.f32.mrf.mxu0
  %v4401 = vadd.f32 %v4352, %v4400
  %4402 = vmatmul.bf16.gmra.mxu0 %v2318
  %v4403 = vpop.f32.mrf.mxu0
  %v4404 = vadd.f32 %v4355, %v4403
  %v4405 = vpop.f32.mrf.mxu0
  %v4406 = vadd.f32 %v4357, %v4405
  %4407 = vmatmul.bf16.gmra.mxu0 %v2322
  %v4408 = vpop.f32.mrf.mxu0
  %v4409 = vadd.f32 %v4360, %v4408
  %v4410 = vpop.f32.mrf.mxu0
  %v4411 = vadd.f32 %v4362, %v4410
  %4412 = vmatmul.bf16.gmra.mxu0 %v2326
  %v4413 = vpop.f32.mrf.mxu0
  %v4414 = vadd.f32 %v4365, %v4413
  %v4415 = vpop.f32.mrf.mxu0
  %v4416 = vadd.f32 %v4367, %v4415
  %4417 = vmatmul.bf16.gmra.mxu0 %v2330
  %v4418 = vpop.f32.mrf.mxu0
  %v4419 = vadd.f32 %v4370, %v4418
  %v4420 = vpop.f32.mrf.mxu0
  %v4421 = vadd.f32 %v4372, %v4420
  %4422 = vmatmul.bf16.gmra.mxu0 %v2334
  %v4423 = vpop.f32.mrf.mxu0
  %v4424 = vadd.f32 %v4375, %v4423
  %v4425 = vpop.f32.mrf.mxu0
  %v4426 = vadd.f32 %v4377, %v4425
  %4427 = vmatmul.bf16.gmra.mxu0 %v2338
  %v4428 = vpop.f32.mrf.mxu0
  %v4429 = vadd.f32 %v4380, %v4428
  %v4430 = vpop.f32.mrf.mxu0
  %v4431 = vadd.f32 %v4382, %v4430
  %4432 = vdwg.mxu0
  %4433 = vmatpush.bf16.msra.mxu0 %v3632
  %4434 = vmatpush.bf16.msra.mxu0 %v3624
  %4435 = vmatpush.bf16.msra.mxu0 %v3616
  %4436 = vmatpush.bf16.msra.mxu0 %v3608
  %4437 = vmatpush.bf16.msra.mxu0 %v3600
  %4438 = vmatpush.bf16.msra.mxu0 %v3592
  %4439 = vmatpush.bf16.msra.mxu0 %v3584
  %4440 = vmatpush.bf16.msra.mxu0 %v3576
  %4441 = vmatmul.bf16.gmra.mxu0 %v2311
  %v4442 = vpop.f32.mrf.mxu0
  %v4443 = vadd.f32 %v4394, %v4442
  %v4444 = vpop.f32.mrf.mxu0
  %v4445 = vadd.f32 %v4396, %v4444
  %4446 = vmatmul.bf16.gmra.mxu0 %v2315
  %v4447 = vpop.f32.mrf.mxu0
  %v4448 = vadd.f32 %v4399, %v4447
  %v4449 = vpop.f32.mrf.mxu0
  %v4450 = vadd.f32 %v4401, %v4449
  %4451 = vmatmul.bf16.gmra.mxu0 %v2319
  %v4452 = vpop.f32.mrf.mxu0
  %v4453 = vadd.f32 %v4404, %v4452
  %v4454 = vpop.f32.mrf.mxu0
  %v4455 = vadd.f32 %v4406, %v4454
  %4456 = vmatmul.bf16.gmra.mxu0 %v2323
  %v4457 = vpop.f32.mrf.mxu0
  %v4458 = vadd.f32 %v4409, %v4457
  %v4459 = vpop.f32.mrf.mxu0
  %v4460 = vadd.f32 %v4411, %v4459
  %4461 = vmatmul.bf16.gmra.mxu0 %v2327
  %v4462 = vpop.f32.mrf.mxu0
  %v4463 = vadd.f32 %v4414, %v4462
  %v4464 = vpop.f32.mrf.mxu0
  %v4465 = vadd.f32 %v4416, %v4464
  %4466 = vmatmul.bf16.gmra.mxu0 %v2331
  %v4467 = vpop.f32.mrf.mxu0
  %v4468 = vadd.f32 %v4419, %v4467
  %v4469 = vpop.f32.mrf.mxu0
  %v4470 = vadd.f32 %v4421, %v4469
  %4471 = vmatmul.bf16.gmra.mxu0 %v2335
  %v4472 = vpop.f32.mrf.mxu0
  %v4473 = vadd.f32 %v4424, %v4472
  %v4474 = vpop.f32.mrf.mxu0
  %v4475 = vadd.f32 %v4426, %v4474
  %4476 = vmatmul.bf16.gmra.mxu0 %v2339
  %v4477 = vpop.f32.mrf.mxu0
  %v4478 = vadd.f32 %v4429, %v4477
  %v4479 = vpop.f32.mrf.mxu0
  %v4480 = vadd.f32 %v4431, %v4479
  %4481 = vdwg.mxu0
  %4482 = vmatpush.bf16.msra.mxu0 %v3441
  %4483 = vmatpush.bf16.msra.mxu0 %v3433
  %4484 = vmatpush.bf16.msra.mxu0 %v3425
  %4485 = vmatpush.bf16.msra.mxu0 %v3417
  %4486 = vmatpush.bf16.msra.mxu0 %v3409
  %4487 = vmatpush.bf16.msra.mxu0 %v3401
  %4488 = vmatpush.bf16.msra.mxu0 %v3393
  %4489 = vmatpush.bf16.msra.mxu0 %v3385
  %4490 = vmatmul.bf16.gmra.mxu0 %v2308
  %v4491 = vpop.f32.mrf.mxu0
  %v4492 = vadd.f32 %v2601, %v4491
  %v4493 = vpop.f32.mrf.mxu0
  %v4494 = vadd.f32 %v2601, %v4493
  %4495 = vmatmul.bf16.gmra.mxu0 %v2312
  %v4496 = vpop.f32.mrf.mxu0
  %v4497 = vadd.f32 %v2601, %v4496
  %v4498 = vpop.f32.mrf.mxu0
  %v4499 = vadd.f32 %v2601, %v4498
  %4500 = vmatmul.bf16.gmra.mxu0 %v2316
  %v4501 = vpop.f32.mrf.mxu0
  %v4502 = vadd.f32 %v2601, %v4501
  %v4503 = vpop.f32.mrf.mxu0
  %v4504 = vadd.f32 %v2601, %v4503
  %4505 = vmatmul.bf16.gmra.mxu0 %v2320
  %v4506 = vpop.f32.mrf.mxu0
  %v4507 = vadd.f32 %v2601, %v4506
  %v4508 = vpop.f32.mrf.mxu0
  %v4509 = vadd.f32 %v2601, %v4508
  %4510 = vmatmul.bf16.gmra.mxu0 %v2324
  %v4511 = vpop.f32.mrf.mxu0
  %v4512 = vadd.f32 %v2601, %v4511
  %v4513 = vpop.f32.mrf.mxu0
  %v4514 = vadd.f32 %v2601, %v4513
  %4515 = vmatmul.bf16.gmra.mxu0 %v2328
  %v4516 = vpop.f32.mrf.mxu0
  %v4517 = vadd.f32 %v2601, %v4516
  %v4518 = vpop.f32.mrf.mxu0
  %v4519 = vadd.f32 %v2601, %v4518
  %4520 = vmatmul.bf16.gmra.mxu0 %v2332
  %v4521 = vpop.f32.mrf.mxu0
  %v4522 = vadd.f32 %v2601, %v4521
  %v4523 = vpop.f32.mrf.mxu0
  %v4524 = vadd.f32 %v2601, %v4523
  %4525 = vmatmul.bf16.gmra.mxu0 %v2336
  %v4526 = vpop.f32.mrf.mxu0
  %v4527 = vadd.f32 %v2601, %v4526
  %v4528 = vpop.f32.mrf.mxu0
  %v4529 = vadd.f32 %v2601, %v4528
  %4530 = vdwg.mxu0
  %4531 = vmatpush.bf16.msra.mxu0 %v3505
  %4532 = vmatpush.bf16.msra.mxu0 %v3497
  %4533 = vmatpush.bf16.msra.mxu0 %v3489
  %4534 = vmatpush.bf16.msra.mxu0 %v3481
  %4535 = vmatpush.bf16.msra.mxu0 %v3473
  %4536 = vmatpush.bf16.msra.mxu0 %v3465
  %4537 = vmatpush.bf16.msra.mxu0 %v3457
  %4538 = vmatpush.bf16.msra.mxu0 %v3449
  %4539 = vmatmul.bf16.gmra.mxu0 %v2309
  %v4540 = vpop.f32.mrf.mxu0
  %v4541 = vadd.f32 %v4492, %v4540
  %v4542 = vpop.f32.mrf.mxu0
  %v4543 = vadd.f32 %v4494, %v4542
  %4544 = vmatmul.bf16.gmra.mxu0 %v2313
  %v4545 = vpop.f32.mrf.mxu0
  %v4546 = vadd.f32 %v4497, %v4545
  %v4547 = vpop.f32.mrf.mxu0
  %v4548 = vadd.f32 %v4499, %v4547
  %4549 = vmatmul.bf16.gmra.mxu0 %v2317
  %v4550 = vpop.f32.mrf.mxu0
  %v4551 = vadd.f32 %v4502, %v4550
  %v4552 = vpop.f32.mrf.mxu0
  %v4553 = vadd.f32 %v4504, %v4552
  %4554 = vmatmul.bf16.gmra.mxu0 %v2321
  %v4555 = vpop.f32.mrf.mxu0
  %v4556 = vadd.f32 %v4507, %v4555
  %v4557 = vpop.f32.mrf.mxu0
  %v4558 = vadd.f32 %v4509, %v4557
  %4559 = vmatmul.bf16.gmra.mxu0 %v2325
  %v4560 = vpop.f32.mrf.mxu0
  %v4561 = vadd.f32 %v4512, %v4560
  %v4562 = vpop.f32.mrf.mxu0
  %v4563 = vadd.f32 %v4514, %v4562
  %4564 = vmatmul.bf16.gmra.mxu0 %v2329
  %v4565 = vpop.f32.mrf.mxu0
  %v4566 = vadd.f32 %v4517, %v4565
  %v4567 = vpop.f32.mrf.mxu0
  %v4568 = vadd.f32 %v4519, %v4567
  %4569 = vmatmul.bf16.gmra.mxu0 %v2333
  %v4570 = vpop.f32.mrf.mxu0
  %v4571 = vadd.f32 %v4522, %v4570
  %v4572 = vpop.f32.mrf.mxu0
  %v4573 = vadd.f32 %v4524, %v4572
  %4574 = vmatmul.bf16.gmra.mxu0 %v2337
  %v4575 = vpop.f32.mrf.mxu0
  %v4576 = vadd.f32 %v4527, %v4575
  %v4577 = vpop.f32.mrf.mxu0
  %v4578 = vadd.f32 %v4529, %v4577
  %4579 = vdwg.mxu0
  %4580 = vmatpush.bf16.msra.mxu0 %v3569
  %4581 = vmatpush.bf16.msra.mxu0 %v3561
  %4582 = vmatpush.bf16.msra.mxu0 %v3553
  %4583 = vmatpush.bf16.msra.mxu0 %v3545
  %4584 = vmatpush.bf16.msra.mxu0 %v3537
  %4585 = vmatpush.bf16.msra.mxu0 %v3529
  %4586 = vmatpush.bf16.msra.mxu0 %v3521
  %4587 = vmatpush.bf16.msra.mxu0 %v3513
  %4588 = vmatmul.bf16.gmra.mxu0 %v2310
  %v4589 = vpop.f32.mrf.mxu0
  %v4590 = vadd.f32 %v4541, %v4589
  %v4591 = vpop.f32.mrf.mxu0
  %v4592 = vadd.f32 %v4543, %v4591
  %4593 = vmatmul.bf16.gmra.mxu0 %v2314
  %v4594 = vpop.f32.mrf.mxu0
  %v4595 = vadd.f32 %v4546, %v4594
  %v4596 = vpop.f32.mrf.mxu0
  %v4597 = vadd.f32 %v4548, %v4596
  %4598 = vmatmul.bf16.gmra.mxu0 %v2318
  %v4599 = vpop.f32.mrf.mxu0
  %v4600 = vadd.f32 %v4551, %v4599
  %v4601 = vpop.f32.mrf.mxu0
  %v4602 = vadd.f32 %v4553, %v4601
  %4603 = vmatmul.bf16.gmra.mxu0 %v2322
  %v4604 = vpop.f32.mrf.mxu0
  %v4605 = vadd.f32 %v4556, %v4604
  %v4606 = vpop.f32.mrf.mxu0
  %v4607 = vadd.f32 %v4558, %v4606
  %4608 = vmatmul.bf16.gmra.mxu0 %v2326
  %v4609 = vpop.f32.mrf.mxu0
  %v4610 = vadd.f32 %v4561, %v4609
  %v4611 = vpop.f32.mrf.mxu0
  %v4612 = vadd.f32 %v4563, %v4611
  %4613 = vmatmul.bf16.gmra.mxu0 %v2330
  %v4614 = vpop.f32.mrf.mxu0
  %v4615 = vadd.f32 %v4566, %v4614
  %v4616 = vpop.f32.mrf.mxu0
  %v4617 = vadd.f32 %v4568, %v4616
  %4618 = vmatmul.bf16.gmra.mxu0 %v2334
  %v4619 = vpop.f32.mrf.mxu0
  %v4620 = vadd.f32 %v4571, %v4619
  %v4621 = vpop.f32.mrf.mxu0
  %v4622 = vadd.f32 %v4573, %v4621
  %4623 = vmatmul.bf16.gmra.mxu0 %v2338
  %v4624 = vpop.f32.mrf.mxu0
  %v4625 = vadd.f32 %v4576, %v4624
  %v4626 = vpop.f32.mrf.mxu0
  %v4627 = vadd.f32 %v4578, %v4626
  %4628 = vdwg.mxu0
  %4629 = vmatpush.bf16.msra.mxu0 %v3633
  %4630 = vmatpush.bf16.msra.mxu0 %v3625
  %4631 = vmatpush.bf16.msra.mxu0 %v3617
  %4632 = vmatpush.bf16.msra.mxu0 %v3609
  %4633 = vmatpush.bf16.msra.mxu0 %v3601
  %4634 = vmatpush.bf16.msra.mxu0 %v3593
  %4635 = vmatpush.bf16.msra.mxu0 %v3585
  %4636 = vmatpush.bf16.msra.mxu0 %v3577
  %4637 = vmatmul.bf16.gmra.mxu0 %v2311
  %v4638 = vpop.f32.mrf.mxu0
  %v4639 = vadd.f32 %v4590, %v4638
  %v4640 = vpop.f32.mrf.mxu0
  %v4641 = vadd.f32 %v4592, %v4640
  %4642 = vmatmul.bf16.gmra.mxu0 %v2315
  %v4643 = vpop.f32.mrf.mxu0
  %v4644 = vadd.f32 %v4595, %v4643
  %v4645 = vpop.f32.mrf.mxu0
  %v4646 = vadd.f32 %v4597, %v4645
  %4647 = vmatmul.bf16.gmra.mxu0 %v2319
  %v4648 = vpop.f32.mrf.mxu0
  %v4649 = vadd.f32 %v4600, %v4648
  %v4650 = vpop.f32.mrf.mxu0
  %v4651 = vadd.f32 %v4602, %v4650
  %4652 = vmatmul.bf16.gmra.mxu0 %v2323
  %v4653 = vpop.f32.mrf.mxu0
  %v4654 = vadd.f32 %v4605, %v4653
  %v4655 = vpop.f32.mrf.mxu0
  %v4656 = vadd.f32 %v4607, %v4655
  %4657 = vmatmul.bf16.gmra.mxu0 %v2327
  %v4658 = vpop.f32.mrf.mxu0
  %v4659 = vadd.f32 %v4610, %v4658
  %v4660 = vpop.f32.mrf.mxu0
  %v4661 = vadd.f32 %v4612, %v4660
  %4662 = vmatmul.bf16.gmra.mxu0 %v2331
  %v4663 = vpop.f32.mrf.mxu0
  %v4664 = vadd.f32 %v4615, %v4663
  %v4665 = vpop.f32.mrf.mxu0
  %v4666 = vadd.f32 %v4617, %v4665
  %4667 = vmatmul.bf16.gmra.mxu0 %v2335
  %v4668 = vpop.f32.mrf.mxu0
  %v4669 = vadd.f32 %v4620, %v4668
  %v4670 = vpop.f32.mrf.mxu0
  %v4671 = vadd.f32 %v4622, %v4670
  %4672 = vmatmul.bf16.gmra.mxu0 %v2339
  %v4673 = vpop.f32.mrf.mxu0
  %v4674 = vadd.f32 %v4625, %v4673
  %v4675 = vpop.f32.mrf.mxu0
  %v4676 = vadd.f32 %v4627, %v4675
  %4677 = vdwg.mxu0
  %4678 = vmatpush.bf16.msra.mxu0 %v3442
  %4679 = vmatpush.bf16.msra.mxu0 %v3434
  %4680 = vmatpush.bf16.msra.mxu0 %v3426
  %4681 = vmatpush.bf16.msra.mxu0 %v3418
  %4682 = vmatpush.bf16.msra.mxu0 %v3410
  %4683 = vmatpush.bf16.msra.mxu0 %v3402
  %4684 = vmatpush.bf16.msra.mxu0 %v3394
  %4685 = vmatpush.bf16.msra.mxu0 %v3386
  %4686 = vmatmul.bf16.gmra.mxu0 %v2308
  %v4687 = vpop.f32.mrf.mxu0
  %v4688 = vadd.f32 %v2602, %v4687
  %v4689 = vpop.f32.mrf.mxu0
  %v4690 = vadd.f32 %v2602, %v4689
  %4691 = vmatmul.bf16.gmra.mxu0 %v2312
  %v4692 = vpop.f32.mrf.mxu0
  %v4693 = vadd.f32 %v2602, %v4692
  %v4694 = vpop.f32.mrf.mxu0
  %v4695 = vadd.f32 %v2602, %v4694
  %4696 = vmatmul.bf16.gmra.mxu0 %v2316
  %v4697 = vpop.f32.mrf.mxu0
  %v4698 = vadd.f32 %v2602, %v4697
  %v4699 = vpop.f32.mrf.mxu0
  %v4700 = vadd.f32 %v2602, %v4699
  %4701 = vmatmul.bf16.gmra.mxu0 %v2320
  %v4702 = vpop.f32.mrf.mxu0
  %v4703 = vadd.f32 %v2602, %v4702
  %v4704 = vpop.f32.mrf.mxu0
  %v4705 = vadd.f32 %v2602, %v4704
  %4706 = vmatmul.bf16.gmra.mxu0 %v2324
  %v4707 = vpop.f32.mrf.mxu0
  %v4708 = vadd.f32 %v2602, %v4707
  %v4709 = vpop.f32.mrf.mxu0
  %v4710 = vadd.f32 %v2602, %v4709
  %4711 = vmatmul.bf16.gmra.mxu0 %v2328
  %v4712 = vpop.f32.mrf.mxu0
  %v4713 = vadd.f32 %v2602, %v4712
  %v4714 = vpop.f32.mrf.mxu0
  %v4715 = vadd.f32 %v2602, %v4714
  %4716 = vmatmul.bf16.gmra.mxu0 %v2332
  %v4717 = vpop.f32.mrf.mxu0
  %v4718 = vadd.f32 %v2602, %v4717
  %v4719 = vpop.f32.mrf.mxu0
  %v4720 = vadd.f32 %v2602, %v4719
  %4721 = vmatmul.bf16.gmra.mxu0 %v2336
  %v4722 = vpop.f32.mrf.mxu0
  %v4723 = vadd.f32 %v2602, %v4722
  %v4724 = vpop.f32.mrf.mxu0
  %v4725 = vadd.f32 %v2602, %v4724
  %4726 = vdwg.mxu0
  %4727 = vmatpush.bf16.msra.mxu0 %v3506
  %4728 = vmatpush.bf16.msra.mxu0 %v3498
  %4729 = vmatpush.bf16.msra.mxu0 %v3490
  %4730 = vmatpush.bf16.msra.mxu0 %v3482
  %4731 = vmatpush.bf16.msra.mxu0 %v3474
  %4732 = vmatpush.bf16.msra.mxu0 %v3466
  %4733 = vmatpush.bf16.msra.mxu0 %v3458
  %4734 = vmatpush.bf16.msra.mxu0 %v3450
  %4735 = vmatmul.bf16.gmra.mxu0 %v2309
  %v4736 = vpop.f32.mrf.mxu0
  %v4737 = vadd.f32 %v4688, %v4736
  %v4738 = vpop.f32.mrf.mxu0
  %v4739 = vadd.f32 %v4690, %v4738
  %4740 = vmatmul.bf16.gmra.mxu0 %v2313
  %v4741 = vpop.f32.mrf.mxu0
  %v4742 = vadd.f32 %v4693, %v4741
  %v4743 = vpop.f32.mrf.mxu0
  %v4744 = vadd.f32 %v4695, %v4743
  %4745 = vmatmul.bf16.gmra.mxu0 %v2317
  %v4746 = vpop.f32.mrf.mxu0
  %v4747 = vadd.f32 %v4698, %v4746
  %v4748 = vpop.f32.mrf.mxu0
  %v4749 = vadd.f32 %v4700, %v4748
  %4750 = vmatmul.bf16.gmra.mxu0 %v2321
  %v4751 = vpop.f32.mrf.mxu0
  %v4752 = vadd.f32 %v4703, %v4751
  %v4753 = vpop.f32.mrf.mxu0
  %v4754 = vadd.f32 %v4705, %v4753
  %4755 = vmatmul.bf16.gmra.mxu0 %v2325
  %v4756 = vpop.f32.mrf.mxu0
  %v4757 = vadd.f32 %v4708, %v4756
  %v4758 = vpop.f32.mrf.mxu0
  %v4759 = vadd.f32 %v4710, %v4758
  %4760 = vmatmul.bf16.gmra.mxu0 %v2329
  %v4761 = vpop.f32.mrf.mxu0
  %v4762 = vadd.f32 %v4713, %v4761
  %v4763 = vpop.f32.mrf.mxu0
  %v4764 = vadd.f32 %v4715, %v4763
  %4765 = vmatmul.bf16.gmra.mxu0 %v2333
  %v4766 = vpop.f32.mrf.mxu0
  %v4767 = vadd.f32 %v4718, %v4766
  %v4768 = vpop.f32.mrf.mxu0
  %v4769 = vadd.f32 %v4720, %v4768
  %4770 = vmatmul.bf16.gmra.mxu0 %v2337
  %v4771 = vpop.f32.mrf.mxu0
  %v4772 = vadd.f32 %v4723, %v4771
  %v4773 = vpop.f32.mrf.mxu0
  %v4774 = vadd.f32 %v4725, %v4773
  %4775 = vdwg.mxu0
  %4776 = vmatpush.bf16.msra.mxu0 %v3570
  %4777 = vmatpush.bf16.msra.mxu0 %v3562
  %4778 = vmatpush.bf16.msra.mxu0 %v3554
  %4779 = vmatpush.bf16.msra.mxu0 %v3546
  %4780 = vmatpush.bf16.msra.mxu0 %v3538
  %4781 = vmatpush.bf16.msra.mxu0 %v3530
  %4782 = vmatpush.bf16.msra.mxu0 %v3522
  %4783 = vmatpush.bf16.msra.mxu0 %v3514
  %4784 = vmatmul.bf16.gmra.mxu0 %v2310
  %v4785 = vpop.f32.mrf.mxu0
  %v4786 = vadd.f32 %v4737, %v4785
  %v4787 = vpop.f32.mrf.mxu0
  %v4788 = vadd.f32 %v4739, %v4787
  %4789 = vmatmul.bf16.gmra.mxu0 %v2314
  %v4790 = vpop.f32.mrf.mxu0
  %v4791 = vadd.f32 %v4742, %v4790
  %v4792 = vpop.f32.mrf.mxu0
  %v4793 = vadd.f32 %v4744, %v4792
  %4794 = vmatmul.bf16.gmra.mxu0 %v2318
  %v4795 = vpop.f32.mrf.mxu0
  %v4796 = vadd.f32 %v4747, %v4795
  %v4797 = vpop.f32.mrf.mxu0
  %v4798 = vadd.f32 %v4749, %v4797
  %4799 = vmatmul.bf16.gmra.mxu0 %v2322
  %v4800 = vpop.f32.mrf.mxu0
  %v4801 = vadd.f32 %v4752, %v4800
  %v4802 = vpop.f32.mrf.mxu0
  %v4803 = vadd.f32 %v4754, %v4802
  %4804 = vmatmul.bf16.gmra.mxu0 %v2326
  %v4805 = vpop.f32.mrf.mxu0
  %v4806 = vadd.f32 %v4757, %v4805
  %v4807 = vpop.f32.mrf.mxu0
  %v4808 = vadd.f32 %v4759, %v4807
  %4809 = vmatmul.bf16.gmra.mxu0 %v2330
  %v4810 = vpop.f32.mrf.mxu0
  %v4811 = vadd.f32 %v4762, %v4810
  %v4812 = vpop.f32.mrf.mxu0
  %v4813 = vadd.f32 %v4764, %v4812
  %4814 = vmatmul.bf16.gmra.mxu0 %v2334
  %v4815 = vpop.f32.mrf.mxu0
  %v4816 = vadd.f32 %v4767, %v4815
  %v4817 = vpop.f32.mrf.mxu0
  %v4818 = vadd.f32 %v4769, %v4817
  %4819 = vmatmul.bf16.gmra.mxu0 %v2338
  %v4820 = vpop.f32.mrf.mxu0
  %v4821 = vadd.f32 %v4772, %v4820
  %v4822 = vpop.f32.mrf.mxu0
  %v4823 = vadd.f32 %v4774, %v4822
  %4824 = vdwg.mxu0
  %4825 = vmatpush.bf16.msra.mxu0 %v3634
  %4826 = vmatpush.bf16.msra.mxu0 %v3626
  %4827 = vmatpush.bf16.msra.mxu0 %v3618
  %4828 = vmatpush.bf16.msra.mxu0 %v3610
  %4829 = vmatpush.bf16.msra.mxu0 %v3602
  %4830 = vmatpush.bf16.msra.mxu0 %v3594
  %4831 = vmatpush.bf16.msra.mxu0 %v3586
  %4832 = vmatpush.bf16.msra.mxu0 %v3578
  %4833 = vmatmul.bf16.gmra.mxu0 %v2311
  %v4834 = vpop.f32.mrf.mxu0
  %v4835 = vadd.f32 %v4786, %v4834
  %v4836 = vpop.f32.mrf.mxu0
  %v4837 = vadd.f32 %v4788, %v4836
  %4838 = vmatmul.bf16.gmra.mxu0 %v2315
  %v4839 = vpop.f32.mrf.mxu0
  %v4840 = vadd.f32 %v4791, %v4839
  %v4841 = vpop.f32.mrf.mxu0
  %v4842 = vadd.f32 %v4793, %v4841
  %4843 = vmatmul.bf16.gmra.mxu0 %v2319
  %v4844 = vpop.f32.mrf.mxu0
  %v4845 = vadd.f32 %v4796, %v4844
  %v4846 = vpop.f32.mrf.mxu0
  %v4847 = vadd.f32 %v4798, %v4846
  %4848 = vmatmul.bf16.gmra.mxu0 %v2323
  %v4849 = vpop.f32.mrf.mxu0
  %v4850 = vadd.f32 %v4801, %v4849
  %v4851 = vpop.f32.mrf.mxu0
  %v4852 = vadd.f32 %v4803, %v4851
  %4853 = vmatmul.bf16.gmra.mxu0 %v2327
  %v4854 = vpop.f32.mrf.mxu0
  %v4855 = vadd.f32 %v4806, %v4854
  %v4856 = vpop.f32.mrf.mxu0
  %v4857 = vadd.f32 %v4808, %v4856
  %4858 = vmatmul.bf16.gmra.mxu0 %v2331
  %v4859 = vpop.f32.mrf.mxu0
  %v4860 = vadd.f32 %v4811, %v4859
  %v4861 = vpop.f32.mrf.mxu0
  %v4862 = vadd.f32 %v4813, %v4861
  %4863 = vmatmul.bf16.gmra.mxu0 %v2335
  %v4864 = vpop.f32.mrf.mxu0
  %v4865 = vadd.f32 %v4816, %v4864
  %v4866 = vpop.f32.mrf.mxu0
  %v4867 = vadd.f32 %v4818, %v4866
  %4868 = vmatmul.bf16.gmra.mxu0 %v2339
  %v4869 = vpop.f32.mrf.mxu0
  %v4870 = vadd.f32 %v4821, %v4869
  %v4871 = vpop.f32.mrf.mxu0
  %v4872 = vadd.f32 %v4823, %v4871
  %4873 = vdwg.mxu0
  %4874 = vmatpush.bf16.msra.mxu0 %v3443
  %4875 = vmatpush.bf16.msra.mxu0 %v3435
  %4876 = vmatpush.bf16.msra.mxu0 %v3427
  %4877 = vmatpush.bf16.msra.mxu0 %v3419
  %4878 = vmatpush.bf16.msra.mxu0 %v3411
  %4879 = vmatpush.bf16.msra.mxu0 %v3403
  %4880 = vmatpush.bf16.msra.mxu0 %v3395
  %4881 = vmatpush.bf16.msra.mxu0 %v3387
  %4882 = vmatmul.bf16.gmra.mxu0 %v2308
  %v4883 = vpop.f32.mrf.mxu0
  %v4884 = vadd.f32 %v2603, %v4883
  %v4885 = vpop.f32.mrf.mxu0
  %v4886 = vadd.f32 %v2603, %v4885
  %4887 = vmatmul.bf16.gmra.mxu0 %v2312
  %v4888 = vpop.f32.mrf.mxu0
  %v4889 = vadd.f32 %v2603, %v4888
  %v4890 = vpop.f32.mrf.mxu0
  %v4891 = vadd.f32 %v2603, %v4890
  %4892 = vmatmul.bf16.gmra.mxu0 %v2316
  %v4893 = vpop.f32.mrf.mxu0
  %v4894 = vadd.f32 %v2603, %v4893
  %v4895 = vpop.f32.mrf.mxu0
  %v4896 = vadd.f32 %v2603, %v4895
  %4897 = vmatmul.bf16.gmra.mxu0 %v2320
  %v4898 = vpop.f32.mrf.mxu0
  %v4899 = vadd.f32 %v2603, %v4898
  %v4900 = vpop.f32.mrf.mxu0
  %v4901 = vadd.f32 %v2603, %v4900
  %4902 = vmatmul.bf16.gmra.mxu0 %v2324
  %v4903 = vpop.f32.mrf.mxu0
  %v4904 = vadd.f32 %v2603, %v4903
  %v4905 = vpop.f32.mrf.mxu0
  %v4906 = vadd.f32 %v2603, %v4905
  %4907 = vmatmul.bf16.gmra.mxu0 %v2328
  %v4908 = vpop.f32.mrf.mxu0
  %v4909 = vadd.f32 %v2603, %v4908
  %v4910 = vpop.f32.mrf.mxu0
  %v4911 = vadd.f32 %v2603, %v4910
  %4912 = vmatmul.bf16.gmra.mxu0 %v2332
  %v4913 = vpop.f32.mrf.mxu0
  %v4914 = vadd.f32 %v2603, %v4913
  %v4915 = vpop.f32.mrf.mxu0
  %v4916 = vadd.f32 %v2603, %v4915
  %4917 = vmatmul.bf16.gmra.mxu0 %v2336
  %v4918 = vpop.f32.mrf.mxu0
  %v4919 = vadd.f32 %v2603, %v4918
  %v4920 = vpop.f32.mrf.mxu0
  %v4921 = vadd.f32 %v2603, %v4920
  %4922 = vdwg.mxu0
  %4923 = vmatpush.bf16.msra.mxu0 %v3507
  %4924 = vmatpush.bf16.msra.mxu0 %v3499
  %4925 = vmatpush.bf16.msra.mxu0 %v3491
  %4926 = vmatpush.bf16.msra.mxu0 %v3483
  %4927 = vmatpush.bf16.msra.mxu0 %v3475
  %4928 = vmatpush.bf16.msra.mxu0 %v3467
  %4929 = vmatpush.bf16.msra.mxu0 %v3459
  %4930 = vmatpush.bf16.msra.mxu0 %v3451
  %4931 = vmatmul.bf16.gmra.mxu0 %v2309
  %v4932 = vpop.f32.mrf.mxu0
  %v4933 = vadd.f32 %v4884, %v4932
  %v4934 = vpop.f32.mrf.mxu0
  %v4935 = vadd.f32 %v4886, %v4934
  %4936 = vmatmul.bf16.gmra.mxu0 %v2313
  %v4937 = vpop.f32.mrf.mxu0
  %v4938 = vadd.f32 %v4889, %v4937
  %v4939 = vpop.f32.mrf.mxu0
  %v4940 = vadd.f32 %v4891, %v4939
  %4941 = vmatmul.bf16.gmra.mxu0 %v2317
  %v4942 = vpop.f32.mrf.mxu0
  %v4943 = vadd.f32 %v4894, %v4942
  %v4944 = vpop.f32.mrf.mxu0
  %v4945 = vadd.f32 %v4896, %v4944
  %4946 = vmatmul.bf16.gmra.mxu0 %v2321
  %v4947 = vpop.f32.mrf.mxu0
  %v4948 = vadd.f32 %v4899, %v4947
  %v4949 = vpop.f32.mrf.mxu0
  %v4950 = vadd.f32 %v4901, %v4949
  %4951 = vmatmul.bf16.gmra.mxu0 %v2325
  %v4952 = vpop.f32.mrf.mxu0
  %v4953 = vadd.f32 %v4904, %v4952
  %v4954 = vpop.f32.mrf.mxu0
  %v4955 = vadd.f32 %v4906, %v4954
  %4956 = vmatmul.bf16.gmra.mxu0 %v2329
  %v4957 = vpop.f32.mrf.mxu0
  %v4958 = vadd.f32 %v4909, %v4957
  %v4959 = vpop.f32.mrf.mxu0
  %v4960 = vadd.f32 %v4911, %v4959
  %4961 = vmatmul.bf16.gmra.mxu0 %v2333
  %v4962 = vpop.f32.mrf.mxu0
  %v4963 = vadd.f32 %v4914, %v4962
  %v4964 = vpop.f32.mrf.mxu0
  %v4965 = vadd.f32 %v4916, %v4964
  %4966 = vmatmul.bf16.gmra.mxu0 %v2337
  %v4967 = vpop.f32.mrf.mxu0
  %v4968 = vadd.f32 %v4919, %v4967
  %v4969 = vpop.f32.mrf.mxu0
  %v4970 = vadd.f32 %v4921, %v4969
  %4971 = vdwg.mxu0
  %4972 = vmatpush.bf16.msra.mxu0 %v3571
  %4973 = vmatpush.bf16.msra.mxu0 %v3563
  %4974 = vmatpush.bf16.msra.mxu0 %v3555
  %4975 = vmatpush.bf16.msra.mxu0 %v3547
  %4976 = vmatpush.bf16.msra.mxu0 %v3539
  %4977 = vmatpush.bf16.msra.mxu0 %v3531
  %4978 = vmatpush.bf16.msra.mxu0 %v3523
  %4979 = vmatpush.bf16.msra.mxu0 %v3515
  %4980 = vmatmul.bf16.gmra.mxu0 %v2310
  %v4981 = vpop.f32.mrf.mxu0
  %v4982 = vadd.f32 %v4933, %v4981
  %v4983 = vpop.f32.mrf.mxu0
  %v4984 = vadd.f32 %v4935, %v4983
  %4985 = vmatmul.bf16.gmra.mxu0 %v2314
  %v4986 = vpop.f32.mrf.mxu0
  %v4987 = vadd.f32 %v4938, %v4986
  %v4988 = vpop.f32.mrf.mxu0
  %v4989 = vadd.f32 %v4940, %v4988
  %4990 = vmatmul.bf16.gmra.mxu0 %v2318
  %v4991 = vpop.f32.mrf.mxu0
  %v4992 = vadd.f32 %v4943, %v4991
  %v4993 = vpop.f32.mrf.mxu0
  %v4994 = vadd.f32 %v4945, %v4993
  %4995 = vmatmul.bf16.gmra.mxu0 %v2322
  %v4996 = vpop.f32.mrf.mxu0
  %v4997 = vadd.f32 %v4948, %v4996
  %v4998 = vpop.f32.mrf.mxu0
  %v4999 = vadd.f32 %v4950, %v4998
  %5000 = vmatmul.bf16.gmra.mxu0 %v2326
  %v5001 = vpop.f32.mrf.mxu0
  %v5002 = vadd.f32 %v4953, %v5001
  %v5003 = vpop.f32.mrf.mxu0
  %v5004 = vadd.f32 %v4955, %v5003
  %5005 = vmatmul.bf16.gmra.mxu0 %v2330
  %v5006 = vpop.f32.mrf.mxu0
  %v5007 = vadd.f32 %v4958, %v5006
  %v5008 = vpop.f32.mrf.mxu0
  %v5009 = vadd.f32 %v4960, %v5008
  %5010 = vmatmul.bf16.gmra.mxu0 %v2334
  %v5011 = vpop.f32.mrf.mxu0
  %v5012 = vadd.f32 %v4963, %v5011
  %v5013 = vpop.f32.mrf.mxu0
  %v5014 = vadd.f32 %v4965, %v5013
  %5015 = vmatmul.bf16.gmra.mxu0 %v2338
  %v5016 = vpop.f32.mrf.mxu0
  %v5017 = vadd.f32 %v4968, %v5016
  %v5018 = vpop.f32.mrf.mxu0
  %v5019 = vadd.f32 %v4970, %v5018
  %5020 = vdwg.mxu0
  %5021 = vmatpush.bf16.msra.mxu0 %v3635
  %5022 = vmatpush.bf16.msra.mxu0 %v3627
  %5023 = vmatpush.bf16.msra.mxu0 %v3619
  %5024 = vmatpush.bf16.msra.mxu0 %v3611
  %5025 = vmatpush.bf16.msra.mxu0 %v3603
  %5026 = vmatpush.bf16.msra.mxu0 %v3595
  %5027 = vmatpush.bf16.msra.mxu0 %v3587
  %5028 = vmatpush.bf16.msra.mxu0 %v3579
  %5029 = vmatmul.bf16.gmra.mxu0 %v2311
  %v5030 = vpop.f32.mrf.mxu0
  %v5031 = vadd.f32 %v4982, %v5030
  %v5032 = vpop.f32.mrf.mxu0
  %v5033 = vadd.f32 %v4984, %v5032
  %5034 = vmatmul.bf16.gmra.mxu0 %v2315
  %v5035 = vpop.f32.mrf.mxu0
  %v5036 = vadd.f32 %v4987, %v5035
  %v5037 = vpop.f32.mrf.mxu0
  %v5038 = vadd.f32 %v4989, %v5037
  %5039 = vmatmul.bf16.gmra.mxu0 %v2319
  %v5040 = vpop.f32.mrf.mxu0
  %v5041 = vadd.f32 %v4992, %v5040
  %v5042 = vpop.f32.mrf.mxu0
  %v5043 = vadd.f32 %v4994, %v5042
  %5044 = vmatmul.bf16.gmra.mxu0 %v2323
  %v5045 = vpop.f32.mrf.mxu0
  %v5046 = vadd.f32 %v4997, %v5045
  %v5047 = vpop.f32.mrf.mxu0
  %v5048 = vadd.f32 %v4999, %v5047
  %5049 = vmatmul.bf16.gmra.mxu0 %v2327
  %v5050 = vpop.f32.mrf.mxu0
  %v5051 = vadd.f32 %v5002, %v5050
  %v5052 = vpop.f32.mrf.mxu0
  %v5053 = vadd.f32 %v5004, %v5052
  %5054 = vmatmul.bf16.gmra.mxu0 %v2331
  %v5055 = vpop.f32.mrf.mxu0
  %v5056 = vadd.f32 %v5007, %v5055
  %v5057 = vpop.f32.mrf.mxu0
  %v5058 = vadd.f32 %v5009, %v5057
  %5059 = vmatmul.bf16.gmra.mxu0 %v2335
  %v5060 = vpop.f32.mrf.mxu0
  %v5061 = vadd.f32 %v5012, %v5060
  %v5062 = vpop.f32.mrf.mxu0
  %v5063 = vadd.f32 %v5014, %v5062
  %5064 = vmatmul.bf16.gmra.mxu0 %v2339
  %v5065 = vpop.f32.mrf.mxu0
  %v5066 = vadd.f32 %v5017, %v5065
  %v5067 = vpop.f32.mrf.mxu0
  %v5068 = vadd.f32 %v5019, %v5067
  %5069 = vdwg.mxu0
  %5070 = vmatpush.bf16.msra.mxu0 %v3444
  %5071 = vmatpush.bf16.msra.mxu0 %v3436
  %5072 = vmatpush.bf16.msra.mxu0 %v3428
  %5073 = vmatpush.bf16.msra.mxu0 %v3420
  %5074 = vmatpush.bf16.msra.mxu0 %v3412
  %5075 = vmatpush.bf16.msra.mxu0 %v3404
  %5076 = vmatpush.bf16.msra.mxu0 %v3396
  %5077 = vmatpush.bf16.msra.mxu0 %v3388
  %5078 = vmatmul.bf16.gmra.mxu0 %v2308
  %v5079 = vpop.f32.mrf.mxu0
  %v5080 = vadd.f32 %v2604, %v5079
  %v5081 = vpop.f32.mrf.mxu0
  %v5082 = vadd.f32 %v2604, %v5081
  %5083 = vmatmul.bf16.gmra.mxu0 %v2312
  %v5084 = vpop.f32.mrf.mxu0
  %v5085 = vadd.f32 %v2604, %v5084
  %v5086 = vpop.f32.mrf.mxu0
  %v5087 = vadd.f32 %v2604, %v5086
  %5088 = vmatmul.bf16.gmra.mxu0 %v2316
  %v5089 = vpop.f32.mrf.mxu0
  %v5090 = vadd.f32 %v2604, %v5089
  %v5091 = vpop.f32.mrf.mxu0
  %v5092 = vadd.f32 %v2604, %v5091
  %5093 = vmatmul.bf16.gmra.mxu0 %v2320
  %v5094 = vpop.f32.mrf.mxu0
  %v5095 = vadd.f32 %v2604, %v5094
  %v5096 = vpop.f32.mrf.mxu0
  %v5097 = vadd.f32 %v2604, %v5096
  %5098 = vmatmul.bf16.gmra.mxu0 %v2324
  %v5099 = vpop.f32.mrf.mxu0
  %v5100 = vadd.f32 %v2604, %v5099
  %v5101 = vpop.f32.mrf.mxu0
  %v5102 = vadd.f32 %v2604, %v5101
  %5103 = vmatmul.bf16.gmra.mxu0 %v2328
  %v5104 = vpop.f32.mrf.mxu0
  %v5105 = vadd.f32 %v2604, %v5104
  %v5106 = vpop.f32.mrf.mxu0
  %v5107 = vadd.f32 %v2604, %v5106
  %5108 = vmatmul.bf16.gmra.mxu0 %v2332
  %v5109 = vpop.f32.mrf.mxu0
  %v5110 = vadd.f32 %v2604, %v5109
  %v5111 = vpop.f32.mrf.mxu0
  %v5112 = vadd.f32 %v2604, %v5111
  %5113 = vmatmul.bf16.gmra.mxu0 %v2336
  %v5114 = vpop.f32.mrf.mxu0
  %v5115 = vadd.f32 %v2604, %v5114
  %v5116 = vpop.f32.mrf.mxu0
  %v5117 = vadd.f32 %v2604, %v5116
  %5118 = vdwg.mxu0
  %5119 = vmatpush.bf16.msra.mxu0 %v3508
  %5120 = vmatpush.bf16.msra.mxu0 %v3500
  %5121 = vmatpush.bf16.msra.mxu0 %v3492
  %5122 = vmatpush.bf16.msra.mxu0 %v3484
  %5123 = vmatpush.bf16.msra.mxu0 %v3476
  %5124 = vmatpush.bf16.msra.mxu0 %v3468
  %5125 = vmatpush.bf16.msra.mxu0 %v3460
  %5126 = vmatpush.bf16.msra.mxu0 %v3452
  %5127 = vmatmul.bf16.gmra.mxu0 %v2309
  %v5128 = vpop.f32.mrf.mxu0
  %v5129 = vadd.f32 %v5080, %v5128
  %v5130 = vpop.f32.mrf.mxu0
  %v5131 = vadd.f32 %v5082, %v5130
  %5132 = vmatmul.bf16.gmra.mxu0 %v2313
  %v5133 = vpop.f32.mrf.mxu0
  %v5134 = vadd.f32 %v5085, %v5133
  %v5135 = vpop.f32.mrf.mxu0
  %v5136 = vadd.f32 %v5087, %v5135
  %5137 = vmatmul.bf16.gmra.mxu0 %v2317
  %v5138 = vpop.f32.mrf.mxu0
  %v5139 = vadd.f32 %v5090, %v5138
  %v5140 = vpop.f32.mrf.mxu0
  %v5141 = vadd.f32 %v5092, %v5140
  %5142 = vmatmul.bf16.gmra.mxu0 %v2321
  %v5143 = vpop.f32.mrf.mxu0
  %v5144 = vadd.f32 %v5095, %v5143
  %v5145 = vpop.f32.mrf.mxu0
  %v5146 = vadd.f32 %v5097, %v5145
  %5147 = vmatmul.bf16.gmra.mxu0 %v2325
  %v5148 = vpop.f32.mrf.mxu0
  %v5149 = vadd.f32 %v5100, %v5148
  %v5150 = vpop.f32.mrf.mxu0
  %v5151 = vadd.f32 %v5102, %v5150
  %5152 = vmatmul.bf16.gmra.mxu0 %v2329
  %v5153 = vpop.f32.mrf.mxu0
  %v5154 = vadd.f32 %v5105, %v5153
  %v5155 = vpop.f32.mrf.mxu0
  %v5156 = vadd.f32 %v5107, %v5155
  %5157 = vmatmul.bf16.gmra.mxu0 %v2333
  %v5158 = vpop.f32.mrf.mxu0
  %v5159 = vadd.f32 %v5110, %v5158
  %v5160 = vpop.f32.mrf.mxu0
  %v5161 = vadd.f32 %v5112, %v5160
  %5162 = vmatmul.bf16.gmra.mxu0 %v2337
  %v5163 = vpop.f32.mrf.mxu0
  %v5164 = vadd.f32 %v5115, %v5163
  %v5165 = vpop.f32.mrf.mxu0
  %v5166 = vadd.f32 %v5117, %v5165
  %5167 = vdwg.mxu0
  %5168 = vmatpush.bf16.msra.mxu0 %v3572
  %5169 = vmatpush.bf16.msra.mxu0 %v3564
  %5170 = vmatpush.bf16.msra.mxu0 %v3556
  %5171 = vmatpush.bf16.msra.mxu0 %v3548
  %5172 = vmatpush.bf16.msra.mxu0 %v3540
  %5173 = vmatpush.bf16.msra.mxu0 %v3532
  %5174 = vmatpush.bf16.msra.mxu0 %v3524
  %5175 = vmatpush.bf16.msra.mxu0 %v3516
  %5176 = vmatmul.bf16.gmra.mxu0 %v2310
  %v5177 = vpop.f32.mrf.mxu0
  %v5178 = vadd.f32 %v5129, %v5177
  %v5179 = vpop.f32.mrf.mxu0
  %v5180 = vadd.f32 %v5131, %v5179
  %5181 = vmatmul.bf16.gmra.mxu0 %v2314
  %v5182 = vpop.f32.mrf.mxu0
  %v5183 = vadd.f32 %v5134, %v5182
  %v5184 = vpop.f32.mrf.mxu0
  %v5185 = vadd.f32 %v5136, %v5184
  %5186 = vmatmul.bf16.gmra.mxu0 %v2318
  %v5187 = vpop.f32.mrf.mxu0
  %v5188 = vadd.f32 %v5139, %v5187
  %v5189 = vpop.f32.mrf.mxu0
  %v5190 = vadd.f32 %v5141, %v5189
  %5191 = vmatmul.bf16.gmra.mxu0 %v2322
  %v5192 = vpop.f32.mrf.mxu0
  %v5193 = vadd.f32 %v5144, %v5192
  %v5194 = vpop.f32.mrf.mxu0
  %v5195 = vadd.f32 %v5146, %v5194
  %5196 = vmatmul.bf16.gmra.mxu0 %v2326
  %v5197 = vpop.f32.mrf.mxu0
  %v5198 = vadd.f32 %v5149, %v5197
  %v5199 = vpop.f32.mrf.mxu0
  %v5200 = vadd.f32 %v5151, %v5199
  %5201 = vmatmul.bf16.gmra.mxu0 %v2330
  %v5202 = vpop.f32.mrf.mxu0
  %v5203 = vadd.f32 %v5154, %v5202
  %v5204 = vpop.f32.mrf.mxu0
  %v5205 = vadd.f32 %v5156, %v5204
  %5206 = vmatmul.bf16.gmra.mxu0 %v2334
  %v5207 = vpop.f32.mrf.mxu0
  %v5208 = vadd.f32 %v5159, %v5207
  %v5209 = vpop.f32.mrf.mxu0
  %v5210 = vadd.f32 %v5161, %v5209
  %5211 = vmatmul.bf16.gmra.mxu0 %v2338
  %v5212 = vpop.f32.mrf.mxu0
  %v5213 = vadd.f32 %v5164, %v5212
  %v5214 = vpop.f32.mrf.mxu0
  %v5215 = vadd.f32 %v5166, %v5214
  %5216 = vdwg.mxu0
  %5217 = vmatpush.bf16.msra.mxu0 %v3636
  %5218 = vmatpush.bf16.msra.mxu0 %v3628
  %5219 = vmatpush.bf16.msra.mxu0 %v3620
  %5220 = vmatpush.bf16.msra.mxu0 %v3612
  %5221 = vmatpush.bf16.msra.mxu0 %v3604
  %5222 = vmatpush.bf16.msra.mxu0 %v3596
  %5223 = vmatpush.bf16.msra.mxu0 %v3588
  %5224 = vmatpush.bf16.msra.mxu0 %v3580
  %5225 = vmatmul.bf16.gmra.mxu0 %v2311
  %v5226 = vpop.f32.mrf.mxu0
  %v5227 = vadd.f32 %v5178, %v5226
  %v5228 = vpop.f32.mrf.mxu0
  %v5229 = vadd.f32 %v5180, %v5228
  %5230 = vmatmul.bf16.gmra.mxu0 %v2315
  %v5231 = vpop.f32.mrf.mxu0
  %v5232 = vadd.f32 %v5183, %v5231
  %v5233 = vpop.f32.mrf.mxu0
  %v5234 = vadd.f32 %v5185, %v5233
  %5235 = vmatmul.bf16.gmra.mxu0 %v2319
  %v5236 = vpop.f32.mrf.mxu0
  %v5237 = vadd.f32 %v5188, %v5236
  %v5238 = vpop.f32.mrf.mxu0
  %v5239 = vadd.f32 %v5190, %v5238
  %5240 = vmatmul.bf16.gmra.mxu0 %v2323
  %v5241 = vpop.f32.mrf.mxu0
  %v5242 = vadd.f32 %v5193, %v5241
  %v5243 = vpop.f32.mrf.mxu0
  %v5244 = vadd.f32 %v5195, %v5243
  %5245 = vmatmul.bf16.gmra.mxu0 %v2327
  %v5246 = vpop.f32.mrf.mxu0
  %v5247 = vadd.f32 %v5198, %v5246
  %v5248 = vpop.f32.mrf.mxu0
  %v5249 = vadd.f32 %v5200, %v5248
  %5250 = vmatmul.bf16.gmra.mxu0 %v2331
  %v5251 = vpop.f32.mrf.mxu0
  %v5252 = vadd.f32 %v5203, %v5251
  %v5253 = vpop.f32.mrf.mxu0
  %v5254 = vadd.f32 %v5205, %v5253
  %5255 = vmatmul.bf16.gmra.mxu0 %v2335
  %v5256 = vpop.f32.mrf.mxu0
  %v5257 = vadd.f32 %v5208, %v5256
  %v5258 = vpop.f32.mrf.mxu0
  %v5259 = vadd.f32 %v5210, %v5258
  %5260 = vmatmul.bf16.gmra.mxu0 %v2339
  %v5261 = vpop.f32.mrf.mxu0
  %v5262 = vadd.f32 %v5213, %v5261
  %v5263 = vpop.f32.mrf.mxu0
  %v5264 = vadd.f32 %v5215, %v5263
  %5265 = vdwg.mxu0
  %5266 = vmatpush.bf16.msra.mxu0 %v3445
  %5267 = vmatpush.bf16.msra.mxu0 %v3437
  %5268 = vmatpush.bf16.msra.mxu0 %v3429
  %5269 = vmatpush.bf16.msra.mxu0 %v3421
  %5270 = vmatpush.bf16.msra.mxu0 %v3413
  %5271 = vmatpush.bf16.msra.mxu0 %v3405
  %5272 = vmatpush.bf16.msra.mxu0 %v3397
  %5273 = vmatpush.bf16.msra.mxu0 %v3389
  %5274 = vmatmul.bf16.gmra.mxu0 %v2308
  %v5275 = vpop.f32.mrf.mxu0
  %v5276 = vadd.f32 %v2605, %v5275
  %v5277 = vpop.f32.mrf.mxu0
  %v5278 = vadd.f32 %v2605, %v5277
  %5279 = vmatmul.bf16.gmra.mxu0 %v2312
  %v5280 = vpop.f32.mrf.mxu0
  %v5281 = vadd.f32 %v2605, %v5280
  %v5282 = vpop.f32.mrf.mxu0
  %v5283 = vadd.f32 %v2605, %v5282
  %5284 = vmatmul.bf16.gmra.mxu0 %v2316
  %v5285 = vpop.f32.mrf.mxu0
  %v5286 = vadd.f32 %v2605, %v5285
  %v5287 = vpop.f32.mrf.mxu0
  %v5288 = vadd.f32 %v2605, %v5287
  %5289 = vmatmul.bf16.gmra.mxu0 %v2320
  %v5290 = vpop.f32.mrf.mxu0
  %v5291 = vadd.f32 %v2605, %v5290
  %v5292 = vpop.f32.mrf.mxu0
  %v5293 = vadd.f32 %v2605, %v5292
  %5294 = vmatmul.bf16.gmra.mxu0 %v2324
  %v5295 = vpop.f32.mrf.mxu0
  %v5296 = vadd.f32 %v2605, %v5295
  %v5297 = vpop.f32.mrf.mxu0
  %v5298 = vadd.f32 %v2605, %v5297
  %5299 = vmatmul.bf16.gmra.mxu0 %v2328
  %v5300 = vpop.f32.mrf.mxu0
  %v5301 = vadd.f32 %v2605, %v5300
  %v5302 = vpop.f32.mrf.mxu0
  %v5303 = vadd.f32 %v2605, %v5302
  %5304 = vmatmul.bf16.gmra.mxu0 %v2332
  %v5305 = vpop.f32.mrf.mxu0
  %v5306 = vadd.f32 %v2605, %v5305
  %v5307 = vpop.f32.mrf.mxu0
  %v5308 = vadd.f32 %v2605, %v5307
  %5309 = vmatmul.bf16.gmra.mxu0 %v2336
  %v5310 = vpop.f32.mrf.mxu0
  %v5311 = vadd.f32 %v2605, %v5310
  %v5312 = vpop.f32.mrf.mxu0
  %v5313 = vadd.f32 %v2605, %v5312
  %5314 = vdwg.mxu0
  %5315 = vmatpush.bf16.msra.mxu0 %v3509
  %5316 = vmatpush.bf16.msra.mxu0 %v3501
  %5317 = vmatpush.bf16.msra.mxu0 %v3493
  %5318 = vmatpush.bf16.msra.mxu0 %v3485
  %5319 = vmatpush.bf16.msra.mxu0 %v3477
  %5320 = vmatpush.bf16.msra.mxu0 %v3469
  %5321 = vmatpush.bf16.msra.mxu0 %v3461
  %5322 = vmatpush.bf16.msra.mxu0 %v3453
  %5323 = vmatmul.bf16.gmra.mxu0 %v2309
  %v5324 = vpop.f32.mrf.mxu0
  %v5325 = vadd.f32 %v5276, %v5324
  %v5326 = vpop.f32.mrf.mxu0
  %v5327 = vadd.f32 %v5278, %v5326
  %5328 = vmatmul.bf16.gmra.mxu0 %v2313
  %v5329 = vpop.f32.mrf.mxu0
  %v5330 = vadd.f32 %v5281, %v5329
  %v5331 = vpop.f32.mrf.mxu0
  %v5332 = vadd.f32 %v5283, %v5331
  %5333 = vmatmul.bf16.gmra.mxu0 %v2317
  %v5334 = vpop.f32.mrf.mxu0
  %v5335 = vadd.f32 %v5286, %v5334
  %v5336 = vpop.f32.mrf.mxu0
  %v5337 = vadd.f32 %v5288, %v5336
  %5338 = vmatmul.bf16.gmra.mxu0 %v2321
  %v5339 = vpop.f32.mrf.mxu0
  %v5340 = vadd.f32 %v5291, %v5339
  %v5341 = vpop.f32.mrf.mxu0
  %v5342 = vadd.f32 %v5293, %v5341
  %5343 = vmatmul.bf16.gmra.mxu0 %v2325
  %v5344 = vpop.f32.mrf.mxu0
  %v5345 = vadd.f32 %v5296, %v5344
  %v5346 = vpop.f32.mrf.mxu0
  %v5347 = vadd.f32 %v5298, %v5346
  %5348 = vmatmul.bf16.gmra.mxu0 %v2329
  %v5349 = vpop.f32.mrf.mxu0
  %v5350 = vadd.f32 %v5301, %v5349
  %v5351 = vpop.f32.mrf.mxu0
  %v5352 = vadd.f32 %v5303, %v5351
  %5353 = vmatmul.bf16.gmra.mxu0 %v2333
  %v5354 = vpop.f32.mrf.mxu0
  %v5355 = vadd.f32 %v5306, %v5354
  %v5356 = vpop.f32.mrf.mxu0
  %v5357 = vadd.f32 %v5308, %v5356
  %5358 = vmatmul.bf16.gmra.mxu0 %v2337
  %v5359 = vpop.f32.mrf.mxu0
  %v5360 = vadd.f32 %v5311, %v5359
  %v5361 = vpop.f32.mrf.mxu0
  %v5362 = vadd.f32 %v5313, %v5361
  %5363 = vdwg.mxu0
  %5364 = vmatpush.bf16.msra.mxu0 %v3573
  %5365 = vmatpush.bf16.msra.mxu0 %v3565
  %5366 = vmatpush.bf16.msra.mxu0 %v3557
  %5367 = vmatpush.bf16.msra.mxu0 %v3549
  %5368 = vmatpush.bf16.msra.mxu0 %v3541
  %5369 = vmatpush.bf16.msra.mxu0 %v3533
  %5370 = vmatpush.bf16.msra.mxu0 %v3525
  %5371 = vmatpush.bf16.msra.mxu0 %v3517
  %5372 = vmatmul.bf16.gmra.mxu0 %v2310
  %v5373 = vpop.f32.mrf.mxu0
  %v5374 = vadd.f32 %v5325, %v5373
  %v5375 = vpop.f32.mrf.mxu0
  %v5376 = vadd.f32 %v5327, %v5375
  %5377 = vmatmul.bf16.gmra.mxu0 %v2314
  %v5378 = vpop.f32.mrf.mxu0
  %v5379 = vadd.f32 %v5330, %v5378
  %v5380 = vpop.f32.mrf.mxu0
  %v5381 = vadd.f32 %v5332, %v5380
  %5382 = vmatmul.bf16.gmra.mxu0 %v2318
  %v5383 = vpop.f32.mrf.mxu0
  %v5384 = vadd.f32 %v5335, %v5383
  %v5385 = vpop.f32.mrf.mxu0
  %v5386 = vadd.f32 %v5337, %v5385
  %5387 = vmatmul.bf16.gmra.mxu0 %v2322
  %v5388 = vpop.f32.mrf.mxu0
  %v5389 = vadd.f32 %v5340, %v5388
  %v5390 = vpop.f32.mrf.mxu0
  %v5391 = vadd.f32 %v5342, %v5390
  %5392 = vmatmul.bf16.gmra.mxu0 %v2326
  %v5393 = vpop.f32.mrf.mxu0
  %v5394 = vadd.f32 %v5345, %v5393
  %v5395 = vpop.f32.mrf.mxu0
  %v5396 = vadd.f32 %v5347, %v5395
  %5397 = vmatmul.bf16.gmra.mxu0 %v2330
  %v5398 = vpop.f32.mrf.mxu0
  %v5399 = vadd.f32 %v5350, %v5398
  %v5400 = vpop.f32.mrf.mxu0
  %v5401 = vadd.f32 %v5352, %v5400
  %5402 = vmatmul.bf16.gmra.mxu0 %v2334
  %v5403 = vpop.f32.mrf.mxu0
  %v5404 = vadd.f32 %v5355, %v5403
  %v5405 = vpop.f32.mrf.mxu0
  %v5406 = vadd.f32 %v5357, %v5405
  %5407 = vmatmul.bf16.gmra.mxu0 %v2338
  %v5408 = vpop.f32.mrf.mxu0
  %v5409 = vadd.f32 %v5360, %v5408
  %v5410 = vpop.f32.mrf.mxu0
  %v5411 = vadd.f32 %v5362, %v5410
  %5412 = vdwg.mxu0
  %5413 = vmatpush.bf16.msra.mxu0 %v3637
  %5414 = vmatpush.bf16.msra.mxu0 %v3629
  %5415 = vmatpush.bf16.msra.mxu0 %v3621
  %5416 = vmatpush.bf16.msra.mxu0 %v3613
  %5417 = vmatpush.bf16.msra.mxu0 %v3605
  %5418 = vmatpush.bf16.msra.mxu0 %v3597
  %5419 = vmatpush.bf16.msra.mxu0 %v3589
  %5420 = vmatpush.bf16.msra.mxu0 %v3581
  %5421 = vmatmul.bf16.gmra.mxu0 %v2311
  %v5422 = vpop.f32.mrf.mxu0
  %v5423 = vadd.f32 %v5374, %v5422
  %v5424 = vpop.f32.mrf.mxu0
  %v5425 = vadd.f32 %v5376, %v5424
  %5426 = vmatmul.bf16.gmra.mxu0 %v2315
  %v5427 = vpop.f32.mrf.mxu0
  %v5428 = vadd.f32 %v5379, %v5427
  %v5429 = vpop.f32.mrf.mxu0
  %v5430 = vadd.f32 %v5381, %v5429
  %5431 = vmatmul.bf16.gmra.mxu0 %v2319
  %v5432 = vpop.f32.mrf.mxu0
  %v5433 = vadd.f32 %v5384, %v5432
  %v5434 = vpop.f32.mrf.mxu0
  %v5435 = vadd.f32 %v5386, %v5434
  %5436 = vmatmul.bf16.gmra.mxu0 %v2323
  %v5437 = vpop.f32.mrf.mxu0
  %v5438 = vadd.f32 %v5389, %v5437
  %v5439 = vpop.f32.mrf.mxu0
  %v5440 = vadd.f32 %v5391, %v5439
  %5441 = vmatmul.bf16.gmra.mxu0 %v2327
  %v5442 = vpop.f32.mrf.mxu0
  %v5443 = vadd.f32 %v5394, %v5442
  %v5444 = vpop.f32.mrf.mxu0
  %v5445 = vadd.f32 %v5396, %v5444
  %5446 = vmatmul.bf16.gmra.mxu0 %v2331
  %v5447 = vpop.f32.mrf.mxu0
  %v5448 = vadd.f32 %v5399, %v5447
  %v5449 = vpop.f32.mrf.mxu0
  %v5450 = vadd.f32 %v5401, %v5449
  %5451 = vmatmul.bf16.gmra.mxu0 %v2335
  %v5452 = vpop.f32.mrf.mxu0
  %v5453 = vadd.f32 %v5404, %v5452
  %v5454 = vpop.f32.mrf.mxu0
  %v5455 = vadd.f32 %v5406, %v5454
  %5456 = vmatmul.bf16.gmra.mxu0 %v2339
  %v5457 = vpop.f32.mrf.mxu0
  %v5458 = vadd.f32 %v5409, %v5457
  %v5459 = vpop.f32.mrf.mxu0
  %v5460 = vadd.f32 %v5411, %v5459
  %5461 = vdwg.mxu0
  %v5462 = vmax.f32 %v4051, 0.0
  %v5463 = vmax.f32 %v4247, 0.0
  %v5464 = vmax.f32 %v4443, 0.0
  %v5465 = vmax.f32 %v4639, 0.0
  %v5466 = vmax.f32 %v4835, 0.0
  %v5467 = vmax.f32 %v5031, 0.0
  %v5468 = vmax.f32 %v5227, 0.0
  %v5469 = vmax.f32 %v5423, 0.0
  %v5470 = vmax.f32 %v4053, 0.0
  %v5471 = vmax.f32 %v4249, 0.0
  %v5472 = vmax.f32 %v4445, 0.0
  %v5473 = vmax.f32 %v4641, 0.0
  %v5474 = vmax.f32 %v4837, 0.0
  %v5475 = vmax.f32 %v5033, 0.0
  %v5476 = vmax.f32 %v5229, 0.0
  %v5477 = vmax.f32 %v5425, 0.0
  %v5478 = vmax.f32 %v4056, 0.0
  %v5479 = vmax.f32 %v4252, 0.0
  %v5480 = vmax.f32 %v4448, 0.0
  %v5481 = vmax.f32 %v4644, 0.0
  %v5482 = vmax.f32 %v4840, 0.0
  %v5483 = vmax.f32 %v5036, 0.0
  %v5484 = vmax.f32 %v5232, 0.0
  %v5485 = vmax.f32 %v5428, 0.0
  %v5486 = vmax.f32 %v4058, 0.0
  %v5487 = vmax.f32 %v4254, 0.0
  %v5488 = vmax.f32 %v4450, 0.0
  %v5489 = vmax.f32 %v4646, 0.0
  %v5490 = vmax.f32 %v4842, 0.0
  %v5491 = vmax.f32 %v5038, 0.0
  %v5492 = vmax.f32 %v5234, 0.0
  %v5493 = vmax.f32 %v5430, 0.0
  %v5494 = vmax.f32 %v4061, 0.0
  %v5495 = vmax.f32 %v4257, 0.0
  %v5496 = vmax.f32 %v4453, 0.0
  %v5497 = vmax.f32 %v4649, 0.0
  %v5498 = vmax.f32 %v4845, 0.0
  %v5499 = vmax.f32 %v5041, 0.0
  %v5500 = vmax.f32 %v5237, 0.0
  %v5501 = vmax.f32 %v5433, 0.0
  %v5502 = vmax.f32 %v4063, 0.0
  %v5503 = vmax.f32 %v4259, 0.0
  %v5504 = vmax.f32 %v4455, 0.0
  %v5505 = vmax.f32 %v4651, 0.0
  %v5506 = vmax.f32 %v4847, 0.0
  %v5507 = vmax.f32 %v5043, 0.0
  %v5508 = vmax.f32 %v5239, 0.0
  %v5509 = vmax.f32 %v5435, 0.0
  %v5510 = vmax.f32 %v4066, 0.0
  %v5511 = vmax.f32 %v4262, 0.0
  %v5512 = vmax.f32 %v4458, 0.0
  %v5513 = vmax.f32 %v4654, 0.0
  %v5514 = vmax.f32 %v4850, 0.0
  %v5515 = vmax.f32 %v5046, 0.0
  %v5516 = vmax.f32 %v5242, 0.0
  %v5517 = vmax.f32 %v5438, 0.0
  %v5518 = vmax.f32 %v4068, 0.0
  %v5519 = vmax.f32 %v4264, 0.0
  %v5520 = vmax.f32 %v4460, 0.0
  %v5521 = vmax.f32 %v4656, 0.0
  %v5522 = vmax.f32 %v4852, 0.0
  %v5523 = vmax.f32 %v5048, 0.0
  %v5524 = vmax.f32 %v5244, 0.0
  %v5525 = vmax.f32 %v5440, 0.0
  %v5526 = vmax.f32 %v4071, 0.0
  %v5527 = vmax.f32 %v4267, 0.0
  %v5528 = vmax.f32 %v4463, 0.0
  %v5529 = vmax.f32 %v4659, 0.0
  %v5530 = vmax.f32 %v4855, 0.0
  %v5531 = vmax.f32 %v5051, 0.0
  %v5532 = vmax.f32 %v5247, 0.0
  %v5533 = vmax.f32 %v5443, 0.0
  %v5534 = vmax.f32 %v4073, 0.0
  %v5535 = vmax.f32 %v4269, 0.0
  %v5536 = vmax.f32 %v4465, 0.0
  %v5537 = vmax.f32 %v4661, 0.0
  %v5538 = vmax.f32 %v4857, 0.0
  %v5539 = vmax.f32 %v5053, 0.0
  %v5540 = vmax.f32 %v5249, 0.0
  %v5541 = vmax.f32 %v5445, 0.0
  %v5542 = vmax.f32 %v4076, 0.0
  %v5543 = vmax.f32 %v4272, 0.0
  %v5544 = vmax.f32 %v4468, 0.0
  %v5545 = vmax.f32 %v4664, 0.0
  %v5546 = vmax.f32 %v4860, 0.0
  %v5547 = vmax.f32 %v5056, 0.0
  %v5548 = vmax.f32 %v5252, 0.0
  %v5549 = vmax.f32 %v5448, 0.0
  %v5550 = vmax.f32 %v4078, 0.0
  %v5551 = vmax.f32 %v4274, 0.0
  %v5552 = vmax.f32 %v4470, 0.0
  %v5553 = vmax.f32 %v4666, 0.0
  %v5554 = vmax.f32 %v4862, 0.0
  %v5555 = vmax.f32 %v5058, 0.0
  %v5556 = vmax.f32 %v5254, 0.0
  %v5557 = vmax.f32 %v5450, 0.0
  %v5558 = vmax.f32 %v4081, 0.0
  %v5559 = vmax.f32 %v4277, 0.0
  %v5560 = vmax.f32 %v4473, 0.0
  %v5561 = vmax.f32 %v4669, 0.0
  %v5562 = vmax.f32 %v4865, 0.0
  %v5563 = vmax.f32 %v5061, 0.0
  %v5564 = vmax.f32 %v5257, 0.0
  %v5565 = vmax.f32 %v5453, 0.0
  %v5566 = vmax.f32 %v4083, 0.0
  %v5567 = vmax.f32 %v4279, 0.0
  %v5568 = vmax.f32 %v4475, 0.0
  %v5569 = vmax.f32 %v4671, 0.0
  %v5570 = vmax.f32 %v4867, 0.0
  %v5571 = vmax.f32 %v5063, 0.0
  %v5572 = vmax.f32 %v5259, 0.0
  %v5573 = vmax.f32 %v5455, 0.0
  %v5574 = vmax.f32 %v4086, 0.0
  %v5575 = vmax.f32 %v4282, 0.0
  %v5576 = vmax.f32 %v4478, 0.0
  %v5577 = vmax.f32 %v4674, 0.0
  %v5578 = vmax.f32 %v4870, 0.0
  %v5579 = vmax.f32 %v5066, 0.0
  %v5580 = vmax.f32 %v5262, 0.0
  %v5581 = vmax.f32 %v5458, 0.0
  %v5582 = vmax.f32 %v4088, 0.0
  %v5583 = vmax.f32 %v4284, 0.0
  %v5584 = vmax.f32 %v4480, 0.0
  %v5585 = vmax.f32 %v4676, 0.0
  %v5586 = vmax.f32 %v4872, 0.0
  %v5587 = vmax.f32 %v5068, 0.0
  %v5588 = vmax.f32 %v5264, 0.0
  %v5589 = vmax.f32 %v5460, 0.0
  %v5590 = vpack.c.bf16 %v5470, %v5462
  %v5591 = vpack.c.bf16 %v5471, %v5463
  %v5592 = vpack.c.bf16 %v5472, %v5464
  %v5593 = vpack.c.bf16 %v5473, %v5465
  %v5594 = vpack.c.bf16 %v5474, %v5466
  %v5595 = vpack.c.bf16 %v5475, %v5467
  %v5596 = vpack.c.bf16 %v5476, %v5468
  %v5597 = vpack.c.bf16 %v5477, %v5469
  %v5598 = vpack.c.bf16 %v5486, %v5478
  %v5599 = vpack.c.bf16 %v5487, %v5479
  %v5600 = vpack.c.bf16 %v5488, %v5480
  %v5601 = vpack.c.bf16 %v5489, %v5481
  %v5602 = vpack.c.bf16 %v5490, %v5482
  %v5603 = vpack.c.bf16 %v5491, %v5483
  %v5604 = vpack.c.bf16 %v5492, %v5484
  %v5605 = vpack.c.bf16 %v5493, %v5485
  %v5606 = vpack.c.bf16 %v5502, %v5494
  %v5607 = vpack.c.bf16 %v5503, %v5495
  %v5608 = vpack.c.bf16 %v5504, %v5496
  %v5609 = vpack.c.bf16 %v5505, %v5497
  %v5610 = vpack.c.bf16 %v5506, %v5498
  %v5611 = vpack.c.bf16 %v5507, %v5499
  %v5612 = vpack.c.bf16 %v5508, %v5500
  %v5613 = vpack.c.bf16 %v5509, %v5501
  %v5614 = vpack.c.bf16 %v5518, %v5510
  %v5615 = vpack.c.bf16 %v5519, %v5511
  %v5616 = vpack.c.bf16 %v5520, %v5512
  %v5617 = vpack.c.bf16 %v5521, %v5513
  %v5618 = vpack.c.bf16 %v5522, %v5514
  %v5619 = vpack.c.bf16 %v5523, %v5515
  %v5620 = vpack.c.bf16 %v5524, %v5516
  %v5621 = vpack.c.bf16 %v5525, %v5517
  %v5622 = vpack.c.bf16 %v5534, %v5526
  %v5623 = vpack.c.bf16 %v5535, %v5527
  %v5624 = vpack.c.bf16 %v5536, %v5528
  %v5625 = vpack.c.bf16 %v5537, %v5529
  %v5626 = vpack.c.bf16 %v5538, %v5530
  %v5627 = vpack.c.bf16 %v5539, %v5531
  %v5628 = vpack.c.bf16 %v5540, %v5532
  %v5629 = vpack.c.bf16 %v5541, %v5533
  %v5630 = vpack.c.bf16 %v5550, %v5542
  %v5631 = vpack.c.bf16 %v5551, %v5543
  %v5632 = vpack.c.bf16 %v5552, %v5544
  %v5633 = vpack.c.bf16 %v5553, %v5545
  %v5634 = vpack.c.bf16 %v5554, %v5546
  %v5635 = vpack.c.bf16 %v5555, %v5547
  %v5636 = vpack.c.bf16 %v5556, %v5548
  %v5637 = vpack.c.bf16 %v5557, %v5549
  %v5638 = vpack.c.bf16 %v5566, %v5558
  %v5639 = vpack.c.bf16 %v5567, %v5559
  %v5640 = vpack.c.bf16 %v5568, %v5560
  %v5641 = vpack.c.bf16 %v5569, %v5561
  %v5642 = vpack.c.bf16 %v5570, %v5562
  %v5643 = vpack.c.bf16 %v5571, %v5563
  %v5644 = vpack.c.bf16 %v5572, %v5564
  %v5645 = vpack.c.bf16 %v5573, %v5565
  %v5646 = vpack.c.bf16 %v5582, %v5574
  %v5647 = vpack.c.bf16 %v5583, %v5575
  %v5648 = vpack.c.bf16 %v5584, %v5576
  %v5649 = vpack.c.bf16 %v5585, %v5577
  %v5650 = vpack.c.bf16 %v5586, %v5578
  %v5651 = vpack.c.bf16 %v5587, %v5579
  %v5652 = vpack.c.bf16 %v5588, %v5580
  %v5653 = vpack.c.bf16 %v5589, %v5581
  %v5654 = vld [vmem:[%s5] sm:$0xff]
  %v5655 = vld [vmem:[%s5 + $0x8] sm:$0xff]
  %v5656 = vld [vmem:[%s5 + $0x10] sm:$0xff]
  %v5657 = vld [vmem:[%s5 + $0x18] sm:$0xff]
  %v5658 = vld [vmem:[%s5 + $0x20] sm:$0xff]
  %v5659 = vld [vmem:[%s5 + $0x28] sm:$0xff]
  %v5660 = vld [vmem:[%s5 + $0x30] sm:$0xff]
  %v5661 = vld [vmem:[%s5 + $0x38] sm:$0xff]
  %v5662 = vld [vmem:[%s5 + $0x40] sm:$0xff]
  %v5663 = vld [vmem:[%s5 + $0x48] sm:$0xff]
  %v5664 = vld [vmem:[%s5 + $0x50] sm:$0xff]
  %v5665 = vld [vmem:[%s5 + $0x58] sm:$0xff]
  %v5666 = vld [vmem:[%s5 + $0x60] sm:$0xff]
  %v5667 = vld [vmem:[%s5 + $0x68] sm:$0xff]
  %v5668 = vld [vmem:[%s5 + $0x70] sm:$0xff]
  %v5669 = vld [vmem:[%s5 + $0x78] sm:$0xff]
  %v5670 = vld [vmem:[%s5 + $0x80] sm:$0xff]
  %v5671 = vld [vmem:[%s5 + $0x88] sm:$0xff]
  %v5672 = vld [vmem:[%s5 + $0x90] sm:$0xff]
  %v5673 = vld [vmem:[%s5 + $0x98] sm:$0xff]
  %v5674 = vld [vmem:[%s5 + $0xa0] sm:$0xff]
  %v5675 = vld [vmem:[%s5 + $0xa8] sm:$0xff]
  %v5676 = vld [vmem:[%s5 + $0xb0] sm:$0xff]
  %v5677 = vld [vmem:[%s5 + $0xb8] sm:$0xff]
  %v5678 = vld [vmem:[%s5 + $0xc0] sm:$0xff]
  %v5679 = vld [vmem:[%s5 + $0xc8] sm:$0xff]
  %v5680 = vld [vmem:[%s5 + $0xd0] sm:$0xff]
  %v5681 = vld [vmem:[%s5 + $0xd8] sm:$0xff]
  %v5682 = vld [vmem:[%s5 + $0xe0] sm:$0xff]
  %v5683 = vld [vmem:[%s5 + $0xe8] sm:$0xff]
  %v5684 = vld [vmem:[%s5 + $0xf0] sm:$0xff]
  %v5685 = vld [vmem:[%s5 + $0xf8] sm:$0xff]
  %v5686 = vld [vmem:[%s5 + $0x100] sm:$0xff]
  %v5687 = vld [vmem:[%s5 + $0x108] sm:$0xff]
  %v5688 = vld [vmem:[%s5 + $0x110] sm:$0xff]
  %v5689 = vld [vmem:[%s5 + $0x118] sm:$0xff]
  %v5690 = vld [vmem:[%s5 + $0x120] sm:$0xff]
  %v5691 = vld [vmem:[%s5 + $0x128] sm:$0xff]
  %v5692 = vld [vmem:[%s5 + $0x130] sm:$0xff]
  %v5693 = vld [vmem:[%s5 + $0x138] sm:$0xff]
  %v5694 = vld [vmem:[%s5 + $0x140] sm:$0xff]
  %v5695 = vld [vmem:[%s5 + $0x148] sm:$0xff]
  %v5696 = vld [vmem:[%s5 + $0x150] sm:$0xff]
  %v5697 = vld [vmem:[%s5 + $0x158] sm:$0xff]
  %v5698 = vld [vmem:[%s5 + $0x160] sm:$0xff]
  %v5699 = vld [vmem:[%s5 + $0x168] sm:$0xff]
  %v5700 = vld [vmem:[%s5 + $0x170] sm:$0xff]
  %v5701 = vld [vmem:[%s5 + $0x178] sm:$0xff]
  %v5702 = vld [vmem:[%s5 + $0x180] sm:$0xff]
  %v5703 = vld [vmem:[%s5 + $0x188] sm:$0xff]
  %v5704 = vld [vmem:[%s5 + $0x190] sm:$0xff]
  %v5705 = vld [vmem:[%s5 + $0x198] sm:$0xff]
  %v5706 = vld [vmem:[%s5 + $0x1a0] sm:$0xff]
  %v5707 = vld [vmem:[%s5 + $0x1a8] sm:$0xff]
  %v5708 = vld [vmem:[%s5 + $0x1b0] sm:$0xff]
  %v5709 = vld [vmem:[%s5 + $0x1b8] sm:$0xff]
  %v5710 = vld [vmem:[%s5 + $0x1c0] sm:$0xff]
  %v5711 = vld [vmem:[%s5 + $0x1c8] sm:$0xff]
  %v5712 = vld [vmem:[%s5 + $0x1d0] sm:$0xff]
  %v5713 = vld [vmem:[%s5 + $0x1d8] sm:$0xff]
  %v5714 = vld [vmem:[%s5 + $0x1e0] sm:$0xff]
  %v5715 = vld [vmem:[%s5 + $0x1e8] sm:$0xff]
  %v5716 = vld [vmem:[%s5 + $0x1f0] sm:$0xff]
  %v5717 = vld [vmem:[%s5 + $0x1f8] sm:$0xff]
  %v5718 = vld [vmem:[%s5 + $0x200] sm:$0xff]
  %v5719 = vld [vmem:[%s5 + $0x208] sm:$0xff]
  %v5720 = vld [vmem:[%s5 + $0x210] sm:$0xff]
  %v5721 = vld [vmem:[%s5 + $0x218] sm:$0xff]
  %v5722 = vld [vmem:[%s5 + $0x220] sm:$0xff]
  %v5723 = vld [vmem:[%s5 + $0x228] sm:$0xff]
  %v5724 = vld [vmem:[%s5 + $0x230] sm:$0xff]
  %v5725 = vld [vmem:[%s5 + $0x238] sm:$0xff]
  %v5726 = vld [vmem:[%s5 + $0x240] sm:$0xff]
  %v5727 = vld [vmem:[%s5 + $0x248] sm:$0xff]
  %v5728 = vld [vmem:[%s5 + $0x250] sm:$0xff]
  %v5729 = vld [vmem:[%s5 + $0x258] sm:$0xff]
  %v5730 = vld [vmem:[%s5 + $0x260] sm:$0xff]
  %v5731 = vld [vmem:[%s5 + $0x268] sm:$0xff]
  %v5732 = vld [vmem:[%s5 + $0x270] sm:$0xff]
  %v5733 = vld [vmem:[%s5 + $0x278] sm:$0xff]
  %v5734 = vld [vmem:[%s5 + $0x280] sm:$0xff]
  %v5735 = vld [vmem:[%s5 + $0x288] sm:$0xff]
  %v5736 = vld [vmem:[%s5 + $0x290] sm:$0xff]
  %v5737 = vld [vmem:[%s5 + $0x298] sm:$0xff]
  %v5738 = vld [vmem:[%s5 + $0x2a0] sm:$0xff]
  %v5739 = vld [vmem:[%s5 + $0x2a8] sm:$0xff]
  %v5740 = vld [vmem:[%s5 + $0x2b0] sm:$0xff]
  %v5741 = vld [vmem:[%s5 + $0x2b8] sm:$0xff]
  %v5742 = vld [vmem:[%s5 + $0x2c0] sm:$0xff]
  %v5743 = vld [vmem:[%s5 + $0x2c8] sm:$0xff]
  %v5744 = vld [vmem:[%s5 + $0x2d0] sm:$0xff]
  %v5745 = vld [vmem:[%s5 + $0x2d8] sm:$0xff]
  %v5746 = vld [vmem:[%s5 + $0x2e0] sm:$0xff]
  %v5747 = vld [vmem:[%s5 + $0x2e8] sm:$0xff]
  %v5748 = vld [vmem:[%s5 + $0x2f0] sm:$0xff]
  %v5749 = vld [vmem:[%s5 + $0x2f8] sm:$0xff]
  %v5750 = vld [vmem:[%s5 + $0x300] sm:$0xff]
  %v5751 = vld [vmem:[%s5 + $0x308] sm:$0xff]
  %v5752 = vld [vmem:[%s5 + $0x310] sm:$0xff]
  %v5753 = vld [vmem:[%s5 + $0x318] sm:$0xff]
  %v5754 = vld [vmem:[%s5 + $0x320] sm:$0xff]
  %v5755 = vld [vmem:[%s5 + $0x328] sm:$0xff]
  %v5756 = vld [vmem:[%s5 + $0x330] sm:$0xff]
  %v5757 = vld [vmem:[%s5 + $0x338] sm:$0xff]
  %v5758 = vld [vmem:[%s5 + $0x340] sm:$0xff]
  %v5759 = vld [vmem:[%s5 + $0x348] sm:$0xff]
  %v5760 = vld [vmem:[%s5 + $0x350] sm:$0xff]
  %v5761 = vld [vmem:[%s5 + $0x358] sm:$0xff]
  %v5762 = vld [vmem:[%s5 + $0x360] sm:$0xff]
  %v5763 = vld [vmem:[%s5 + $0x368] sm:$0xff]
  %v5764 = vld [vmem:[%s5 + $0x370] sm:$0xff]
  %v5765 = vld [vmem:[%s5 + $0x378] sm:$0xff]
  %v5766 = vld [vmem:[%s5 + $0x380] sm:$0xff]
  %v5767 = vld [vmem:[%s5 + $0x388] sm:$0xff]
  %v5768 = vld [vmem:[%s5 + $0x390] sm:$0xff]
  %v5769 = vld [vmem:[%s5 + $0x398] sm:$0xff]
  %v5770 = vld [vmem:[%s5 + $0x3a0] sm:$0xff]
  %v5771 = vld [vmem:[%s5 + $0x3a8] sm:$0xff]
  %v5772 = vld [vmem:[%s5 + $0x3b0] sm:$0xff]
  %v5773 = vld [vmem:[%s5 + $0x3b8] sm:$0xff]
  %v5774 = vld [vmem:[%s5 + $0x3c0] sm:$0xff]
  %v5775 = vld [vmem:[%s5 + $0x3c8] sm:$0xff]
  %v5776 = vld [vmem:[%s5 + $0x3d0] sm:$0xff]
  %v5777 = vld [vmem:[%s5 + $0x3d8] sm:$0xff]
  %v5778 = vld [vmem:[%s5 + $0x3e0] sm:$0xff]
  %v5779 = vld [vmem:[%s5 + $0x3e8] sm:$0xff]
  %v5780 = vld [vmem:[%s5 + $0x3f0] sm:$0xff]
  %v5781 = vld [vmem:[%s5 + $0x3f8] sm:$0xff]
  %v5782 = vld [vmem:[%s5 + $0x400] sm:$0xff]
  %v5783 = vld [vmem:[%s5 + $0x408] sm:$0xff]
  %v5784 = vld [vmem:[%s5 + $0x410] sm:$0xff]
  %v5785 = vld [vmem:[%s5 + $0x418] sm:$0xff]
  %v5786 = vld [vmem:[%s5 + $0x420] sm:$0xff]
  %v5787 = vld [vmem:[%s5 + $0x428] sm:$0xff]
  %v5788 = vld [vmem:[%s5 + $0x430] sm:$0xff]
  %v5789 = vld [vmem:[%s5 + $0x438] sm:$0xff]
  %v5790 = vld [vmem:[%s5 + $0x440] sm:$0xff]
  %v5791 = vld [vmem:[%s5 + $0x448] sm:$0xff]
  %v5792 = vld [vmem:[%s5 + $0x450] sm:$0xff]
  %v5793 = vld [vmem:[%s5 + $0x458] sm:$0xff]
  %v5794 = vld [vmem:[%s5 + $0x460] sm:$0xff]
  %v5795 = vld [vmem:[%s5 + $0x468] sm:$0xff]
  %v5796 = vld [vmem:[%s5 + $0x470] sm:$0xff]
  %v5797 = vld [vmem:[%s5 + $0x478] sm:$0xff]
  %v5798 = vld [vmem:[%s5 + $0x480] sm:$0xff]
  %v5799 = vld [vmem:[%s5 + $0x488] sm:$0xff]
  %v5800 = vld [vmem:[%s5 + $0x490] sm:$0xff]
  %v5801 = vld [vmem:[%s5 + $0x498] sm:$0xff]
  %v5802 = vld [vmem:[%s5 + $0x4a0] sm:$0xff]
  %v5803 = vld [vmem:[%s5 + $0x4a8] sm:$0xff]
  %v5804 = vld [vmem:[%s5 + $0x4b0] sm:$0xff]
  %v5805 = vld [vmem:[%s5 + $0x4b8] sm:$0xff]
  %v5806 = vld [vmem:[%s5 + $0x4c0] sm:$0xff]
  %v5807 = vld [vmem:[%s5 + $0x4c8] sm:$0xff]
  %v5808 = vld [vmem:[%s5 + $0x4d0] sm:$0xff]
  %v5809 = vld [vmem:[%s5 + $0x4d8] sm:$0xff]
  %v5810 = vld [vmem:[%s5 + $0x4e0] sm:$0xff]
  %v5811 = vld [vmem:[%s5 + $0x4e8] sm:$0xff]
  %v5812 = vld [vmem:[%s5 + $0x4f0] sm:$0xff]
  %v5813 = vld [vmem:[%s5 + $0x4f8] sm:$0xff]
  %v5814 = vld [vmem:[%s5 + $0x500] sm:$0xff]
  %v5815 = vld [vmem:[%s5 + $0x508] sm:$0xff]
  %v5816 = vld [vmem:[%s5 + $0x510] sm:$0xff]
  %v5817 = vld [vmem:[%s5 + $0x518] sm:$0xff]
  %v5818 = vld [vmem:[%s5 + $0x520] sm:$0xff]
  %v5819 = vld [vmem:[%s5 + $0x528] sm:$0xff]
  %v5820 = vld [vmem:[%s5 + $0x530] sm:$0xff]
  %v5821 = vld [vmem:[%s5 + $0x538] sm:$0xff]
  %v5822 = vld [vmem:[%s5 + $0x540] sm:$0xff]
  %v5823 = vld [vmem:[%s5 + $0x548] sm:$0xff]
  %v5824 = vld [vmem:[%s5 + $0x550] sm:$0xff]
  %v5825 = vld [vmem:[%s5 + $0x558] sm:$0xff]
  %v5826 = vld [vmem:[%s5 + $0x560] sm:$0xff]
  %v5827 = vld [vmem:[%s5 + $0x568] sm:$0xff]
  %v5828 = vld [vmem:[%s5 + $0x570] sm:$0xff]
  %v5829 = vld [vmem:[%s5 + $0x578] sm:$0xff]
  %v5830 = vld [vmem:[%s5 + $0x580] sm:$0xff]
  %v5831 = vld [vmem:[%s5 + $0x588] sm:$0xff]
  %v5832 = vld [vmem:[%s5 + $0x590] sm:$0xff]
  %v5833 = vld [vmem:[%s5 + $0x598] sm:$0xff]
  %v5834 = vld [vmem:[%s5 + $0x5a0] sm:$0xff]
  %v5835 = vld [vmem:[%s5 + $0x5a8] sm:$0xff]
  %v5836 = vld [vmem:[%s5 + $0x5b0] sm:$0xff]
  %v5837 = vld [vmem:[%s5 + $0x5b8] sm:$0xff]
  %v5838 = vld [vmem:[%s5 + $0x5c0] sm:$0xff]
  %v5839 = vld [vmem:[%s5 + $0x5c8] sm:$0xff]
  %v5840 = vld [vmem:[%s5 + $0x5d0] sm:$0xff]
  %v5841 = vld [vmem:[%s5 + $0x5d8] sm:$0xff]
  %v5842 = vld [vmem:[%s5 + $0x5e0] sm:$0xff]
  %v5843 = vld [vmem:[%s5 + $0x5e8] sm:$0xff]
  %v5844 = vld [vmem:[%s5 + $0x5f0] sm:$0xff]
  %v5845 = vld [vmem:[%s5 + $0x5f8] sm:$0xff]
  %v5846 = vld [vmem:[%s5 + $0x600] sm:$0xff]
  %v5847 = vld [vmem:[%s5 + $0x608] sm:$0xff]
  %v5848 = vld [vmem:[%s5 + $0x610] sm:$0xff]
  %v5849 = vld [vmem:[%s5 + $0x618] sm:$0xff]
  %v5850 = vld [vmem:[%s5 + $0x620] sm:$0xff]
  %v5851 = vld [vmem:[%s5 + $0x628] sm:$0xff]
  %v5852 = vld [vmem:[%s5 + $0x630] sm:$0xff]
  %v5853 = vld [vmem:[%s5 + $0x638] sm:$0xff]
  %v5854 = vld [vmem:[%s5 + $0x640] sm:$0xff]
  %v5855 = vld [vmem:[%s5 + $0x648] sm:$0xff]
  %v5856 = vld [vmem:[%s5 + $0x650] sm:$0xff]
  %v5857 = vld [vmem:[%s5 + $0x658] sm:$0xff]
  %v5858 = vld [vmem:[%s5 + $0x660] sm:$0xff]
  %v5859 = vld [vmem:[%s5 + $0x668] sm:$0xff]
  %v5860 = vld [vmem:[%s5 + $0x670] sm:$0xff]
  %v5861 = vld [vmem:[%s5 + $0x678] sm:$0xff]
  %v5862 = vld [vmem:[%s5 + $0x680] sm:$0xff]
  %v5863 = vld [vmem:[%s5 + $0x688] sm:$0xff]
  %v5864 = vld [vmem:[%s5 + $0x690] sm:$0xff]
  %v5865 = vld [vmem:[%s5 + $0x698] sm:$0xff]
  %v5866 = vld [vmem:[%s5 + $0x6a0] sm:$0xff]
  %v5867 = vld [vmem:[%s5 + $0x6a8] sm:$0xff]
  %v5868 = vld [vmem:[%s5 + $0x6b0] sm:$0xff]
  %v5869 = vld [vmem:[%s5 + $0x6b8] sm:$0xff]
  %v5870 = vld [vmem:[%s5 + $0x6c0] sm:$0xff]
  %v5871 = vld [vmem:[%s5 + $0x6c8] sm:$0xff]
  %v5872 = vld [vmem:[%s5 + $0x6d0] sm:$0xff]
  %v5873 = vld [vmem:[%s5 + $0x6d8] sm:$0xff]
  %v5874 = vld [vmem:[%s5 + $0x6e0] sm:$0xff]
  %v5875 = vld [vmem:[%s5 + $0x6e8] sm:$0xff]
  %v5876 = vld [vmem:[%s5 + $0x6f0] sm:$0xff]
  %v5877 = vld [vmem:[%s5 + $0x6f8] sm:$0xff]
  %v5878 = vld [vmem:[%s5 + $0x700] sm:$0xff]
  %v5879 = vld [vmem:[%s5 + $0x708] sm:$0xff]
  %v5880 = vld [vmem:[%s5 + $0x710] sm:$0xff]
  %v5881 = vld [vmem:[%s5 + $0x718] sm:$0xff]
  %v5882 = vld [vmem:[%s5 + $0x720] sm:$0xff]
  %v5883 = vld [vmem:[%s5 + $0x728] sm:$0xff]
  %v5884 = vld [vmem:[%s5 + $0x730] sm:$0xff]
  %v5885 = vld [vmem:[%s5 + $0x738] sm:$0xff]
  %v5886 = vld [vmem:[%s5 + $0x740] sm:$0xff]
  %v5887 = vld [vmem:[%s5 + $0x748] sm:$0xff]
  %v5888 = vld [vmem:[%s5 + $0x750] sm:$0xff]
  %v5889 = vld [vmem:[%s5 + $0x758] sm:$0xff]
  %v5890 = vld [vmem:[%s5 + $0x760] sm:$0xff]
  %v5891 = vld [vmem:[%s5 + $0x768] sm:$0xff]
  %v5892 = vld [vmem:[%s5 + $0x770] sm:$0xff]
  %v5893 = vld [vmem:[%s5 + $0x778] sm:$0xff]
  %v5894 = vld [vmem:[%s5 + $0x780] sm:$0xff]
  %v5895 = vld [vmem:[%s5 + $0x788] sm:$0xff]
  %v5896 = vld [vmem:[%s5 + $0x790] sm:$0xff]
  %v5897 = vld [vmem:[%s5 + $0x798] sm:$0xff]
  %v5898 = vld [vmem:[%s5 + $0x7a0] sm:$0xff]
  %v5899 = vld [vmem:[%s5 + $0x7a8] sm:$0xff]
  %v5900 = vld [vmem:[%s5 + $0x7b0] sm:$0xff]
  %v5901 = vld [vmem:[%s5 + $0x7b8] sm:$0xff]
  %v5902 = vld [vmem:[%s5 + $0x7c0] sm:$0xff]
  %v5903 = vld [vmem:[%s5 + $0x7c8] sm:$0xff]
  %v5904 = vld [vmem:[%s5 + $0x7d0] sm:$0xff]
  %v5905 = vld [vmem:[%s5 + $0x7d8] sm:$0xff]
  %v5906 = vld [vmem:[%s5 + $0x7e0] sm:$0xff]
  %v5907 = vld [vmem:[%s5 + $0x7e8] sm:$0xff]
  %v5908 = vld [vmem:[%s5 + $0x7f0] sm:$0xff]
  %v5909 = vld [vmem:[%s5 + $0x7f8] sm:$0xff]
  %v5910 = vld [vmem:[%s6] sm:$0xf]
  %v5912 = vperm.slane %v5910, 0
  %v5913 = vperm.slane %v5910, 1
  %v5914 = vperm.slane %v5910, 2
  %v5915 = vperm.slane %v5910, 3
  %v6176 = vunpack.c.l.b16 %v5654
  %v6177 = vunpack.c.h.b16 %v5654
  %v6178 = vunpack.c.l.b16 %v5655
  %v6179 = vunpack.c.h.b16 %v5655
  %v6180 = vunpack.c.l.b16 %v5656
  %v6181 = vunpack.c.h.b16 %v5656
  %v6182 = vunpack.c.l.b16 %v5657
  %v6183 = vunpack.c.h.b16 %v5657
  %v6184 = vunpack.c.l.b16 %v5658
  %v6185 = vunpack.c.h.b16 %v5658
  %v6186 = vunpack.c.l.b16 %v5659
  %v6187 = vunpack.c.h.b16 %v5659
  %v6188 = vunpack.c.l.b16 %v5660
  %v6189 = vunpack.c.h.b16 %v5660
  %v6190 = vunpack.c.l.b16 %v5661
  %v6191 = vunpack.c.h.b16 %v5661
  %v6192 = vunpack.c.l.b16 %v5662
  %v6193 = vunpack.c.h.b16 %v5662
  %v6194 = vunpack.c.l.b16 %v5663
  %v6195 = vunpack.c.h.b16 %v5663
  %v6196 = vunpack.c.l.b16 %v5664
  %v6197 = vunpack.c.h.b16 %v5664
  %v6198 = vunpack.c.l.b16 %v5665
  %v6199 = vunpack.c.h.b16 %v5665
  %v6200 = vunpack.c.l.b16 %v5666
  %v6201 = vunpack.c.h.b16 %v5666
  %v6202 = vunpack.c.l.b16 %v5667
  %v6203 = vunpack.c.h.b16 %v5667
  %v6204 = vunpack.c.l.b16 %v5668
  %v6205 = vunpack.c.h.b16 %v5668
  %v6206 = vunpack.c.l.b16 %v5669
  %v6207 = vunpack.c.h.b16 %v5669
  %v6208 = vunpack.c.l.b16 %v5670
  %v6209 = vunpack.c.h.b16 %v5670
  %v6210 = vunpack.c.l.b16 %v5671
  %v6211 = vunpack.c.h.b16 %v5671
  %v6212 = vunpack.c.l.b16 %v5672
  %v6213 = vunpack.c.h.b16 %v5672
  %v6214 = vunpack.c.l.b16 %v5673
  %v6215 = vunpack.c.h.b16 %v5673
  %v6216 = vunpack.c.l.b16 %v5674
  %v6217 = vunpack.c.h.b16 %v5674
  %v6218 = vunpack.c.l.b16 %v5675
  %v6219 = vunpack.c.h.b16 %v5675
  %v6220 = vunpack.c.l.b16 %v5676
  %v6221 = vunpack.c.h.b16 %v5676
  %v6222 = vunpack.c.l.b16 %v5677
  %v6223 = vunpack.c.h.b16 %v5677
  %v6224 = vunpack.c.l.b16 %v5678
  %v6225 = vunpack.c.h.b16 %v5678
  %v6226 = vunpack.c.l.b16 %v5679
  %v6227 = vunpack.c.h.b16 %v5679
  %v6228 = vunpack.c.l.b16 %v5680
  %v6229 = vunpack.c.h.b16 %v5680
  %v6230 = vunpack.c.l.b16 %v5681
  %v6231 = vunpack.c.h.b16 %v5681
  %v6232 = vunpack.c.l.b16 %v5682
  %v6233 = vunpack.c.h.b16 %v5682
  %v6234 = vunpack.c.l.b16 %v5683
  %v6235 = vunpack.c.h.b16 %v5683
  %v6236 = vunpack.c.l.b16 %v5684
  %v6237 = vunpack.c.h.b16 %v5684
  %v6238 = vunpack.c.l.b16 %v5685
  %v6239 = vunpack.c.h.b16 %v5685
  %v6240 = vunpack.c.l.b16 %v5686
  %v6241 = vunpack.c.h.b16 %v5686
  %v6242 = vunpack.c.l.b16 %v5687
  %v6243 = vunpack.c.h.b16 %v5687
  %v6244 = vunpack.c.l.b16 %v5688
  %v6245 = vunpack.c.h.b16 %v5688
  %v6246 = vunpack.c.l.b16 %v5689
  %v6247 = vunpack.c.h.b16 %v5689
  %v6248 = vunpack.c.l.b16 %v5690
  %v6249 = vunpack.c.h.b16 %v5690
  %v6250 = vunpack.c.l.b16 %v5691
  %v6251 = vunpack.c.h.b16 %v5691
  %v6252 = vunpack.c.l.b16 %v5692
  %v6253 = vunpack.c.h.b16 %v5692
  %v6254 = vunpack.c.l.b16 %v5693
  %v6255 = vunpack.c.h.b16 %v5693
  %v6256 = vunpack.c.l.b16 %v5694
  %v6257 = vunpack.c.h.b16 %v5694
  %v6258 = vunpack.c.l.b16 %v5695
  %v6259 = vunpack.c.h.b16 %v5695
  %v6260 = vunpack.c.l.b16 %v5696
  %v6261 = vunpack.c.h.b16 %v5696
  %v6262 = vunpack.c.l.b16 %v5697
  %v6263 = vunpack.c.h.b16 %v5697
  %v6264 = vunpack.c.l.b16 %v5698
  %v6265 = vunpack.c.h.b16 %v5698
  %v6266 = vunpack.c.l.b16 %v5699
  %v6267 = vunpack.c.h.b16 %v5699
  %v6268 = vunpack.c.l.b16 %v5700
  %v6269 = vunpack.c.h.b16 %v5700
  %v6270 = vunpack.c.l.b16 %v5701
  %v6271 = vunpack.c.h.b16 %v5701
  %v6272 = vunpack.c.l.b16 %v5702
  %v6273 = vunpack.c.h.b16 %v5702
  %v6274 = vunpack.c.l.b16 %v5703
  %v6275 = vunpack.c.h.b16 %v5703
  %v6276 = vunpack.c.l.b16 %v5704
  %v6277 = vunpack.c.h.b16 %v5704
  %v6278 = vunpack.c.l.b16 %v5705
  %v6279 = vunpack.c.h.b16 %v5705
  %v6280 = vunpack.c.l.b16 %v5706
  %v6281 = vunpack.c.h.b16 %v5706
  %v6282 = vunpack.c.l.b16 %v5707
  %v6283 = vunpack.c.h.b16 %v5707
  %v6284 = vunpack.c.l.b16 %v5708
  %v6285 = vunpack.c.h.b16 %v5708
  %v6286 = vunpack.c.l.b16 %v5709
  %v6287 = vunpack.c.h.b16 %v5709
  %v6288 = vunpack.c.l.b16 %v5710
  %v6289 = vunpack.c.h.b16 %v5710
  %v6290 = vunpack.c.l.b16 %v5711
  %v6291 = vunpack.c.h.b16 %v5711
  %v6292 = vunpack.c.l.b16 %v5712
  %v6293 = vunpack.c.h.b16 %v5712
  %v6294 = vunpack.c.l.b16 %v5713
  %v6295 = vunpack.c.h.b16 %v5713
  %v6296 = vunpack.c.l.b16 %v5714
  %v6297 = vunpack.c.h.b16 %v5714
  %v6298 = vunpack.c.l.b16 %v5715
  %v6299 = vunpack.c.h.b16 %v5715
  %v6300 = vunpack.c.l.b16 %v5716
  %v6301 = vunpack.c.h.b16 %v5716
  %v6302 = vunpack.c.l.b16 %v5717
  %v6303 = vunpack.c.h.b16 %v5717
  %v6304 = vunpack.c.l.b16 %v5718
  %v6305 = vunpack.c.h.b16 %v5718
  %v6306 = vunpack.c.l.b16 %v5719
  %v6307 = vunpack.c.h.b16 %v5719
  %v6308 = vunpack.c.l.b16 %v5720
  %v6309 = vunpack.c.h.b16 %v5720
  %v6310 = vunpack.c.l.b16 %v5721
  %v6311 = vunpack.c.h.b16 %v5721
  %v6312 = vunpack.c.l.b16 %v5722
  %v6313 = vunpack.c.h.b16 %v5722
  %v6314 = vunpack.c.l.b16 %v5723
  %v6315 = vunpack.c.h.b16 %v5723
  %v6316 = vunpack.c.l.b16 %v5724
  %v6317 = vunpack.c.h.b16 %v5724
  %v6318 = vunpack.c.l.b16 %v5725
  %v6319 = vunpack.c.h.b16 %v5725
  %v6320 = vunpack.c.l.b16 %v5726
  %v6321 = vunpack.c.h.b16 %v5726
  %v6322 = vunpack.c.l.b16 %v5727
  %v6323 = vunpack.c.h.b16 %v5727
  %v6324 = vunpack.c.l.b16 %v5728
  %v6325 = vunpack.c.h.b16 %v5728
  %v6326 = vunpack.c.l.b16 %v5729
  %v6327 = vunpack.c.h.b16 %v5729
  %v6328 = vunpack.c.l.b16 %v5730
  %v6329 = vunpack.c.h.b16 %v5730
  %v6330 = vunpack.c.l.b16 %v5731
  %v6331 = vunpack.c.h.b16 %v5731
  %v6332 = vunpack.c.l.b16 %v5732
  %v6333 = vunpack.c.h.b16 %v5732
  %v6334 = vunpack.c.l.b16 %v5733
  %v6335 = vunpack.c.h.b16 %v5733
  %v6336 = vunpack.c.l.b16 %v5734
  %v6337 = vunpack.c.h.b16 %v5734
  %v6338 = vunpack.c.l.b16 %v5735
  %v6339 = vunpack.c.h.b16 %v5735
  %v6340 = vunpack.c.l.b16 %v5736
  %v6341 = vunpack.c.h.b16 %v5736
  %v6342 = vunpack.c.l.b16 %v5737
  %v6343 = vunpack.c.h.b16 %v5737
  %v6344 = vunpack.c.l.b16 %v5738
  %v6345 = vunpack.c.h.b16 %v5738
  %v6346 = vunpack.c.l.b16 %v5739
  %v6347 = vunpack.c.h.b16 %v5739
  %v6348 = vunpack.c.l.b16 %v5740
  %v6349 = vunpack.c.h.b16 %v5740
  %v6350 = vunpack.c.l.b16 %v5741
  %v6351 = vunpack.c.h.b16 %v5741
  %v6352 = vunpack.c.l.b16 %v5742
  %v6353 = vunpack.c.h.b16 %v5742
  %v6354 = vunpack.c.l.b16 %v5743
  %v6355 = vunpack.c.h.b16 %v5743
  %v6356 = vunpack.c.l.b16 %v5744
  %v6357 = vunpack.c.h.b16 %v5744
  %v6358 = vunpack.c.l.b16 %v5745
  %v6359 = vunpack.c.h.b16 %v5745
  %v6360 = vunpack.c.l.b16 %v5746
  %v6361 = vunpack.c.h.b16 %v5746
  %v6362 = vunpack.c.l.b16 %v5747
  %v6363 = vunpack.c.h.b16 %v5747
  %v6364 = vunpack.c.l.b16 %v5748
  %v6365 = vunpack.c.h.b16 %v5748
  %v6366 = vunpack.c.l.b16 %v5749
  %v6367 = vunpack.c.h.b16 %v5749
  %v6368 = vunpack.c.l.b16 %v5750
  %v6369 = vunpack.c.h.b16 %v5750
  %v6370 = vunpack.c.l.b16 %v5751
  %v6371 = vunpack.c.h.b16 %v5751
  %v6372 = vunpack.c.l.b16 %v5752
  %v6373 = vunpack.c.h.b16 %v5752
  %v6374 = vunpack.c.l.b16 %v5753
  %v6375 = vunpack.c.h.b16 %v5753
  %v6376 = vunpack.c.l.b16 %v5754
  %v6377 = vunpack.c.h.b16 %v5754
  %v6378 = vunpack.c.l.b16 %v5755
  %v6379 = vunpack.c.h.b16 %v5755
  %v6380 = vunpack.c.l.b16 %v5756
  %v6381 = vunpack.c.h.b16 %v5756
  %v6382 = vunpack.c.l.b16 %v5757
  %v6383 = vunpack.c.h.b16 %v5757
  %v6384 = vunpack.c.l.b16 %v5758
  %v6385 = vunpack.c.h.b16 %v5758
  %v6386 = vunpack.c.l.b16 %v5759
  %v6387 = vunpack.c.h.b16 %v5759
  %v6388 = vunpack.c.l.b16 %v5760
  %v6389 = vunpack.c.h.b16 %v5760
  %v6390 = vunpack.c.l.b16 %v5761
  %v6391 = vunpack.c.h.b16 %v5761
  %v6392 = vunpack.c.l.b16 %v5762
  %v6393 = vunpack.c.h.b16 %v5762
  %v6394 = vunpack.c.l.b16 %v5763
  %v6395 = vunpack.c.h.b16 %v5763
  %v6396 = vunpack.c.l.b16 %v5764
  %v6397 = vunpack.c.h.b16 %v5764
  %v6398 = vunpack.c.l.b16 %v5765
  %v6399 = vunpack.c.h.b16 %v5765
  %v6400 = vunpack.c.l.b16 %v5766
  %v6401 = vunpack.c.h.b16 %v5766
  %v6402 = vunpack.c.l.b16 %v5767
  %v6403 = vunpack.c.h.b16 %v5767
  %v6404 = vunpack.c.l.b16 %v5768
  %v6405 = vunpack.c.h.b16 %v5768
  %v6406 = vunpack.c.l.b16 %v5769
  %v6407 = vunpack.c.h.b16 %v5769
  %v6408 = vunpack.c.l.b16 %v5770
  %v6409 = vunpack.c.h.b16 %v5770
  %v6410 = vunpack.c.l.b16 %v5771
  %v6411 = vunpack.c.h.b16 %v5771
  %v6412 = vunpack.c.l.b16 %v5772
  %v6413 = vunpack.c.h.b16 %v5772
  %v6414 = vunpack.c.l.b16 %v5773
  %v6415 = vunpack.c.h.b16 %v5773
  %v6416 = vunpack.c.l.b16 %v5774
  %v6417 = vunpack.c.h.b16 %v5774
  %v6418 = vunpack.c.l.b16 %v5775
  %v6419 = vunpack.c.h.b16 %v5775
  %v6420 = vunpack.c.l.b16 %v5776
  %v6421 = vunpack.c.h.b16 %v5776
  %v6422 = vunpack.c.l.b16 %v5777
  %v6423 = vunpack.c.h.b16 %v5777
  %v6424 = vunpack.c.l.b16 %v5778
  %v6425 = vunpack.c.h.b16 %v5778
  %v6426 = vunpack.c.l.b16 %v5779
  %v6427 = vunpack.c.h.b16 %v5779
  %v6428 = vunpack.c.l.b16 %v5780
  %v6429 = vunpack.c.h.b16 %v5780
  %v6430 = vunpack.c.l.b16 %v5781
  %v6431 = vunpack.c.h.b16 %v5781
  %v6432 = vunpack.c.l.b16 %v5782
  %v6433 = vunpack.c.h.b16 %v5782
  %v6434 = vunpack.c.l.b16 %v5783
  %v6435 = vunpack.c.h.b16 %v5783
  %v6436 = vunpack.c.l.b16 %v5784
  %v6437 = vunpack.c.h.b16 %v5784
  %v6438 = vunpack.c.l.b16 %v5785
  %v6439 = vunpack.c.h.b16 %v5785
  %v6440 = vunpack.c.l.b16 %v5786
  %v6441 = vunpack.c.h.b16 %v5786
  %v6442 = vunpack.c.l.b16 %v5787
  %v6443 = vunpack.c.h.b16 %v5787
  %v6444 = vunpack.c.l.b16 %v5788
  %v6445 = vunpack.c.h.b16 %v5788
  %v6446 = vunpack.c.l.b16 %v5789
  %v6447 = vunpack.c.h.b16 %v5789
  %v6448 = vunpack.c.l.b16 %v5790
  %v6449 = vunpack.c.h.b16 %v5790
  %v6450 = vunpack.c.l.b16 %v5791
  %v6451 = vunpack.c.h.b16 %v5791
  %v6452 = vunpack.c.l.b16 %v5792
  %v6453 = vunpack.c.h.b16 %v5792
  %v6454 = vunpack.c.l.b16 %v5793
  %v6455 = vunpack.c.h.b16 %v5793
  %v6456 = vunpack.c.l.b16 %v5794
  %v6457 = vunpack.c.h.b16 %v5794
  %v6458 = vunpack.c.l.b16 %v5795
  %v6459 = vunpack.c.h.b16 %v5795
  %v6460 = vunpack.c.l.b16 %v5796
  %v6461 = vunpack.c.h.b16 %v5796
  %v6462 = vunpack.c.l.b16 %v5797
  %v6463 = vunpack.c.h.b16 %v5797
  %v6464 = vunpack.c.l.b16 %v5798
  %v6465 = vunpack.c.h.b16 %v5798
  %v6466 = vunpack.c.l.b16 %v5799
  %v6467 = vunpack.c.h.b16 %v5799
  %v6468 = vunpack.c.l.b16 %v5800
  %v6469 = vunpack.c.h.b16 %v5800
  %v6470 = vunpack.c.l.b16 %v5801
  %v6471 = vunpack.c.h.b16 %v5801
  %v6472 = vunpack.c.l.b16 %v5802
  %v6473 = vunpack.c.h.b16 %v5802
  %v6474 = vunpack.c.l.b16 %v5803
  %v6475 = vunpack.c.h.b16 %v5803
  %v6476 = vunpack.c.l.b16 %v5804
  %v6477 = vunpack.c.h.b16 %v5804
  %v6478 = vunpack.c.l.b16 %v5805
  %v6479 = vunpack.c.h.b16 %v5805
  %v6480 = vunpack.c.l.b16 %v5806
  %v6481 = vunpack.c.h.b16 %v5806
  %v6482 = vunpack.c.l.b16 %v5807
  %v6483 = vunpack.c.h.b16 %v5807
  %v6484 = vunpack.c.l.b16 %v5808
  %v6485 = vunpack.c.h.b16 %v5808
  %v6486 = vunpack.c.l.b16 %v5809
  %v6487 = vunpack.c.h.b16 %v5809
  %v6488 = vunpack.c.l.b16 %v5810
  %v6489 = vunpack.c.h.b16 %v5810
  %v6490 = vunpack.c.l.b16 %v5811
  %v6491 = vunpack.c.h.b16 %v5811
  %v6492 = vunpack.c.l.b16 %v5812
  %v6493 = vunpack.c.h.b16 %v5812
  %v6494 = vunpack.c.l.b16 %v5813
  %v6495 = vunpack.c.h.b16 %v5813
  %v6496 = vunpack.c.l.b16 %v5814
  %v6497 = vunpack.c.h.b16 %v5814
  %v6498 = vunpack.c.l.b16 %v5815
  %v6499 = vunpack.c.h.b16 %v5815
  %v6500 = vunpack.c.l.b16 %v5816
  %v6501 = vunpack.c.h.b16 %v5816
  %v6502 = vunpack.c.l.b16 %v5817
  %v6503 = vunpack.c.h.b16 %v5817
  %v6504 = vunpack.c.l.b16 %v5818
  %v6505 = vunpack.c.h.b16 %v5818
  %v6506 = vunpack.c.l.b16 %v5819
  %v6507 = vunpack.c.h.b16 %v5819
  %v6508 = vunpack.c.l.b16 %v5820
  %v6509 = vunpack.c.h.b16 %v5820
  %v6510 = vunpack.c.l.b16 %v5821
  %v6511 = vunpack.c.h.b16 %v5821
  %v6512 = vunpack.c.l.b16 %v5822
  %v6513 = vunpack.c.h.b16 %v5822
  %v6514 = vunpack.c.l.b16 %v5823
  %v6515 = vunpack.c.h.b16 %v5823
  %v6516 = vunpack.c.l.b16 %v5824
  %v6517 = vunpack.c.h.b16 %v5824
  %v6518 = vunpack.c.l.b16 %v5825
  %v6519 = vunpack.c.h.b16 %v5825
  %v6520 = vunpack.c.l.b16 %v5826
  %v6521 = vunpack.c.h.b16 %v5826
  %v6522 = vunpack.c.l.b16 %v5827
  %v6523 = vunpack.c.h.b16 %v5827
  %v6524 = vunpack.c.l.b16 %v5828
  %v6525 = vunpack.c.h.b16 %v5828
  %v6526 = vunpack.c.l.b16 %v5829
  %v6527 = vunpack.c.h.b16 %v5829
  %v6528 = vunpack.c.l.b16 %v5830
  %v6529 = vunpack.c.h.b16 %v5830
  %v6530 = vunpack.c.l.b16 %v5831
  %v6531 = vunpack.c.h.b16 %v5831
  %v6532 = vunpack.c.l.b16 %v5832
  %v6533 = vunpack.c.h.b16 %v5832
  %v6534 = vunpack.c.l.b16 %v5833
  %v6535 = vunpack.c.h.b16 %v5833
  %v6536 = vunpack.c.l.b16 %v5834
  %v6537 = vunpack.c.h.b16 %v5834
  %v6538 = vunpack.c.l.b16 %v5835
  %v6539 = vunpack.c.h.b16 %v5835
  %v6540 = vunpack.c.l.b16 %v5836
  %v6541 = vunpack.c.h.b16 %v5836
  %v6542 = vunpack.c.l.b16 %v5837
  %v6543 = vunpack.c.h.b16 %v5837
  %v6544 = vunpack.c.l.b16 %v5838
  %v6545 = vunpack.c.h.b16 %v5838
  %v6546 = vunpack.c.l.b16 %v5839
  %v6547 = vunpack.c.h.b16 %v5839
  %v6548 = vunpack.c.l.b16 %v5840
  %v6549 = vunpack.c.h.b16 %v5840
  %v6550 = vunpack.c.l.b16 %v5841
  %v6551 = vunpack.c.h.b16 %v5841
  %v6552 = vunpack.c.l.b16 %v5842
  %v6553 = vunpack.c.h.b16 %v5842
  %v6554 = vunpack.c.l.b16 %v5843
  %v6555 = vunpack.c.h.b16 %v5843
  %v6556 = vunpack.c.l.b16 %v5844
  %v6557 = vunpack.c.h.b16 %v5844
  %v6558 = vunpack.c.l.b16 %v5845
  %v6559 = vunpack.c.h.b16 %v5845
  %v6560 = vunpack.c.l.b16 %v5846
  %v6561 = vunpack.c.h.b16 %v5846
  %v6562 = vunpack.c.l.b16 %v5847
  %v6563 = vunpack.c.h.b16 %v5847
  %v6564 = vunpack.c.l.b16 %v5848
  %v6565 = vunpack.c.h.b16 %v5848
  %v6566 = vunpack.c.l.b16 %v5849
  %v6567 = vunpack.c.h.b16 %v5849
  %v6568 = vunpack.c.l.b16 %v5850
  %v6569 = vunpack.c.h.b16 %v5850
  %v6570 = vunpack.c.l.b16 %v5851
  %v6571 = vunpack.c.h.b16 %v5851
  %v6572 = vunpack.c.l.b16 %v5852
  %v6573 = vunpack.c.h.b16 %v5852
  %v6574 = vunpack.c.l.b16 %v5853
  %v6575 = vunpack.c.h.b16 %v5853
  %v6576 = vunpack.c.l.b16 %v5854
  %v6577 = vunpack.c.h.b16 %v5854
  %v6578 = vunpack.c.l.b16 %v5855
  %v6579 = vunpack.c.h.b16 %v5855
  %v6580 = vunpack.c.l.b16 %v5856
  %v6581 = vunpack.c.h.b16 %v5856
  %v6582 = vunpack.c.l.b16 %v5857
  %v6583 = vunpack.c.h.b16 %v5857
  %v6584 = vunpack.c.l.b16 %v5858
  %v6585 = vunpack.c.h.b16 %v5858
  %v6586 = vunpack.c.l.b16 %v5859
  %v6587 = vunpack.c.h.b16 %v5859
  %v6588 = vunpack.c.l.b16 %v5860
  %v6589 = vunpack.c.h.b16 %v5860
  %v6590 = vunpack.c.l.b16 %v5861
  %v6591 = vunpack.c.h.b16 %v5861
  %v6592 = vunpack.c.l.b16 %v5862
  %v6593 = vunpack.c.h.b16 %v5862
  %v6594 = vunpack.c.l.b16 %v5863
  %v6595 = vunpack.c.h.b16 %v5863
  %v6596 = vunpack.c.l.b16 %v5864
  %v6597 = vunpack.c.h.b16 %v5864
  %v6598 = vunpack.c.l.b16 %v5865
  %v6599 = vunpack.c.h.b16 %v5865
  %v6600 = vunpack.c.l.b16 %v5866
  %v6601 = vunpack.c.h.b16 %v5866
  %v6602 = vunpack.c.l.b16 %v5867
  %v6603 = vunpack.c.h.b16 %v5867
  %v6604 = vunpack.c.l.b16 %v5868
  %v6605 = vunpack.c.h.b16 %v5868
  %v6606 = vunpack.c.l.b16 %v5869
  %v6607 = vunpack.c.h.b16 %v5869
  %v6608 = vunpack.c.l.b16 %v5870
  %v6609 = vunpack.c.h.b16 %v5870
  %v6610 = vunpack.c.l.b16 %v5871
  %v6611 = vunpack.c.h.b16 %v5871
  %v6612 = vunpack.c.l.b16 %v5872
  %v6613 = vunpack.c.h.b16 %v5872
  %v6614 = vunpack.c.l.b16 %v5873
  %v6615 = vunpack.c.h.b16 %v5873
  %v6616 = vunpack.c.l.b16 %v5874
  %v6617 = vunpack.c.h.b16 %v5874
  %v6618 = vunpack.c.l.b16 %v5875
  %v6619 = vunpack.c.h.b16 %v5875
  %v6620 = vunpack.c.l.b16 %v5876
  %v6621 = vunpack.c.h.b16 %v5876
  %v6622 = vunpack.c.l.b16 %v5877
  %v6623 = vunpack.c.h.b16 %v5877
  %v6624 = vunpack.c.l.b16 %v5878
  %v6625 = vunpack.c.h.b16 %v5878
  %v6626 = vunpack.c.l.b16 %v5879
  %v6627 = vunpack.c.h.b16 %v5879
  %v6628 = vunpack.c.l.b16 %v5880
  %v6629 = vunpack.c.h.b16 %v5880
  %v6630 = vunpack.c.l.b16 %v5881
  %v6631 = vunpack.c.h.b16 %v5881
  %v6632 = vunpack.c.l.b16 %v5882
  %v6633 = vunpack.c.h.b16 %v5882
  %v6634 = vunpack.c.l.b16 %v5883
  %v6635 = vunpack.c.h.b16 %v5883
  %v6636 = vunpack.c.l.b16 %v5884
  %v6637 = vunpack.c.h.b16 %v5884
  %v6638 = vunpack.c.l.b16 %v5885
  %v6639 = vunpack.c.h.b16 %v5885
  %v6640 = vunpack.c.l.b16 %v5886
  %v6641 = vunpack.c.h.b16 %v5886
  %v6642 = vunpack.c.l.b16 %v5887
  %v6643 = vunpack.c.h.b16 %v5887
  %v6644 = vunpack.c.l.b16 %v5888
  %v6645 = vunpack.c.h.b16 %v5888
  %v6646 = vunpack.c.l.b16 %v5889
  %v6647 = vunpack.c.h.b16 %v5889
  %v6648 = vunpack.c.l.b16 %v5890
  %v6649 = vunpack.c.h.b16 %v5890
  %v6650 = vunpack.c.l.b16 %v5891
  %v6651 = vunpack.c.h.b16 %v5891
  %v6652 = vunpack.c.l.b16 %v5892
  %v6653 = vunpack.c.h.b16 %v5892
  %v6654 = vunpack.c.l.b16 %v5893
  %v6655 = vunpack.c.h.b16 %v5893
  %v6656 = vunpack.c.l.b16 %v5894
  %v6657 = vunpack.c.h.b16 %v5894
  %v6658 = vunpack.c.l.b16 %v5895
  %v6659 = vunpack.c.h.b16 %v5895
  %v6660 = vunpack.c.l.b16 %v5896
  %v6661 = vunpack.c.h.b16 %v5896
  %v6662 = vunpack.c.l.b16 %v5897
  %v6663 = vunpack.c.h.b16 %v5897
  %v6664 = vunpack.c.l.b16 %v5898
  %v6665 = vunpack.c.h.b16 %v5898
  %v6666 = vunpack.c.l.b16 %v5899
  %v6667 = vunpack.c.h.b16 %v5899
  %v6668 = vunpack.c.l.b16 %v5900
  %v6669 = vunpack.c.h.b16 %v5900
  %v6670 = vunpack.c.l.b16 %v5901
  %v6671 = vunpack.c.h.b16 %v5901
  %v6672 = vunpack.c.l.b16 %v5902
  %v6673 = vunpack.c.h.b16 %v5902
  %v6674 = vunpack.c.l.b16 %v5903
  %v6675 = vunpack.c.h.b16 %v5903
  %v6676 = vunpack.c.l.b16 %v5904
  %v6677 = vunpack.c.h.b16 %v5904
  %v6678 = vunpack.c.l.b16 %v5905
  %v6679 = vunpack.c.h.b16 %v5905
  %v6680 = vunpack.c.l.b16 %v5906
  %v6681 = vunpack.c.h.b16 %v5906
  %v6682 = vunpack.c.l.b16 %v5907
  %v6683 = vunpack.c.h.b16 %v5907
  %v6684 = vunpack.c.l.b16 %v5908
  %v6685 = vunpack.c.h.b16 %v5908
  %v6686 = vunpack.c.l.b16 %v5909
  %v6687 = vunpack.c.h.b16 %v5909
  %v6688 = vpack.c.b16 %v6180, %v6176
  %v6689 = vpack.c.b16 %v6181, %v6177
  %v6690 = vpack.c.b16 %v6182, %v6178
  %v6691 = vpack.c.b16 %v6183, %v6179
  %v6692 = vpack.c.b16 %v6188, %v6184
  %v6693 = vpack.c.b16 %v6189, %v6185
  %v6694 = vpack.c.b16 %v6190, %v6186
  %v6695 = vpack.c.b16 %v6191, %v6187
  %v6696 = vpack.c.b16 %v6196, %v6192
  %v6697 = vpack.c.b16 %v6197, %v6193
  %v6698 = vpack.c.b16 %v6198, %v6194
  %v6699 = vpack.c.b16 %v6199, %v6195
  %v6700 = vpack.c.b16 %v6204, %v6200
  %v6701 = vpack.c.b16 %v6205, %v6201
  %v6702 = vpack.c.b16 %v6206, %v6202
  %v6703 = vpack.c.b16 %v6207, %v6203
  %v6704 = vpack.c.b16 %v6212, %v6208
  %v6705 = vpack.c.b16 %v6213, %v6209
  %v6706 = vpack.c.b16 %v6214, %v6210
  %v6707 = vpack.c.b16 %v6215, %v6211
  %v6708 = vpack.c.b16 %v6220, %v6216
  %v6709 = vpack.c.b16 %v6221, %v6217
  %v6710 = vpack.c.b16 %v6222, %v6218
  %v6711 = vpack.c.b16 %v6223, %v6219
  %v6712 = vpack.c.b16 %v6228, %v6224
  %v6713 = vpack.c.b16 %v6229, %v6225
  %v6714 = vpack.c.b16 %v6230, %v6226
  %v6715 = vpack.c.b16 %v6231, %v6227
  %v6716 = vpack.c.b16 %v6236, %v6232
  %v6717 = vpack.c.b16 %v6237, %v6233
  %v6718 = vpack.c.b16 %v6238, %v6234
  %v6719 = vpack.c.b16 %v6239, %v6235
  %v6720 = vpack.c.b16 %v6244, %v6240
  %v6721 = vpack.c.b16 %v6245, %v6241
  %v6722 = vpack.c.b16 %v6246, %v6242
  %v6723 = vpack.c.b16 %v6247, %v6243
  %v6724 = vpack.c.b16 %v6252, %v6248
  %v6725 = vpack.c.b16 %v6253, %v6249
  %v6726 = vpack.c.b16 %v6254, %v6250
  %v6727 = vpack.c.b16 %v6255, %v6251
  %v6728 = vpack.c.b16 %v6260, %v6256
  %v6729 = vpack.c.b16 %v6261, %v6257
  %v6730 = vpack.c.b16 %v6262, %v6258
  %v6731 = vpack.c.b16 %v6263, %v6259
  %v6732 = vpack.c.b16 %v6268, %v6264
  %v6733 = vpack.c.b16 %v6269, %v6265
  %v6734 = vpack.c.b16 %v6270, %v6266
  %v6735 = vpack.c.b16 %v6271, %v6267
  %v6736 = vpack.c.b16 %v6276, %v6272
  %v6737 = vpack.c.b16 %v6277, %v6273
  %v6738 = vpack.c.b16 %v6278, %v6274
  %v6739 = vpack.c.b16 %v6279, %v6275
  %v6740 = vpack.c.b16 %v6284, %v6280
  %v6741 = vpack.c.b16 %v6285, %v6281
  %v6742 = vpack.c.b16 %v6286, %v6282
  %v6743 = vpack.c.b16 %v6287, %v6283
  %v6744 = vpack.c.b16 %v6292, %v6288
  %v6745 = vpack.c.b16 %v6293, %v6289
  %v6746 = vpack.c.b16 %v6294, %v6290
  %v6747 = vpack.c.b16 %v6295, %v6291
  %v6748 = vpack.c.b16 %v6300, %v6296
  %v6749 = vpack.c.b16 %v6301, %v6297
  %v6750 = vpack.c.b16 %v6302, %v6298
  %v6751 = vpack.c.b16 %v6303, %v6299
  %v6752 = vpack.c.b16 %v6308, %v6304
  %v6753 = vpack.c.b16 %v6309, %v6305
  %v6754 = vpack.c.b16 %v6310, %v6306
  %v6755 = vpack.c.b16 %v6311, %v6307
  %v6756 = vpack.c.b16 %v6316, %v6312
  %v6757 = vpack.c.b16 %v6317, %v6313
  %v6758 = vpack.c.b16 %v6318, %v6314
  %v6759 = vpack.c.b16 %v6319, %v6315
  %v6760 = vpack.c.b16 %v6324, %v6320
  %v6761 = vpack.c.b16 %v6325, %v6321
  %v6762 = vpack.c.b16 %v6326, %v6322
  %v6763 = vpack.c.b16 %v6327, %v6323
  %v6764 = vpack.c.b16 %v6332, %v6328
  %v6765 = vpack.c.b16 %v6333, %v6329
  %v6766 = vpack.c.b16 %v6334, %v6330
  %v6767 = vpack.c.b16 %v6335, %v6331
  %v6768 = vpack.c.b16 %v6340, %v6336
  %v6769 = vpack.c.b16 %v6341, %v6337
  %v6770 = vpack.c.b16 %v6342, %v6338
  %v6771 = vpack.c.b16 %v6343, %v6339
  %v6772 = vpack.c.b16 %v6348, %v6344
  %v6773 = vpack.c.b16 %v6349, %v6345
  %v6774 = vpack.c.b16 %v6350, %v6346
  %v6775 = vpack.c.b16 %v6351, %v6347
  %v6776 = vpack.c.b16 %v6356, %v6352
  %v6777 = vpack.c.b16 %v6357, %v6353
  %v6778 = vpack.c.b16 %v6358, %v6354
  %v6779 = vpack.c.b16 %v6359, %v6355
  %v6780 = vpack.c.b16 %v6364, %v6360
  %v6781 = vpack.c.b16 %v6365, %v6361
  %v6782 = vpack.c.b16 %v6366, %v6362
  %v6783 = vpack.c.b16 %v6367, %v6363
  %v6784 = vpack.c.b16 %v6372, %v6368
  %v6785 = vpack.c.b16 %v6373, %v6369
  %v6786 = vpack.c.b16 %v6374, %v6370
  %v6787 = vpack.c.b16 %v6375, %v6371
  %v6788 = vpack.c.b16 %v6380, %v6376
  %v6789 = vpack.c.b16 %v6381, %v6377
  %v6790 = vpack.c.b16 %v6382, %v6378
  %v6791 = vpack.c.b16 %v6383, %v6379
  %v6792 = vpack.c.b16 %v6388, %v6384
  %v6793 = vpack.c.b16 %v6389, %v6385
  %v6794 = vpack.c.b16 %v6390, %v6386
  %v6795 = vpack.c.b16 %v6391, %v6387
  %v6796 = vpack.c.b16 %v6396, %v6392
  %v6797 = vpack.c.b16 %v6397, %v6393
  %v6798 = vpack.c.b16 %v6398, %v6394
  %v6799 = vpack.c.b16 %v6399, %v6395
  %v6800 = vpack.c.b16 %v6404, %v6400
  %v6801 = vpack.c.b16 %v6405, %v6401
  %v6802 = vpack.c.b16 %v6406, %v6402
  %v6803 = vpack.c.b16 %v6407, %v6403
  %v6804 = vpack.c.b16 %v6412, %v6408
  %v6805 = vpack.c.b16 %v6413, %v6409
  %v6806 = vpack.c.b16 %v6414, %v6410
  %v6807 = vpack.c.b16 %v6415, %v6411
  %v6808 = vpack.c.b16 %v6420, %v6416
  %v6809 = vpack.c.b16 %v6421, %v6417
  %v6810 = vpack.c.b16 %v6422, %v6418
  %v6811 = vpack.c.b16 %v6423, %v6419
  %v6812 = vpack.c.b16 %v6428, %v6424
  %v6813 = vpack.c.b16 %v6429, %v6425
  %v6814 = vpack.c.b16 %v6430, %v6426
  %v6815 = vpack.c.b16 %v6431, %v6427
  %v6816 = vpack.c.b16 %v6436, %v6432
  %v6817 = vpack.c.b16 %v6437, %v6433
  %v6818 = vpack.c.b16 %v6438, %v6434
  %v6819 = vpack.c.b16 %v6439, %v6435
  %v6820 = vpack.c.b16 %v6444, %v6440
  %v6821 = vpack.c.b16 %v6445, %v6441
  %v6822 = vpack.c.b16 %v6446, %v6442
  %v6823 = vpack.c.b16 %v6447, %v6443
  %v6824 = vpack.c.b16 %v6452, %v6448
  %v6825 = vpack.c.b16 %v6453, %v6449
  %v6826 = vpack.c.b16 %v6454, %v6450
  %v6827 = vpack.c.b16 %v6455, %v6451
  %v6828 = vpack.c.b16 %v6460, %v6456
  %v6829 = vpack.c.b16 %v6461, %v6457
  %v6830 = vpack.c.b16 %v6462, %v6458
  %v6831 = vpack.c.b16 %v6463, %v6459
  %v6832 = vpack.c.b16 %v6468, %v6464
  %v6833 = vpack.c.b16 %v6469, %v6465
  %v6834 = vpack.c.b16 %v6470, %v6466
  %v6835 = vpack.c.b16 %v6471, %v6467
  %v6836 = vpack.c.b16 %v6476, %v6472
  %v6837 = vpack.c.b16 %v6477, %v6473
  %v6838 = vpack.c.b16 %v6478, %v6474
  %v6839 = vpack.c.b16 %v6479, %v6475
  %v6840 = vpack.c.b16 %v6484, %v6480
  %v6841 = vpack.c.b16 %v6485, %v6481
  %v6842 = vpack.c.b16 %v6486, %v6482
  %v6843 = vpack.c.b16 %v6487, %v6483
  %v6844 = vpack.c.b16 %v6492, %v6488
  %v6845 = vpack.c.b16 %v6493, %v6489
  %v6846 = vpack.c.b16 %v6494, %v6490
  %v6847 = vpack.c.b16 %v6495, %v6491
  %v6848 = vpack.c.b16 %v6500, %v6496
  %v6849 = vpack.c.b16 %v6501, %v6497
  %v6850 = vpack.c.b16 %v6502, %v6498
  %v6851 = vpack.c.b16 %v6503, %v6499
  %v6852 = vpack.c.b16 %v6508, %v6504
  %v6853 = vpack.c.b16 %v6509, %v6505
  %v6854 = vpack.c.b16 %v6510, %v6506
  %v6855 = vpack.c.b16 %v6511, %v6507
  %v6856 = vpack.c.b16 %v6516, %v6512
  %v6857 = vpack.c.b16 %v6517, %v6513
  %v6858 = vpack.c.b16 %v6518, %v6514
  %v6859 = vpack.c.b16 %v6519, %v6515
  %v6860 = vpack.c.b16 %v6524, %v6520
  %v6861 = vpack.c.b16 %v6525, %v6521
  %v6862 = vpack.c.b16 %v6526, %v6522
  %v6863 = vpack.c.b16 %v6527, %v6523
  %v6864 = vpack.c.b16 %v6532, %v6528
  %v6865 = vpack.c.b16 %v6533, %v6529
  %v6866 = vpack.c.b16 %v6534, %v6530
  %v6867 = vpack.c.b16 %v6535, %v6531
  %v6868 = vpack.c.b16 %v6540, %v6536
  %v6869 = vpack.c.b16 %v6541, %v6537
  %v6870 = vpack.c.b16 %v6542, %v6538
  %v6871 = vpack.c.b16 %v6543, %v6539
  %v6872 = vpack.c.b16 %v6548, %v6544
  %v6873 = vpack.c.b16 %v6549, %v6545
  %v6874 = vpack.c.b16 %v6550, %v6546
  %v6875 = vpack.c.b16 %v6551, %v6547
  %v6876 = vpack.c.b16 %v6556, %v6552
  %v6877 = vpack.c.b16 %v6557, %v6553
  %v6878 = vpack.c.b16 %v6558, %v6554
  %v6879 = vpack.c.b16 %v6559, %v6555
  %v6880 = vpack.c.b16 %v6564, %v6560
  %v6881 = vpack.c.b16 %v6565, %v6561
  %v6882 = vpack.c.b16 %v6566, %v6562
  %v6883 = vpack.c.b16 %v6567, %v6563
  %v6884 = vpack.c.b16 %v6572, %v6568
  %v6885 = vpack.c.b16 %v6573, %v6569
  %v6886 = vpack.c.b16 %v6574, %v6570
  %v6887 = vpack.c.b16 %v6575, %v6571
  %v6888 = vpack.c.b16 %v6580, %v6576
  %v6889 = vpack.c.b16 %v6581, %v6577
  %v6890 = vpack.c.b16 %v6582, %v6578
  %v6891 = vpack.c.b16 %v6583, %v6579
  %v6892 = vpack.c.b16 %v6588, %v6584
  %v6893 = vpack.c.b16 %v6589, %v6585
  %v6894 = vpack.c.b16 %v6590, %v6586
  %v6895 = vpack.c.b16 %v6591, %v6587
  %v6896 = vpack.c.b16 %v6596, %v6592
  %v6897 = vpack.c.b16 %v6597, %v6593
  %v6898 = vpack.c.b16 %v6598, %v6594
  %v6899 = vpack.c.b16 %v6599, %v6595
  %v6900 = vpack.c.b16 %v6604, %v6600
  %v6901 = vpack.c.b16 %v6605, %v6601
  %v6902 = vpack.c.b16 %v6606, %v6602
  %v6903 = vpack.c.b16 %v6607, %v6603
  %v6904 = vpack.c.b16 %v6612, %v6608
  %v6905 = vpack.c.b16 %v6613, %v6609
  %v6906 = vpack.c.b16 %v6614, %v6610
  %v6907 = vpack.c.b16 %v6615, %v6611
  %v6908 = vpack.c.b16 %v6620, %v6616
  %v6909 = vpack.c.b16 %v6621, %v6617
  %v6910 = vpack.c.b16 %v6622, %v6618
  %v6911 = vpack.c.b16 %v6623, %v6619
  %v6912 = vpack.c.b16 %v6628, %v6624
  %v6913 = vpack.c.b16 %v6629, %v6625
  %v6914 = vpack.c.b16 %v6630, %v6626
  %v6915 = vpack.c.b16 %v6631, %v6627
  %v6916 = vpack.c.b16 %v6636, %v6632
  %v6917 = vpack.c.b16 %v6637, %v6633
  %v6918 = vpack.c.b16 %v6638, %v6634
  %v6919 = vpack.c.b16 %v6639, %v6635
  %v6920 = vpack.c.b16 %v6644, %v6640
  %v6921 = vpack.c.b16 %v6645, %v6641
  %v6922 = vpack.c.b16 %v6646, %v6642
  %v6923 = vpack.c.b16 %v6647, %v6643
  %v6924 = vpack.c.b16 %v6652, %v6648
  %v6925 = vpack.c.b16 %v6653, %v6649
  %v6926 = vpack.c.b16 %v6654, %v6650
  %v6927 = vpack.c.b16 %v6655, %v6651
  %v6928 = vpack.c.b16 %v6660, %v6656
  %v6929 = vpack.c.b16 %v6661, %v6657
  %v6930 = vpack.c.b16 %v6662, %v6658
  %v6931 = vpack.c.b16 %v6663, %v6659
  %v6932 = vpack.c.b16 %v6668, %v6664
  %v6933 = vpack.c.b16 %v6669, %v6665
  %v6934 = vpack.c.b16 %v6670, %v6666
  %v6935 = vpack.c.b16 %v6671, %v6667
  %v6936 = vpack.c.b16 %v6676, %v6672
  %v6937 = vpack.c.b16 %v6677, %v6673
  %v6938 = vpack.c.b16 %v6678, %v6674
  %v6939 = vpack.c.b16 %v6679, %v6675
  %v6940 = vpack.c.b16 %v6684, %v6680
  %v6941 = vpack.c.b16 %v6685, %v6681
  %v6942 = vpack.c.b16 %v6686, %v6682
  %v6943 = vpack.c.b16 %v6687, %v6683
  %7200 = vmatpush.bf16.msra.mxu0 %v6716
  %7201 = vmatpush.bf16.msra.mxu0 %v6712
  %7202 = vmatpush.bf16.msra.mxu0 %v6708
  %7203 = vmatpush.bf16.msra.mxu0 %v6704
  %7204 = vmatpush.bf16.msra.mxu0 %v6700
  %7205 = vmatpush.bf16.msra.mxu0 %v6696
  %7206 = vmatpush.bf16.msra.mxu0 %v6692
  %7207 = vmatpush.bf16.msra.mxu0 %v6688
  %7208 = vmatmul.bf16.gmra.mxu0 %v5590
  %v7209 = vpop.f32.mrf.mxu0
  %v7210 = vadd.f32 %v5912, %v7209
  %v7211 = vpop.f32.mrf.mxu0
  %v7212 = vadd.f32 %v5912, %v7211
  %7213 = vmatmul.bf16.gmra.mxu0 %v5598
  %v7214 = vpop.f32.mrf.mxu0
  %v7215 = vadd.f32 %v5912, %v7214
  %v7216 = vpop.f32.mrf.mxu0
  %v7217 = vadd.f32 %v5912, %v7216
  %7218 = vmatmul.bf16.gmra.mxu0 %v5606
  %v7219 = vpop.f32.mrf.mxu0
  %v7220 = vadd.f32 %v5912, %v7219
  %v7221 = vpop.f32.mrf.mxu0
  %v7222 = vadd.f32 %v5912, %v7221
  %7223 = vmatmul.bf16.gmra.mxu0 %v5614
  %v7224 = vpop.f32.mrf.mxu0
  %v7225 = vadd.f32 %v5912, %v7224
  %v7226 = vpop.f32.mrf.mxu0
  %v7227 = vadd.f32 %v5912, %v7226
  %7228 = vmatmul.bf16.gmra.mxu0 %v5622
  %v7229 = vpop.f32.mrf.mxu0
  %v7230 = vadd.f32 %v5912, %v7229
  %v7231 = vpop.f32.mrf.mxu0
  %v7232 = vadd.f32 %v5912, %v7231
  %7233 = vmatmul.bf16.gmra.mxu0 %v5630
  %v7234 = vpop.f32.mrf.mxu0
  %v7235 = vadd.f32 %v5912, %v7234
  %v7236 = vpop.f32.mrf.mxu0
  %v7237 = vadd.f32 %v5912, %v7236
  %7238 = vmatmul.bf16.gmra.mxu0 %v5638
  %v7239 = vpop.f32.mrf.mxu0
  %v7240 = vadd.f32 %v5912, %v7239
  %v7241 = vpop.f32.mrf.mxu0
  %v7242 = vadd.f32 %v5912, %v7241
  %7243 = vmatmul.bf16.gmra.mxu0 %v5646
  %v7244 = vpop.f32.mrf.mxu0
  %v7245 = vadd.f32 %v5912, %v7244
  %v7246 = vpop.f32.mrf.mxu0
  %v7247 = vadd.f32 %v5912, %v7246
  %7248 = vdwg.mxu0
  %7249 = vmatpush.bf16.msra.mxu0 %v6748
  %7250 = vmatpush.bf16.msra.mxu0 %v6744
  %7251 = vmatpush.bf16.msra.mxu0 %v6740
  %7252 = vmatpush.bf16.msra.mxu0 %v6736
  %7253 = vmatpush.bf16.msra.mxu0 %v6732
  %7254 = vmatpush.bf16.msra.mxu0 %v6728
  %7255 = vmatpush.bf16.msra.mxu0 %v6724
  %7256 = vmatpush.bf16.msra.mxu0 %v6720
  %7257 = vmatmul.bf16.gmra.mxu0 %v5591
  %v7258 = vpop.f32.mrf.mxu0
  %v7259 = vadd.f32 %v7210, %v7258
  %v7260 = vpop.f32.mrf.mxu0
  %v7261 = vadd.f32 %v7212, %v7260
  %7262 = vmatmul.bf16.gmra.mxu0 %v5599
  %v7263 = vpop.f32.mrf.mxu0
  %v7264 = vadd.f32 %v7215, %v7263
  %v7265 = vpop.f32.mrf.mxu0
  %v7266 = vadd.f32 %v7217, %v7265
  %7267 = vmatmul.bf16.gmra.mxu0 %v5607
  %v7268 = vpop.f32.mrf.mxu0
  %v7269 = vadd.f32 %v7220, %v7268
  %v7270 = vpop.f32.mrf.mxu0
  %v7271 = vadd.f32 %v7222, %v7270
  %7272 = vmatmul.bf16.gmra.mxu0 %v5615
  %v7273 = vpop.f32.mrf.mxu0
  %v7274 = vadd.f32 %v7225, %v7273
  %v7275 = vpop.f32.mrf.mxu0
  %v7276 = vadd.f32 %v7227, %v7275
  %7277 = vmatmul.bf16.gmra.mxu0 %v5623
  %v7278 = vpop.f32.mrf.mxu0
  %v7279 = vadd.f32 %v7230, %v7278
  %v7280 = vpop.f32.mrf.mxu0
  %v7281 = vadd.f32 %v7232, %v7280
  %7282 = vmatmul.bf16.gmra.mxu0 %v5631
  %v7283 = vpop.f32.mrf.mxu0
  %v7284 = vadd.f32 %v7235, %v7283
  %v7285 = vpop.f32.mrf.mxu0
  %v7286 = vadd.f32 %v7237, %v7285
  %7287 = vmatmul.bf16.gmra.mxu0 %v5639
  %v7288 = vpop.f32.mrf.mxu0
  %v7289 = vadd.f32 %v7240, %v7288
  %v7290 = vpop.f32.mrf.mxu0
  %v7291 = vadd.f32 %v7242, %v7290
  %7292 = vmatmul.bf16.gmra.mxu0 %v5647
  %v7293 = vpop.f32.mrf.mxu0
  %v7294 = vadd.f32 %v7245, %v7293
  %v7295 = vpop.f32.mrf.mxu0
  %v7296 = vadd.f32 %v7247, %v7295
  %7297 = vdwg.mxu0
  %7298 = vmatpush.bf16.msra.mxu0 %v6780
  %7299 = vmatpush.bf16.msra.mxu0 %v6776
  %7300 = vmatpush.bf16.msra.mxu0 %v6772
  %7301 = vmatpush.bf16.msra.mxu0 %v6768
  %7302 = vmatpush.bf16.msra.mxu0 %v6764
  %7303 = vmatpush.bf16.msra.mxu0 %v6760
  %7304 = vmatpush.bf16.msra.mxu0 %v6756
  %7305 = vmatpush.bf16.msra.mxu0 %v6752
  %7306 = vmatmul.bf16.gmra.mxu0 %v5592
  %v7307 = vpop.f32.mrf.mxu0
  %v7308 = vadd.f32 %v7259, %v7307
  %v7309 = vpop.f32.mrf.mxu0
  %v7310 = vadd.f32 %v7261, %v7309
  %7311 = vmatmul.bf16.gmra.mxu0 %v5600
  %v7312 = vpop.f32.mrf.mxu0
  %v7313 = vadd.f32 %v7264, %v7312
  %v7314 = vpop.f32.mrf.mxu0
  %v7315 = vadd.f32 %v7266, %v7314
  %7316 = vmatmul.bf16.gmra.mxu0 %v5608
  %v7317 = vpop.f32.mrf.mxu0
  %v7318 = vadd.f32 %v7269, %v7317
  %v7319 = vpop.f32.mrf.mxu0
  %v7320 = vadd.f32 %v7271, %v7319
  %7321 = vmatmul.bf16.gmra.mxu0 %v5616
  %v7322 = vpop.f32.mrf.mxu0
  %v7323 = vadd.f32 %v7274, %v7322
  %v7324 = vpop.f32.mrf.mxu0
  %v7325 = vadd.f32 %v7276, %v7324
  %7326 = vmatmul.bf16.gmra.mxu0 %v5624
  %v7327 = vpop.f32.mrf.mxu0
  %v7328 = vadd.f32 %v7279, %v7327
  %v7329 = vpop.f32.mrf.mxu0
  %v7330 = vadd.f32 %v7281, %v7329
  %7331 = vmatmul.bf16.gmra.mxu0 %v5632
  %v7332 = vpop.f32.mrf.mxu0
  %v7333 = vadd.f32 %v7284, %v7332
  %v7334 = vpop.f32.mrf.mxu0
  %v7335 = vadd.f32 %v7286, %v7334
  %7336 = vmatmul.bf16.gmra.mxu0 %v5640
  %v7337 = vpop.f32.mrf.mxu0
  %v7338 = vadd.f32 %v7289, %v7337
  %v7339 = vpop.f32.mrf.mxu0
  %v7340 = vadd.f32 %v7291, %v7339
  %7341 = vmatmul.bf16.gmra.mxu0 %v5648
  %v7342 = vpop.f32.mrf.mxu0
  %v7343 = vadd.f32 %v7294, %v7342
  %v7344 = vpop.f32.mrf.mxu0
  %v7345 = vadd.f32 %v7296, %v7344
  %7346 = vdwg.mxu0
  %7347 = vmatpush.bf16.msra.mxu0 %v6812
  %7348 = vmatpush.bf16.msra.mxu0 %v6808
  %7349 = vmatpush.bf16.msra.mxu0 %v6804
  %7350 = vmatpush.bf16.msra.mxu0 %v6800
  %7351 = vmatpush.bf16.msra.mxu0 %v6796
  %7352 = vmatpush.bf16.msra.mxu0 %v6792
  %7353 = vmatpush.bf16.msra.mxu0 %v6788
  %7354 = vmatpush.bf16.msra.mxu0 %v6784
  %7355 = vmatmul.bf16.gmra.mxu0 %v5593
  %v7356 = vpop.f32.mrf.mxu0
  %v7357 = vadd.f32 %v7308, %v7356
  %v7358 = vpop.f32.mrf.mxu0
  %v7359 = vadd.f32 %v7310, %v7358
  %7360 = vmatmul.bf16.gmra.mxu0 %v5601
  %v7361 = vpop.f32.mrf.mxu0
  %v7362 = vadd.f32 %v7313, %v7361
  %v7363 = vpop.f32.mrf.mxu0
  %v7364 = vadd.f32 %v7315, %v7363
  %7365 = vmatmul.bf16.gmra.mxu0 %v5609
  %v7366 = vpop.f32.mrf.mxu0
  %v7367 = vadd.f32 %v7318, %v7366
  %v7368 = vpop.f32.mrf.mxu0
  %v7369 = vadd.f32 %v7320, %v7368
  %7370 = vmatmul.bf16.gmra.mxu0 %v5617
  %v7371 = vpop.f32.mrf.mxu0
  %v7372 = vadd.f32 %v7323, %v7371
  %v7373 = vpop.f32.mrf.mxu0
  %v7374 = vadd.f32 %v7325, %v7373
  %7375 = vmatmul.bf16.gmra.mxu0 %v5625
  %v7376 = vpop.f32.mrf.mxu0
  %v7377 = vadd.f32 %v7328, %v7376
  %v7378 = vpop.f32.mrf.mxu0
  %v7379 = vadd.f32 %v7330, %v7378
  %7380 = vmatmul.bf16.gmra.mxu0 %v5633
  %v7381 = vpop.f32.mrf.mxu0
  %v7382 = vadd.f32 %v7333, %v7381
  %v7383 = vpop.f32.mrf.mxu0
  %v7384 = vadd.f32 %v7335, %v7383
  %7385 = vmatmul.bf16.gmra.mxu0 %v5641
  %v7386 = vpop.f32.mrf.mxu0
  %v7387 = vadd.f32 %v7338, %v7386
  %v7388 = vpop.f32.mrf.mxu0
  %v7389 = vadd.f32 %v7340, %v7388
  %7390 = vmatmul.bf16.gmra.mxu0 %v5649
  %v7391 = vpop.f32.mrf.mxu0
  %v7392 = vadd.f32 %v7343, %v7391
  %v7393 = vpop.f32.mrf.mxu0
  %v7394 = vadd.f32 %v7345, %v7393
  %7395 = vdwg.mxu0
  %7396 = vmatpush.bf16.msra.mxu0 %v6844
  %7397 = vmatpush.bf16.msra.mxu0 %v6840
  %7398 = vmatpush.bf16.msra.mxu0 %v6836
  %7399 = vmatpush.bf16.msra.mxu0 %v6832
  %7400 = vmatpush.bf16.msra.mxu0 %v6828
  %7401 = vmatpush.bf16.msra.mxu0 %v6824
  %7402 = vmatpush.bf16.msra.mxu0 %v6820
  %7403 = vmatpush.bf16.msra.mxu0 %v6816
  %7404 = vmatmul.bf16.gmra.mxu0 %v5594
  %v7405 = vpop.f32.mrf.mxu0
  %v7406 = vadd.f32 %v7357, %v7405
  %v7407 = vpop.f32.mrf.mxu0
  %v7408 = vadd.f32 %v7359, %v7407
  %7409 = vmatmul.bf16.gmra.mxu0 %v5602
  %v7410 = vpop.f32.mrf.mxu0
  %v7411 = vadd.f32 %v7362, %v7410
  %v7412 = vpop.f32.mrf.mxu0
  %v7413 = vadd.f32 %v7364, %v7412
  %7414 = vmatmul.bf16.gmra.mxu0 %v5610
  %v7415 = vpop.f32.mrf.mxu0
  %v7416 = vadd.f32 %v7367, %v7415
  %v7417 = vpop.f32.mrf.mxu0
  %v7418 = vadd.f32 %v7369, %v7417
  %7419 = vmatmul.bf16.gmra.mxu0 %v5618
  %v7420 = vpop.f32.mrf.mxu0
  %v7421 = vadd.f32 %v7372, %v7420
  %v7422 = vpop.f32.mrf.mxu0
  %v7423 = vadd.f32 %v7374, %v7422
  %7424 = vmatmul.bf16.gmra.mxu0 %v5626
  %v7425 = vpop.f32.mrf.mxu0
  %v7426 = vadd.f32 %v7377, %v7425
  %v7427 = vpop.f32.mrf.mxu0
  %v7428 = vadd.f32 %v7379, %v7427
  %7429 = vmatmul.bf16.gmra.mxu0 %v5634
  %v7430 = vpop.f32.mrf.mxu0
  %v7431 = vadd.f32 %v7382, %v7430
  %v7432 = vpop.f32.mrf.mxu0
  %v7433 = vadd.f32 %v7384, %v7432
  %7434 = vmatmul.bf16.gmra.mxu0 %v5642
  %v7435 = vpop.f32.mrf.mxu0
  %v7436 = vadd.f32 %v7387, %v7435
  %v7437 = vpop.f32.mrf.mxu0
  %v7438 = vadd.f32 %v7389, %v7437
  %7439 = vmatmul.bf16.gmra.mxu0 %v5650
  %v7440 = vpop.f32.mrf.mxu0
  %v7441 = vadd.f32 %v7392, %v7440
  %v7442 = vpop.f32.mrf.mxu0
  %v7443 = vadd.f32 %v7394, %v7442
  %7444 = vdwg.mxu0
  %7445 = vmatpush.bf16.msra.mxu0 %v6876
  %7446 = vmatpush.bf16.msra.mxu0 %v6872
  %7447 = vmatpush.bf16.msra.mxu0 %v6868
  %7448 = vmatpush.bf16.msra.mxu0 %v6864
  %7449 = vmatpush.bf16.msra.mxu0 %v6860
  %7450 = vmatpush.bf16.msra.mxu0 %v6856
  %7451 = vmatpush.bf16.msra.mxu0 %v6852
  %7452 = vmatpush.bf16.msra.mxu0 %v6848
  %7453 = vmatmul.bf16.gmra.mxu0 %v5595
  %v7454 = vpop.f32.mrf.mxu0
  %v7455 = vadd.f32 %v7406, %v7454
  %v7456 = vpop.f32.mrf.mxu0
  %v7457 = vadd.f32 %v7408, %v7456
  %7458 = vmatmul.bf16.gmra.mxu0 %v5603
  %v7459 = vpop.f32.mrf.mxu0
  %v7460 = vadd.f32 %v7411, %v7459
  %v7461 = vpop.f32.mrf.mxu0
  %v7462 = vadd.f32 %v7413, %v7461
  %7463 = vmatmul.bf16.gmra.mxu0 %v5611
  %v7464 = vpop.f32.mrf.mxu0
  %v7465 = vadd.f32 %v7416, %v7464
  %v7466 = vpop.f32.mrf.mxu0
  %v7467 = vadd.f32 %v7418, %v7466
  %7468 = vmatmul.bf16.gmra.mxu0 %v5619
  %v7469 = vpop.f32.mrf.mxu0
  %v7470 = vadd.f32 %v7421, %v7469
  %v7471 = vpop.f32.mrf.mxu0
  %v7472 = vadd.f32 %v7423, %v7471
  %7473 = vmatmul.bf16.gmra.mxu0 %v5627
  %v7474 = vpop.f32.mrf.mxu0
  %v7475 = vadd.f32 %v7426, %v7474
  %v7476 = vpop.f32.mrf.mxu0
  %v7477 = vadd.f32 %v7428, %v7476
  %7478 = vmatmul.bf16.gmra.mxu0 %v5635
  %v7479 = vpop.f32.mrf.mxu0
  %v7480 = vadd.f32 %v7431, %v7479
  %v7481 = vpop.f32.mrf.mxu0
  %v7482 = vadd.f32 %v7433, %v7481
  %7483 = vmatmul.bf16.gmra.mxu0 %v5643
  %v7484 = vpop.f32.mrf.mxu0
  %v7485 = vadd.f32 %v7436, %v7484
  %v7486 = vpop.f32.mrf.mxu0
  %v7487 = vadd.f32 %v7438, %v7486
  %7488 = vmatmul.bf16.gmra.mxu0 %v5651
  %v7489 = vpop.f32.mrf.mxu0
  %v7490 = vadd.f32 %v7441, %v7489
  %v7491 = vpop.f32.mrf.mxu0
  %v7492 = vadd.f32 %v7443, %v7491
  %7493 = vdwg.mxu0
  %7494 = vmatpush.bf16.msra.mxu0 %v6908
  %7495 = vmatpush.bf16.msra.mxu0 %v6904
  %7496 = vmatpush.bf16.msra.mxu0 %v6900
  %7497 = vmatpush.bf16.msra.mxu0 %v6896
  %7498 = vmatpush.bf16.msra.mxu0 %v6892
  %7499 = vmatpush.bf16.msra.mxu0 %v6888
  %7500 = vmatpush.bf16.msra.mxu0 %v6884
  %7501 = vmatpush.bf16.msra.mxu0 %v6880
  %7502 = vmatmul.bf16.gmra.mxu0 %v5596
  %v7503 = vpop.f32.mrf.mxu0
  %v7504 = vadd.f32 %v7455, %v7503
  %v7505 = vpop.f32.mrf.mxu0
  %v7506 = vadd.f32 %v7457, %v7505
  %7507 = vmatmul.bf16.gmra.mxu0 %v5604
  %v7508 = vpop.f32.mrf.mxu0
  %v7509 = vadd.f32 %v7460, %v7508
  %v7510 = vpop.f32.mrf.mxu0
  %v7511 = vadd.f32 %v7462, %v7510
  %7512 = vmatmul.bf16.gmra.mxu0 %v5612
  %v7513 = vpop.f32.mrf.mxu0
  %v7514 = vadd.f32 %v7465, %v7513
  %v7515 = vpop.f32.mrf.mxu0
  %v7516 = vadd.f32 %v7467, %v7515
  %7517 = vmatmul.bf16.gmra.mxu0 %v5620
  %v7518 = vpop.f32.mrf.mxu0
  %v7519 = vadd.f32 %v7470, %v7518
  %v7520 = vpop.f32.mrf.mxu0
  %v7521 = vadd.f32 %v7472, %v7520
  %7522 = vmatmul.bf16.gmra.mxu0 %v5628
  %v7523 = vpop.f32.mrf.mxu0
  %v7524 = vadd.f32 %v7475, %v7523
  %v7525 = vpop.f32.mrf.mxu0
  %v7526 = vadd.f32 %v7477, %v7525
  %7527 = vmatmul.bf16.gmra.mxu0 %v5636
  %v7528 = vpop.f32.mrf.mxu0
  %v7529 = vadd.f32 %v7480, %v7528
  %v7530 = vpop.f32.mrf.mxu0
  %v7531 = vadd.f32 %v7482, %v7530
  %7532 = vmatmul.bf16.gmra.mxu0 %v5644
  %v7533 = vpop.f32.mrf.mxu0
  %v7534 = vadd.f32 %v7485, %v7533
  %v7535 = vpop.f32.mrf.mxu0
  %v7536 = vadd.f32 %v7487, %v7535
  %7537 = vmatmul.bf16.gmra.mxu0 %v5652
  %v7538 = vpop.f32.mrf.mxu0
  %v7539 = vadd.f32 %v7490, %v7538
  %v7540 = vpop.f32.mrf.mxu0
  %v7541 = vadd.f32 %v7492, %v7540
  %7542 = vdwg.mxu0
  %7543 = vmatpush.bf16.msra.mxu0 %v6940
  %7544 = vmatpush.bf16.msra.mxu0 %v6936
  %7545 = vmatpush.bf16.msra.mxu0 %v6932
  %7546 = vmatpush.bf16.msra.mxu0 %v6928
  %7547 = vmatpush.bf16.msra.mxu0 %v6924
  %7548 = vmatpush.bf16.msra.mxu0 %v6920
  %7549 = vmatpush.bf16.msra.mxu0 %v6916
  %7550 = vmatpush.bf16.msra.mxu0 %v6912
  %7551 = vmatmul.bf16.gmra.mxu0 %v5597
  %v7552 = vpop.f32.mrf.mxu0
  %v7553 = vadd.f32 %v7504, %v7552
  %v7554 = vpop.f32.mrf.mxu0
  %v7555 = vadd.f32 %v7506, %v7554
  %7556 = vmatmul.bf16.gmra.mxu0 %v5605
  %v7557 = vpop.f32.mrf.mxu0
  %v7558 = vadd.f32 %v7509, %v7557
  %v7559 = vpop.f32.mrf.mxu0
  %v7560 = vadd.f32 %v7511, %v7559
  %7561 = vmatmul.bf16.gmra.mxu0 %v5613
  %v7562 = vpop.f32.mrf.mxu0
  %v7563 = vadd.f32 %v7514, %v7562
  %v7564 = vpop.f32.mrf.mxu0
  %v7565 = vadd.f32 %v7516, %v7564
  %7566 = vmatmul.bf16.gmra.mxu0 %v5621
  %v7567 = vpop.f32.mrf.mxu0
  %v7568 = vadd.f32 %v7519, %v7567
  %v7569 = vpop.f32.mrf.mxu0
  %v7570 = vadd.f32 %v7521, %v7569
  %7571 = vmatmul.bf16.gmra.mxu0 %v5629
  %v7572 = vpop.f32.mrf.mxu0
  %v7573 = vadd.f32 %v7524, %v7572
  %v7574 = vpop.f32.mrf.mxu0
  %v7575 = vadd.f32 %v7526, %v7574
  %7576 = vmatmul.bf16.gmra.mxu0 %v5637
  %v7577 = vpop.f32.mrf.mxu0
  %v7578 = vadd.f32 %v7529, %v7577
  %v7579 = vpop.f32.mrf.mxu0
  %v7580 = vadd.f32 %v7531, %v7579
  %7581 = vmatmul.bf16.gmra.mxu0 %v5645
  %v7582 = vpop.f32.mrf.mxu0
  %v7583 = vadd.f32 %v7534, %v7582
  %v7584 = vpop.f32.mrf.mxu0
  %v7585 = vadd.f32 %v7536, %v7584
  %7586 = vmatmul.bf16.gmra.mxu0 %v5653
  %v7587 = vpop.f32.mrf.mxu0
  %v7588 = vadd.f32 %v7539, %v7587
  %v7589 = vpop.f32.mrf.mxu0
  %v7590 = vadd.f32 %v7541, %v7589
  %7591 = vdwg.mxu0
  %7592 = vmatpush.bf16.msra.mxu0 %v6717
  %7593 = vmatpush.bf16.msra.mxu0 %v6713
  %7594 = vmatpush.bf16.msra.mxu0 %v6709
  %7595 = vmatpush.bf16.msra.mxu0 %v6705
  %7596 = vmatpush.bf16.msra.mxu0 %v6701
  %7597 = vmatpush.bf16.msra.mxu0 %v6697
  %7598 = vmatpush.bf16.msra.mxu0 %v6693
  %7599 = vmatpush.bf16.msra.mxu0 %v6689
  %7600 = vmatmul.bf16.gmra.mxu0 %v5590
  %v7601 = vpop.f32.mrf.mxu0
  %v7602 = vadd.f32 %v5913, %v7601
  %v7603 = vpop.f32.mrf.mxu0
  %v7604 = vadd.f32 %v5913, %v7603
  %7605 = vmatmul.bf16.gmra.mxu0 %v5598
  %v7606 = vpop.f32.mrf.mxu0
  %v7607 = vadd.f32 %v5913, %v7606
  %v7608 = vpop.f32.mrf.mxu0
  %v7609 = vadd.f32 %v5913, %v7608
  %7610 = vmatmul.bf16.gmra.mxu0 %v5606
  %v7611 = vpop.f32.mrf.mxu0
  %v7612 = vadd.f32 %v5913, %v7611
  %v7613 = vpop.f32.mrf.mxu0
  %v7614 = vadd.f32 %v5913, %v7613
  %7615 = vmatmul.bf16.gmra.mxu0 %v5614
  %v7616 = vpop.f32.mrf.mxu0
  %v7617 = vadd.f32 %v5913, %v7616
  %v7618 = vpop.f32.mrf.mxu0
  %v7619 = vadd.f32 %v5913, %v7618
  %7620 = vmatmul.bf16.gmra.mxu0 %v5622
  %v7621 = vpop.f32.mrf.mxu0
  %v7622 = vadd.f32 %v5913, %v7621
  %v7623 = vpop.f32.mrf.mxu0
  %v7624 = vadd.f32 %v5913, %v7623
  %7625 = vmatmul.bf16.gmra.mxu0 %v5630
  %v7626 = vpop.f32.mrf.mxu0
  %v7627 = vadd.f32 %v5913, %v7626
  %v7628 = vpop.f32.mrf.mxu0
  %v7629 = vadd.f32 %v5913, %v7628
  %7630 = vmatmul.bf16.gmra.mxu0 %v5638
  %v7631 = vpop.f32.mrf.mxu0
  %v7632 = vadd.f32 %v5913, %v7631
  %v7633 = vpop.f32.mrf.mxu0
  %v7634 = vadd.f32 %v5913, %v7633
  %7635 = vmatmul.bf16.gmra.mxu0 %v5646
  %v7636 = vpop.f32.mrf.mxu0
  %v7637 = vadd.f32 %v5913, %v7636
  %v7638 = vpop.f32.mrf.mxu0
  %v7639 = vadd.f32 %v5913, %v7638
  %7640 = vdwg.mxu0
  %7641 = vmatpush.bf16.msra.mxu0 %v6749
  %7642 = vmatpush.bf16.msra.mxu0 %v6745
  %7643 = vmatpush.bf16.msra.mxu0 %v6741
  %7644 = vmatpush.bf16.msra.mxu0 %v6737
  %7645 = vmatpush.bf16.msra.mxu0 %v6733
  %7646 = vmatpush.bf16.msra.mxu0 %v6729
  %7647 = vmatpush.bf16.msra.mxu0 %v6725
  %7648 = vmatpush.bf16.msra.mxu0 %v6721
  %7649 = vmatmul.bf16.gmra.mxu0 %v5591
  %v7650 = vpop.f32.mrf.mxu0
  %v7651 = vadd.f32 %v7602, %v7650
  %v7652 = vpop.f32.mrf.mxu0
  %v7653 = vadd.f32 %v7604, %v7652
  %7654 = vmatmul.bf16.gmra.mxu0 %v5599
  %v7655 = vpop.f32.mrf.mxu0
  %v7656 = vadd.f32 %v7607, %v7655
  %v7657 = vpop.f32.mrf.mxu0
  %v7658 = vadd.f32 %v7609, %v7657
  %7659 = vmatmul.bf16.gmra.mxu0 %v5607
  %v7660 = vpop.f32.mrf.mxu0
  %v7661 = vadd.f32 %v7612, %v7660
  %v7662 = vpop.f32.mrf.mxu0
  %v7663 = vadd.f32 %v7614, %v7662
  %7664 = vmatmul.bf16.gmra.mxu0 %v5615
  %v7665 = vpop.f32.mrf.mxu0
  %v7666 = vadd.f32 %v7617, %v7665
  %v7667 = vpop.f32.mrf.mxu0
  %v7668 = vadd.f32 %v7619, %v7667
  %7669 = vmatmul.bf16.gmra.mxu0 %v5623
  %v7670 = vpop.f32.mrf.mxu0
  %v7671 = vadd.f32 %v7622, %v7670
  %v7672 = vpop.f32.mrf.mxu0
  %v7673 = vadd.f32 %v7624, %v7672
  %7674 = vmatmul.bf16.gmra.mxu0 %v5631
  %v7675 = vpop.f32.mrf.mxu0
  %v7676 = vadd.f32 %v7627, %v7675
  %v7677 = vpop.f32.mrf.mxu0
  %v7678 = vadd.f32 %v7629, %v7677
  %7679 = vmatmul.bf16.gmra.mxu0 %v5639
  %v7680 = vpop.f32.mrf.mxu0
  %v7681 = vadd.f32 %v7632, %v7680
  %v7682 = vpop.f32.mrf.mxu0
  %v7683 = vadd.f32 %v7634, %v7682
  %7684 = vmatmul.bf16.gmra.mxu0 %v5647
  %v7685 = vpop.f32.mrf.mxu0
  %v7686 = vadd.f32 %v7637, %v7685
  %v7687 = vpop.f32.mrf.mxu0
  %v7688 = vadd.f32 %v7639, %v7687
  %7689 = vdwg.mxu0
  %7690 = vmatpush.bf16.msra.mxu0 %v6781
  %7691 = vmatpush.bf16.msra.mxu0 %v6777
  %7692 = vmatpush.bf16.msra.mxu0 %v6773
  %7693 = vmatpush.bf16.msra.mxu0 %v6769
  %7694 = vmatpush.bf16.msra.mxu0 %v6765
  %7695 = vmatpush.bf16.msra.mxu0 %v6761
  %7696 = vmatpush.bf16.msra.mxu0 %v6757
  %7697 = vmatpush.bf16.msra.mxu0 %v6753
  %7698 = vmatmul.bf16.gmra.mxu0 %v5592
  %v7699 = vpop.f32.mrf.mxu0
  %v7700 = vadd.f32 %v7651, %v7699
  %v7701 = vpop.f32.mrf.mxu0
  %v7702 = vadd.f32 %v7653, %v7701
  %7703 = vmatmul.bf16.gmra.mxu0 %v5600
  %v7704 = vpop.f32.mrf.mxu0
  %v7705 = vadd.f32 %v7656, %v7704
  %v7706 = vpop.f32.mrf.mxu0
  %v7707 = vadd.f32 %v7658, %v7706
  %7708 = vmatmul.bf16.gmra.mxu0 %v5608
  %v7709 = vpop.f32.mrf.mxu0
  %v7710 = vadd.f32 %v7661, %v7709
  %v7711 = vpop.f32.mrf.mxu0
  %v7712 = vadd.f32 %v7663, %v7711
  %7713 = vmatmul.bf16.gmra.mxu0 %v5616
  %v7714 = vpop.f32.mrf.mxu0
  %v7715 = vadd.f32 %v7666, %v7714
  %v7716 = vpop.f32.mrf.mxu0
  %v7717 = vadd.f32 %v7668, %v7716
  %7718 = vmatmul.bf16.gmra.mxu0 %v5624
  %v7719 = vpop.f32.mrf.mxu0
  %v7720 = vadd.f32 %v7671, %v7719
  %v7721 = vpop.f32.mrf.mxu0
  %v7722 = vadd.f32 %v7673, %v7721
  %7723 = vmatmul.bf16.gmra.mxu0 %v5632
  %v7724 = vpop.f32.mrf.mxu0
  %v7725 = vadd.f32 %v7676, %v7724
  %v7726 = vpop.f32.mrf.mxu0
  %v7727 = vadd.f32 %v7678, %v7726
  %7728 = vmatmul.bf16.gmra.mxu0 %v5640
  %v7729 = vpop.f32.mrf.mxu0
  %v7730 = vadd.f32 %v7681, %v7729
  %v7731 = vpop.f32.mrf.mxu0
  %v7732 = vadd.f32 %v7683, %v7731
  %7733 = vmatmul.bf16.gmra.mxu0 %v5648
  %v7734 = vpop.f32.mrf.mxu0
  %v7735 = vadd.f32 %v7686, %v7734
  %v7736 = vpop.f32.mrf.mxu0
  %v7737 = vadd.f32 %v7688, %v7736
  %7738 = vdwg.mxu0
  %7739 = vmatpush.bf16.msra.mxu0 %v6813
  %7740 = vmatpush.bf16.msra.mxu0 %v6809
  %7741 = vmatpush.bf16.msra.mxu0 %v6805
  %7742 = vmatpush.bf16.msra.mxu0 %v6801
  %7743 = vmatpush.bf16.msra.mxu0 %v6797
  %7744 = vmatpush.bf16.msra.mxu0 %v6793
  %7745 = vmatpush.bf16.msra.mxu0 %v6789
  %7746 = vmatpush.bf16.msra.mxu0 %v6785
  %7747 = vmatmul.bf16.gmra.mxu0 %v5593
  %v7748 = vpop.f32.mrf.mxu0
  %v7749 = vadd.f32 %v7700, %v7748
  %v7750 = vpop.f32.mrf.mxu0
  %v7751 = vadd.f32 %v7702, %v7750
  %7752 = vmatmul.bf16.gmra.mxu0 %v5601
  %v7753 = vpop.f32.mrf.mxu0
  %v7754 = vadd.f32 %v7705, %v7753
  %v7755 = vpop.f32.mrf.mxu0
  %v7756 = vadd.f32 %v7707, %v7755
  %7757 = vmatmul.bf16.gmra.mxu0 %v5609
  %v7758 = vpop.f32.mrf.mxu0
  %v7759 = vadd.f32 %v7710, %v7758
  %v7760 = vpop.f32.mrf.mxu0
  %v7761 = vadd.f32 %v7712, %v7760
  %7762 = vmatmul.bf16.gmra.mxu0 %v5617
  %v7763 = vpop.f32.mrf.mxu0
  %v7764 = vadd.f32 %v7715, %v7763
  %v7765 = vpop.f32.mrf.mxu0
  %v7766 = vadd.f32 %v7717, %v7765
  %7767 = vmatmul.bf16.gmra.mxu0 %v5625
  %v7768 = vpop.f32.mrf.mxu0
  %v7769 = vadd.f32 %v7720, %v7768
  %v7770 = vpop.f32.mrf.mxu0
  %v7771 = vadd.f32 %v7722, %v7770
  %7772 = vmatmul.bf16.gmra.mxu0 %v5633
  %v7773 = vpop.f32.mrf.mxu0
  %v7774 = vadd.f32 %v7725, %v7773
  %v7775 = vpop.f32.mrf.mxu0
  %v7776 = vadd.f32 %v7727, %v7775
  %7777 = vmatmul.bf16.gmra.mxu0 %v5641
  %v7778 = vpop.f32.mrf.mxu0
  %v7779 = vadd.f32 %v7730, %v7778
  %v7780 = vpop.f32.mrf.mxu0
  %v7781 = vadd.f32 %v7732, %v7780
  %7782 = vmatmul.bf16.gmra.mxu0 %v5649
  %v7783 = vpop.f32.mrf.mxu0
  %v7784 = vadd.f32 %v7735, %v7783
  %v7785 = vpop.f32.mrf.mxu0
  %v7786 = vadd.f32 %v7737, %v7785
  %7787 = vdwg.mxu0
  %7788 = vmatpush.bf16.msra.mxu0 %v6845
  %7789 = vmatpush.bf16.msra.mxu0 %v6841
  %7790 = vmatpush.bf16.msra.mxu0 %v6837
  %7791 = vmatpush.bf16.msra.mxu0 %v6833
  %7792 = vmatpush.bf16.msra.mxu0 %v6829
  %7793 = vmatpush.bf16.msra.mxu0 %v6825
  %7794 = vmatpush.bf16.msra.mxu0 %v6821
  %7795 = vmatpush.bf16.msra.mxu0 %v6817
  %7796 = vmatmul.bf16.gmra.mxu0 %v5594
  %v7797 = vpop.f32.mrf.mxu0
  %v7798 = vadd.f32 %v7749, %v7797
  %v7799 = vpop.f32.mrf.mxu0
  %v7800 = vadd.f32 %v7751, %v7799
  %7801 = vmatmul.bf16.gmra.mxu0 %v5602
  %v7802 = vpop.f32.mrf.mxu0
  %v7803 = vadd.f32 %v7754, %v7802
  %v7804 = vpop.f32.mrf.mxu0
  %v7805 = vadd.f32 %v7756, %v7804
  %7806 = vmatmul.bf16.gmra.mxu0 %v5610
  %v7807 = vpop.f32.mrf.mxu0
  %v7808 = vadd.f32 %v7759, %v7807
  %v7809 = vpop.f32.mrf.mxu0
  %v7810 = vadd.f32 %v7761, %v7809
  %7811 = vmatmul.bf16.gmra.mxu0 %v5618
  %v7812 = vpop.f32.mrf.mxu0
  %v7813 = vadd.f32 %v7764, %v7812
  %v7814 = vpop.f32.mrf.mxu0
  %v7815 = vadd.f32 %v7766, %v7814
  %7816 = vmatmul.bf16.gmra.mxu0 %v5626
  %v7817 = vpop.f32.mrf.mxu0
  %v7818 = vadd.f32 %v7769, %v7817
  %v7819 = vpop.f32.mrf.mxu0
  %v7820 = vadd.f32 %v7771, %v7819
  %7821 = vmatmul.bf16.gmra.mxu0 %v5634
  %v7822 = vpop.f32.mrf.mxu0
  %v7823 = vadd.f32 %v7774, %v7822
  %v7824 = vpop.f32.mrf.mxu0
  %v7825 = vadd.f32 %v7776, %v7824
  %7826 = vmatmul.bf16.gmra.mxu0 %v5642
  %v7827 = vpop.f32.mrf.mxu0
  %v7828 = vadd.f32 %v7779, %v7827
  %v7829 = vpop.f32.mrf.mxu0
  %v7830 = vadd.f32 %v7781, %v7829
  %7831 = vmatmul.bf16.gmra.mxu0 %v5650
  %v7832 = vpop.f32.mrf.mxu0
  %v7833 = vadd.f32 %v7784, %v7832
  %v7834 = vpop.f32.mrf.mxu0
  %v7835 = vadd.f32 %v7786, %v7834
  %7836 = vdwg.mxu0
  %7837 = vmatpush.bf16.msra.mxu0 %v6877
  %7838 = vmatpush.bf16.msra.mxu0 %v6873
  %7839 = vmatpush.bf16.msra.mxu0 %v6869
  %7840 = vmatpush.bf16.msra.mxu0 %v6865
  %7841 = vmatpush.bf16.msra.mxu0 %v6861
  %7842 = vmatpush.bf16.msra.mxu0 %v6857
  %7843 = vmatpush.bf16.msra.mxu0 %v6853
  %7844 = vmatpush.bf16.msra.mxu0 %v6849
  %7845 = vmatmul.bf16.gmra.mxu0 %v5595
  %v7846 = vpop.f32.mrf.mxu0
  %v7847 = vadd.f32 %v7798, %v7846
  %v7848 = vpop.f32.mrf.mxu0
  %v7849 = vadd.f32 %v7800, %v7848
  %7850 = vmatmul.bf16.gmra.mxu0 %v5603
  %v7851 = vpop.f32.mrf.mxu0
  %v7852 = vadd.f32 %v7803, %v7851
  %v7853 = vpop.f32.mrf.mxu0
  %v7854 = vadd.f32 %v7805, %v7853
  %7855 = vmatmul.bf16.gmra.mxu0 %v5611
  %v7856 = vpop.f32.mrf.mxu0
  %v7857 = vadd.f32 %v7808, %v7856
  %v7858 = vpop.f32.mrf.mxu0
  %v7859 = vadd.f32 %v7810, %v7858
  %7860 = vmatmul.bf16.gmra.mxu0 %v5619
  %v7861 = vpop.f32.mrf.mxu0
  %v7862 = vadd.f32 %v7813, %v7861
  %v7863 = vpop.f32.mrf.mxu0
  %v7864 = vadd.f32 %v7815, %v7863
  %7865 = vmatmul.bf16.gmra.mxu0 %v5627
  %v7866 = vpop.f32.mrf.mxu0
  %v7867 = vadd.f32 %v7818, %v7866
  %v7868 = vpop.f32.mrf.mxu0
  %v7869 = vadd.f32 %v7820, %v7868
  %7870 = vmatmul.bf16.gmra.mxu0 %v5635
  %v7871 = vpop.f32.mrf.mxu0
  %v7872 = vadd.f32 %v7823, %v7871
  %v7873 = vpop.f32.mrf.mxu0
  %v7874 = vadd.f32 %v7825, %v7873
  %7875 = vmatmul.bf16.gmra.mxu0 %v5643
  %v7876 = vpop.f32.mrf.mxu0
  %v7877 = vadd.f32 %v7828, %v7876
  %v7878 = vpop.f32.mrf.mxu0
  %v7879 = vadd.f32 %v7830, %v7878
  %7880 = vmatmul.bf16.gmra.mxu0 %v5651
  %v7881 = vpop.f32.mrf.mxu0
  %v7882 = vadd.f32 %v7833, %v7881
  %v7883 = vpop.f32.mrf.mxu0
  %v7884 = vadd.f32 %v7835, %v7883
  %7885 = vdwg.mxu0
  %7886 = vmatpush.bf16.msra.mxu0 %v6909
  %7887 = vmatpush.bf16.msra.mxu0 %v6905
  %7888 = vmatpush.bf16.msra.mxu0 %v6901
  %7889 = vmatpush.bf16.msra.mxu0 %v6897
  %7890 = vmatpush.bf16.msra.mxu0 %v6893
  %7891 = vmatpush.bf16.msra.mxu0 %v6889
  %7892 = vmatpush.bf16.msra.mxu0 %v6885
  %7893 = vmatpush.bf16.msra.mxu0 %v6881
  %7894 = vmatmul.bf16.gmra.mxu0 %v5596
  %v7895 = vpop.f32.mrf.mxu0
  %v7896 = vadd.f32 %v7847, %v7895
  %v7897 = vpop.f32.mrf.mxu0
  %v7898 = vadd.f32 %v7849, %v7897
  %7899 = vmatmul.bf16.gmra.mxu0 %v5604
  %v7900 = vpop.f32.mrf.mxu0
  %v7901 = vadd.f32 %v7852, %v7900
  %v7902 = vpop.f32.mrf.mxu0
  %v7903 = vadd.f32 %v7854, %v7902
  %7904 = vmatmul.bf16.gmra.mxu0 %v5612
  %v7905 = vpop.f32.mrf.mxu0
  %v7906 = vadd.f32 %v7857, %v7905
  %v7907 = vpop.f32.mrf.mxu0
  %v7908 = vadd.f32 %v7859, %v7907
  %7909 = vmatmul.bf16.gmra.mxu0 %v5620
  %v7910 = vpop.f32.mrf.mxu0
  %v7911 = vadd.f32 %v7862, %v7910
  %v7912 = vpop.f32.mrf.mxu0
  %v7913 = vadd.f32 %v7864, %v7912
  %7914 = vmatmul.bf16.gmra.mxu0 %v5628
  %v7915 = vpop.f32.mrf.mxu0
  %v7916 = vadd.f32 %v7867, %v7915
  %v7917 = vpop.f32.mrf.mxu0
  %v7918 = vadd.f32 %v7869, %v7917
  %7919 = vmatmul.bf16.gmra.mxu0 %v5636
  %v7920 = vpop.f32.mrf.mxu0
  %v7921 = vadd.f32 %v7872, %v7920
  %v7922 = vpop.f32.mrf.mxu0
  %v7923 = vadd.f32 %v7874, %v7922
  %7924 = vmatmul.bf16.gmra.mxu0 %v5644
  %v7925 = vpop.f32.mrf.mxu0
  %v7926 = vadd.f32 %v7877, %v7925
  %v7927 = vpop.f32.mrf.mxu0
  %v7928 = vadd.f32 %v7879, %v7927
  %7929 = vmatmul.bf16.gmra.mxu0 %v5652
  %v7930 = vpop.f32.mrf.mxu0
  %v7931 = vadd.f32 %v7882, %v7930
  %v7932 = vpop.f32.mrf.mxu0
  %v7933 = vadd.f32 %v7884, %v7932
  %7934 = vdwg.mxu0
  %7935 = vmatpush.bf16.msra.mxu0 %v6941
  %7936 = vmatpush.bf16.msra.mxu0 %v6937
  %7937 = vmatpush.bf16.msra.mxu0 %v6933
  %7938 = vmatpush.bf16.msra.mxu0 %v6929
  %7939 = vmatpush.bf16.msra.mxu0 %v6925
  %7940 = vmatpush.bf16.msra.mxu0 %v6921
  %7941 = vmatpush.bf16.msra.mxu0 %v6917
  %7942 = vmatpush.bf16.msra.mxu0 %v6913
  %7943 = vmatmul.bf16.gmra.mxu0 %v5597
  %v7944 = vpop.f32.mrf.mxu0
  %v7945 = vadd.f32 %v7896, %v7944
  %v7946 = vpop.f32.mrf.mxu0
  %v7947 = vadd.f32 %v7898, %v7946
  %7948 = vmatmul.bf16.gmra.mxu0 %v5605
  %v7949 = vpop.f32.mrf.mxu0
  %v7950 = vadd.f32 %v7901, %v7949
  %v7951 = vpop.f32.mrf.mxu0
  %v7952 = vadd.f32 %v7903, %v7951
  %7953 = vmatmul.bf16.gmra.mxu0 %v5613
  %v7954 = vpop.f32.mrf.mxu0
  %v7955 = vadd.f32 %v7906, %v7954
  %v7956 = vpop.f32.mrf.mxu0
  %v7957 = vadd.f32 %v7908, %v7956
  %7958 = vmatmul.bf16.gmra.mxu0 %v5621
  %v7959 = vpop.f32.mrf.mxu0
  %v7960 = vadd.f32 %v7911, %v7959
  %v7961 = vpop.f32.mrf.mxu0
  %v7962 = vadd.f32 %v7913, %v7961
  %7963 = vmatmul.bf16.gmra.mxu0 %v5629
  %v7964 = vpop.f32.mrf.mxu0
  %v7965 = vadd.f32 %v7916, %v7964
  %v7966 = vpop.f32.mrf.mxu0
  %v7967 = vadd.f32 %v7918, %v7966
  %7968 = vmatmul.bf16.gmra.mxu0 %v5637
  %v7969 = vpop.f32.mrf.mxu0
  %v7970 = vadd.f32 %v7921, %v7969
  %v7971 = vpop.f32.mrf.mxu0
  %v7972 = vadd.f32 %v7923, %v7971
  %7973 = vmatmul.bf16.gmra.mxu0 %v5645
  %v7974 = vpop.f32.mrf.mxu0
  %v7975 = vadd.f32 %v7926, %v7974
  %v7976 = vpop.f32.mrf.mxu0
  %v7977 = vadd.f32 %v7928, %v7976
  %7978 = vmatmul.bf16.gmra.mxu0 %v5653
  %v7979 = vpop.f32.mrf.mxu0
  %v7980 = vadd.f32 %v7931, %v7979
  %v7981 = vpop.f32.mrf.mxu0
  %v7982 = vadd.f32 %v7933, %v7981
  %7983 = vdwg.mxu0
  %7984 = vmatpush.bf16.msra.mxu0 %v6718
  %7985 = vmatpush.bf16.msra.mxu0 %v6714
  %7986 = vmatpush.bf16.msra.mxu0 %v6710
  %7987 = vmatpush.bf16.msra.mxu0 %v6706
  %7988 = vmatpush.bf16.msra.mxu0 %v6702
  %7989 = vmatpush.bf16.msra.mxu0 %v6698
  %7990 = vmatpush.bf16.msra.mxu0 %v6694
  %7991 = vmatpush.bf16.msra.mxu0 %v6690
  %7992 = vmatmul.bf16.gmra.mxu0 %v5590
  %v7993 = vpop.f32.mrf.mxu0
  %v7994 = vadd.f32 %v5914, %v7993
  %v7995 = vpop.f32.mrf.mxu0
  %v7996 = vadd.f32 %v5914, %v7995
  %7997 = vmatmul.bf16.gmra.mxu0 %v5598
  %v7998 = vpop.f32.mrf.mxu0
  %v7999 = vadd.f32 %v5914, %v7998
  %v8000 = vpop.f32.mrf.mxu0
  %v8001 = vadd.f32 %v5914, %v8000
  %8002 = vmatmul.bf16.gmra.mxu0 %v5606
  %v8003 = vpop.f32.mrf.mxu0
  %v8004 = vadd.f32 %v5914, %v8003
  %v8005 = vpop.f32.mrf.mxu0
  %v8006 = vadd.f32 %v5914, %v8005
  %8007 = vmatmul.bf16.gmra.mxu0 %v5614
  %v8008 = vpop.f32.mrf.mxu0
  %v8009 = vadd.f32 %v5914, %v8008
  %v8010 = vpop.f32.mrf.mxu0
  %v8011 = vadd.f32 %v5914, %v8010
  %8012 = vmatmul.bf16.gmra.mxu0 %v5622
  %v8013 = vpop.f32.mrf.mxu0
  %v8014 = vadd.f32 %v5914, %v8013
  %v8015 = vpop.f32.mrf.mxu0
  %v8016 = vadd.f32 %v5914, %v8015
  %8017 = vmatmul.bf16.gmra.mxu0 %v5630
  %v8018 = vpop.f32.mrf.mxu0
  %v8019 = vadd.f32 %v5914, %v8018
  %v8020 = vpop.f32.mrf.mxu0
  %v8021 = vadd.f32 %v5914, %v8020
  %8022 = vmatmul.bf16.gmra.mxu0 %v5638
  %v8023 = vpop.f32.mrf.mxu0
  %v8024 = vadd.f32 %v5914, %v8023
  %v8025 = vpop.f32.mrf.mxu0
  %v8026 = vadd.f32 %v5914, %v8025
  %8027 = vmatmul.bf16.gmra.mxu0 %v5646
  %v8028 = vpop.f32.mrf.mxu0
  %v8029 = vadd.f32 %v5914, %v8028
  %v8030 = vpop.f32.mrf.mxu0
  %v8031 = vadd.f32 %v5914, %v8030
  %8032 = vdwg.mxu0
  %8033 = vmatpush.bf16.msra.mxu0 %v6750
  %8034 = vmatpush.bf16.msra.mxu0 %v6746
  %8035 = vmatpush.bf16.msra.mxu0 %v6742
  %8036 = vmatpush.bf16.msra.mxu0 %v6738
  %8037 = vmatpush.bf16.msra.mxu0 %v6734
  %8038 = vmatpush.bf16.msra.mxu0 %v6730
  %8039 = vmatpush.bf16.msra.mxu0 %v6726
  %8040 = vmatpush.bf16.msra.mxu0 %v6722
  %8041 = vmatmul.bf16.gmra.mxu0 %v5591
  %v8042 = vpop.f32.mrf.mxu0
  %v8043 = vadd.f32 %v7994, %v8042
  %v8044 = vpop.f32.mrf.mxu0
  %v8045 = vadd.f32 %v7996, %v8044
  %8046 = vmatmul.bf16.gmra.mxu0 %v5599
  %v8047 = vpop.f32.mrf.mxu0
  %v8048 = vadd.f32 %v7999, %v8047
  %v8049 = vpop.f32.mrf.mxu0
  %v8050 = vadd.f32 %v8001, %v8049
  %8051 = vmatmul.bf16.gmra.mxu0 %v5607
  %v8052 = vpop.f32.mrf.mxu0
  %v8053 = vadd.f32 %v8004, %v8052
  %v8054 = vpop.f32.mrf.mxu0
  %v8055 = vadd.f32 %v8006, %v8054
  %8056 = vmatmul.bf16.gmra.mxu0 %v5615
  %v8057 = vpop.f32.mrf.mxu0
  %v8058 = vadd.f32 %v8009, %v8057
  %v8059 = vpop.f32.mrf.mxu0
  %v8060 = vadd.f32 %v8011, %v8059
  %8061 = vmatmul.bf16.gmra.mxu0 %v5623
  %v8062 = vpop.f32.mrf.mxu0
  %v8063 = vadd.f32 %v8014, %v8062
  %v8064 = vpop.f32.mrf.mxu0
  %v8065 = vadd.f32 %v8016, %v8064
  %8066 = vmatmul.bf16.gmra.mxu0 %v5631
  %v8067 = vpop.f32.mrf.mxu0
  %v8068 = vadd.f32 %v8019, %v8067
  %v8069 = vpop.f32.mrf.mxu0
  %v8070 = vadd.f32 %v8021, %v8069
  %8071 = vmatmul.bf16.gmra.mxu0 %v5639
  %v8072 = vpop.f32.mrf.mxu0
  %v8073 = vadd.f32 %v8024, %v8072
  %v8074 = vpop.f32.mrf.mxu0
  %v8075 = vadd.f32 %v8026, %v8074
  %8076 = vmatmul.bf16.gmra.mxu0 %v5647
  %v8077 = vpop.f32.mrf.mxu0
  %v8078 = vadd.f32 %v8029, %v8077
  %v8079 = vpop.f32.mrf.mxu0
  %v8080 = vadd.f32 %v8031, %v8079
  %8081 = vdwg.mxu0
  %8082 = vmatpush.bf16.msra.mxu0 %v6782
  %8083 = vmatpush.bf16.msra.mxu0 %v6778
  %8084 = vmatpush.bf16.msra.mxu0 %v6774
  %8085 = vmatpush.bf16.msra.mxu0 %v6770
  %8086 = vmatpush.bf16.msra.mxu0 %v6766
  %8087 = vmatpush.bf16.msra.mxu0 %v6762
  %8088 = vmatpush.bf16.msra.mxu0 %v6758
  %8089 = vmatpush.bf16.msra.mxu0 %v6754
  %8090 = vmatmul.bf16.gmra.mxu0 %v5592
  %v8091 = vpop.f32.mrf.mxu0
  %v8092 = vadd.f32 %v8043, %v8091
  %v8093 = vpop.f32.mrf.mxu0
  %v8094 = vadd.f32 %v8045, %v8093
  %8095 = vmatmul.bf16.gmra.mxu0 %v5600
  %v8096 = vpop.f32.mrf.mxu0
  %v8097 = vadd.f32 %v8048, %v8096
  %v8098 = vpop.f32.mrf.mxu0
  %v8099 = vadd.f32 %v8050, %v8098
  %8100 = vmatmul.bf16.gmra.mxu0 %v5608
  %v8101 = vpop.f32.mrf.mxu0
  %v8102 = vadd.f32 %v8053, %v8101
  %v8103 = vpop.f32.mrf.mxu0
  %v8104 = vadd.f32 %v8055, %v8103
  %8105 = vmatmul.bf16.gmra.mxu0 %v5616
  %v8106 = vpop.f32.mrf.mxu0
  %v8107 = vadd.f32 %v8058, %v8106
  %v8108 = vpop.f32.mrf.mxu0
  %v8109 = vadd.f32 %v8060, %v8108
  %8110 = vmatmul.bf16.gmra.mxu0 %v5624
  %v8111 = vpop.f32.mrf.mxu0
  %v8112 = vadd.f32 %v8063, %v8111
  %v8113 = vpop.f32.mrf.mxu0
  %v8114 = vadd.f32 %v8065, %v8113
  %8115 = vmatmul.bf16.gmra.mxu0 %v5632
  %v8116 = vpop.f32.mrf.mxu0
  %v8117 = vadd.f32 %v8068, %v8116
  %v8118 = vpop.f32.mrf.mxu0
  %v8119 = vadd.f32 %v8070, %v8118
  %8120 = vmatmul.bf16.gmra.mxu0 %v5640
  %v8121 = vpop.f32.mrf.mxu0
  %v8122 = vadd.f32 %v8073, %v8121
  %v8123 = vpop.f32.mrf.mxu0
  %v8124 = vadd.f32 %v8075, %v8123
  %8125 = vmatmul.bf16.gmra.mxu0 %v5648
  %v8126 = vpop.f32.mrf.mxu0
  %v8127 = vadd.f32 %v8078, %v8126
  %v8128 = vpop.f32.mrf.mxu0
  %v8129 = vadd.f32 %v8080, %v8128
  %8130 = vdwg.mxu0
  %8131 = vmatpush.bf16.msra.mxu0 %v6814
  %8132 = vmatpush.bf16.msra.mxu0 %v6810
  %8133 = vmatpush.bf16.msra.mxu0 %v6806
  %8134 = vmatpush.bf16.msra.mxu0 %v6802
  %8135 = vmatpush.bf16.msra.mxu0 %v6798
  %8136 = vmatpush.bf16.msra.mxu0 %v6794
  %8137 = vmatpush.bf16.msra.mxu0 %v6790
  %8138 = vmatpush.bf16.msra.mxu0 %v6786
  %8139 = vmatmul.bf16.gmra.mxu0 %v5593
  %v8140 = vpop.f32.mrf.mxu0
  %v8141 = vadd.f32 %v8092, %v8140
  %v8142 = vpop.f32.mrf.mxu0
  %v8143 = vadd.f32 %v8094, %v8142
  %8144 = vmatmul.bf16.gmra.mxu0 %v5601
  %v8145 = vpop.f32.mrf.mxu0
  %v8146 = vadd.f32 %v8097, %v8145
  %v8147 = vpop.f32.mrf.mxu0
  %v8148 = vadd.f32 %v8099, %v8147
  %8149 = vmatmul.bf16.gmra.mxu0 %v5609
  %v8150 = vpop.f32.mrf.mxu0
  %v8151 = vadd.f32 %v8102, %v8150
  %v8152 = vpop.f32.mrf.mxu0
  %v8153 = vadd.f32 %v8104, %v8152
  %8154 = vmatmul.bf16.gmra.mxu0 %v5617
  %v8155 = vpop.f32.mrf.mxu0
  %v8156 = vadd.f32 %v8107, %v8155
  %v8157 = vpop.f32.mrf.mxu0
  %v8158 = vadd.f32 %v8109, %v8157
  %8159 = vmatmul.bf16.gmra.mxu0 %v5625
  %v8160 = vpop.f32.mrf.mxu0
  %v8161 = vadd.f32 %v8112, %v8160
  %v8162 = vpop.f32.mrf.mxu0
  %v8163 = vadd.f32 %v8114, %v8162
  %8164 = vmatmul.bf16.gmra.mxu0 %v5633
  %v8165 = vpop.f32.mrf.mxu0
  %v8166 = vadd.f32 %v8117, %v8165
  %v8167 = vpop.f32.mrf.mxu0
  %v8168 = vadd.f32 %v8119, %v8167
  %8169 = vmatmul.bf16.gmra.mxu0 %v5641
  %v8170 = vpop.f32.mrf.mxu0
  %v8171 = vadd.f32 %v8122, %v8170
  %v8172 = vpop.f32.mrf.mxu0
  %v8173 = vadd.f32 %v8124, %v8172
  %8174 = vmatmul.bf16.gmra.mxu0 %v5649
  %v8175 = vpop.f32.mrf.mxu0
  %v8176 = vadd.f32 %v8127, %v8175
  %v8177 = vpop.f32.mrf.mxu0
  %v8178 = vadd.f32 %v8129, %v8177
  %8179 = vdwg.mxu0
  %8180 = vmatpush.bf16.msra.mxu0 %v6846
  %8181 = vmatpush.bf16.msra.mxu0 %v6842
  %8182 = vmatpush.bf16.msra.mxu0 %v6838
  %8183 = vmatpush.bf16.msra.mxu0 %v6834
  %8184 = vmatpush.bf16.msra.mxu0 %v6830
  %8185 = vmatpush.bf16.msra.mxu0 %v6826
  %8186 = vmatpush.bf16.msra.mxu0 %v6822
  %8187 = vmatpush.bf16.msra.mxu0 %v6818
  %8188 = vmatmul.bf16.gmra.mxu0 %v5594
  %v8189 = vpop.f32.mrf.mxu0
  %v8190 = vadd.f32 %v8141, %v8189
  %v8191 = vpop.f32.mrf.mxu0
  %v8192 = vadd.f32 %v8143, %v8191
  %8193 = vmatmul.bf16.gmra.mxu0 %v5602
  %v8194 = vpop.f32.mrf.mxu0
  %v8195 = vadd.f32 %v8146, %v8194
  %v8196 = vpop.f32.mrf.mxu0
  %v8197 = vadd.f32 %v8148, %v8196
  %8198 = vmatmul.bf16.gmra.mxu0 %v5610
  %v8199 = vpop.f32.mrf.mxu0
  %v8200 = vadd.f32 %v8151, %v8199
  %v8201 = vpop.f32.mrf.mxu0
  %v8202 = vadd.f32 %v8153, %v8201
  %8203 = vmatmul.bf16.gmra.mxu0 %v5618
  %v8204 = vpop.f32.mrf.mxu0
  %v8205 = vadd.f32 %v8156, %v8204
  %v8206 = vpop.f32.mrf.mxu0
  %v8207 = vadd.f32 %v8158, %v8206
  %8208 = vmatmul.bf16.gmra.mxu0 %v5626
  %v8209 = vpop.f32.mrf.mxu0
  %v8210 = vadd.f32 %v8161, %v8209
  %v8211 = vpop.f32.mrf.mxu0
  %v8212 = vadd.f32 %v8163, %v8211
  %8213 = vmatmul.bf16.gmra.mxu0 %v5634
  %v8214 = vpop.f32.mrf.mxu0
  %v8215 = vadd.f32 %v8166, %v8214
  %v8216 = vpop.f32.mrf.mxu0
  %v8217 = vadd.f32 %v8168, %v8216
  %8218 = vmatmul.bf16.gmra.mxu0 %v5642
  %v8219 = vpop.f32.mrf.mxu0
  %v8220 = vadd.f32 %v8171, %v8219
  %v8221 = vpop.f32.mrf.mxu0
  %v8222 = vadd.f32 %v8173, %v8221
  %8223 = vmatmul.bf16.gmra.mxu0 %v5650
  %v8224 = vpop.f32.mrf.mxu0
  %v8225 = vadd.f32 %v8176, %v8224
  %v8226 = vpop.f32.mrf.mxu0
  %v8227 = vadd.f32 %v8178, %v8226
  %8228 = vdwg.mxu0
  %8229 = vmatpush.bf16.msra.mxu0 %v6878
  %8230 = vmatpush.bf16.msra.mxu0 %v6874
  %8231 = vmatpush.bf16.msra.mxu0 %v6870
  %8232 = vmatpush.bf16.msra.mxu0 %v6866
  %8233 = vmatpush.bf16.msra.mxu0 %v6862
  %8234 = vmatpush.bf16.msra.mxu0 %v6858
  %8235 = vmatpush.bf16.msra.mxu0 %v6854
  %8236 = vmatpush.bf16.msra.mxu0 %v6850
  %8237 = vmatmul.bf16.gmra.mxu0 %v5595
  %v8238 = vpop.f32.mrf.mxu0
  %v8239 = vadd.f32 %v8190, %v8238
  %v8240 = vpop.f32.mrf.mxu0
  %v8241 = vadd.f32 %v8192, %v8240
  %8242 = vmatmul.bf16.gmra.mxu0 %v5603
  %v8243 = vpop.f32.mrf.mxu0
  %v8244 = vadd.f32 %v8195, %v8243
  %v8245 = vpop.f32.mrf.mxu0
  %v8246 = vadd.f32 %v8197, %v8245
  %8247 = vmatmul.bf16.gmra.mxu0 %v5611
  %v8248 = vpop.f32.mrf.mxu0
  %v8249 = vadd.f32 %v8200, %v8248
  %v8250 = vpop.f32.mrf.mxu0
  %v8251 = vadd.f32 %v8202, %v8250
  %8252 = vmatmul.bf16.gmra.mxu0 %v5619
  %v8253 = vpop.f32.mrf.mxu0
  %v8254 = vadd.f32 %v8205, %v8253
  %v8255 = vpop.f32.mrf.mxu0
  %v8256 = vadd.f32 %v8207, %v8255
  %8257 = vmatmul.bf16.gmra.mxu0 %v5627
  %v8258 = vpop.f32.mrf.mxu0
  %v8259 = vadd.f32 %v8210, %v8258
  %v8260 = vpop.f32.mrf.mxu0
  %v8261 = vadd.f32 %v8212, %v8260
  %8262 = vmatmul.bf16.gmra.mxu0 %v5635
  %v8263 = vpop.f32.mrf.mxu0
  %v8264 = vadd.f32 %v8215, %v8263
  %v8265 = vpop.f32.mrf.mxu0
  %v8266 = vadd.f32 %v8217, %v8265
  %8267 = vmatmul.bf16.gmra.mxu0 %v5643
  %v8268 = vpop.f32.mrf.mxu0
  %v8269 = vadd.f32 %v8220, %v8268
  %v8270 = vpop.f32.mrf.mxu0
  %v8271 = vadd.f32 %v8222, %v8270
  %8272 = vmatmul.bf16.gmra.mxu0 %v5651
  %v8273 = vpop.f32.mrf.mxu0
  %v8274 = vadd.f32 %v8225, %v8273
  %v8275 = vpop.f32.mrf.mxu0
  %v8276 = vadd.f32 %v8227, %v8275
  %8277 = vdwg.mxu0
  %8278 = vmatpush.bf16.msra.mxu0 %v6910
  %8279 = vmatpush.bf16.msra.mxu0 %v6906
  %8280 = vmatpush.bf16.msra.mxu0 %v6902
  %8281 = vmatpush.bf16.msra.mxu0 %v6898
  %8282 = vmatpush.bf16.msra.mxu0 %v6894
  %8283 = vmatpush.bf16.msra.mxu0 %v6890
  %8284 = vmatpush.bf16.msra.mxu0 %v6886
  %8285 = vmatpush.bf16.msra.mxu0 %v6882
  %8286 = vmatmul.bf16.gmra.mxu0 %v5596
  %v8287 = vpop.f32.mrf.mxu0
  %v8288 = vadd.f32 %v8239, %v8287
  %v8289 = vpop.f32.mrf.mxu0
  %v8290 = vadd.f32 %v8241, %v8289
  %8291 = vmatmul.bf16.gmra.mxu0 %v5604
  %v8292 = vpop.f32.mrf.mxu0
  %v8293 = vadd.f32 %v8244, %v8292
  %v8294 = vpop.f32.mrf.mxu0
  %v8295 = vadd.f32 %v8246, %v8294
  %8296 = vmatmul.bf16.gmra.mxu0 %v5612
  %v8297 = vpop.f32.mrf.mxu0
  %v8298 = vadd.f32 %v8249, %v8297
  %v8299 = vpop.f32.mrf.mxu0
  %v8300 = vadd.f32 %v8251, %v8299
  %8301 = vmatmul.bf16.gmra.mxu0 %v5620
  %v8302 = vpop.f32.mrf.mxu0
  %v8303 = vadd.f32 %v8254, %v8302
  %v8304 = vpop.f32.mrf.mxu0
  %v8305 = vadd.f32 %v8256, %v8304
  %8306 = vmatmul.bf16.gmra.mxu0 %v5628
  %v8307 = vpop.f32.mrf.mxu0
  %v8308 = vadd.f32 %v8259, %v8307
  %v8309 = vpop.f32.mrf.mxu0
  %v8310 = vadd.f32 %v8261, %v8309
  %8311 = vmatmul.bf16.gmra.mxu0 %v5636
  %v8312 = vpop.f32.mrf.mxu0
  %v8313 = vadd.f32 %v8264, %v8312
  %v8314 = vpop.f32.mrf.mxu0
  %v8315 = vadd.f32 %v8266, %v8314
  %8316 = vmatmul.bf16.gmra.mxu0 %v5644
  %v8317 = vpop.f32.mrf.mxu0
  %v8318 = vadd.f32 %v8269, %v8317
  %v8319 = vpop.f32.mrf.mxu0
  %v8320 = vadd.f32 %v8271, %v8319
  %8321 = vmatmul.bf16.gmra.mxu0 %v5652
  %v8322 = vpop.f32.mrf.mxu0
  %v8323 = vadd.f32 %v8274, %v8322
  %v8324 = vpop.f32.mrf.mxu0
  %v8325 = vadd.f32 %v8276, %v8324
  %8326 = vdwg.mxu0
  %8327 = vmatpush.bf16.msra.mxu0 %v6942
  %8328 = vmatpush.bf16.msra.mxu0 %v6938
  %8329 = vmatpush.bf16.msra.mxu0 %v6934
  %8330 = vmatpush.bf16.msra.mxu0 %v6930
  %8331 = vmatpush.bf16.msra.mxu0 %v6926
  %8332 = vmatpush.bf16.msra.mxu0 %v6922
  %8333 = vmatpush.bf16.msra.mxu0 %v6918
  %8334 = vmatpush.bf16.msra.mxu0 %v6914
  %8335 = vmatmul.bf16.gmra.mxu0 %v5597
  %v8336 = vpop.f32.mrf.mxu0
  %v8337 = vadd.f32 %v8288, %v8336
  %v8338 = vpop.f32.mrf.mxu0
  %v8339 = vadd.f32 %v8290, %v8338
  %8340 = vmatmul.bf16.gmra.mxu0 %v5605
  %v8341 = vpop.f32.mrf.mxu0
  %v8342 = vadd.f32 %v8293, %v8341
  %v8343 = vpop.f32.mrf.mxu0
  %v8344 = vadd.f32 %v8295, %v8343
  %8345 = vmatmul.bf16.gmra.mxu0 %v5613
  %v8346 = vpop.f32.mrf.mxu0
  %v8347 = vadd.f32 %v8298, %v8346
  %v8348 = vpop.f32.mrf.mxu0
  %v8349 = vadd.f32 %v8300, %v8348
  %8350 = vmatmul.bf16.gmra.mxu0 %v5621
  %v8351 = vpop.f32.mrf.mxu0
  %v8352 = vadd.f32 %v8303, %v8351
  %v8353 = vpop.f32.mrf.mxu0
  %v8354 = vadd.f32 %v8305, %v8353
  %8355 = vmatmul.bf16.gmra.mxu0 %v5629
  %v8356 = vpop.f32.mrf.mxu0
  %v8357 = vadd.f32 %v8308, %v8356
  %v8358 = vpop.f32.mrf.mxu0
  %v8359 = vadd.f32 %v8310, %v8358
  %8360 = vmatmul.bf16.gmra.mxu0 %v5637
  %v8361 = vpop.f32.mrf.mxu0
  %v8362 = vadd.f32 %v8313, %v8361
  %v8363 = vpop.f32.mrf.mxu0
  %v8364 = vadd.f32 %v8315, %v8363
  %8365 = vmatmul.bf16.gmra.mxu0 %v5645
  %v8366 = vpop.f32.mrf.mxu0
  %v8367 = vadd.f32 %v8318, %v8366
  %v8368 = vpop.f32.mrf.mxu0
  %v8369 = vadd.f32 %v8320, %v8368
  %8370 = vmatmul.bf16.gmra.mxu0 %v5653
  %v8371 = vpop.f32.mrf.mxu0
  %v8372 = vadd.f32 %v8323, %v8371
  %v8373 = vpop.f32.mrf.mxu0
  %v8374 = vadd.f32 %v8325, %v8373
  %8375 = vdwg.mxu0
  %8376 = vmatpush.bf16.msra.mxu0 %v6719
  %8377 = vmatpush.bf16.msra.mxu0 %v6715
  %8378 = vmatpush.bf16.msra.mxu0 %v6711
  %8379 = vmatpush.bf16.msra.mxu0 %v6707
  %8380 = vmatpush.bf16.msra.mxu0 %v6703
  %8381 = vmatpush.bf16.msra.mxu0 %v6699
  %8382 = vmatpush.bf16.msra.mxu0 %v6695
  %8383 = vmatpush.bf16.msra.mxu0 %v6691
  %8384 = vmatmul.bf16.gmra.mxu0 %v5590
  %v8385 = vpop.f32.mrf.mxu0
  %v8386 = vadd.f32 %v5915, %v8385
  %v8387 = vpop.f32.mrf.mxu0
  %v8388 = vadd.f32 %v5915, %v8387
  %8389 = vmatmul.bf16.gmra.mxu0 %v5598
  %v8390 = vpop.f32.mrf.mxu0
  %v8391 = vadd.f32 %v5915, %v8390
  %v8392 = vpop.f32.mrf.mxu0
  %v8393 = vadd.f32 %v5915, %v8392
  %8394 = vmatmul.bf16.gmra.mxu0 %v5606
  %v8395 = vpop.f32.mrf.mxu0
  %v8396 = vadd.f32 %v5915, %v8395
  %v8397 = vpop.f32.mrf.mxu0
  %v8398 = vadd.f32 %v5915, %v8397
  %8399 = vmatmul.bf16.gmra.mxu0 %v5614
  %v8400 = vpop.f32.mrf.mxu0
  %v8401 = vadd.f32 %v5915, %v8400
  %v8402 = vpop.f32.mrf.mxu0
  %v8403 = vadd.f32 %v5915, %v8402
  %8404 = vmatmul.bf16.gmra.mxu0 %v5622
  %v8405 = vpop.f32.mrf.mxu0
  %v8406 = vadd.f32 %v5915, %v8405
  %v8407 = vpop.f32.mrf.mxu0
  %v8408 = vadd.f32 %v5915, %v8407
  %8409 = vmatmul.bf16.gmra.mxu0 %v5630
  %v8410 = vpop.f32.mrf.mxu0
  %v8411 = vadd.f32 %v5915, %v8410
  %v8412 = vpop.f32.mrf.mxu0
  %v8413 = vadd.f32 %v5915, %v8412
  %8414 = vmatmul.bf16.gmra.mxu0 %v5638
  %v8415 = vpop.f32.mrf.mxu0
  %v8416 = vadd.f32 %v5915, %v8415
  %v8417 = vpop.f32.mrf.mxu0
  %v8418 = vadd.f32 %v5915, %v8417
  %8419 = vmatmul.bf16.gmra.mxu0 %v5646
  %v8420 = vpop.f32.mrf.mxu0
  %v8421 = vadd.f32 %v5915, %v8420
  %v8422 = vpop.f32.mrf.mxu0
  %v8423 = vadd.f32 %v5915, %v8422
  %8424 = vdwg.mxu0
  %8425 = vmatpush.bf16.msra.mxu0 %v6751
  %8426 = vmatpush.bf16.msra.mxu0 %v6747
  %8427 = vmatpush.bf16.msra.mxu0 %v6743
  %8428 = vmatpush.bf16.msra.mxu0 %v6739
  %8429 = vmatpush.bf16.msra.mxu0 %v6735
  %8430 = vmatpush.bf16.msra.mxu0 %v6731
  %8431 = vmatpush.bf16.msra.mxu0 %v6727
  %8432 = vmatpush.bf16.msra.mxu0 %v6723
  %8433 = vmatmul.bf16.gmra.mxu0 %v5591
  %v8434 = vpop.f32.mrf.mxu0
  %v8435 = vadd.f32 %v8386, %v8434
  %v8436 = vpop.f32.mrf.mxu0
  %v8437 = vadd.f32 %v8388, %v8436
  %8438 = vmatmul.bf16.gmra.mxu0 %v5599
  %v8439 = vpop.f32.mrf.mxu0
  %v8440 = vadd.f32 %v8391, %v8439
  %v8441 = vpop.f32.mrf.mxu0
  %v8442 = vadd.f32 %v8393, %v8441
  %8443 = vmatmul.bf16.gmra.mxu0 %v5607
  %v8444 = vpop.f32.mrf.mxu0
  %v8445 = vadd.f32 %v8396, %v8444
  %v8446 = vpop.f32.mrf.mxu0
  %v8447 = vadd.f32 %v8398, %v8446
  %8448 = vmatmul.bf16.gmra.mxu0 %v5615
  %v8449 = vpop.f32.mrf.mxu0
  %v8450 = vadd.f32 %v8401, %v8449
  %v8451 = vpop.f32.mrf.mxu0
  %v8452 = vadd.f32 %v8403, %v8451
  %8453 = vmatmul.bf16.gmra.mxu0 %v5623
  %v8454 = vpop.f32.mrf.mxu0
  %v8455 = vadd.f32 %v8406, %v8454
  %v8456 = vpop.f32.mrf.mxu0
  %v8457 = vadd.f32 %v8408, %v8456
  %8458 = vmatmul.bf16.gmra.mxu0 %v5631
  %v8459 = vpop.f32.mrf.mxu0
  %v8460 = vadd.f32 %v8411, %v8459
  %v8461 = vpop.f32.mrf.mxu0
  %v8462 = vadd.f32 %v8413, %v8461
  %8463 = vmatmul.bf16.gmra.mxu0 %v5639
  %v8464 = vpop.f32.mrf.mxu0
  %v8465 = vadd.f32 %v8416, %v8464
  %v8466 = vpop.f32.mrf.mxu0
  %v8467 = vadd.f32 %v8418, %v8466
  %8468 = vmatmul.bf16.gmra.mxu0 %v5647
  %v8469 = vpop.f32.mrf.mxu0
  %v8470 = vadd.f32 %v8421, %v8469
  %v8471 = vpop.f32.mrf.mxu0
  %v8472 = vadd.f32 %v8423, %v8471
  %8473 = vdwg.mxu0
  %8474 = vmatpush.bf16.msra.mxu0 %v6783
  %8475 = vmatpush.bf16.msra.mxu0 %v6779
  %8476 = vmatpush.bf16.msra.mxu0 %v6775
  %8477 = vmatpush.bf16.msra.mxu0 %v6771
  %8478 = vmatpush.bf16.msra.mxu0 %v6767
  %8479 = vmatpush.bf16.msra.mxu0 %v6763
  %8480 = vmatpush.bf16.msra.mxu0 %v6759
  %8481 = vmatpush.bf16.msra.mxu0 %v6755
  %8482 = vmatmul.bf16.gmra.mxu0 %v5592
  %v8483 = vpop.f32.mrf.mxu0
  %v8484 = vadd.f32 %v8435, %v8483
  %v8485 = vpop.f32.mrf.mxu0
  %v8486 = vadd.f32 %v8437, %v8485
  %8487 = vmatmul.bf16.gmra.mxu0 %v5600
  %v8488 = vpop.f32.mrf.mxu0
  %v8489 = vadd.f32 %v8440, %v8488
  %v8490 = vpop.f32.mrf.mxu0
  %v8491 = vadd.f32 %v8442, %v8490
  %8492 = vmatmul.bf16.gmra.mxu0 %v5608
  %v8493 = vpop.f32.mrf.mxu0
  %v8494 = vadd.f32 %v8445, %v8493
  %v8495 = vpop.f32.mrf.mxu0
  %v8496 = vadd.f32 %v8447, %v8495
  %8497 = vmatmul.bf16.gmra.mxu0 %v5616
  %v8498 = vpop.f32.mrf.mxu0
  %v8499 = vadd.f32 %v8450, %v8498
  %v8500 = vpop.f32.mrf.mxu0
  %v8501 = vadd.f32 %v8452, %v8500
  %8502 = vmatmul.bf16.gmra.mxu0 %v5624
  %v8503 = vpop.f32.mrf.mxu0
  %v8504 = vadd.f32 %v8455, %v8503
  %v8505 = vpop.f32.mrf.mxu0
  %v8506 = vadd.f32 %v8457, %v8505
  %8507 = vmatmul.bf16.gmra.mxu0 %v5632
  %v8508 = vpop.f32.mrf.mxu0
  %v8509 = vadd.f32 %v8460, %v8508
  %v8510 = vpop.f32.mrf.mxu0
  %v8511 = vadd.f32 %v8462, %v8510
  %8512 = vmatmul.bf16.gmra.mxu0 %v5640
  %v8513 = vpop.f32.mrf.mxu0
  %v8514 = vadd.f32 %v8465, %v8513
  %v8515 = vpop.f32.mrf.mxu0
  %v8516 = vadd.f32 %v8467, %v8515
  %8517 = vmatmul.bf16.gmra.mxu0 %v5648
  %v8518 = vpop.f32.mrf.mxu0
  %v8519 = vadd.f32 %v8470, %v8518
  %v8520 = vpop.f32.mrf.mxu0
  %v8521 = vadd.f32 %v8472, %v8520
  %8522 = vdwg.mxu0
  %8523 = vmatpush.bf16.msra.mxu0 %v6815
  %8524 = vmatpush.bf16.msra.mxu0 %v6811
  %8525 = vmatpush.bf16.msra.mxu0 %v6807
  %8526 = vmatpush.bf16.msra.mxu0 %v6803
  %8527 = vmatpush.bf16.msra.mxu0 %v6799
  %8528 = vmatpush.bf16.msra.mxu0 %v6795
  %8529 = vmatpush.bf16.msra.mxu0 %v6791
  %8530 = vmatpush.bf16.msra.mxu0 %v6787
  %8531 = vmatmul.bf16.gmra.mxu0 %v5593
  %v8532 = vpop.f32.mrf.mxu0
  %v8533 = vadd.f32 %v8484, %v8532
  %v8534 = vpop.f32.mrf.mxu0
  %v8535 = vadd.f32 %v8486, %v8534
  %8536 = vmatmul.bf16.gmra.mxu0 %v5601
  %v8537 = vpop.f32.mrf.mxu0
  %v8538 = vadd.f32 %v8489, %v8537
  %v8539 = vpop.f32.mrf.mxu0
  %v8540 = vadd.f32 %v8491, %v8539
  %8541 = vmatmul.bf16.gmra.mxu0 %v5609
  %v8542 = vpop.f32.mrf.mxu0
  %v8543 = vadd.f32 %v8494, %v8542
  %v8544 = vpop.f32.mrf.mxu0
  %v8545 = vadd.f32 %v8496, %v8544
  %8546 = vmatmul.bf16.gmra.mxu0 %v5617
  %v8547 = vpop.f32.mrf.mxu0
  %v8548 = vadd.f32 %v8499, %v8547
  %v8549 = vpop.f32.mrf.mxu0
  %v8550 = vadd.f32 %v8501, %v8549
  %8551 = vmatmul.bf16.gmra.mxu0 %v5625
  %v8552 = vpop.f32.mrf.mxu0
  %v8553 = vadd.f32 %v8504, %v8552
  %v8554 = vpop.f32.mrf.mxu0
  %v8555 = vadd.f32 %v8506, %v8554
  %8556 = vmatmul.bf16.gmra.mxu0 %v5633
  %v8557 = vpop.f32.mrf.mxu0
  %v8558 = vadd.f32 %v8509, %v8557
  %v8559 = vpop.f32.mrf.mxu0
  %v8560 = vadd.f32 %v8511, %v8559
  %8561 = vmatmul.bf16.gmra.mxu0 %v5641
  %v8562 = vpop.f32.mrf.mxu0
  %v8563 = vadd.f32 %v8514, %v8562
  %v8564 = vpop.f32.mrf.mxu0
  %v8565 = vadd.f32 %v8516, %v8564
  %8566 = vmatmul.bf16.gmra.mxu0 %v5649
  %v8567 = vpop.f32.mrf.mxu0
  %v8568 = vadd.f32 %v8519, %v8567
  %v8569 = vpop.f32.mrf.mxu0
  %v8570 = vadd.f32 %v8521, %v8569
  %8571 = vdwg.mxu0
  %8572 = vmatpush.bf16.msra.mxu0 %v6847
  %8573 = vmatpush.bf16.msra.mxu0 %v6843
  %8574 = vmatpush.bf16.msra.mxu0 %v6839
  %8575 = vmatpush.bf16.msra.mxu0 %v6835
  %8576 = vmatpush.bf16.msra.mxu0 %v6831
  %8577 = vmatpush.bf16.msra.mxu0 %v6827
  %8578 = vmatpush.bf16.msra.mxu0 %v6823
  %8579 = vmatpush.bf16.msra.mxu0 %v6819
  %8580 = vmatmul.bf16.gmra.mxu0 %v5594
  %v8581 = vpop.f32.mrf.mxu0
  %v8582 = vadd.f32 %v8533, %v8581
  %v8583 = vpop.f32.mrf.mxu0
  %v8584 = vadd.f32 %v8535, %v8583
  %8585 = vmatmul.bf16.gmra.mxu0 %v5602
  %v8586 = vpop.f32.mrf.mxu0
  %v8587 = vadd.f32 %v8538, %v8586
  %v8588 = vpop.f32.mrf.mxu0
  %v8589 = vadd.f32 %v8540, %v8588
  %8590 = vmatmul.bf16.gmra.mxu0 %v5610
  %v8591 = vpop.f32.mrf.mxu0
  %v8592 = vadd.f32 %v8543, %v8591
  %v8593 = vpop.f32.mrf.mxu0
  %v8594 = vadd.f32 %v8545, %v8593
  %8595 = vmatmul.bf16.gmra.mxu0 %v5618
  %v8596 = vpop.f32.mrf.mxu0
  %v8597 = vadd.f32 %v8548, %v8596
  %v8598 = vpop.f32.mrf.mxu0
  %v8599 = vadd.f32 %v8550, %v8598
  %8600 = vmatmul.bf16.gmra.mxu0 %v5626
  %v8601 = vpop.f32.mrf.mxu0
  %v8602 = vadd.f32 %v8553, %v8601
  %v8603 = vpop.f32.mrf.mxu0
  %v8604 = vadd.f32 %v8555, %v8603
  %8605 = vmatmul.bf16.gmra.mxu0 %v5634
  %v8606 = vpop.f32.mrf.mxu0
  %v8607 = vadd.f32 %v8558, %v8606
  %v8608 = vpop.f32.mrf.mxu0
  %v8609 = vadd.f32 %v8560, %v8608
  %8610 = vmatmul.bf16.gmra.mxu0 %v5642
  %v8611 = vpop.f32.mrf.mxu0
  %v8612 = vadd.f32 %v8563, %v8611
  %v8613 = vpop.f32.mrf.mxu0
  %v8614 = vadd.f32 %v8565, %v8613
  %8615 = vmatmul.bf16.gmra.mxu0 %v5650
  %v8616 = vpop.f32.mrf.mxu0
  %v8617 = vadd.f32 %v8568, %v8616
  %v8618 = vpop.f32.mrf.mxu0
  %v8619 = vadd.f32 %v8570, %v8618
  %8620 = vdwg.mxu0
  %8621 = vmatpush.bf16.msra.mxu0 %v6879
  %8622 = vmatpush.bf16.msra.mxu0 %v6875
  %8623 = vmatpush.bf16.msra.mxu0 %v6871
  %8624 = vmatpush.bf16.msra.mxu0 %v6867
  %8625 = vmatpush.bf16.msra.mxu0 %v6863
  %8626 = vmatpush.bf16.msra.mxu0 %v6859
  %8627 = vmatpush.bf16.msra.mxu0 %v6855
  %8628 = vmatpush.bf16.msra.mxu0 %v6851
  %8629 = vmatmul.bf16.gmra.mxu0 %v5595
  %v8630 = vpop.f32.mrf.mxu0
  %v8631 = vadd.f32 %v8582, %v8630
  %v8632 = vpop.f32.mrf.mxu0
  %v8633 = vadd.f32 %v8584, %v8632
  %8634 = vmatmul.bf16.gmra.mxu0 %v5603
  %v8635 = vpop.f32.mrf.mxu0
  %v8636 = vadd.f32 %v8587, %v8635
  %v8637 = vpop.f32.mrf.mxu0
  %v8638 = vadd.f32 %v8589, %v8637
  %8639 = vmatmul.bf16.gmra.mxu0 %v5611
  %v8640 = vpop.f32.mrf.mxu0
  %v8641 = vadd.f32 %v8592, %v8640
  %v8642 = vpop.f32.mrf.mxu0
  %v8643 = vadd.f32 %v8594, %v8642
  %8644 = vmatmul.bf16.gmra.mxu0 %v5619
  %v8645 = vpop.f32.mrf.mxu0
  %v8646 = vadd.f32 %v8597, %v8645
  %v8647 = vpop.f32.mrf.mxu0
  %v8648 = vadd.f32 %v8599, %v8647
  %8649 = vmatmul.bf16.gmra.mxu0 %v5627
  %v8650 = vpop.f32.mrf.mxu0
  %v8651 = vadd.f32 %v8602, %v8650
  %v8652 = vpop.f32.mrf.mxu0
  %v8653 = vadd.f32 %v8604, %v8652
  %8654 = vmatmul.bf16.gmra.mxu0 %v5635
  %v8655 = vpop.f32.mrf.mxu0
  %v8656 = vadd.f32 %v8607, %v8655
  %v8657 = vpop.f32.mrf.mxu0
  %v8658 = vadd.f32 %v8609, %v8657
  %8659 = vmatmul.bf16.gmra.mxu0 %v5643
  %v8660 = vpop.f32.mrf.mxu0
  %v8661 = vadd.f32 %v8612, %v8660
  %v8662 = vpop.f32.mrf.mxu0
  %v8663 = vadd.f32 %v8614, %v8662
  %8664 = vmatmul.bf16.gmra.mxu0 %v5651
  %v8665 = vpop.f32.mrf.mxu0
  %v8666 = vadd.f32 %v8617, %v8665
  %v8667 = vpop.f32.mrf.mxu0
  %v8668 = vadd.f32 %v8619, %v8667
  %8669 = vdwg.mxu0
  %8670 = vmatpush.bf16.msra.mxu0 %v6911
  %8671 = vmatpush.bf16.msra.mxu0 %v6907
  %8672 = vmatpush.bf16.msra.mxu0 %v6903
  %8673 = vmatpush.bf16.msra.mxu0 %v6899
  %8674 = vmatpush.bf16.msra.mxu0 %v6895
  %8675 = vmatpush.bf16.msra.mxu0 %v6891
  %8676 = vmatpush.bf16.msra.mxu0 %v6887
  %8677 = vmatpush.bf16.msra.mxu0 %v6883
  %8678 = vmatmul.bf16.gmra.mxu0 %v5596
  %v8679 = vpop.f32.mrf.mxu0
  %v8680 = vadd.f32 %v8631, %v8679
  %v8681 = vpop.f32.mrf.mxu0
  %v8682 = vadd.f32 %v8633, %v8681
  %8683 = vmatmul.bf16.gmra.mxu0 %v5604
  %v8684 = vpop.f32.mrf.mxu0
  %v8685 = vadd.f32 %v8636, %v8684
  %v8686 = vpop.f32.mrf.mxu0
  %v8687 = vadd.f32 %v8638, %v8686
  %8688 = vmatmul.bf16.gmra.mxu0 %v5612
  %v8689 = vpop.f32.mrf.mxu0
  %v8690 = vadd.f32 %v8641, %v8689
  %v8691 = vpop.f32.mrf.mxu0
  %v8692 = vadd.f32 %v8643, %v8691
  %8693 = vmatmul.bf16.gmra.mxu0 %v5620
  %v8694 = vpop.f32.mrf.mxu0
  %v8695 = vadd.f32 %v8646, %v8694
  %v8696 = vpop.f32.mrf.mxu0
  %v8697 = vadd.f32 %v8648, %v8696
  %8698 = vmatmul.bf16.gmra.mxu0 %v5628
  %v8699 = vpop.f32.mrf.mxu0
  %v8700 = vadd.f32 %v8651, %v8699
  %v8701 = vpop.f32.mrf.mxu0
  %v8702 = vadd.f32 %v8653, %v8701
  %8703 = vmatmul.bf16.gmra.mxu0 %v5636
  %v8704 = vpop.f32.mrf.mxu0
  %v8705 = vadd.f32 %v8656, %v8704
  %v8706 = vpop.f32.mrf.mxu0
  %v8707 = vadd.f32 %v8658, %v8706
  %8708 = vmatmul.bf16.gmra.mxu0 %v5644
  %v8709 = vpop.f32.mrf.mxu0
  %v8710 = vadd.f32 %v8661, %v8709
  %v8711 = vpop.f32.mrf.mxu0
  %v8712 = vadd.f32 %v8663, %v8711
  %8713 = vmatmul.bf16.gmra.mxu0 %v5652
  %v8714 = vpop.f32.mrf.mxu0
  %v8715 = vadd.f32 %v8666, %v8714
  %v8716 = vpop.f32.mrf.mxu0
  %v8717 = vadd.f32 %v8668, %v8716
  %8718 = vdwg.mxu0
  %8719 = vmatpush.bf16.msra.mxu0 %v6943
  %8720 = vmatpush.bf16.msra.mxu0 %v6939
  %8721 = vmatpush.bf16.msra.mxu0 %v6935
  %8722 = vmatpush.bf16.msra.mxu0 %v6931
  %8723 = vmatpush.bf16.msra.mxu0 %v6927
  %8724 = vmatpush.bf16.msra.mxu0 %v6923
  %8725 = vmatpush.bf16.msra.mxu0 %v6919
  %8726 = vmatpush.bf16.msra.mxu0 %v6915
  %8727 = vmatmul.bf16.gmra.mxu0 %v5597
  %v8728 = vpop.f32.mrf.mxu0
  %v8729 = vadd.f32 %v8680, %v8728
  %v8730 = vpop.f32.mrf.mxu0
  %v8731 = vadd.f32 %v8682, %v8730
  %8732 = vmatmul.bf16.gmra.mxu0 %v5605
  %v8733 = vpop.f32.mrf.mxu0
  %v8734 = vadd.f32 %v8685, %v8733
  %v8735 = vpop.f32.mrf.mxu0
  %v8736 = vadd.f32 %v8687, %v8735
  %8737 = vmatmul.bf16.gmra.mxu0 %v5613
  %v8738 = vpop.f32.mrf.mxu0
  %v8739 = vadd.f32 %v8690, %v8738
  %v8740 = vpop.f32.mrf.mxu0
  %v8741 = vadd.f32 %v8692, %v8740
  %8742 = vmatmul.bf16.gmra.mxu0 %v5621
  %v8743 = vpop.f32.mrf.mxu0
  %v8744 = vadd.f32 %v8695, %v8743
  %v8745 = vpop.f32.mrf.mxu0
  %v8746 = vadd.f32 %v8697, %v8745
  %8747 = vmatmul.bf16.gmra.mxu0 %v5629
  %v8748 = vpop.f32.mrf.mxu0
  %v8749 = vadd.f32 %v8700, %v8748
  %v8750 = vpop.f32.mrf.mxu0
  %v8751 = vadd.f32 %v8702, %v8750
  %8752 = vmatmul.bf16.gmra.mxu0 %v5637
  %v8753 = vpop.f32.mrf.mxu0
  %v8754 = vadd.f32 %v8705, %v8753
  %v8755 = vpop.f32.mrf.mxu0
  %v8756 = vadd.f32 %v8707, %v8755
  %8757 = vmatmul.bf16.gmra.mxu0 %v5645
  %v8758 = vpop.f32.mrf.mxu0
  %v8759 = vadd.f32 %v8710, %v8758
  %v8760 = vpop.f32.mrf.mxu0
  %v8761 = vadd.f32 %v8712, %v8760
  %8762 = vmatmul.bf16.gmra.mxu0 %v5653
  %v8763 = vpop.f32.mrf.mxu0
  %v8764 = vadd.f32 %v8715, %v8763
  %v8765 = vpop.f32.mrf.mxu0
  %v8766 = vadd.f32 %v8717, %v8765
  %8767 = vdwg.mxu0
  %v8768 = vmax.f32 %v7553, 0.0
  %v8769 = vmax.f32 %v7945, 0.0
  %v8770 = vmax.f32 %v8337, 0.0
  %v8771 = vmax.f32 %v8729, 0.0
  %v8772 = vmax.f32 %v7555, 0.0
  %v8773 = vmax.f32 %v7947, 0.0
  %v8774 = vmax.f32 %v8339, 0.0
  %v8775 = vmax.f32 %v8731, 0.0
  %v8776 = vmax.f32 %v7558, 0.0
  %v8777 = vmax.f32 %v7950, 0.0
  %v8778 = vmax.f32 %v8342, 0.0
  %v8779 = vmax.f32 %v8734, 0.0
  %v8780 = vmax.f32 %v7560, 0.0
  %v8781 = vmax.f32 %v7952, 0.0
  %v8782 = vmax.f32 %v8344, 0.0
  %v8783 = vmax.f32 %v8736, 0.0
  %v8784 = vmax.f32 %v7563, 0.0
  %v8785 = vmax.f32 %v7955, 0.0
  %v8786 = vmax.f32 %v8347, 0.0
  %v8787 = vmax.f32 %v8739, 0.0
  %v8788 = vmax.f32 %v7565, 0.0
  %v8789 = vmax.f32 %v7957, 0.0
  %v8790 = vmax.f32 %v8349, 0.0
  %v8791 = vmax.f32 %v8741, 0.0
  %v8792 = vmax.f32 %v7568, 0.0
  %v8793 = vmax.f32 %v7960, 0.0
  %v8794 = vmax.f32 %v8352, 0.0
  %v8795 = vmax.f32 %v8744, 0.0
  %v8796 = vmax.f32 %v7570, 0.0
  %v8797 = vmax.f32 %v7962, 0.0
  %v8798 = vmax.f32 %v8354, 0.0
  %v8799 = vmax.f32 %v8746, 0.0
  %v8800 = vmax.f32 %v7573, 0.0
  %v8801 = vmax.f32 %v7965, 0.0
  %v8802 = vmax.f32 %v8357, 0.0
  %v8803 = vmax.f32 %v8749, 0.0
  %v8804 = vmax.f32 %v7575, 0.0
  %v8805 = vmax.f32 %v7967, 0.0
  %v8806 = vmax.f32 %v8359, 0.0
  %v8807 = vmax.f32 %v8751, 0.0
  %v8808 = vmax.f32 %v7578, 0.0
  %v8809 = vmax.f32 %v7970, 0.0
  %v8810 = vmax.f32 %v8362, 0.0
  %v8811 = vmax.f32 %v8754, 0.0
  %v8812 = vmax.f32 %v7580, 0.0
  %v8813 = vmax.f32 %v7972, 0.0
  %v8814 = vmax.f32 %v8364, 0.0
  %v8815 = vmax.f32 %v8756, 0.0
  %v8816 = vmax.f32 %v7583, 0.0
  %v8817 = vmax.f32 %v7975, 0.0
  %v8818 = vmax.f32 %v8367, 0.0
  %v8819 = vmax.f32 %v8759, 0.0
  %v8820 = vmax.f32 %v7585, 0.0
  %v8821 = vmax.f32 %v7977, 0.0
  %v8822 = vmax.f32 %v8369, 0.0
  %v8823 = vmax.f32 %v8761, 0.0
  %v8824 = vmax.f32 %v7588, 0.0
  %v8825 = vmax.f32 %v7980, 0.0
  %v8826 = vmax.f32 %v8372, 0.0
  %v8827 = vmax.f32 %v8764, 0.0
  %v8828 = vmax.f32 %v7590, 0.0
  %v8829 = vmax.f32 %v7982, 0.0
  %v8830 = vmax.f32 %v8374, 0.0
  %v8831 = vmax.f32 %v8766, 0.0
  %v8832 = vpack.c.bf16 %v8772, %v8768
  %v8833 = vpack.c.bf16 %v8773, %v8769
  %v8834 = vpack.c.bf16 %v8774, %v8770
  %v8835 = vpack.c.bf16 %v8775, %v8771
  %v8836 = vpack.c.bf16 %v8780, %v8776
  %v8837 = vpack.c.bf16 %v8781, %v8777
  %v8838 = vpack.c.bf16 %v8782, %v8778
  %v8839 = vpack.c.bf16 %v8783, %v8779
  %v8840 = vpack.c.bf16 %v8788, %v8784
  %v8841 = vpack.c.bf16 %v8789, %v8785
  %v8842 = vpack.c.bf16 %v8790, %v8786
  %v8843 = vpack.c.bf16 %v8791, %v8787
  %v8844 = vpack.c.bf16 %v8796, %v8792
  %v8845 = vpack.c.bf16 %v8797, %v8793
  %v8846 = vpack.c.bf16 %v8798, %v8794
  %v8847 = vpack.c.bf16 %v8799, %v8795
  %v8848 = vpack.c.bf16 %v8804, %v8800
  %v8849 = vpack.c.bf16 %v8805, %v8801
  %v8850 = vpack.c.bf16 %v8806, %v8802
  %v8851 = vpack.c.bf16 %v8807, %v8803
  %v8852 = vpack.c.bf16 %v8812, %v8808
  %v8853 = vpack.c.bf16 %v8813, %v8809
  %v8854 = vpack.c.bf16 %v8814, %v8810
  %v8855 = vpack.c.bf16 %v8815, %v8811
  %v8856 = vpack.c.bf16 %v8820, %v8816
  %v8857 = vpack.c.bf16 %v8821, %v8817
  %v8858 = vpack.c.bf16 %v8822, %v8818
  %v8859 = vpack.c.bf16 %v8823, %v8819
  %v8860 = vpack.c.bf16 %v8828, %v8824
  %v8861 = vpack.c.bf16 %v8829, %v8825
  %v8862 = vpack.c.bf16 %v8830, %v8826
  %v8863 = vpack.c.bf16 %v8831, %v8827
  %v8864 = vld [vmem:[%s7] sm:$0xf]
  %v8865 = vld [vmem:[%s7 + $0x4] sm:$0xf]
  %v8866 = vld [vmem:[%s7 + $0x8] sm:$0xf]
  %v8867 = vld [vmem:[%s7 + $0xc] sm:$0xf]
  %v8868 = vld [vmem:[%s7 + $0x10] sm:$0xf]
  %v8869 = vld [vmem:[%s7 + $0x14] sm:$0xf]
  %v8870 = vld [vmem:[%s7 + $0x18] sm:$0xf]
  %v8871 = vld [vmem:[%s7 + $0x1c] sm:$0xf]
  %v8872 = vld [vmem:[%s7 + $0x20] sm:$0xf]
  %v8873 = vld [vmem:[%s7 + $0x24] sm:$0xf]
  %v8874 = vld [vmem:[%s7 + $0x28] sm:$0xf]
  %v8875 = vld [vmem:[%s7 + $0x2c] sm:$0xf]
  %v8876 = vld [vmem:[%s7 + $0x30] sm:$0xf]
  %v8877 = vld [vmem:[%s7 + $0x34] sm:$0xf]
  %v8878 = vld [vmem:[%s7 + $0x38] sm:$0xf]
  %v8879 = vld [vmem:[%s7 + $0x3c] sm:$0xf]
  %v8880 = vld [vmem:[%s7 + $0x40] sm:$0xf]
  %v8881 = vld [vmem:[%s7 + $0x44] sm:$0xf]
  %v8882 = vld [vmem:[%s7 + $0x48] sm:$0xf]
  %v8883 = vld [vmem:[%s7 + $0x4c] sm:$0xf]
  %v8884 = vld [vmem:[%s7 + $0x50] sm:$0xf]
  %v8885 = vld [vmem:[%s7 + $0x54] sm:$0xf]
  %v8886 = vld [vmem:[%s7 + $0x58] sm:$0xf]
  %v8887 = vld [vmem:[%s7 + $0x5c] sm:$0xf]
  %v8888 = vld [vmem:[%s7 + $0x60] sm:$0xf]
  %v8889 = vld [vmem:[%s7 + $0x64] sm:$0xf]
  %v8890 = vld [vmem:[%s7 + $0x68] sm:$0xf]
  %v8891 = vld [vmem:[%s7 + $0x6c] sm:$0xf]
  %v8892 = vld [vmem:[%s7 + $0x70] sm:$0xf]
  %v8893 = vld [vmem:[%s7 + $0x74] sm:$0xf]
  %v8894 = vld [vmem:[%s7 + $0x78] sm:$0xf]
  %v8895 = vld [vmem:[%s7 + $0x7c] sm:$0xf]
  %v8896 = vld [vmem:[%s7 + $0x80] sm:$0xf]
  %v8897 = vld [vmem:[%s7 + $0x84] sm:$0xf]
  %v8898 = vld [vmem:[%s7 + $0x88] sm:$0xf]
  %v8899 = vld [vmem:[%s7 + $0x8c] sm:$0xf]
  %v8900 = vld [vmem:[%s7 + $0x90] sm:$0xf]
  %v8901 = vld [vmem:[%s7 + $0x94] sm:$0xf]
  %v8902 = vld [vmem:[%s7 + $0x98] sm:$0xf]
  %v8903 = vld [vmem:[%s7 + $0x9c] sm:$0xf]
  %v8904 = vld [vmem:[%s7 + $0xa0] sm:$0xf]
  %v8905 = vld [vmem:[%s7 + $0xa4] sm:$0xf]
  %v8906 = vld [vmem:[%s7 + $0xa8] sm:$0xf]
  %v8907 = vld [vmem:[%s7 + $0xac] sm:$0xf]
  %v8908 = vld [vmem:[%s7 + $0xb0] sm:$0xf]
  %v8909 = vld [vmem:[%s7 + $0xb4] sm:$0xf]
  %v8910 = vld [vmem:[%s7 + $0xb8] sm:$0xf]
  %v8911 = vld [vmem:[%s7 + $0xbc] sm:$0xf]
  %v8912 = vld [vmem:[%s7 + $0xc0] sm:$0xf]
  %v8913 = vld [vmem:[%s7 + $0xc4] sm:$0xf]
  %v8914 = vld [vmem:[%s7 + $0xc8] sm:$0xf]
  %v8915 = vld [vmem:[%s7 + $0xcc] sm:$0xf]
  %v8916 = vld [vmem:[%s7 + $0xd0] sm:$0xf]
  %v8917 = vld [vmem:[%s7 + $0xd4] sm:$0xf]
  %v8918 = vld [vmem:[%s7 + $0xd8] sm:$0xf]
  %v8919 = vld [vmem:[%s7 + $0xdc] sm:$0xf]
  %v8920 = vld [vmem:[%s7 + $0xe0] sm:$0xf]
  %v8921 = vld [vmem:[%s7 + $0xe4] sm:$0xf]
  %v8922 = vld [vmem:[%s7 + $0xe8] sm:$0xf]
  %v8923 = vld [vmem:[%s7 + $0xec] sm:$0xf]
  %v8924 = vld [vmem:[%s7 + $0xf0] sm:$0xf]
  %v8925 = vld [vmem:[%s7 + $0xf4] sm:$0xf]
  %v8926 = vld [vmem:[%s7 + $0xf8] sm:$0xf]
  %v8927 = vld [vmem:[%s7 + $0xfc] sm:$0xf]
  %v8928 = vld [vmem:[%s8] sm:$0x1]
  %v8930 = vperm.slane %v8928, 0
  %v8996 = vunpack.c.l.b16 %v8864
  %v8997 = vunpack.c.l.b16 %v8865
  %v8998 = vunpack.c.l.b16 %v8866
  %v8999 = vunpack.c.l.b16 %v8867
  %v9000 = vunpack.c.l.b16 %v8868
  %v9001 = vunpack.c.l.b16 %v8869
  %v9002 = vunpack.c.l.b16 %v8870
  %v9003 = vunpack.c.l.b16 %v8871
  %v9004 = vunpack.c.l.b16 %v8872
  %v9005 = vunpack.c.l.b16 %v8873
  %v9006 = vunpack.c.l.b16 %v8874
  %v9007 = vunpack.c.l.b16 %v8875
  %v9008 = vunpack.c.l.b16 %v8876
  %v9009 = vunpack.c.l.b16 %v8877
  %v9010 = vunpack.c.l.b16 %v8878
  %v9011 = vunpack.c.l.b16 %v8879
  %v9012 = vunpack.c.l.b16 %v8880
  %v9013 = vunpack.c.l.b16 %v8881
  %v9014 = vunpack.c.l.b16 %v8882
  %v9015 = vunpack.c.l.b16 %v8883
  %v9016 = vunpack.c.l.b16 %v8884
  %v9017 = vunpack.c.l.b16 %v8885
  %v9018 = vunpack.c.l.b16 %v8886
  %v9019 = vunpack.c.l.b16 %v8887
  %v9020 = vunpack.c.l.b16 %v8888
  %v9021 = vunpack.c.l.b16 %v8889
  %v9022 = vunpack.c.l.b16 %v8890
  %v9023 = vunpack.c.l.b16 %v8891
  %v9024 = vunpack.c.l.b16 %v8892
  %v9025 = vunpack.c.l.b16 %v8893
  %v9026 = vunpack.c.l.b16 %v8894
  %v9027 = vunpack.c.l.b16 %v8895
  %v9028 = vunpack.c.l.b16 %v8896
  %v9029 = vunpack.c.l.b16 %v8897
  %v9030 = vunpack.c.l.b16 %v8898
  %v9031 = vunpack.c.l.b16 %v8899
  %v9032 = vunpack.c.l.b16 %v8900
  %v9033 = vunpack.c.l.b16 %v8901
  %v9034 = vunpack.c.l.b16 %v8902
  %v9035 = vunpack.c.l.b16 %v8903
  %v9036 = vunpack.c.l.b16 %v8904
  %v9037 = vunpack.c.l.b16 %v8905
  %v9038 = vunpack.c.l.b16 %v8906
  %v9039 = vunpack.c.l.b16 %v8907
  %v9040 = vunpack.c.l.b16 %v8908
  %v9041 = vunpack.c.l.b16 %v8909
  %v9042 = vunpack.c.l.b16 %v8910
  %v9043 = vunpack.c.l.b16 %v8911
  %v9044 = vunpack.c.l.b16 %v8912
  %v9045 = vunpack.c.l.b16 %v8913
  %v9046 = vunpack.c.l.b16 %v8914
  %v9047 = vunpack.c.l.b16 %v8915
  %v9048 = vunpack.c.l.b16 %v8916
  %v9049 = vunpack.c.l.b16 %v8917
  %v9050 = vunpack.c.l.b16 %v8918
  %v9051 = vunpack.c.l.b16 %v8919
  %v9052 = vunpack.c.l.b16 %v8920
  %v9053 = vunpack.c.l.b16 %v8921
  %v9054 = vunpack.c.l.b16 %v8922
  %v9055 = vunpack.c.l.b16 %v8923
  %v9056 = vunpack.c.l.b16 %v8924
  %v9057 = vunpack.c.l.b16 %v8925
  %v9058 = vunpack.c.l.b16 %v8926
  %v9059 = vunpack.c.l.b16 %v8927
  %v9060 = vpack.c.b16 %v8997, %v8996
  %v9061 = vpack.c.b16 %v8999, %v8998
  %v9062 = vpack.c.b16 %v9001, %v9000
  %v9063 = vpack.c.b16 %v9003, %v9002
  %v9064 = vpack.c.b16 %v9005, %v9004
  %v9065 = vpack.c.b16 %v9007, %v9006
  %v9066 = vpack.c.b16 %v9009, %v9008
  %v9067 = vpack.c.b16 %v9011, %v9010
  %v9068 = vpack.c.b16 %v9013, %v9012
  %v9069 = vpack.c.b16 %v9015, %v9014
  %v9070 = vpack.c.b16 %v9017, %v9016
  %v9071 = vpack.c.b16 %v9019, %v9018
  %v9072 = vpack.c.b16 %v9021, %v9020
  %v9073 = vpack.c.b16 %v9023, %v9022
  %v9074 = vpack.c.b16 %v9025, %v9024
  %v9075 = vpack.c.b16 %v9027, %v9026
  %v9076 = vpack.c.b16 %v9029, %v9028
  %v9077 = vpack.c.b16 %v9031, %v9030
  %v9078 = vpack.c.b16 %v9033, %v9032
  %v9079 = vpack.c.b16 %v9035, %v9034
  %v9080 = vpack.c.b16 %v9037, %v9036
  %v9081 = vpack.c.b16 %v9039, %v9038
  %v9082 = vpack.c.b16 %v9041, %v9040
  %v9083 = vpack.c.b16 %v9043, %v9042
  %v9084 = vpack.c.b16 %v9045, %v9044
  %v9085 = vpack.c.b16 %v9047, %v9046
  %v9086 = vpack.c.b16 %v9049, %v9048
  %v9087 = vpack.c.b16 %v9051, %v9050
  %v9088 = vpack.c.b16 %v9053, %v9052
  %v9089 = vpack.c.b16 %v9055, %v9054
  %v9090 = vpack.c.b16 %v9057, %v9056
  %v9091 = vpack.c.b16 %v9059, %v9058
  %9124 = vmatpush.bf16.msra.mxu0 %v9067
  %9125 = vmatpush.bf16.msra.mxu0 %v9066
  %9126 = vmatpush.bf16.msra.mxu0 %v9065
  %9127 = vmatpush.bf16.msra.mxu0 %v9064
  %9128 = vmatpush.bf16.msra.mxu0 %v9063
  %9129 = vmatpush.bf16.msra.mxu0 %v9062
  %9130 = vmatpush.bf16.msra.mxu0 %v9061
  %9131 = vmatpush.bf16.msra.mxu0 %v9060
  %9132 = vmatmul.bf16.gmra.mxu0 %v8832
  %v9133 = vpop.f32.mrf.mxu0
  %v9134 = vadd.f32 %v8930, %v9133
  %v9135 = vpop.f32.mrf.mxu0
  %v9136 = vadd.f32 %v8930, %v9135
  %9137 = vmatmul.bf16.gmra.mxu0 %v8836
  %v9138 = vpop.f32.mrf.mxu0
  %v9139 = vadd.f32 %v8930, %v9138
  %v9140 = vpop.f32.mrf.mxu0
  %v9141 = vadd.f32 %v8930, %v9140
  %9142 = vmatmul.bf16.gmra.mxu0 %v8840
  %v9143 = vpop.f32.mrf.mxu0
  %v9144 = vadd.f32 %v8930, %v9143
  %v9145 = vpop.f32.mrf.mxu0
  %v9146 = vadd.f32 %v8930, %v9145
  %9147 = vmatmul.bf16.gmra.mxu0 %v8844
  %v9148 = vpop.f32.mrf.mxu0
  %v9149 = vadd.f32 %v8930, %v9148
  %v9150 = vpop.f32.mrf.mxu0
  %v9151 = vadd.f32 %v8930, %v9150
  %9152 = vmatmul.bf16.gmra.mxu0 %v8848
  %v9153 = vpop.f32.mrf.mxu0
  %v9154 = vadd.f32 %v8930, %v9153
  %v9155 = vpop.f32.mrf.mxu0
  %v9156 = vadd.f32 %v8930, %v9155
  %9157 = vmatmul.bf16.gmra.mxu0 %v8852
  %v9158 = vpop.f32.mrf.mxu0
  %v9159 = vadd.f32 %v8930, %v9158
  %v9160 = vpop.f32.mrf.mxu0
  %v9161 = vadd.f32 %v8930, %v9160
  %9162 = vmatmul.bf16.gmra.mxu0 %v8856
  %v9163 = vpop.f32.mrf.mxu0
  %v9164 = vadd.f32 %v8930, %v9163
  %v9165 = vpop.f32.mrf.mxu0
  %v9166 = vadd.f32 %v8930, %v9165
  %9167 = vmatmul.bf16.gmra.mxu0 %v8860
  %v9168 = vpop.f32.mrf.mxu0
  %v9169 = vadd.f32 %v8930, %v9168
  %v9170 = vpop.f32.mrf.mxu0
  %v9171 = vadd.f32 %v8930, %v9170
  %9172 = vdwg.mxu0
  %9173 = vmatpush.bf16.msra.mxu0 %v9075
  %9174 = vmatpush.bf16.msra.mxu0 %v9074
  %9175 = vmatpush.bf16.msra.mxu0 %v9073
  %9176 = vmatpush.bf16.msra.mxu0 %v9072
  %9177 = vmatpush.bf16.msra.mxu0 %v9071
  %9178 = vmatpush.bf16.msra.mxu0 %v9070
  %9179 = vmatpush.bf16.msra.mxu0 %v9069
  %9180 = vmatpush.bf16.msra.mxu0 %v9068
  %9181 = vmatmul.bf16.gmra.mxu0 %v8833
  %v9182 = vpop.f32.mrf.mxu0
  %v9183 = vadd.f32 %v9134, %v9182
  %v9184 = vpop.f32.mrf.mxu0
  %v9185 = vadd.f32 %v9136, %v9184
  %9186 = vmatmul.bf16.gmra.mxu0 %v8837
  %v9187 = vpop.f32.mrf.mxu0
  %v9188 = vadd.f32 %v9139, %v9187
  %v9189 = vpop.f32.mrf.mxu0
  %v9190 = vadd.f32 %v9141, %v9189
  %9191 = vmatmul.bf16.gmra.mxu0 %v8841
  %v9192 = vpop.f32.mrf.mxu0
  %v9193 = vadd.f32 %v9144, %v9192
  %v9194 = vpop.f32.mrf.mxu0
  %v9195 = vadd.f32 %v9146, %v9194
  %9196 = vmatmul.bf16.gmra.mxu0 %v8845
  %v9197 = vpop.f32.mrf.mxu0
  %v9198 = vadd.f32 %v9149, %v9197
  %v9199 = vpop.f32.mrf.mxu0
  %v9200 = vadd.f32 %v9151, %v9199
  %9201 = vmatmul.bf16.gmra.mxu0 %v8849
  %v9202 = vpop.f32.mrf.mxu0
  %v9203 = vadd.f32 %v9154, %v9202
  %v9204 = vpop.f32.mrf.mxu0
  %v9205 = vadd.f32 %v9156, %v9204
  %9206 = vmatmul.bf16.gmra.mxu0 %v8853
  %v9207 = vpop.f32.mrf.mxu0
  %v9208 = vadd.f32 %v9159, %v9207
  %v9209 = vpop.f32.mrf.mxu0
  %v9210 = vadd.f32 %v9161, %v9209
  %9211 = vmatmul.bf16.gmra.mxu0 %v8857
  %v9212 = vpop.f32.mrf.mxu0
  %v9213 = vadd.f32 %v9164, %v9212
  %v9214 = vpop.f32.mrf.mxu0
  %v9215 = vadd.f32 %v9166, %v9214
  %9216 = vmatmul.bf16.gmra.mxu0 %v8861
  %v9217 = vpop.f32.mrf.mxu0
  %v9218 = vadd.f32 %v9169, %v9217
  %v9219 = vpop.f32.mrf.mxu0
  %v9220 = vadd.f32 %v9171, %v9219
  %9221 = vdwg.mxu0
  %9222 = vmatpush.bf16.msra.mxu0 %v9083
  %9223 = vmatpush.bf16.msra.mxu0 %v9082
  %9224 = vmatpush.bf16.msra.mxu0 %v9081
  %9225 = vmatpush.bf16.msra.mxu0 %v9080
  %9226 = vmatpush.bf16.msra.mxu0 %v9079
  %9227 = vmatpush.bf16.msra.mxu0 %v9078
  %9228 = vmatpush.bf16.msra.mxu0 %v9077
  %9229 = vmatpush.bf16.msra.mxu0 %v9076
  %9230 = vmatmul.bf16.gmra.mxu0 %v8834
  %v9231 = vpop.f32.mrf.mxu0
  %v9232 = vadd.f32 %v9183, %v9231
  %v9233 = vpop.f32.mrf.mxu0
  %v9234 = vadd.f32 %v9185, %v9233
  %9235 = vmatmul.bf16.gmra.mxu0 %v8838
  %v9236 = vpop.f32.mrf.mxu0
  %v9237 = vadd.f32 %v9188, %v9236
  %v9238 = vpop.f32.mrf.mxu0
  %v9239 = vadd.f32 %v9190, %v9238
  %9240 = vmatmul.bf16.gmra.mxu0 %v8842
  %v9241 = vpop.f32.mrf.mxu0
  %v9242 = vadd.f32 %v9193, %v9241
  %v9243 = vpop.f32.mrf.mxu0
  %v9244 = vadd.f32 %v9195, %v9243
  %9245 = vmatmul.bf16.gmra.mxu0 %v8846
  %v9246 = vpop.f32.mrf.mxu0
  %v9247 = vadd.f32 %v9198, %v9246
  %v9248 = vpop.f32.mrf.mxu0
  %v9249 = vadd.f32 %v9200, %v9248
  %9250 = vmatmul.bf16.gmra.mxu0 %v8850
  %v9251 = vpop.f32.mrf.mxu0
  %v9252 = vadd.f32 %v9203, %v9251
  %v9253 = vpop.f32.mrf.mxu0
  %v9254 = vadd.f32 %v9205, %v9253
  %9255 = vmatmul.bf16.gmra.mxu0 %v8854
  %v9256 = vpop.f32.mrf.mxu0
  %v9257 = vadd.f32 %v9208, %v9256
  %v9258 = vpop.f32.mrf.mxu0
  %v9259 = vadd.f32 %v9210, %v9258
  %9260 = vmatmul.bf16.gmra.mxu0 %v8858
  %v9261 = vpop.f32.mrf.mxu0
  %v9262 = vadd.f32 %v9213, %v9261
  %v9263 = vpop.f32.mrf.mxu0
  %v9264 = vadd.f32 %v9215, %v9263
  %9265 = vmatmul.bf16.gmra.mxu0 %v8862
  %v9266 = vpop.f32.mrf.mxu0
  %v9267 = vadd.f32 %v9218, %v9266
  %v9268 = vpop.f32.mrf.mxu0
  %v9269 = vadd.f32 %v9220, %v9268
  %9270 = vdwg.mxu0
  %9271 = vmatpush.bf16.msra.mxu0 %v9091
  %9272 = vmatpush.bf16.msra.mxu0 %v9090
  %9273 = vmatpush.bf16.msra.mxu0 %v9089
  %9274 = vmatpush.bf16.msra.mxu0 %v9088
  %9275 = vmatpush.bf16.msra.mxu0 %v9087
  %9276 = vmatpush.bf16.msra.mxu0 %v9086
  %9277 = vmatpush.bf16.msra.mxu0 %v9085
  %9278 = vmatpush.bf16.msra.mxu0 %v9084
  %9279 = vmatmul.bf16.gmra.mxu0 %v8835
  %v9280 = vpop.f32.mrf.mxu0
  %v9281 = vadd.f32 %v9232, %v9280
  %v9282 = vpop.f32.mrf.mxu0
  %v9283 = vadd.f32 %v9234, %v9282
  %9284 = vmatmul.bf16.gmra.mxu0 %v8839
  %v9285 = vpop.f32.mrf.mxu0
  %v9286 = vadd.f32 %v9237, %v9285
  %v9287 = vpop.f32.mrf.mxu0
  %v9288 = vadd.f32 %v9239, %v9287
  %9289 = vmatmul.bf16.gmra.mxu0 %v8843
  %v9290 = vpop.f32.mrf.mxu0
  %v9291 = vadd.f32 %v9242, %v9290
  %v9292 = vpop.f32.mrf.mxu0
  %v9293 = vadd.f32 %v9244, %v9292
  %9294 = vmatmul.bf16.gmra.mxu0 %v8847
  %v9295 = vpop.f32.mrf.mxu0
  %v9296 = vadd.f32 %v9247, %v9295
  %v9297 = vpop.f32.mrf.mxu0
  %v9298 = vadd.f32 %v9249, %v9297
  %9299 = vmatmul.bf16.gmra.mxu0 %v8851
  %v9300 = vpop.f32.mrf.mxu0
  %v9301 = vadd.f32 %v9252, %v9300
  %v9302 = vpop.f32.mrf.mxu0
  %v9303 = vadd.f32 %v9254, %v9302
  %9304 = vmatmul.bf16.gmra.mxu0 %v8855
  %v9305 = vpop.f32.mrf.mxu0
  %v9306 = vadd.f32 %v9257, %v9305
  %v9307 = vpop.f32.mrf.mxu0
  %v9308 = vadd.f32 %v9259, %v9307
  %9309 = vmatmul.bf16.gmra.mxu0 %v8859
  %v9310 = vpop.f32.mrf.mxu0
  %v9311 = vadd.f32 %v9262, %v9310
  %v9312 = vpop.f32.mrf.mxu0
  %v9313 = vadd.f32 %v9264, %v9312
  %9314 = vmatmul.bf16.gmra.mxu0 %v8863
  %v9315 = vpop.f32.mrf.mxu0
  %v9316 = vadd.f32 %v9267, %v9315
  %v9317 = vpop.f32.mrf.mxu0
  %v9318 = vadd.f32 %v9269, %v9317
  %9319 = vdwg.mxu0
  %v9320 = vmax.f32 %v9281, 0.0
  %v9321 = vmax.f32 %v9283, 0.0
  %v9322 = vmax.f32 %v9286, 0.0
  %v9323 = vmax.f32 %v9288, 0.0
  %v9324 = vmax.f32 %v9291, 0.0
  %v9325 = vmax.f32 %v9293, 0.0
  %v9326 = vmax.f32 %v9296, 0.0
  %v9327 = vmax.f32 %v9298, 0.0
  %v9328 = vmax.f32 %v9301, 0.0
  %v9329 = vmax.f32 %v9303, 0.0
  %v9330 = vmax.f32 %v9306, 0.0
  %v9331 = vmax.f32 %v9308, 0.0
  %v9332 = vmax.f32 %v9311, 0.0
  %v9333 = vmax.f32 %v9313, 0.0
  %v9334 = vmax.f32 %v9316, 0.0
  %v9335 = vmax.f32 %v9318, 0.0
  %v9336 = vpack.c.bf16 %v9321, %v9320
  %v9337 = vpack.c.bf16 %v9323, %v9322
  %v9338 = vpack.c.bf16 %v9325, %v9324
  %v9339 = vpack.c.bf16 %v9327, %v9326
  %v9340 = vpack.c.bf16 %v9329, %v9328
  %v9341 = vpack.c.bf16 %v9331, %v9330
  %v9342 = vpack.c.bf16 %v9333, %v9332
  %v9343 = vpack.c.bf16 %v9335, %v9334
  %v9344 = vld [vmem:[%s9] sm:$0xf]
  %v9345 = vld [vmem:[%s9 + $0x4] sm:$0xf]
  %v9346 = vld [vmem:[%s9 + $0x8] sm:$0xf]
  %v9347 = vld [vmem:[%s9 + $0xc] sm:$0xf]
  %v9348 = vld [vmem:[%s9 + $0x10] sm:$0xf]
  %v9349 = vld [vmem:[%s9 + $0x14] sm:$0xf]
  %v9350 = vld [vmem:[%s9 + $0x18] sm:$0xf]
  %v9351 = vld [vmem:[%s9 + $0x1c] sm:$0xf]
  %v9352 = vld [vmem:[%s9 + $0x20] sm:$0xf]
  %v9353 = vld [vmem:[%s9 + $0x24] sm:$0xf]
  %v9354 = vld [vmem:[%s9 + $0x28] sm:$0xf]
  %v9355 = vld [vmem:[%s9 + $0x2c] sm:$0xf]
  %v9356 = vld [vmem:[%s9 + $0x30] sm:$0xf]
  %v9357 = vld [vmem:[%s9 + $0x34] sm:$0xf]
  %v9358 = vld [vmem:[%s9 + $0x38] sm:$0xf]
  %v9359 = vld [vmem:[%s9 + $0x3c] sm:$0xf]
  %v9360 = vld [vmem:[%s10] sm:$0x1]
  %v9362 = vperm.slane %v9360, 0
  %v9380 = vunpack.c.l.b16 %v9344
  %v9381 = vunpack.c.l.b16 %v9345
  %v9382 = vunpack.c.l.b16 %v9346
  %v9383 = vunpack.c.l.b16 %v9347
  %v9384 = vunpack.c.l.b16 %v9348
  %v9385 = vunpack.c.l.b16 %v9349
  %v9386 = vunpack.c.l.b16 %v9350
  %v9387 = vunpack.c.l.b16 %v9351
  %v9388 = vunpack.c.l.b16 %v9352
  %v9389 = vunpack.c.l.b16 %v9353
  %v9390 = vunpack.c.l.b16 %v9354
  %v9391 = vunpack.c.l.b16 %v9355
  %v9392 = vunpack.c.l.b16 %v9356
  %v9393 = vunpack.c.l.b16 %v9357
  %v9394 = vunpack.c.l.b16 %v9358
  %v9395 = vunpack.c.l.b16 %v9359
  %v9396 = vpack.c.b16 %v9381, %v9380
  %v9397 = vpack.c.b16 %v9383, %v9382
  %v9398 = vpack.c.b16 %v9385, %v9384
  %v9399 = vpack.c.b16 %v9387, %v9386
  %v9400 = vpack.c.b16 %v9389, %v9388
  %v9401 = vpack.c.b16 %v9391, %v9390
  %v9402 = vpack.c.b16 %v9393, %v9392
  %v9403 = vpack.c.b16 %v9395, %v9394
  %9412 = vmatpush.bf16.msra.mxu0 %v9403
  %9413 = vmatpush.bf16.msra.mxu0 %v9402
  %9414 = vmatpush.bf16.msra.mxu0 %v9401
  %9415 = vmatpush.bf16.msra.mxu0 %v9400
  %9416 = vmatpush.bf16.msra.mxu0 %v9399
  %9417 = vmatpush.bf16.msra.mxu0 %v9398
  %9418 = vmatpush.bf16.msra.mxu0 %v9397
  %9419 = vmatpush.bf16.msra.mxu0 %v9396
  %9420 = vmatmul.bf16.gmra.mxu0 %v9336
  %v9421 = vpop.f32.mrf.mxu0
  %v9422 = vadd.f32 %v9362, %v9421
  %v9423 = vpop.f32.mrf.mxu0
  %v9424 = vadd.f32 %v9362, %v9423
  %9425 = vmatmul.bf16.gmra.mxu0 %v9337
  %v9426 = vpop.f32.mrf.mxu0
  %v9427 = vadd.f32 %v9362, %v9426
  %v9428 = vpop.f32.mrf.mxu0
  %v9429 = vadd.f32 %v9362, %v9428
  %9430 = vmatmul.bf16.gmra.mxu0 %v9338
  %v9431 = vpop.f32.mrf.mxu0
  %v9432 = vadd.f32 %v9362, %v9431
  %v9433 = vpop.f32.mrf.mxu0
  %v9434 = vadd.f32 %v9362, %v9433
  %9435 = vmatmul.bf16.gmra.mxu0 %v9339
  %v9436 = vpop.f32.mrf.mxu0
  %v9437 = vadd.f32 %v9362, %v9436
  %v9438 = vpop.f32.mrf.mxu0
  %v9439 = vadd.f32 %v9362, %v9438
  %9440 = vmatmul.bf16.gmra.mxu0 %v9340
  %v9441 = vpop.f32.mrf.mxu0
  %v9442 = vadd.f32 %v9362, %v9441
  %v9443 = vpop.f32.mrf.mxu0
  %v9444 = vadd.f32 %v9362, %v9443
  %9445 = vmatmul.bf16.gmra.mxu0 %v9341
  %v9446 = vpop.f32.mrf.mxu0
  %v9447 = vadd.f32 %v9362, %v9446
  %v9448 = vpop.f32.mrf.mxu0
  %v9449 = vadd.f32 %v9362, %v9448
  %9450 = vmatmul.bf16.gmra.mxu0 %v9342
  %v9451 = vpop.f32.mrf.mxu0
  %v9452 = vadd.f32 %v9362, %v9451
  %v9453 = vpop.f32.mrf.mxu0
  %v9454 = vadd.f32 %v9362, %v9453
  %9455 = vmatmul.bf16.gmra.mxu0 %v9343
  %v9456 = vpop.f32.mrf.mxu0
  %v9457 = vadd.f32 %v9362, %v9456
  %v9458 = vpop.f32.mrf.mxu0
  %v9459 = vadd.f32 %v9362, %v9458
  %9460 = vdwg.mxu0
  %9461 = vst [vmem:[%s11] sm:$0xff] %v9422
  %9462 = vst [vmem:[%s11 + $0x8] sm:$0xff] %v9424
  %9463 = vst [vmem:[%s11 + $0x10] sm:$0xff] %v9427
  %9464 = vst [vmem:[%s11 + $0x18] sm:$0xff] %v9429
  %9465 = vst [vmem:[%s11 + $0x20] sm:$0xff] %v9432
  %9466 = vst [vmem:[%s11 + $0x28] sm:$0xff] %v9434
  %9467 = vst [vmem:[%s11 + $0x30] sm:$0xff] %v9437
  %9468 = vst [vmem:[%s11 + $0x38] sm:$0xff] %v9439
  %9469 = vst [vmem:[%s11 + $0x40] sm:$0xff] %v9442
  %9470 = vst [vmem:[%s11 + $0x48] sm:$0xff] %v9444
  %9471 = vst [vmem:[%s11 + $0x50] sm:$0xff] %v9447
  %9472 = vst [vmem:[%s11 + $0x58] sm:$0xff] %v9449
  %9473 = vst [vmem:[%s11 + $0x60] sm:$0xff] %v9452
  %9474 = vst [vmem:[%s11 + $0x68] sm:$0xff] %v9454
  %9475 = vst [vmem:[%s11 + $0x70] sm:$0xff] %v9457
  %9476 = vst [vmem:[%s11 + $0x78] sm:$0xff] %v9459
  // Predicated region
  $region46: #{mlp_forward.1} parent=0 // pred_check
    _
  $region47: #{mlp_forward.1} parent=0 // pred_check_branch
    %9478 = sbr.rel (0) target = $region49
  $region48: #{mlp_forward.1} parent=0 // pred_region
    _
  $region49: #{mlp_forward.1} parent=0 // pred_fallthru
    _
  // Predicated region
  $region50: #{mlp_forward.1} parent=0 // pred_check
    _
  $region51: #{mlp_forward.1} parent=0 // pred_check_branch
    %9480 = sbr.rel (0) target = $region53
  $region52: #{mlp_forward.1} parent=0 // pred_region
    _
  $region53: #{mlp_forward.1} parent=0 // pred_fallthru
    _

</llo_original>
